<compile_context>
chip_gen: v7x
topology: tpu7x:2x2x1
jax: 0.10.0
libtpu: 0.0.40
codegen_flags: <defaults>
</compile_context>

<pallas_src>
import jax
import jax.numpy as jnp
from jax.experimental import pallas as pl
from jax.experimental.pallas import tpu as pltpu

_PAD = 8  # sublane-aligned offset of the 1x1 output along W inside the scratch


# ----------------------------------------------------------------------------
# Fused kernel: conv(x1), conv(x2), attention, beta-scale   (one batch element)
# ----------------------------------------------------------------------------
def disca_kernel(x1_ref, x2_ref, xf_ref, w1_ref, b1_ref, w3_ref, b3_ref,
                 scale_ref, shift_ref, beta_ref, o_ref,
                 midp_ref, col_ref, f1_ref, f2_ref):
    # Block shapes:
    #   x1_ref/x2_ref : (1, H, W, C)            bf16  NHWC image
    #   xf_ref        : (1, C, N)               bf16  x.view(B, C, -1)
    #   w1_ref        : (C, Cmid)               bf16  1x1 conv weight
    #   b1_ref        : (1, Cmid)               f32
    #   w3_ref        : (9*Cmid, C)             bf16  3x3 weight, (dh, dw, ci) flat
    #   b3/scale/shift: (1, C)                  f32
    #   beta_ref      : (1, 1)                  f32
    #   o_ref         : (1, C, N)               f32   beta * attention output
    #   midp_ref      : (H+2, W+_PAD+2, Cmid)   f32   padded 1x1 out (scratch)
    #   col_ref       : (N, 9*Cmid)             bf16  im2col matrix (scratch)
    #   f1_ref        : (C, N)                  bf16  conv(x1) == F_   (scratch)
    #   f2_ref        : (N, C)                  bf16  conv(x2) == F__^T (scratch)
    _, H, W, C = x1_ref.shape
    Cmid = w1_ref.shape[1]
    N = H * W

    # Zero the padded scratch; both branches overwrite only the aligned
    # interior [1:1+H, _PAD:_PAD+W], so the 3x3 zero-padding ring stays intact.
    # Unconditional per-step zeroing keeps correctness under megacore sharding
    # of the parallel batch axis (each core has its own scratch), and it is
    # only ~240 KiB of VMEM stores.
    midp_ref[...] = jnp.zeros_like(midp_ref)

    def conv_branch(x_hwc):
        # 1x1 conv (bf16 x bf16 -> f32 accumulate on the MXU).
        mid = jnp.dot(x_hwc.reshape(N, C), w1_ref[...],
                      preferred_element_type=jnp.float32) + b1_ref[...]
        midp_ref[1:1 + H, _PAD:_PAD + W, :] = mid.reshape(H, W, Cmid)

        # im2col: 9 shifted taps -> one fat (N, 9*Cmid) @ (9*Cmid, C) matmul,
        # amortizing MXU push/pop instead of 9 skinny K=Cmid matmuls.
        for dh in range(3):
            for dw in range(3):
                k = dh * 3 + dw
                tap = midp_ref[dh:dh + H, _PAD - 1 + dw:_PAD - 1 + dw + W, :]
                col_ref[:, k * Cmid:(k + 1) * Cmid] = (
                    tap.reshape(N, Cmid).astype(jnp.bfloat16))

        y = jnp.dot(col_ref[...], w3_ref[...],
                    preferred_element_type=jnp.float32) + b3_ref[...]
        # LeakyReLU (negative_slope = 0.01, PyTorch default).
        y = jnp.where(y >= 0.0, y, 0.01 * y)
        # BatchNorm2d, inference form: y * scale + shift.
        # TODO(synk): train()-mode BatchNorm2d would use batch statistics; this
        # kernel implements the inference (running-stats) affine form.
        return y * scale_ref[...] + shift_ref[...]            # (N, C) f32

    # x1 branch in (C, N) layout, x2 branch in (N, C) layout, so both attention
    # matmuls below are plain MXU matmuls with no further transposes.
    f1_ref[...] = jnp.transpose(conv_branch(x1_ref[0])).astype(jnp.bfloat16)
    f2_ref[...] = conv_branch(x2_ref[0]).astype(jnp.bfloat16)

    # scores[i, j] = sum_n conv(x1)[i, n] * conv(x2)[j, n] == torch.bmm(F_, F__)
    scores = jnp.dot(f1_ref[...], f2_ref[...],
                     preferred_element_type=jnp.float32)       # (C, C) f32
    scores = scores - jnp.max(scores, axis=-1, keepdims=True)
    e = jnp.exp(scores)
    att = e * pl.reciprocal(jnp.sum(e, axis=-1, keepdims=True), approx=True)
    out = jnp.dot(att.astype(jnp.bfloat16), xf_ref[0],
                  preferred_element_type=jnp.float32)          # (C, N) f32
    o_ref[0] = (out * beta_ref[...]).astype(o_ref.dtype)


# ----------------------------------------------------------------------------
# Wrapper
# ----------------------------------------------------------------------------
def disca_forward(x, x1, x2, p, beta):
    """x, x1, x2: NCHW float32. Returns NCHW float32 == beta * attention-out."""
    B, C, H, W = x.shape
    N = H * W
    Cmid = p["w1"].shape[1]

    # NCHW -> NHWC (+ bf16 cast) for the conv branches.  At production scale
    # the module boundary should be NHWC (or the transpose folded into the
    # upstream producer) so this extra HBM round trip disappears.
    x1n = jnp.transpose(x1, (0, 2, 3, 1)).astype(jnp.bfloat16)
    x2n = jnp.transpose(x2, (0, 2, 3, 1)).astype(jnp.bfloat16)
    xf = x.reshape(B, C, N).astype(jnp.bfloat16)               # == x.view(B, C, -1)

    const = lambda shape: pl.BlockSpec(shape, lambda b, _s=shape: (0,) * len(_s))

    out = pl.pallas_call(
        disca_kernel,
        out_shape=jax.ShapeDtypeStruct((B, C, N), jnp.float32),
        grid=(B,),
        in_specs=[
            pl.BlockSpec((1, H, W, C), lambda b: (b, 0, 0, 0)),   # x1
            pl.BlockSpec((1, H, W, C), lambda b: (b, 0, 0, 0)),   # x2
            pl.BlockSpec((1, C, N), lambda b: (b, 0, 0)),         # x (flattened)
            const((C, Cmid)), const((1, Cmid)),                   # w1, b1
            const((9 * Cmid, C)), const((1, C)),                  # w3, b3
            const((1, C)), const((1, C)),                         # bn scale, shift
            const((1, 1)),                                        # beta
        ],
        out_specs=pl.BlockSpec((1, C, N), lambda b: (b, 0, 0)),
        scratch_shapes=[
            pltpu.VMEM((H + 2, W + _PAD + 2, Cmid), jnp.float32),  # padded 1x1 out
            pltpu.VMEM((N, 9 * Cmid), jnp.bfloat16),               # im2col
            pltpu.VMEM((C, N), jnp.bfloat16),                      # F_
            pltpu.VMEM((N, C), jnp.bfloat16),                      # F__^T
        ],
        compiler_params=pltpu.CompilerParams(
            # Batch axis fully independent -> megacore sharding.
            dimension_semantics=("parallel",),
            # Raised above the scoped defaults; needed at real 512-channel
            # sizes, harmless at the toy sizes used here.
            vmem_limit_bytes=48 * 1024 * 1024),
    )(x1n, x2n, xf, p["w1"], p["b1"], p["w3m"], p["b3"],
      p["scale"], p["shift"], beta)

    return out.reshape(B, C, H, W)


# ----------------------------------------------------------------------------
# Pure-JAX reference (f32 math on the same bf16-rounded params/inputs)
# ----------------------------------------------------------------------------
def ref_forward(x, x1, x2, p, beta):
    f = lambda a: a.astype(jnp.float32)
    B, C, H, W = x.shape
    N = H * W
    Cmid = p["w1"].shape[1]
    w1, b1 = f(p["w1"]), f(p["b1"])
    w3 = f(p["w3m"]).reshape(3, 3, Cmid, C)
    b3, scale, shift = f(p["b3"]), f(p["scale"]), f(p["shift"])

    def conv_ref(t):
        xn = jnp.transpose(f(t.astype(jnp.bfloat16)), (0, 2, 3, 1))
        mid = jnp.einsum("bhwc,cm->bhwm", xn, w1) + b1[0]
        mp = jnp.pad(mid, ((0, 0), (1, 1), (1, 1), (0, 0)))
        out = sum(jnp.einsum("bhwm,mo->bhwo", mp[:, dh:dh + H, dw:dw + W, :],
                             w3[dh, dw])
                  for dh in range(3) for dw in range(3)) + b3[0]
        out = jnp.where(out >= 0, out, 0.01 * out)
        out = out * scale[0] + shift[0]
        return out.reshape(B, N, C)

    f1, f2 = conv_ref(x1), conv_ref(x2)
    scores = jnp.einsum("bni,bnj->bij", f1, f2)
    att = jax.nn.softmax(scores, axis=-1)
    xf = f(x.astype(jnp.bfloat16)).reshape(B, C, N)
    out = jnp.einsum("bij,bjn->bin", att, xf)
    return (beta.reshape(()) * out).reshape(B, C, H, W)


# ----------------------------------------------------------------------------
# Main
# ----------------------------------------------------------------------------
if __name__ == "__main__":
    B, C, Cmid, H, W = 2, 256, 128, 16, 16   # lane-dense stand-ins for 512/256
    N = H * W

    key = jax.random.PRNGKey(0)
    kw1, kb1, kw3, kb3, kx, kx1, kx2 = jax.random.split(key, 7)

    # BatchNorm2d defaults (gamma=1, beta=0, running_mean=0, running_var=1),
    # folded to inference-form scale/shift.
    eps = 1e-5
    scale = (1.0 / jnp.sqrt(1.0 + eps)) * jnp.ones((C,), jnp.float32)
    shift = jnp.zeros((C,), jnp.float32)

    w1 = 0.03 * jax.random.normal(kw1, (C, Cmid), jnp.float32)
    b1 = 0.01 * jax.random.normal(kb1, (1, Cmid), jnp.float32)
    w3 = 0.01 * jax.random.normal(kw3, (3, 3, Cmid, C), jnp.float32)
    b3 = 0.01 * jax.random.normal(kb3, (1, C), jnp.float32)

    params = {
        "w1": w1.astype(jnp.bfloat16),
        "b1": b1,
        "w3m": w3.reshape(9 * Cmid, C).astype(jnp.bfloat16),  # (dh,dw,ci) flat
        "b3": b3,
        "scale": scale.reshape(1, C),
        "shift": shift.reshape(1, C),
    }
    beta0 = jnp.zeros((1, 1), jnp.float32)   # module init: Parameter(zeros(1))

    x = jax.random.normal(kx, (B, C, H, W), jnp.float32)
    x1 = jax.random.normal(kx1, (B, C, H, W), jnp.float32)
    x2 = jax.random.normal(kx2, (B, C, H, W), jnp.float32)

    fwd = jax.jit(disca_forward)

    # Self-check against the pure-JAX reference with a nonzero beta so the
    # whole attention path is exercised numerically (bf16 matmuls -> loose tol).
    beta_t = jnp.full((1, 1), 0.5, jnp.float32)
    got = jax.block_until_ready(fwd(x, x1, x2, params, beta_t))
    want = ref_forward(x, x1, x2, params, beta_t)
    err = float(jnp.max(jnp.abs(got - want)))
    assert got.shape == (B, C, H, W)
    assert err < 2e-2, f"mismatch vs reference, max abs err = {err}"

    # Run with the module's actual init (beta = 0).
    out = jax.block_until_ready(fwd(x, x1, x2, params, beta0))
    assert out.shape == (B, C, H, W)
    assert bool(jnp.all(jnp.isfinite(out)))

    print("KERNEL_OK")
</pallas_src>

<mosaic_0001>
module attributes {stable_mosaic.version = 11 : i64} {
  func.func @disca_kernel(%arg0: i32, %arg1: memref<1x16x16x256xbf16, #tpu.memory_space<vmem>>, %arg2: memref<1x16x16x256xbf16, #tpu.memory_space<vmem>>, %arg3: memref<1x256x256xbf16, #tpu.memory_space<vmem>>, %arg4: memref<256x128xbf16, #tpu.memory_space<vmem>>, %arg5: memref<1x128xf32, #tpu.memory_space<vmem>>, %arg6: memref<1152x256xbf16, #tpu.memory_space<vmem>>, %arg7: memref<1x256xf32, #tpu.memory_space<vmem>>, %arg8: memref<1x256xf32, #tpu.memory_space<vmem>>, %arg9: memref<1x256xf32, #tpu.memory_space<vmem>>, %arg10: memref<1x1xf32, #tpu.memory_space<vmem>>, %arg11: memref<1x256x256xf32, #tpu.memory_space<vmem>>, %arg12: memref<18x26x128xf32, #tpu.memory_space<vmem>>, %arg13: memref<256x1152xbf16, #tpu.memory_space<vmem>>, %arg14: memref<256x256xbf16, #tpu.memory_space<vmem>>, %arg15: memref<256x256xbf16, #tpu.memory_space<vmem>>) attributes {dimension_semantics = [#tpu.dimension_semantics<parallel>], iteration_bounds = array<i64: 2>, scalar_prefetch = 0 : i64, scratch_operands = 4 : i64, tpu.core_type = #tpu.core_type<tc>, window_params = [{transform_indices = @transform_0, window_bounds = array<i64: 1, 16, 16, 256>}, {transform_indices = @transform_1, window_bounds = array<i64: 1, 16, 16, 256>}, {transform_indices = @transform_2, window_bounds = array<i64: 1, 256, 256>}, {pipeline_mode = #tpu.pipeline_mode<synchronous>, transform_indices = @transform_3, window_bounds = array<i64: 256, 128>}, {pipeline_mode = #tpu.pipeline_mode<synchronous>, transform_indices = @transform_4, window_bounds = array<i64: 1, 128>}, {pipeline_mode = #tpu.pipeline_mode<synchronous>, transform_indices = @transform_5, window_bounds = array<i64: 1152, 256>}, {pipeline_mode = #tpu.pipeline_mode<synchronous>, transform_indices = @transform_6, window_bounds = array<i64: 1, 256>}, {pipeline_mode = #tpu.pipeline_mode<synchronous>, transform_indices = @transform_7, window_bounds = array<i64: 1, 256>}, {pipeline_mode = #tpu.pipeline_mode<synchronous>, transform_indices = @transform_8, window_bounds = array<i64: 1, 256>}, {pipeline_mode = #tpu.pipeline_mode<synchronous>, transform_indices = @transform_9, window_bounds = array<i64: 1, 1>}, {transform_indices = @transform_10, window_bounds = array<i64: 1, 256, 256>}]} {
    %cst = arith.constant 0.000000e+00 : f32
    %0 = vector.broadcast %cst : f32 to vector<18x26x128xf32>
    %c0 = arith.constant 0 : index
    %c0_0 = arith.constant 0 : index
    %c0_1 = arith.constant 0 : index
    %1 = vector.load %arg12[%c0, %c0_0, %c0_1] : memref<18x26x128xf32, #tpu.memory_space<vmem>>, vector<18x26x128xf32>
    tpu.vector_store %arg12[%c0, %c0_0, %c0_1], %0 {strides = array<i32>} : memref<18x26x128xf32, #tpu.memory_space<vmem>>, vector<18x26x128xf32>,
    %c0_2 = arith.constant 0 : index
    %c0_3 = arith.constant 0 : index
    %c0_4 = arith.constant 0 : index
    %c0_5 = arith.constant 0 : index
    %2 = vector.load %arg1[%c0_2, %c0_3, %c0_4, %c0_5] : memref<1x16x16x256xbf16, #tpu.memory_space<vmem>>, vector<1x16x16x256xbf16>
    %3 = vector.shape_cast %2 : vector<1x16x16x256xbf16> to vector<16x16x256xbf16>
    %4 = vector.shape_cast %3 : vector<16x16x256xbf16> to vector<256x256xbf16>
    %c0_6 = arith.constant 0 : index
    %c0_7 = arith.constant 0 : index
    %5 = vector.load %arg4[%c0_6, %c0_7] : memref<256x128xbf16, #tpu.memory_space<vmem>>, vector<256x128xbf16>
    %cst_8 = arith.constant dense<0.000000e+00> : vector<256x128xf32>
    %6 = tpu.matmul %4, %5, %cst_8 {dimension_numbers = #tpu.dot_dimension_numbers<[1], [0], [0], [1], [0, 0, 1, 1], [], []>} : vector<256x256xbf16>, vector<256x128xbf16>, vector<256x128xf32> -> vector<256x128xf32>
    %c0_9 = arith.constant 0 : index
    %c0_10 = arith.constant 0 : index
    %7 = vector.load %arg5[%c0_9, %c0_10] : memref<1x128xf32, #tpu.memory_space<vmem>>, vector<1x128xf32>
    %8 = vector.broadcast %7 : vector<1x128xf32> to vector<256x128xf32>
    %9 = arith.addf %6, %8 : vector<256x128xf32>
    %10 = vector.shape_cast %9 : vector<256x128xf32> to vector<16x16x128xf32>
    %c1 = arith.constant 1 : index
    %c8 = arith.constant 8 : index
    %c0_11 = arith.constant 0 : index
    %11 = vector.load %arg12[%c1, %c8, %c0_11] : memref<18x26x128xf32, #tpu.memory_space<vmem>>, vector<16x16x128xf32>
    tpu.vector_store %arg12[%c1, %c8, %c0_11], %10 {strides = array<i32>} : memref<18x26x128xf32, #tpu.memory_space<vmem>>, vector<16x16x128xf32>,
    %c0_12 = arith.constant 0 : index
    %c7 = arith.constant 7 : index
    %c0_13 = arith.constant 0 : index
    %12 = vector.load %arg12[%c0_12, %c7, %c0_13] : memref<18x26x128xf32, #tpu.memory_space<vmem>>, vector<16x16x128xf32>
    %13 = vector.shape_cast %12 : vector<16x16x128xf32> to vector<256x128xf32>
    %14 = arith.truncf %13 : vector<256x128xf32> to vector<256x128xbf16>
    %c0_14 = arith.constant 0 : index
    %c0_15 = arith.constant 0 : index
    %15 = vector.load %arg13[%c0_14, %c0_15] : memref<256x1152xbf16, #tpu.memory_space<vmem>>, vector<256x128xbf16>
    tpu.vector_store %arg13[%c0_14, %c0_15], %14 {strides = array<i32>} : memref<256x1152xbf16, #tpu.memory_space<vmem>>, vector<256x128xbf16>,
    %c0_16 = arith.constant 0 : index
    %c8_17 = arith.constant 8 : index
    %c0_18 = arith.constant 0 : index
    %16 = vector.load %arg12[%c0_16, %c8_17, %c0_18] : memref<18x26x128xf32, #tpu.memory_space<vmem>>, vector<16x16x128xf32>
    %17 = vector.shape_cast %16 : vector<16x16x128xf32> to vector<256x128xf32>
    %18 = arith.truncf %17 : vector<256x128xf32> to vector<256x128xbf16>
    %c0_19 = arith.constant 0 : index
    %c128 = arith.constant 128 : index
    %19 = vector.load %arg13[%c0_19, %c128] : memref<256x1152xbf16, #tpu.memory_space<vmem>>, vector<256x128xbf16>
    tpu.vector_store %arg13[%c0_19, %c128], %18 {strides = array<i32>} : memref<256x1152xbf16, #tpu.memory_space<vmem>>, vector<256x128xbf16>,
    %c0_20 = arith.constant 0 : index
    %c9 = arith.constant 9 : index
    %c0_21 = arith.constant 0 : index
    %20 = vector.load %arg12[%c0_20, %c9, %c0_21] : memref<18x26x128xf32, #tpu.memory_space<vmem>>, vector<16x16x128xf32>
    %21 = vector.shape_cast %20 : vector<16x16x128xf32> to vector<256x128xf32>
    %22 = arith.truncf %21 : vector<256x128xf32> to vector<256x128xbf16>
    %c0_22 = arith.constant 0 : index
    %c256 = arith.constant 256 : index
    %23 = vector.load %arg13[%c0_22, %c256] : memref<256x1152xbf16, #tpu.memory_space<vmem>>, vector<256x128xbf16>
    tpu.vector_store %arg13[%c0_22, %c256], %22 {strides = array<i32>} : memref<256x1152xbf16, #tpu.memory_space<vmem>>, vector<256x128xbf16>,
    %c1_23 = arith.constant 1 : index
    %c7_24 = arith.constant 7 : index
    %c0_25 = arith.constant 0 : index
    %24 = vector.load %arg12[%c1_23, %c7_24, %c0_25] : memref<18x26x128xf32, #tpu.memory_space<vmem>>, vector<16x16x128xf32>
    %25 = vector.shape_cast %24 : vector<16x16x128xf32> to vector<256x128xf32>
    %26 = arith.truncf %25 : vector<256x128xf32> to vector<256x128xbf16>
    %c0_26 = arith.constant 0 : index
    %c384 = arith.constant 384 : index
    %27 = vector.load %arg13[%c0_26, %c384] : memref<256x1152xbf16, #tpu.memory_space<vmem>>, vector<256x128xbf16>
    tpu.vector_store %arg13[%c0_26, %c384], %26 {strides = array<i32>} : memref<256x1152xbf16, #tpu.memory_space<vmem>>, vector<256x128xbf16>,
    %c1_27 = arith.constant 1 : index
    %c8_28 = arith.constant 8 : index
    %c0_29 = arith.constant 0 : index
    %28 = vector.load %arg12[%c1_27, %c8_28, %c0_29] : memref<18x26x128xf32, #tpu.memory_space<vmem>>, vector<16x16x128xf32>
    %29 = vector.shape_cast %28 : vector<16x16x128xf32> to vector<256x128xf32>
    %30 = arith.truncf %29 : vector<256x128xf32> to vector<256x128xbf16>
    %c0_30 = arith.constant 0 : index
    %c512 = arith.constant 512 : index
    %31 = vector.load %arg13[%c0_30, %c512] : memref<256x1152xbf16, #tpu.memory_space<vmem>>, vector<256x128xbf16>
    tpu.vector_store %arg13[%c0_30, %c512], %30 {strides = array<i32>} : memref<256x1152xbf16, #tpu.memory_space<vmem>>, vector<256x128xbf16>,
    %c1_31 = arith.constant 1 : index
    %c9_32 = arith.constant 9 : index
    %c0_33 = arith.constant 0 : index
    %32 = vector.load %arg12[%c1_31, %c9_32, %c0_33] : memref<18x26x128xf32, #tpu.memory_space<vmem>>, vector<16x16x128xf32>
    %33 = vector.shape_cast %32 : vector<16x16x128xf32> to vector<256x128xf32>
    %34 = arith.truncf %33 : vector<256x128xf32> to vector<256x128xbf16>
    %c0_34 = arith.constant 0 : index
    %c640 = arith.constant 640 : index
    %35 = vector.load %arg13[%c0_34, %c640] : memref<256x1152xbf16, #tpu.memory_space<vmem>>, vector<256x128xbf16>
    tpu.vector_store %arg13[%c0_34, %c640], %34 {strides = array<i32>} : memref<256x1152xbf16, #tpu.memory_space<vmem>>, vector<256x128xbf16>,
    %c2 = arith.constant 2 : index
    %c7_35 = arith.constant 7 : index
    %c0_36 = arith.constant 0 : index
    %36 = vector.load %arg12[%c2, %c7_35, %c0_36] : memref<18x26x128xf32, #tpu.memory_space<vmem>>, vector<16x16x128xf32>
    %37 = vector.shape_cast %36 : vector<16x16x128xf32> to vector<256x128xf32>
    %38 = arith.truncf %37 : vector<256x128xf32> to vector<256x128xbf16>
    %c0_37 = arith.constant 0 : index
    %c768 = arith.constant 768 : index
    %39 = vector.load %arg13[%c0_37, %c768] : memref<256x1152xbf16, #tpu.memory_space<vmem>>, vector<256x128xbf16>
    tpu.vector_store %arg13[%c0_37, %c768], %38 {strides = array<i32>} : memref<256x1152xbf16, #tpu.memory_space<vmem>>, vector<256x128xbf16>,
    %c2_38 = arith.constant 2 : index
    %c8_39 = arith.constant 8 : index
    %c0_40 = arith.constant 0 : index
    %40 = vector.load %arg12[%c2_38, %c8_39, %c0_40] : memref<18x26x128xf32, #tpu.memory_space<vmem>>, vector<16x16x128xf32>
    %41 = vector.shape_cast %40 : vector<16x16x128xf32> to vector<256x128xf32>
    %42 = arith.truncf %41 : vector<256x128xf32> to vector<256x128xbf16>
    %c0_41 = arith.constant 0 : index
    %c896 = arith.constant 896 : index
    %43 = vector.load %arg13[%c0_41, %c896] : memref<256x1152xbf16, #tpu.memory_space<vmem>>, vector<256x128xbf16>
    tpu.vector_store %arg13[%c0_41, %c896], %42 {strides = array<i32>} : memref<256x1152xbf16, #tpu.memory_space<vmem>>, vector<256x128xbf16>,
    %c2_42 = arith.constant 2 : index
    %c9_43 = arith.constant 9 : index
    %c0_44 = arith.constant 0 : index
    %44 = vector.load %arg12[%c2_42, %c9_43, %c0_44] : memref<18x26x128xf32, #tpu.memory_space<vmem>>, vector<16x16x128xf32>
    %45 = vector.shape_cast %44 : vector<16x16x128xf32> to vector<256x128xf32>
    %46 = arith.truncf %45 : vector<256x128xf32> to vector<256x128xbf16>
    %c0_45 = arith.constant 0 : index
    %c1024 = arith.constant 1024 : index
    %47 = vector.load %arg13[%c0_45, %c1024] : memref<256x1152xbf16, #tpu.memory_space<vmem>>, vector<256x128xbf16>
    tpu.vector_store %arg13[%c0_45, %c1024], %46 {strides = array<i32>} : memref<256x1152xbf16, #tpu.memory_space<vmem>>, vector<256x128xbf16>,
    %c0_46 = arith.constant 0 : index
    %c0_47 = arith.constant 0 : index
    %48 = vector.load %arg13[%c0_46, %c0_47] : memref<256x1152xbf16, #tpu.memory_space<vmem>>, vector<256x1152xbf16>
    %c0_48 = arith.constant 0 : index
    %c0_49 = arith.constant 0 : index
    %49 = vector.load %arg6[%c0_48, %c0_49] : memref<1152x256xbf16, #tpu.memory_space<vmem>>, vector<1152x256xbf16>
    %cst_50 = arith.constant dense<0.000000e+00> : vector<256x256xf32>
    %50 = tpu.matmul %48, %49, %cst_50 {dimension_numbers = #tpu.dot_dimension_numbers<[1], [0], [0], [1], [0, 0, 1, 1], [], []>} : vector<256x1152xbf16>, vector<1152x256xbf16>, vector<256x256xf32> -> vector<256x256xf32>
    %c0_51 = arith.constant 0 : index
    %c0_52 = arith.constant 0 : index
    %51 = vector.load %arg7[%c0_51, %c0_52] : memref<1x256xf32, #tpu.memory_space<vmem>>, vector<1x256xf32>
    %52 = vector.broadcast %51 : vector<1x256xf32> to vector<256x256xf32>
    %53 = arith.addf %50, %52 : vector<256x256xf32>
    %cst_53 = arith.constant 0.000000e+00 : f32
    %54 = vector.broadcast %cst_53 : f32 to vector<256x256xf32>
    %55 = arith.cmpf oge, %53, %54 : vector<256x256xf32>
    %cst_54 = arith.constant 0.00999999977 : f32
    %56 = vector.broadcast %cst_54 : f32 to vector<256x256xf32>
    %57 = arith.mulf %56, %53 : vector<256x256xf32>
    %58 = arith.select %55, %53, %57 : vector<256x256xi1>, vector<256x256xf32>
    %c0_55 = arith.constant 0 : index
    %c0_56 = arith.constant 0 : index
    %59 = vector.load %arg8[%c0_55, %c0_56] : memref<1x256xf32, #tpu.memory_space<vmem>>, vector<1x256xf32>
    %60 = vector.broadcast %59 : vector<1x256xf32> to vector<256x256xf32>
    %61 = arith.mulf %58, %60 : vector<256x256xf32>
    %c0_57 = arith.constant 0 : index
    %c0_58 = arith.constant 0 : index
    %62 = vector.load %arg9[%c0_57, %c0_58] : memref<1x256xf32, #tpu.memory_space<vmem>>, vector<1x256xf32>
    %63 = vector.broadcast %62 : vector<1x256xf32> to vector<256x256xf32>
    %64 = arith.addf %61, %63 : vector<256x256xf32>
    %65 = tpu.transpose %64, [1, 0] : vector<256x256xf32> -> vector<256x256xf32>
    %66 = arith.truncf %65 : vector<256x256xf32> to vector<256x256xbf16>
    %c0_59 = arith.constant 0 : index
    %c0_60 = arith.constant 0 : index
    %67 = vector.load %arg14[%c0_59, %c0_60] : memref<256x256xbf16, #tpu.memory_space<vmem>>, vector<256x256xbf16>
    tpu.vector_store %arg14[%c0_59, %c0_60], %66 {strides = array<i32>} : memref<256x256xbf16, #tpu.memory_space<vmem>>, vector<256x256xbf16>,
    %c0_61 = arith.constant 0 : index
    %c0_62 = arith.constant 0 : index
    %c0_63 = arith.constant 0 : index
    %c0_64 = arith.constant 0 : index
    %68 = vector.load %arg2[%c0_61, %c0_62, %c0_63, %c0_64] : memref<1x16x16x256xbf16, #tpu.memory_space<vmem>>, vector<1x16x16x256xbf16>
    %69 = vector.shape_cast %68 : vector<1x16x16x256xbf16> to vector<16x16x256xbf16>
    %70 = vector.shape_cast %69 : vector<16x16x256xbf16> to vector<256x256xbf16>
    %c0_65 = arith.constant 0 : index
    %c0_66 = arith.constant 0 : index
    %71 = vector.load %arg4[%c0_65, %c0_66] : memref<256x128xbf16, #tpu.memory_space<vmem>>, vector<256x128xbf16>
    %cst_67 = arith.constant dense<0.000000e+00> : vector<256x128xf32>
    %72 = tpu.matmul %70, %71, %cst_67 {dimension_numbers = #tpu.dot_dimension_numbers<[1], [0], [0], [1], [0, 0, 1, 1], [], []>} : vector<256x256xbf16>, vector<256x128xbf16>, vector<256x128xf32> -> vector<256x128xf32>
    %c0_68 = arith.constant 0 : index
    %c0_69 = arith.constant 0 : index
    %73 = vector.load %arg5[%c0_68, %c0_69] : memref<1x128xf32, #tpu.memory_space<vmem>>, vector<1x128xf32>
    %74 = vector.broadcast %73 : vector<1x128xf32> to vector<256x128xf32>
    %75 = arith.addf %72, %74 : vector<256x128xf32>
    %76 = vector.shape_cast %75 : vector<256x128xf32> to vector<16x16x128xf32>
    %c1_70 = arith.constant 1 : index
    %c8_71 = arith.constant 8 : index
    %c0_72 = arith.constant 0 : index
    %77 = vector.load %arg12[%c1_70, %c8_71, %c0_72] : memref<18x26x128xf32, #tpu.memory_space<vmem>>, vector<16x16x128xf32>
    tpu.vector_store %arg12[%c1_70, %c8_71, %c0_72], %76 {strides = array<i32>} : memref<18x26x128xf32, #tpu.memory_space<vmem>>, vector<16x16x128xf32>,
    %c0_73 = arith.constant 0 : index
    %c7_74 = arith.constant 7 : index
    %c0_75 = arith.constant 0 : index
    %78 = vector.load %arg12[%c0_73, %c7_74, %c0_75] : memref<18x26x128xf32, #tpu.memory_space<vmem>>, vector<16x16x128xf32>
    %79 = vector.shape_cast %78 : vector<16x16x128xf32> to vector<256x128xf32>
    %80 = arith.truncf %79 : vector<256x128xf32> to vector<256x128xbf16>
    %c0_76 = arith.constant 0 : index
    %c0_77 = arith.constant 0 : index
    %81 = vector.load %arg13[%c0_76, %c0_77] : memref<256x1152xbf16, #tpu.memory_space<vmem>>, vector<256x128xbf16>
    tpu.vector_store %arg13[%c0_76, %c0_77], %80 {strides = array<i32>} : memref<256x1152xbf16, #tpu.memory_space<vmem>>, vector<256x128xbf16>,
    %c0_78 = arith.constant 0 : index
    %c8_79 = arith.constant 8 : index
    %c0_80 = arith.constant 0 : index
    %82 = vector.load %arg12[%c0_78, %c8_79, %c0_80] : memref<18x26x128xf32, #tpu.memory_space<vmem>>, vector<16x16x128xf32>
    %83 = vector.shape_cast %82 : vector<16x16x128xf32> to vector<256x128xf32>
    %84 = arith.truncf %83 : vector<256x128xf32> to vector<256x128xbf16>
    %c0_81 = arith.constant 0 : index
    %c128_82 = arith.constant 128 : index
    %85 = vector.load %arg13[%c0_81, %c128_82] : memref<256x1152xbf16, #tpu.memory_space<vmem>>, vector<256x128xbf16>
    tpu.vector_store %arg13[%c0_81, %c128_82], %84 {strides = array<i32>} : memref<256x1152xbf16, #tpu.memory_space<vmem>>, vector<256x128xbf16>,
    %c0_83 = arith.constant 0 : index
    %c9_84 = arith.constant 9 : index
    %c0_85 = arith.constant 0 : index
    %86 = vector.load %arg12[%c0_83, %c9_84, %c0_85] : memref<18x26x128xf32, #tpu.memory_space<vmem>>, vector<16x16x128xf32>
    %87 = vector.shape_cast %86 : vector<16x16x128xf32> to vector<256x128xf32>
    %88 = arith.truncf %87 : vector<256x128xf32> to vector<256x128xbf16>
    %c0_86 = arith.constant 0 : index
    %c256_87 = arith.constant 256 : index
    %89 = vector.load %arg13[%c0_86, %c256_87] : memref<256x1152xbf16, #tpu.memory_space<vmem>>, vector<256x128xbf16>
    tpu.vector_store %arg13[%c0_86, %c256_87], %88 {strides = array<i32>} : memref<256x1152xbf16, #tpu.memory_space<vmem>>, vector<256x128xbf16>,
    %c1_88 = arith.constant 1 : index
    %c7_89 = arith.constant 7 : index
    %c0_90 = arith.constant 0 : index
    %90 = vector.load %arg12[%c1_88, %c7_89, %c0_90] : memref<18x26x128xf32, #tpu.memory_space<vmem>>, vector<16x16x128xf32>
    %91 = vector.shape_cast %90 : vector<16x16x128xf32> to vector<256x128xf32>
    %92 = arith.truncf %91 : vector<256x128xf32> to vector<256x128xbf16>
    %c0_91 = arith.constant 0 : index
    %c384_92 = arith.constant 384 : index
    %93 = vector.load %arg13[%c0_91, %c384_92] : memref<256x1152xbf16, #tpu.memory_space<vmem>>, vector<256x128xbf16>
    tpu.vector_store %arg13[%c0_91, %c384_92], %92 {strides = array<i32>} : memref<256x1152xbf16, #tpu.memory_space<vmem>>, vector<256x128xbf16>,
    %c1_93 = arith.constant 1 : index
    %c8_94 = arith.constant 8 : index
    %c0_95 = arith.constant 0 : index
    %94 = vector.load %arg12[%c1_93, %c8_94, %c0_95] : memref<18x26x128xf32, #tpu.memory_space<vmem>>, vector<16x16x128xf32>
    %95 = vector.shape_cast %94 : vector<16x16x128xf32> to vector<256x128xf32>
    %96 = arith.truncf %95 : vector<256x128xf32> to vector<256x128xbf16>
    %c0_96 = arith.constant 0 : index
    %c512_97 = arith.constant 512 : index
    %97 = vector.load %arg13[%c0_96, %c512_97] : memref<256x1152xbf16, #tpu.memory_space<vmem>>, vector<256x128xbf16>
    tpu.vector_store %arg13[%c0_96, %c512_97], %96 {strides = array<i32>} : memref<256x1152xbf16, #tpu.memory_space<vmem>>, vector<256x128xbf16>,
    %c1_98 = arith.constant 1 : index
    %c9_99 = arith.constant 9 : index
    %c0_100 = arith.constant 0 : index
    %98 = vector.load %arg12[%c1_98, %c9_99, %c0_100] : memref<18x26x128xf32, #tpu.memory_space<vmem>>, vector<16x16x128xf32>
    %99 = vector.shape_cast %98 : vector<16x16x128xf32> to vector<256x128xf32>
    %100 = arith.truncf %99 : vector<256x128xf32> to vector<256x128xbf16>
    %c0_101 = arith.constant 0 : index
    %c640_102 = arith.constant 640 : index
    %101 = vector.load %arg13[%c0_101, %c640_102] : memref<256x1152xbf16, #tpu.memory_space<vmem>>, vector<256x128xbf16>
    tpu.vector_store %arg13[%c0_101, %c640_102], %100 {strides = array<i32>} : memref<256x1152xbf16, #tpu.memory_space<vmem>>, vector<256x128xbf16>,
    %c2_103 = arith.constant 2 : index
    %c7_104 = arith.constant 7 : index
    %c0_105 = arith.constant 0 : index
    %102 = vector.load %arg12[%c2_103, %c7_104, %c0_105] : memref<18x26x128xf32, #tpu.memory_space<vmem>>, vector<16x16x128xf32>
    %103 = vector.shape_cast %102 : vector<16x16x128xf32> to vector<256x128xf32>
    %104 = arith.truncf %103 : vector<256x128xf32> to vector<256x128xbf16>
    %c0_106 = arith.constant 0 : index
    %c768_107 = arith.constant 768 : index
    %105 = vector.load %arg13[%c0_106, %c768_107] : memref<256x1152xbf16, #tpu.memory_space<vmem>>, vector<256x128xbf16>
    tpu.vector_store %arg13[%c0_106, %c768_107], %104 {strides = array<i32>} : memref<256x1152xbf16, #tpu.memory_space<vmem>>, vector<256x128xbf16>,
    %c2_108 = arith.constant 2 : index
    %c8_109 = arith.constant 8 : index
    %c0_110 = arith.constant 0 : index
    %106 = vector.load %arg12[%c2_108, %c8_109, %c0_110] : memref<18x26x128xf32, #tpu.memory_space<vmem>>, vector<16x16x128xf32>
    %107 = vector.shape_cast %106 : vector<16x16x128xf32> to vector<256x128xf32>
    %108 = arith.truncf %107 : vector<256x128xf32> to vector<256x128xbf16>
    %c0_111 = arith.constant 0 : index
    %c896_112 = arith.constant 896 : index
    %109 = vector.load %arg13[%c0_111, %c896_112] : memref<256x1152xbf16, #tpu.memory_space<vmem>>, vector<256x128xbf16>
    tpu.vector_store %arg13[%c0_111, %c896_112], %108 {strides = array<i32>} : memref<256x1152xbf16, #tpu.memory_space<vmem>>, vector<256x128xbf16>,
    %c2_113 = arith.constant 2 : index
    %c9_114 = arith.constant 9 : index
    %c0_115 = arith.constant 0 : index
    %110 = vector.load %arg12[%c2_113, %c9_114, %c0_115] : memref<18x26x128xf32, #tpu.memory_space<vmem>>, vector<16x16x128xf32>
    %111 = vector.shape_cast %110 : vector<16x16x128xf32> to vector<256x128xf32>
    %112 = arith.truncf %111 : vector<256x128xf32> to vector<256x128xbf16>
    %c0_116 = arith.constant 0 : index
    %c1024_117 = arith.constant 1024 : index
    %113 = vector.load %arg13[%c0_116, %c1024_117] : memref<256x1152xbf16, #tpu.memory_space<vmem>>, vector<256x128xbf16>
    tpu.vector_store %arg13[%c0_116, %c1024_117], %112 {strides = array<i32>} : memref<256x1152xbf16, #tpu.memory_space<vmem>>, vector<256x128xbf16>,
    %c0_118 = arith.constant 0 : index
    %c0_119 = arith.constant 0 : index
    %114 = vector.load %arg13[%c0_118, %c0_119] : memref<256x1152xbf16, #tpu.memory_space<vmem>>, vector<256x1152xbf16>
    %c0_120 = arith.constant 0 : index
    %c0_121 = arith.constant 0 : index
    %115 = vector.load %arg6[%c0_120, %c0_121] : memref<1152x256xbf16, #tpu.memory_space<vmem>>, vector<1152x256xbf16>
    %cst_122 = arith.constant dense<0.000000e+00> : vector<256x256xf32>
    %116 = tpu.matmul %114, %115, %cst_122 {dimension_numbers = #tpu.dot_dimension_numbers<[1], [0], [0], [1], [0, 0, 1, 1], [], []>} : vector<256x1152xbf16>, vector<1152x256xbf16>, vector<256x256xf32> -> vector<256x256xf32>
    %c0_123 = arith.constant 0 : index
    %c0_124 = arith.constant 0 : index
    %117 = vector.load %arg7[%c0_123, %c0_124] : memref<1x256xf32, #tpu.memory_space<vmem>>, vector<1x256xf32>
    %118 = vector.broadcast %117 : vector<1x256xf32> to vector<256x256xf32>
    %119 = arith.addf %116, %118 : vector<256x256xf32>
    %cst_125 = arith.constant 0.000000e+00 : f32
    %120 = vector.broadcast %cst_125 : f32 to vector<256x256xf32>
    %121 = arith.cmpf oge, %119, %120 : vector<256x256xf32>
    %cst_126 = arith.constant 0.00999999977 : f32
    %122 = vector.broadcast %cst_126 : f32 to vector<256x256xf32>
    %123 = arith.mulf %122, %119 : vector<256x256xf32>
    %124 = arith.select %121, %119, %123 : vector<256x256xi1>, vector<256x256xf32>
    %c0_127 = arith.constant 0 : index
    %c0_128 = arith.constant 0 : index
    %125 = vector.load %arg8[%c0_127, %c0_128] : memref<1x256xf32, #tpu.memory_space<vmem>>, vector<1x256xf32>
    %126 = vector.broadcast %125 : vector<1x256xf32> to vector<256x256xf32>
    %127 = arith.mulf %124, %126 : vector<256x256xf32>
    %c0_129 = arith.constant 0 : index
    %c0_130 = arith.constant 0 : index
    %128 = vector.load %arg9[%c0_129, %c0_130] : memref<1x256xf32, #tpu.memory_space<vmem>>, vector<1x256xf32>
    %129 = vector.broadcast %128 : vector<1x256xf32> to vector<256x256xf32>
    %130 = arith.addf %127, %129 : vector<256x256xf32>
    %131 = arith.truncf %130 : vector<256x256xf32> to vector<256x256xbf16>
    %c0_131 = arith.constant 0 : index
    %c0_132 = arith.constant 0 : index
    %132 = vector.load %arg15[%c0_131, %c0_132] : memref<256x256xbf16, #tpu.memory_space<vmem>>, vector<256x256xbf16>
    tpu.vector_store %arg15[%c0_131, %c0_132], %131 {strides = array<i32>} : memref<256x256xbf16, #tpu.memory_space<vmem>>, vector<256x256xbf16>,
    %c0_133 = arith.constant 0 : index
    %c0_134 = arith.constant 0 : index
    %133 = vector.load %arg14[%c0_133, %c0_134] : memref<256x256xbf16, #tpu.memory_space<vmem>>, vector<256x256xbf16>
    %c0_135 = arith.constant 0 : index
    %c0_136 = arith.constant 0 : index
    %134 = vector.load %arg15[%c0_135, %c0_136] : memref<256x256xbf16, #tpu.memory_space<vmem>>, vector<256x256xbf16>
    %cst_137 = arith.constant dense<0.000000e+00> : vector<256x256xf32>
    %135 = tpu.matmul %133, %134, %cst_137 {dimension_numbers = #tpu.dot_dimension_numbers<[1], [0], [0], [1], [0, 0, 1, 1], [], []>} : vector<256x256xbf16>, vector<256x256xbf16>, vector<256x256xf32> -> vector<256x256xf32>
    %cst_138 = arith.constant dense<0xFF800000> : vector<256xf32>
    %136 = vector.multi_reduction <maximumf>, %135, %cst_138 [1] : vector<256x256xf32> to vector<256xf32>
    %137 = vector.shape_cast %136 : vector<256xf32> to vector<256x1xf32>
    %138 = vector.broadcast %137 : vector<256x1xf32> to vector<256x256xf32>
    %139 = arith.subf %135, %138 : vector<256x256xf32>
    %140 = math.exp %139 : vector<256x256xf32>
    %cst_139 = arith.constant dense<0.000000e+00> : vector<256xf32>
    %141 = vector.multi_reduction <add>, %140, %cst_139 [1] : vector<256x256xf32> to vector<256xf32>
    %142 = vector.shape_cast %141 : vector<256xf32> to vector<256x1xf32>
    %143 = tpu.reciprocal %142 {approx = true} : vector<256x1xf32> -> vector<256x1xf32>
    %144 = vector.broadcast %143 : vector<256x1xf32> to vector<256x256xf32>
    %145 = arith.mulf %140, %144 : vector<256x256xf32>
    %146 = arith.truncf %145 : vector<256x256xf32> to vector<256x256xbf16>
    %c0_140 = arith.constant 0 : index
    %c0_141 = arith.constant 0 : index
    %c0_142 = arith.constant 0 : index
    %147 = vector.load %arg3[%c0_140, %c0_141, %c0_142] : memref<1x256x256xbf16, #tpu.memory_space<vmem>>, vector<1x256x256xbf16>
    %148 = vector.shape_cast %147 : vector<1x256x256xbf16> to vector<256x256xbf16>
    %cst_143 = arith.constant dense<0.000000e+00> : vector<256x256xf32>
    %149 = tpu.matmul %146, %148, %cst_143 {dimension_numbers = #tpu.dot_dimension_numbers<[1], [0], [0], [1], [0, 0, 1, 1], [], []>} : vector<256x256xbf16>, vector<256x256xbf16>, vector<256x256xf32> -> vector<256x256xf32>
    %c0_144 = arith.constant 0 : index
    %c0_145 = arith.constant 0 : index
    %150 = vector.load %arg10[%c0_144, %c0_145] : memref<1x1xf32, #tpu.memory_space<vmem>>, vector<1x1xf32>
    %151 = vector.broadcast %150 : vector<1x1xf32> to vector<256x256xf32>
    %152 = arith.mulf %149, %151 : vector<256x256xf32>
    %c0_146 = arith.constant 0 : index
    %c0_147 = arith.constant 0 : index
    %c0_148 = arith.constant 0 : index
    %153 = vector.load %arg11[%c0_146, %c0_147, %c0_148] : memref<1x256x256xf32, #tpu.memory_space<vmem>>, vector<1x256x256xf32>
    %154 = vector.shape_cast %153 : vector<1x256x256xf32> to vector<256x256xf32>
    %155 = vector.shape_cast %152 : vector<256x256xf32> to vector<1x256x256xf32>
    tpu.vector_store %arg11[%c0_146, %c0_147, %c0_148], %155 {strides = array<i32>} : memref<1x256x256xf32, #tpu.memory_space<vmem>>, vector<1x256x256xf32>,
    return
  }
  func.func @transform_0(%arg0: i32) -> (i32, i32, i32, i32) {
    %c0_i32 = arith.constant 0 : i32
    %c0_i32_0 = arith.constant 0 : i32
    %c0_i32_1 = arith.constant 0 : i32
    %c0_i32_2 = arith.constant 0 : i32
    return %arg0, %c0_i32, %c0_i32_0, %c0_i32_1 : i32, i32, i32, i32
  }
  func.func @transform_1(%arg0: i32) -> (i32, i32, i32, i32) {
    %c0_i32 = arith.constant 0 : i32
    %c0_i32_0 = arith.constant 0 : i32
    %c0_i32_1 = arith.constant 0 : i32
    %c0_i32_2 = arith.constant 0 : i32
    return %arg0, %c0_i32, %c0_i32_0, %c0_i32_1 : i32, i32, i32, i32
  }
  func.func @transform_2(%arg0: i32) -> (i32, i32, i32) {
    %c0_i32 = arith.constant 0 : i32
    %c0_i32_0 = arith.constant 0 : i32
    %c0_i32_1 = arith.constant 0 : i32
    return %arg0, %c0_i32, %c0_i32_0 : i32, i32, i32
  }
  func.func @transform_3(%arg0: i32) -> (i32, i32) {
    %c0_i32 = arith.constant 0 : i32
    %c0_i32_0 = arith.constant 0 : i32
    %c0_i32_1 = arith.constant 0 : i32
    return %c0_i32, %c0_i32_0 : i32, i32
  }
  func.func @transform_4(%arg0: i32) -> (i32, i32) {
    %c0_i32 = arith.constant 0 : i32
    %c0_i32_0 = arith.constant 0 : i32
    %c0_i32_1 = arith.constant 0 : i32
    return %c0_i32, %c0_i32_0 : i32, i32
  }
  func.func @transform_5(%arg0: i32) -> (i32, i32) {
    %c0_i32 = arith.constant 0 : i32
    %c0_i32_0 = arith.constant 0 : i32
    %c0_i32_1 = arith.constant 0 : i32
    return %c0_i32, %c0_i32_0 : i32, i32
  }
  func.func @transform_6(%arg0: i32) -> (i32, i32) {
    %c0_i32 = arith.constant 0 : i32
    %c0_i32_0 = arith.constant 0 : i32
    %c0_i32_1 = arith.constant 0 : i32
    return %c0_i32, %c0_i32_0 : i32, i32
  }
  func.func @transform_7(%arg0: i32) -> (i32, i32) {
    %c0_i32 = arith.constant 0 : i32
    %c0_i32_0 = arith.constant 0 : i32
    %c0_i32_1 = arith.constant 0 : i32
    return %c0_i32, %c0_i32_0 : i32, i32
  }
  func.func @transform_8(%arg0: i32) -> (i32, i32) {
    %c0_i32 = arith.constant 0 : i32
    %c0_i32_0 = arith.constant 0 : i32
    %c0_i32_1 = arith.constant 0 : i32
    return %c0_i32, %c0_i32_0 : i32, i32
  }
  func.func @transform_9(%arg0: i32) -> (i32, i32) {
    %c0_i32 = arith.constant 0 : i32
    %c0_i32_0 = arith.constant 0 : i32
    %c0_i32_1 = arith.constant 0 : i32
    return %c0_i32, %c0_i32_0 : i32, i32
  }
  func.func @transform_10(%arg0: i32) -> (i32, i32, i32) {
    %c0_i32 = arith.constant 0 : i32
    %c0_i32_0 = arith.constant 0 : i32
    %c0_i32_1 = arith.constant 0 : i32
    return %arg0, %c0_i32, %c0_i32_0 : i32, i32, i32
  }
}

</mosaic_0001>

<llo_original>
// kernel: disca_forward.1
$region0: #{disca_forward.1}
  #allocation0 [shape = 'u32[]', space=smem, size = 0x4, offset = 0x4, fixed_abs, tag = 'smem constant byte address 0x4 - core index']
  #allocation1 [shape = 'u32[144,128]{1,0:T(1,128)}', space=vmem, size = 0x12000, scoped, tag = 'internal scratch']
  #allocation2 [shape = 'f32[18,26,128]{2,1,0:T(8,128)}', space=vmem, size = 0x48000, scoped, tag = 'scratch operand']
  #allocation3 [shape = 'bf16[256,1152]{1,0:T(16,128)(2,1)}', space=vmem, size = 0x90000, scoped, tag = 'scratch operand']
  #allocation4 [shape = 'bf16[256,256]{1,0:T(16,128)(2,1)}', space=vmem, size = 0x20000, scoped, tag = 'scratch operand']
  #allocation5 [shape = 'bf16[256,256]{1,0:T(16,128)(2,1)}', space=vmem, size = 0x20000, scoped, tag = 'scratch operand']
  #allocation6 [shape = 'f32[1,1]{1,0:T(1,128)S(1)}', space=vmem, size = 0x200, scoped, tag = 'scoped memory for disca_forward.1']
  %s0 = inlined_call_operand.vmem [shape: bf16[2,16,16,256], index: 0, kind: input, shape index: {}]
  %s1 = inlined_call_operand.vmem [shape: bf16[2,16,16,256], index: 1, kind: input, shape index: {}]
  %s2 = inlined_call_operand.vmem [shape: bf16[2,256,256], index: 2, kind: input, shape index: {}]
  %s3 = inlined_call_operand.vmem [shape: bf16[256,128], index: 3, kind: input, shape index: {}]
  %s4 = inlined_call_operand.vmem [shape: f32[1,128], index: 4, kind: input, shape index: {}]
  %s5 = inlined_call_operand.vmem [shape: bf16[1152,256], index: 5, kind: input, shape index: {}]
  %s6 = inlined_call_operand.vmem [shape: f32[1,256], index: 6, kind: input, shape index: {}]
  %s7 = inlined_call_operand.vmem [shape: f32[1,256], index: 7, kind: input, shape index: {}]
  %s8 = inlined_call_operand.vmem [shape: f32[1,256], index: 8, kind: input, shape index: {}]
  %s9 = inlined_call_operand.<no memory space> [shape: f32[1,1], index: 9, kind: input, shape index: {}]
  %s10 = inlined_call_operand.vmem [shape: f32[2,256,256], index: 10, kind: output, shape index: {}]
  %s11 = sld [smem:[#allocation0]]
  $region73: #{disca_forward.1} parent=0
    _
  %s13 = ssub.s32 1, %s11
  %s14 = scalar_select 0, %s13, %s11
  %v15 = vstv %s9
  %16 = vst [vmem:[#allocation6] sm:$0x1] %v15
  loop: start=0, step=1, limit=4
  $region2: #{disca_forward.1} parent=0 // loop_pre_header
    _
  $region3: #{disca_forward.1} parent=0 // loop_header
    %s18 = sphi 0, %s22
    %p19 = scmp.ge.s32.totalorder %s18, 4
    %s28 = sphi 0, %s30
    %s31 = sphi 0, %s28
    %s32 = sphi 0, %s31
    %s48 = sphi 0, %s32
    %s54 = sphi 0, %s56
    %s57 = sphi 0, %s54
    %s58 = sphi 0, %s57
    %s74 = sphi 0, %s58
    %s80 = sphi 0, %s82
    %s83 = sphi 0, %s80
    %s84 = sphi 0, %s83
    %s100 = sphi 0, %s84
    %s104 = sphi 0, %s104
    %s106 = sphi 0, %s104
    %s107 = sphi 0, %s106
    %s121 = sphi 0, %s107
    %s125 = sphi 0, %s125
    %s127 = sphi 0, %s125
    %s128 = sphi 0, %s127
    %s142 = sphi 0, %s128
    %s146 = sphi 0, %s146
    %s148 = sphi 0, %s146
    %s149 = sphi 0, %s148
    %s163 = sphi 0, %s149
    %s167 = sphi 0, %s167
    %s169 = sphi 0, %s167
    %s170 = sphi 0, %s169
    %s184 = sphi 0, %s170
    %s188 = sphi 0, %s188
    %s190 = sphi 0, %s188
    %s191 = sphi 0, %s190
    %s205 = sphi 0, %s191
    %s209 = sphi 0, %s209
    %s211 = sphi 0, %s209
    %s212 = sphi 0, %s211
    %s226 = sphi 0, %s212
    %s230 = sphi 0, %s230
    %s232 = sphi 0, %s230
    %s233 = sphi 0, %s232
    %s247 = sphi 0, %s233
    %s253 = sphi 0, %s255
    %s256 = sphi 0, %s253
    %s257 = sphi 0, %s256
    %s273 = sphi 0, %s257
  $region4: #{disca_forward.1} parent=0 // loop_header_branch
    %21 = sbr.rel (%p19) target = $region8
  $region5: #{disca_forward.1} parent=0 // loop_body
    %s23 = ssub.s32 %s18, 1
    %s24 = ssub.s32 %s18, 2
    %s25 = sadd.s32 %s18, 1
    %s26 = ssub.s32 %s18, %s25
    %p27 = scmp.eq.s32.totalorder %s26, 0
    %s29 = sadd.s32 %s28, 1
    %s30 = scalar_select %p27, %s28, %s29
    %p33 = pneg %p27
    %p34 = scmp.eq.s32.totalorder %s18, 1
    %p35 = por %p33, %p34
    %p36 = scmp.ne.s32.totalorder %s28, %s31
    %p37 = scmp.eq.s32.totalorder %s18, 0
    %p38 = por %p36, %p37
    %p39 = scmp.ne.s32.totalorder %s28, %s31
    %p40 = scmp.eq.s32.totalorder %s23, 1
    %p41 = por %p39, %p40
    %p42 = scmp.ne.s32.totalorder %s31, %s32
    %p43 = scmp.eq.s32.totalorder %s23, 0
    %p44 = por %p42, %p43
    %p45 = scmp.ne.s32.totalorder %s31, %s32
    %p46 = scmp.eq.s32.totalorder %s24, 1
    %p47 = por %p45, %p46
    %p49 = scmp.ne.s32.totalorder %s32, %s48
    %p50 = scmp.eq.s32.totalorder %s24, 0
    %p51 = por %p49, %p50
    %s52 = ssub.s32 %s18, %s25
    %p53 = scmp.eq.s32.totalorder %s52, 0
    %s55 = sadd.s32 %s54, 1
    %s56 = scalar_select %p53, %s54, %s55
    %p59 = pneg %p53
    %p60 = scmp.eq.s32.totalorder %s18, 1
    %p61 = por %p59, %p60
    %p62 = scmp.ne.s32.totalorder %s54, %s57
    %p63 = scmp.eq.s32.totalorder %s18, 0
    %p64 = por %p62, %p63
    %p65 = scmp.ne.s32.totalorder %s54, %s57
    %p66 = scmp.eq.s32.totalorder %s23, 1
    %p67 = por %p65, %p66
    %p68 = scmp.ne.s32.totalorder %s57, %s58
    %p69 = scmp.eq.s32.totalorder %s23, 0
    %p70 = por %p68, %p69
    %p71 = scmp.ne.s32.totalorder %s57, %s58
    %p72 = scmp.eq.s32.totalorder %s24, 1
    %p73 = por %p71, %p72
    %p75 = scmp.ne.s32.totalorder %s58, %s74
    %p76 = scmp.eq.s32.totalorder %s24, 0
    %p77 = por %p75, %p76
    %s78 = ssub.s32 %s18, %s25
    %p79 = scmp.eq.s32.totalorder %s78, 0
    %s81 = sadd.s32 %s80, 1
    %s82 = scalar_select %p79, %s80, %s81
    %p85 = pneg %p79
    %p86 = scmp.eq.s32.totalorder %s18, 1
    %p87 = por %p85, %p86
    %p88 = scmp.ne.s32.totalorder %s80, %s83
    %p89 = scmp.eq.s32.totalorder %s18, 0
    %p90 = por %p88, %p89
    %p91 = scmp.ne.s32.totalorder %s80, %s83
    %p92 = scmp.eq.s32.totalorder %s23, 1
    %p93 = por %p91, %p92
    %p94 = scmp.ne.s32.totalorder %s83, %s84
    %p95 = scmp.eq.s32.totalorder %s23, 0
    %p96 = por %p94, %p95
    %p97 = scmp.ne.s32.totalorder %s83, %s84
    %p98 = scmp.eq.s32.totalorder %s24, 1
    %p99 = por %p97, %p98
    %p101 = scmp.ne.s32.totalorder %s84, %s100
    %p102 = scmp.eq.s32.totalorder %s24, 0
    %p103 = por %p101, %p102
    %s105 = sadd.s32 %s104, 1
    %p108 = scmp.eq.s32.totalorder %s18, 1
    %p109 = scmp.ne.s32.totalorder %s104, %s106
    %p110 = scmp.eq.s32.totalorder %s18, 0
    %p111 = por %p109, %p110
    %p112 = scmp.ne.s32.totalorder %s104, %s106
    %p113 = scmp.eq.s32.totalorder %s23, 1
    %p114 = por %p112, %p113
    %p115 = scmp.ne.s32.totalorder %s106, %s107
    %p116 = scmp.eq.s32.totalorder %s23, 0
    %p117 = por %p115, %p116
    %p118 = scmp.ne.s32.totalorder %s106, %s107
    %p119 = scmp.eq.s32.totalorder %s24, 1
    %p120 = por %p118, %p119
    %p122 = scmp.ne.s32.totalorder %s107, %s121
    %p123 = scmp.eq.s32.totalorder %s24, 0
    %p124 = por %p122, %p123
    %s126 = sadd.s32 %s125, 1
    %p129 = scmp.eq.s32.totalorder %s18, 1
    %p130 = scmp.ne.s32.totalorder %s125, %s127
    %p131 = scmp.eq.s32.totalorder %s18, 0
    %p132 = por %p130, %p131
    %p133 = scmp.ne.s32.totalorder %s125, %s127
    %p134 = scmp.eq.s32.totalorder %s23, 1
    %p135 = por %p133, %p134
    %p136 = scmp.ne.s32.totalorder %s127, %s128
    %p137 = scmp.eq.s32.totalorder %s23, 0
    %p138 = por %p136, %p137
    %p139 = scmp.ne.s32.totalorder %s127, %s128
    %p140 = scmp.eq.s32.totalorder %s24, 1
    %p141 = por %p139, %p140
    %p143 = scmp.ne.s32.totalorder %s128, %s142
    %p144 = scmp.eq.s32.totalorder %s24, 0
    %p145 = por %p143, %p144
    %s147 = sadd.s32 %s146, 1
    %p150 = scmp.eq.s32.totalorder %s18, 1
    %p151 = scmp.ne.s32.totalorder %s146, %s148
    %p152 = scmp.eq.s32.totalorder %s18, 0
    %p153 = por %p151, %p152
    %p154 = scmp.ne.s32.totalorder %s146, %s148
    %p155 = scmp.eq.s32.totalorder %s23, 1
    %p156 = por %p154, %p155
    %p157 = scmp.ne.s32.totalorder %s148, %s149
    %p158 = scmp.eq.s32.totalorder %s23, 0
    %p159 = por %p157, %p158
    %p160 = scmp.ne.s32.totalorder %s148, %s149
    %p161 = scmp.eq.s32.totalorder %s24, 1
    %p162 = por %p160, %p161
    %p164 = scmp.ne.s32.totalorder %s149, %s163
    %p165 = scmp.eq.s32.totalorder %s24, 0
    %p166 = por %p164, %p165
    %s168 = sadd.s32 %s167, 1
    %p171 = scmp.eq.s32.totalorder %s18, 1
    %p172 = scmp.ne.s32.totalorder %s167, %s169
    %p173 = scmp.eq.s32.totalorder %s18, 0
    %p174 = por %p172, %p173
    %p175 = scmp.ne.s32.totalorder %s167, %s169
    %p176 = scmp.eq.s32.totalorder %s23, 1
    %p177 = por %p175, %p176
    %p178 = scmp.ne.s32.totalorder %s169, %s170
    %p179 = scmp.eq.s32.totalorder %s23, 0
    %p180 = por %p178, %p179
    %p181 = scmp.ne.s32.totalorder %s169, %s170
    %p182 = scmp.eq.s32.totalorder %s24, 1
    %p183 = por %p181, %p182
    %p185 = scmp.ne.s32.totalorder %s170, %s184
    %p186 = scmp.eq.s32.totalorder %s24, 0
    %p187 = por %p185, %p186
    %s189 = sadd.s32 %s188, 1
    %p192 = scmp.eq.s32.totalorder %s18, 1
    %p193 = scmp.ne.s32.totalorder %s188, %s190
    %p194 = scmp.eq.s32.totalorder %s18, 0
    %p195 = por %p193, %p194
    %p196 = scmp.ne.s32.totalorder %s188, %s190
    %p197 = scmp.eq.s32.totalorder %s23, 1
    %p198 = por %p196, %p197
    %p199 = scmp.ne.s32.totalorder %s190, %s191
    %p200 = scmp.eq.s32.totalorder %s23, 0
    %p201 = por %p199, %p200
    %p202 = scmp.ne.s32.totalorder %s190, %s191
    %p203 = scmp.eq.s32.totalorder %s24, 1
    %p204 = por %p202, %p203
    %p206 = scmp.ne.s32.totalorder %s191, %s205
    %p207 = scmp.eq.s32.totalorder %s24, 0
    %p208 = por %p206, %p207
    %s210 = sadd.s32 %s209, 1
    %p213 = scmp.eq.s32.totalorder %s18, 1
    %p214 = scmp.ne.s32.totalorder %s209, %s211
    %p215 = scmp.eq.s32.totalorder %s18, 0
    %p216 = por %p214, %p215
    %p217 = scmp.ne.s32.totalorder %s209, %s211
    %p218 = scmp.eq.s32.totalorder %s23, 1
    %p219 = por %p217, %p218
    %p220 = scmp.ne.s32.totalorder %s211, %s212
    %p221 = scmp.eq.s32.totalorder %s23, 0
    %p222 = por %p220, %p221
    %p223 = scmp.ne.s32.totalorder %s211, %s212
    %p224 = scmp.eq.s32.totalorder %s24, 1
    %p225 = por %p223, %p224
    %p227 = scmp.ne.s32.totalorder %s212, %s226
    %p228 = scmp.eq.s32.totalorder %s24, 0
    %p229 = por %p227, %p228
    %s231 = sadd.s32 %s230, 1
    %p234 = scmp.eq.s32.totalorder %s18, 1
    %p235 = scmp.ne.s32.totalorder %s230, %s232
    %p236 = scmp.eq.s32.totalorder %s18, 0
    %p237 = por %p235, %p236
    %p238 = scmp.ne.s32.totalorder %s230, %s232
    %p239 = scmp.eq.s32.totalorder %s23, 1
    %p240 = por %p238, %p239
    %p241 = scmp.ne.s32.totalorder %s232, %s233
    %p242 = scmp.eq.s32.totalorder %s23, 0
    %p243 = por %p241, %p242
    %p244 = scmp.ne.s32.totalorder %s232, %s233
    %p245 = scmp.eq.s32.totalorder %s24, 1
    %p246 = por %p244, %p245
    %p248 = scmp.ne.s32.totalorder %s233, %s247
    %p249 = scmp.eq.s32.totalorder %s24, 0
    %p250 = por %p248, %p249
    %s251 = ssub.s32 %s18, %s25
    %p252 = scmp.eq.s32.totalorder %s251, 0
    %s254 = sadd.s32 %s253, 1
    %s255 = scalar_select %p252, %s253, %s254
    %p258 = pneg %p252
    %p259 = scmp.eq.s32.totalorder %s18, 1
    %p260 = por %p258, %p259
    %p261 = scmp.ne.s32.totalorder %s253, %s256
    %p262 = scmp.eq.s32.totalorder %s18, 0
    %p263 = por %p261, %p262
    %p264 = scmp.ne.s32.totalorder %s253, %s256
    %p265 = scmp.eq.s32.totalorder %s23, 1
    %p266 = por %p264, %p265
    %p267 = scmp.ne.s32.totalorder %s256, %s257
    %p268 = scmp.eq.s32.totalorder %s23, 0
    %p269 = por %p267, %p268
    %p270 = scmp.ne.s32.totalorder %s256, %s257
    %p271 = scmp.eq.s32.totalorder %s24, 1
    %p272 = por %p270, %p271
    %p274 = scmp.ne.s32.totalorder %s257, %s273
    %p275 = scmp.eq.s32.totalorder %s24, 0
    %p276 = por %p274, %p275
    %p277 = scmp.le.s32.totalorder 1, %s18
    %p278 = scmp.lt.s32.totalorder %s18, 3
    %p279 = pnand %p277, %p278
    %p280 = pneg %p279
    // Predicated region
    $region9: #{disca_forward.1} parent=5 // pred_check
      _
    $region10: #{disca_forward.1} parent=5 // pred_check_branch
      %282 = sbr.rel (%p279) target = $region12
    $region11: #{disca_forward.1} parent=5 // pred_region
      %s283 = ssub.s32 %s18, 1
      // Predicated region
      $region13: #{disca_forward.1} parent=11 // pred_check
        %p284 = pneg %p117
      $region14: #{disca_forward.1} parent=11 // pred_check_branch
        %286 = sbr.rel (%p284) target = $region16
      $region15: #{disca_forward.1} parent=11 // pred_region
        _
      $region16: #{disca_forward.1} parent=11 // pred_fallthru
        _
      // Predicated region
      $region17: #{disca_forward.1} parent=11 // pred_check
        %p287 = pneg %p138
      $region18: #{disca_forward.1} parent=11 // pred_check_branch
        %289 = sbr.rel (%p287) target = $region20
      $region19: #{disca_forward.1} parent=11 // pred_region
        _
      $region20: #{disca_forward.1} parent=11 // pred_fallthru
        _
      // Predicated region
      $region21: #{disca_forward.1} parent=11 // pred_check
        %p290 = pneg %p159
      $region22: #{disca_forward.1} parent=11 // pred_check_branch
        %292 = sbr.rel (%p290) target = $region24
      $region23: #{disca_forward.1} parent=11 // pred_region
        _
      $region24: #{disca_forward.1} parent=11 // pred_fallthru
        _
      // Predicated region
      $region25: #{disca_forward.1} parent=11 // pred_check
        %p293 = pneg %p180
      $region26: #{disca_forward.1} parent=11 // pred_check_branch
        %295 = sbr.rel (%p293) target = $region28
      $region27: #{disca_forward.1} parent=11 // pred_region
        _
      $region28: #{disca_forward.1} parent=11 // pred_fallthru
        _
      // Predicated region
      $region29: #{disca_forward.1} parent=11 // pred_check
        %p296 = pneg %p201
      $region30: #{disca_forward.1} parent=11 // pred_check_branch
        %298 = sbr.rel (%p296) target = $region32
      $region31: #{disca_forward.1} parent=11 // pred_region
        _
      $region32: #{disca_forward.1} parent=11 // pred_fallthru
        _
      // Predicated region
      $region33: #{disca_forward.1} parent=11 // pred_check
        %p299 = pneg %p222
      $region34: #{disca_forward.1} parent=11 // pred_check_branch
        %301 = sbr.rel (%p299) target = $region36
      $region35: #{disca_forward.1} parent=11 // pred_region
        _
      $region36: #{disca_forward.1} parent=11 // pred_fallthru
        _
      // Predicated region
      $region37: #{disca_forward.1} parent=11 // pred_check
        %p302 = pneg %p243
      $region38: #{disca_forward.1} parent=11 // pred_check_branch
        %304 = sbr.rel (%p302) target = $region40
      $region39: #{disca_forward.1} parent=11 // pred_region
        _
      $region40: #{disca_forward.1} parent=11 // pred_fallthru
        _
    $region12: #{disca_forward.1} parent=5 // pred_fallthru
      _
    %p305 = scmp.lt.s32.totalorder %s18, 2
    // Predicated region
    $region41: #{disca_forward.1} parent=5 // pred_check
      %p306 = pneg %p305
    $region42: #{disca_forward.1} parent=5 // pred_check_branch
      %308 = sbr.rel (%p306) target = $region44
    $region43: #{disca_forward.1} parent=5 // pred_region
      // Predicated region
      $region45: #{disca_forward.1} parent=43 // pred_check
        %p309 = pneg %p38
      $region46: #{disca_forward.1} parent=43 // pred_check_branch
        %311 = sbr.rel (%p309) target = $region48
      $region47: #{disca_forward.1} parent=43 // pred_region
        %p312 = scmp.lt.s32.totalorder %s18, 1
        %s313 = scalar_select %p312, %s18, 1
        %s314 = smul.addr %s313, 64
        %s315 = smul.addr %s314, 4
        %s316 = scalar_lea.vmem %s0, %s315
      $region48: #{disca_forward.1} parent=43 // pred_fallthru
        _
      // Predicated region
      $region49: #{disca_forward.1} parent=43 // pred_check
        %p317 = pneg %p64
      $region50: #{disca_forward.1} parent=43 // pred_check_branch
        %319 = sbr.rel (%p317) target = $region52
      $region51: #{disca_forward.1} parent=43 // pred_region
        %p320 = scmp.lt.s32.totalorder %s18, 1
        %s321 = scalar_select %p320, %s18, 1
        %s322 = smul.addr %s321, 64
        %s323 = smul.addr %s322, 4
        %s324 = scalar_lea.vmem %s1, %s323
      $region52: #{disca_forward.1} parent=43 // pred_fallthru
        _
      // Predicated region
      $region53: #{disca_forward.1} parent=43 // pred_check
        %p325 = pneg %p90
      $region54: #{disca_forward.1} parent=43 // pred_check_branch
        %327 = sbr.rel (%p325) target = $region56
      $region55: #{disca_forward.1} parent=43 // pred_region
        %p328 = scmp.lt.s32.totalorder %s18, 1
        %s329 = scalar_select %p328, %s18, 1
        %s330 = smul.addr %s329, 64
        %s331 = smul.addr %s330, 4
        %s332 = scalar_lea.vmem %s2, %s331
      $region56: #{disca_forward.1} parent=43 // pred_fallthru
        _
    $region44: #{disca_forward.1} parent=5 // pred_fallthru
      _
    %p333 = scmp.le.s32.totalorder 1, %s18
    %p334 = scmp.lt.s32.totalorder %s18, 3
    %p335 = pnand %p333, %p334
    %p336 = pneg %p335
    // Predicated region
    $region57: #{disca_forward.1} parent=5 // pred_check
      _
    $region58: #{disca_forward.1} parent=5 // pred_check_branch
      %338 = sbr.rel (%p335) target = $region60
    $region59: #{disca_forward.1} parent=5 // pred_region
      %s339 = ssub.s32 %s18, 1
      %p340 = scmp.lt.s32.totalorder %s23, 1
      %s341 = scalar_select %p340, %s23, 1
      %s342 = smul.addr %s341, 64
      %s343 = smul.addr %s342, 4
      %s344 = scalar_lea.vmem %s0, %s343
      %p345 = pneg %p44
      %p346 = pneg %p41
      %p347 = scmp.lt.s32.totalorder %s23, 1
      %s348 = scalar_select %p347, %s23, 1
      %s349 = smul.addr %s348, 64
      %s350 = smul.addr %s349, 4
      %s351 = scalar_lea.vmem %s1, %s350
      %p352 = pneg %p70
      %p353 = pneg %p67
      %p354 = scmp.lt.s32.totalorder %s23, 1
      %s355 = scalar_select %p354, %s23, 1
      %s356 = smul.addr %s355, 64
      %s357 = smul.addr %s356, 4
      %s358 = scalar_lea.vmem %s2, %s357
      %p359 = pneg %p96
      %p360 = pneg %p93
      %p361 = pneg %p117
      %p362 = pneg %p114
      %p363 = pneg %p138
      %p364 = pneg %p135
      %p365 = pneg %p159
      %p366 = pneg %p156
      %p367 = pneg %p180
      %p368 = pneg %p177
      %p369 = pneg %p201
      %p370 = pneg %p198
      %p371 = pneg %p222
      %p372 = pneg %p219
      %p373 = pneg %p243
      %p374 = pneg %p240
      %p375 = pneg %p269
      %p376 = pneg %p266
      %p377 = scmp.lt.s32.totalorder %s23, 1
      %s378 = scalar_select %p377, %s23, 1
      %s379 = smul.addr %s378, 64
      %s380 = smul.addr %s379, 8
      %s381 = scalar_lea.vmem %s10, %s380
      %p382 = scmp.lt.s32.totalorder %s23, 1
      %s383 = scalar_select %p382, %s23, 1
      %s384 = smul.addr %s383, 64
      %s385 = smul.addr %s384, 4
      %s386 = scalar_lea.vmem %s0, %s385
      %p387 = scmp.lt.s32.totalorder %s23, 1
      %s388 = scalar_select %p387, %s23, 1
      %s389 = smul.addr %s388, 64
      %s390 = smul.addr %s389, 4
      %s391 = scalar_lea.vmem %s1, %s390
      %p392 = scmp.lt.s32.totalorder %s23, 1
      %s393 = scalar_select %p392, %s23, 1
      %s394 = smul.addr %s393, 64
      %s395 = smul.addr %s394, 4
      %s396 = scalar_lea.vmem %s2, %s395
      %p397 = scmp.lt.s32.totalorder %s23, 1
      %s398 = scalar_select %p397, %s23, 1
      %s399 = smul.addr %s398, 64
      %s400 = smul.addr %s399, 8
      %s401 = scalar_lea.vmem %s10, %s400
      %403 = vst [vmem:[#allocation2] sm:$0xff] 0.0
      %404 = vst [vmem:[#allocation2 + $0x8] sm:$0xff] 0.0
      %405 = vst [vmem:[#allocation2 + $0x10] sm:$0xff] 0.0
      %406 = vst [vmem:[#allocation2 + $0x18] sm:$0x3] 0.0
      %407 = vst [vmem:[#allocation2 + $0x20] sm:$0xff] 0.0
      %408 = vst [vmem:[#allocation2 + $0x28] sm:$0xff] 0.0
      %409 = vst [vmem:[#allocation2 + $0x30] sm:$0xff] 0.0
      %410 = vst [vmem:[#allocation2 + $0x38] sm:$0x3] 0.0
      %411 = vst [vmem:[#allocation2 + $0x40] sm:$0xff] 0.0
      %412 = vst [vmem:[#allocation2 + $0x48] sm:$0xff] 0.0
      %413 = vst [vmem:[#allocation2 + $0x50] sm:$0xff] 0.0
      %414 = vst [vmem:[#allocation2 + $0x58] sm:$0x3] 0.0
      %415 = vst [vmem:[#allocation2 + $0x60] sm:$0xff] 0.0
      %416 = vst [vmem:[#allocation2 + $0x68] sm:$0xff] 0.0
      %417 = vst [vmem:[#allocation2 + $0x70] sm:$0xff] 0.0
      %418 = vst [vmem:[#allocation2 + $0x78] sm:$0x3] 0.0
      %419 = vst [vmem:[#allocation2 + $0x80] sm:$0xff] 0.0
      %420 = vst [vmem:[#allocation2 + $0x88] sm:$0xff] 0.0
      %421 = vst [vmem:[#allocation2 + $0x90] sm:$0xff] 0.0
      %422 = vst [vmem:[#allocation2 + $0x98] sm:$0x3] 0.0
      %423 = vst [vmem:[#allocation2 + $0xa0] sm:$0xff] 0.0
      %424 = vst [vmem:[#allocation2 + $0xa8] sm:$0xff] 0.0
      %425 = vst [vmem:[#allocation2 + $0xb0] sm:$0xff] 0.0
      %426 = vst [vmem:[#allocation2 + $0xb8] sm:$0x3] 0.0
      %427 = vst [vmem:[#allocation2 + $0xc0] sm:$0xff] 0.0
      %428 = vst [vmem:[#allocation2 + $0xc8] sm:$0xff] 0.0
      %429 = vst [vmem:[#allocation2 + $0xd0] sm:$0xff] 0.0
      %430 = vst [vmem:[#allocation2 + $0xd8] sm:$0x3] 0.0
      %431 = vst [vmem:[#allocation2 + $0xe0] sm:$0xff] 0.0
      %432 = vst [vmem:[#allocation2 + $0xe8] sm:$0xff] 0.0
      %433 = vst [vmem:[#allocation2 + $0xf0] sm:$0xff] 0.0
      %434 = vst [vmem:[#allocation2 + $0xf8] sm:$0x3] 0.0
      %435 = vst [vmem:[#allocation2 + $0x100] sm:$0xff] 0.0
      %436 = vst [vmem:[#allocation2 + $0x108] sm:$0xff] 0.0
      %437 = vst [vmem:[#allocation2 + $0x110] sm:$0xff] 0.0
      %438 = vst [vmem:[#allocation2 + $0x118] sm:$0x3] 0.0
      %439 = vst [vmem:[#allocation2 + $0x120] sm:$0xff] 0.0
      %440 = vst [vmem:[#allocation2 + $0x128] sm:$0xff] 0.0
      %441 = vst [vmem:[#allocation2 + $0x130] sm:$0xff] 0.0
      %442 = vst [vmem:[#allocation2 + $0x138] sm:$0x3] 0.0
      %443 = vst [vmem:[#allocation2 + $0x140] sm:$0xff] 0.0
      %444 = vst [vmem:[#allocation2 + $0x148] sm:$0xff] 0.0
      %445 = vst [vmem:[#allocation2 + $0x150] sm:$0xff] 0.0
      %446 = vst [vmem:[#allocation2 + $0x158] sm:$0x3] 0.0
      %447 = vst [vmem:[#allocation2 + $0x160] sm:$0xff] 0.0
      %448 = vst [vmem:[#allocation2 + $0x168] sm:$0xff] 0.0
      %449 = vst [vmem:[#allocation2 + $0x170] sm:$0xff] 0.0
      %450 = vst [vmem:[#allocation2 + $0x178] sm:$0x3] 0.0
      %451 = vst [vmem:[#allocation2 + $0x180] sm:$0xff] 0.0
      %452 = vst [vmem:[#allocation2 + $0x188] sm:$0xff] 0.0
      %453 = vst [vmem:[#allocation2 + $0x190] sm:$0xff] 0.0
      %454 = vst [vmem:[#allocation2 + $0x198] sm:$0x3] 0.0
      %455 = vst [vmem:[#allocation2 + $0x1a0] sm:$0xff] 0.0
      %456 = vst [vmem:[#allocation2 + $0x1a8] sm:$0xff] 0.0
      %457 = vst [vmem:[#allocation2 + $0x1b0] sm:$0xff] 0.0
      %458 = vst [vmem:[#allocation2 + $0x1b8] sm:$0x3] 0.0
      %459 = vst [vmem:[#allocation2 + $0x1c0] sm:$0xff] 0.0
      %460 = vst [vmem:[#allocation2 + $0x1c8] sm:$0xff] 0.0
      %461 = vst [vmem:[#allocation2 + $0x1d0] sm:$0xff] 0.0
      %462 = vst [vmem:[#allocation2 + $0x1d8] sm:$0x3] 0.0
      %463 = vst [vmem:[#allocation2 + $0x1e0] sm:$0xff] 0.0
      %464 = vst [vmem:[#allocation2 + $0x1e8] sm:$0xff] 0.0
      %465 = vst [vmem:[#allocation2 + $0x1f0] sm:$0xff] 0.0
      %466 = vst [vmem:[#allocation2 + $0x1f8] sm:$0x3] 0.0
      %467 = vst [vmem:[#allocation2 + $0x200] sm:$0xff] 0.0
      %468 = vst [vmem:[#allocation2 + $0x208] sm:$0xff] 0.0
      %469 = vst [vmem:[#allocation2 + $0x210] sm:$0xff] 0.0
      %470 = vst [vmem:[#allocation2 + $0x218] sm:$0x3] 0.0
      %471 = vst [vmem:[#allocation2 + $0x220] sm:$0xff] 0.0
      %472 = vst [vmem:[#allocation2 + $0x228] sm:$0xff] 0.0
      %473 = vst [vmem:[#allocation2 + $0x230] sm:$0xff] 0.0
      %474 = vst [vmem:[#allocation2 + $0x238] sm:$0x3] 0.0
      %v475 = vld [vmem:[%s386] sm:$0xff]
      %v476 = vld [vmem:[%s386 + $0x8] sm:$0xff]
      %v477 = vld [vmem:[%s386 + $0x10] sm:$0xff]
      %v478 = vld [vmem:[%s386 + $0x18] sm:$0xff]
      %v479 = vld [vmem:[%s386 + $0x20] sm:$0xff]
      %v480 = vld [vmem:[%s386 + $0x28] sm:$0xff]
      %v481 = vld [vmem:[%s386 + $0x30] sm:$0xff]
      %v482 = vld [vmem:[%s386 + $0x38] sm:$0xff]
      %v483 = vld [vmem:[%s386 + $0x40] sm:$0xff]
      %v484 = vld [vmem:[%s386 + $0x48] sm:$0xff]
      %v485 = vld [vmem:[%s386 + $0x50] sm:$0xff]
      %v486 = vld [vmem:[%s386 + $0x58] sm:$0xff]
      %v487 = vld [vmem:[%s386 + $0x60] sm:$0xff]
      %v488 = vld [vmem:[%s386 + $0x68] sm:$0xff]
      %v489 = vld [vmem:[%s386 + $0x70] sm:$0xff]
      %v490 = vld [vmem:[%s386 + $0x78] sm:$0xff]
      %v491 = vld [vmem:[%s386 + $0x80] sm:$0xff]
      %v492 = vld [vmem:[%s386 + $0x88] sm:$0xff]
      %v493 = vld [vmem:[%s386 + $0x90] sm:$0xff]
      %v494 = vld [vmem:[%s386 + $0x98] sm:$0xff]
      %v495 = vld [vmem:[%s386 + $0xa0] sm:$0xff]
      %v496 = vld [vmem:[%s386 + $0xa8] sm:$0xff]
      %v497 = vld [vmem:[%s386 + $0xb0] sm:$0xff]
      %v498 = vld [vmem:[%s386 + $0xb8] sm:$0xff]
      %v499 = vld [vmem:[%s386 + $0xc0] sm:$0xff]
      %v500 = vld [vmem:[%s386 + $0xc8] sm:$0xff]
      %v501 = vld [vmem:[%s386 + $0xd0] sm:$0xff]
      %v502 = vld [vmem:[%s386 + $0xd8] sm:$0xff]
      %v503 = vld [vmem:[%s386 + $0xe0] sm:$0xff]
      %v504 = vld [vmem:[%s386 + $0xe8] sm:$0xff]
      %v505 = vld [vmem:[%s386 + $0xf0] sm:$0xff]
      %v506 = vld [vmem:[%s386 + $0xf8] sm:$0xff]
      %v507 = vld [vmem:[%s3] sm:$0xf]
      %v508 = vld [vmem:[%s3 + $0x4] sm:$0xf]
      %v509 = vld [vmem:[%s3 + $0x8] sm:$0xf]
      %v510 = vld [vmem:[%s3 + $0xc] sm:$0xf]
      %v511 = vld [vmem:[%s3 + $0x10] sm:$0xf]
      %v512 = vld [vmem:[%s3 + $0x14] sm:$0xf]
      %v513 = vld [vmem:[%s3 + $0x18] sm:$0xf]
      %v514 = vld [vmem:[%s3 + $0x1c] sm:$0xf]
      %v515 = vld [vmem:[%s3 + $0x20] sm:$0xf]
      %v516 = vld [vmem:[%s3 + $0x24] sm:$0xf]
      %v517 = vld [vmem:[%s3 + $0x28] sm:$0xf]
      %v518 = vld [vmem:[%s3 + $0x2c] sm:$0xf]
      %v519 = vld [vmem:[%s3 + $0x30] sm:$0xf]
      %v520 = vld [vmem:[%s3 + $0x34] sm:$0xf]
      %v521 = vld [vmem:[%s3 + $0x38] sm:$0xf]
      %v522 = vld [vmem:[%s3 + $0x3c] sm:$0xf]
      %v523 = vld [vmem:[%s3 + $0x40] sm:$0xf]
      %v524 = vld [vmem:[%s3 + $0x44] sm:$0xf]
      %v525 = vld [vmem:[%s3 + $0x48] sm:$0xf]
      %v526 = vld [vmem:[%s3 + $0x4c] sm:$0xf]
      %v527 = vld [vmem:[%s3 + $0x50] sm:$0xf]
      %v528 = vld [vmem:[%s3 + $0x54] sm:$0xf]
      %v529 = vld [vmem:[%s3 + $0x58] sm:$0xf]
      %v530 = vld [vmem:[%s3 + $0x5c] sm:$0xf]
      %v531 = vld [vmem:[%s3 + $0x60] sm:$0xf]
      %v532 = vld [vmem:[%s3 + $0x64] sm:$0xf]
      %v533 = vld [vmem:[%s3 + $0x68] sm:$0xf]
      %v534 = vld [vmem:[%s3 + $0x6c] sm:$0xf]
      %v535 = vld [vmem:[%s3 + $0x70] sm:$0xf]
      %v536 = vld [vmem:[%s3 + $0x74] sm:$0xf]
      %v537 = vld [vmem:[%s3 + $0x78] sm:$0xf]
      %v538 = vld [vmem:[%s3 + $0x7c] sm:$0xf]
      %v539 = vld [vmem:[%s4] sm:$0x1]
      %v541 = vlaneseq
      %v542 = vshrl.u32 %v541, 7
      %v543 = vsub.s32 0, %v542
      %v544 = vrot.slane %v539, %v543
      %v578 = vunpack.c.l.b16 %v475
      %v579 = vunpack.c.h.b16 %v475
      %v580 = vunpack.c.l.b16 %v476
      %v581 = vunpack.c.h.b16 %v476
      %v582 = vunpack.c.l.b16 %v477
      %v583 = vunpack.c.h.b16 %v477
      %v584 = vunpack.c.l.b16 %v478
      %v585 = vunpack.c.h.b16 %v478
      %v586 = vunpack.c.l.b16 %v479
      %v587 = vunpack.c.h.b16 %v479
      %v588 = vunpack.c.l.b16 %v480
      %v589 = vunpack.c.h.b16 %v480
      %v590 = vunpack.c.l.b16 %v481
      %v591 = vunpack.c.h.b16 %v481
      %v592 = vunpack.c.l.b16 %v482
      %v593 = vunpack.c.h.b16 %v482
      %v594 = vunpack.c.l.b16 %v483
      %v595 = vunpack.c.h.b16 %v483
      %v596 = vunpack.c.l.b16 %v484
      %v597 = vunpack.c.h.b16 %v484
      %v598 = vunpack.c.l.b16 %v485
      %v599 = vunpack.c.h.b16 %v485
      %v600 = vunpack.c.l.b16 %v486
      %v601 = vunpack.c.h.b16 %v486
      %v602 = vunpack.c.l.b16 %v487
      %v603 = vunpack.c.h.b16 %v487
      %v604 = vunpack.c.l.b16 %v488
      %v605 = vunpack.c.h.b16 %v488
      %v606 = vunpack.c.l.b16 %v489
      %v607 = vunpack.c.h.b16 %v489
      %v608 = vunpack.c.l.b16 %v490
      %v609 = vunpack.c.h.b16 %v490
      %v610 = vunpack.c.l.b16 %v491
      %v611 = vunpack.c.h.b16 %v491
      %v612 = vunpack.c.l.b16 %v492
      %v613 = vunpack.c.h.b16 %v492
      %v614 = vunpack.c.l.b16 %v493
      %v615 = vunpack.c.h.b16 %v493
      %v616 = vunpack.c.l.b16 %v494
      %v617 = vunpack.c.h.b16 %v494
      %v618 = vunpack.c.l.b16 %v495
      %v619 = vunpack.c.h.b16 %v495
      %v620 = vunpack.c.l.b16 %v496
      %v621 = vunpack.c.h.b16 %v496
      %v622 = vunpack.c.l.b16 %v497
      %v623 = vunpack.c.h.b16 %v497
      %v624 = vunpack.c.l.b16 %v498
      %v625 = vunpack.c.h.b16 %v498
      %v626 = vunpack.c.l.b16 %v499
      %v627 = vunpack.c.h.b16 %v499
      %v628 = vunpack.c.l.b16 %v500
      %v629 = vunpack.c.h.b16 %v500
      %v630 = vunpack.c.l.b16 %v501
      %v631 = vunpack.c.h.b16 %v501
      %v632 = vunpack.c.l.b16 %v502
      %v633 = vunpack.c.h.b16 %v502
      %v634 = vunpack.c.l.b16 %v503
      %v635 = vunpack.c.h.b16 %v503
      %v636 = vunpack.c.l.b16 %v504
      %v637 = vunpack.c.h.b16 %v504
      %v638 = vunpack.c.l.b16 %v505
      %v639 = vunpack.c.h.b16 %v505
      %v640 = vunpack.c.l.b16 %v506
      %v641 = vunpack.c.h.b16 %v506
      %v642 = vpack.c.b16 %v580, %v578
      %v643 = vpack.c.b16 %v581, %v579
      %v644 = vpack.c.b16 %v584, %v582
      %v645 = vpack.c.b16 %v585, %v583
      %v646 = vpack.c.b16 %v588, %v586
      %v647 = vpack.c.b16 %v589, %v587
      %v648 = vpack.c.b16 %v592, %v590
      %v649 = vpack.c.b16 %v593, %v591
      %v650 = vpack.c.b16 %v596, %v594
      %v651 = vpack.c.b16 %v597, %v595
      %v652 = vpack.c.b16 %v600, %v598
      %v653 = vpack.c.b16 %v601, %v599
      %v654 = vpack.c.b16 %v604, %v602
      %v655 = vpack.c.b16 %v605, %v603
      %v656 = vpack.c.b16 %v608, %v606
      %v657 = vpack.c.b16 %v609, %v607
      %v658 = vpack.c.b16 %v612, %v610
      %v659 = vpack.c.b16 %v613, %v611
      %v660 = vpack.c.b16 %v616, %v614
      %v661 = vpack.c.b16 %v617, %v615
      %v662 = vpack.c.b16 %v620, %v618
      %v663 = vpack.c.b16 %v621, %v619
      %v664 = vpack.c.b16 %v624, %v622
      %v665 = vpack.c.b16 %v625, %v623
      %v666 = vpack.c.b16 %v628, %v626
      %v667 = vpack.c.b16 %v629, %v627
      %v668 = vpack.c.b16 %v632, %v630
      %v669 = vpack.c.b16 %v633, %v631
      %v670 = vpack.c.b16 %v636, %v634
      %v671 = vpack.c.b16 %v637, %v635
      %v672 = vpack.c.b16 %v640, %v638
      %v673 = vpack.c.b16 %v641, %v639
      %v738 = vunpack.c.l.b16 %v507
      %v739 = vunpack.c.l.b16 %v508
      %v740 = vunpack.c.l.b16 %v509
      %v741 = vunpack.c.l.b16 %v510
      %v742 = vunpack.c.l.b16 %v511
      %v743 = vunpack.c.l.b16 %v512
      %v744 = vunpack.c.l.b16 %v513
      %v745 = vunpack.c.l.b16 %v514
      %v746 = vunpack.c.l.b16 %v515
      %v747 = vunpack.c.l.b16 %v516
      %v748 = vunpack.c.l.b16 %v517
      %v749 = vunpack.c.l.b16 %v518
      %v750 = vunpack.c.l.b16 %v519
      %v751 = vunpack.c.l.b16 %v520
      %v752 = vunpack.c.l.b16 %v521
      %v753 = vunpack.c.l.b16 %v522
      %v754 = vunpack.c.l.b16 %v523
      %v755 = vunpack.c.l.b16 %v524
      %v756 = vunpack.c.l.b16 %v525
      %v757 = vunpack.c.l.b16 %v526
      %v758 = vunpack.c.l.b16 %v527
      %v759 = vunpack.c.l.b16 %v528
      %v760 = vunpack.c.l.b16 %v529
      %v761 = vunpack.c.l.b16 %v530
      %v762 = vunpack.c.l.b16 %v531
      %v763 = vunpack.c.l.b16 %v532
      %v764 = vunpack.c.l.b16 %v533
      %v765 = vunpack.c.l.b16 %v534
      %v766 = vunpack.c.l.b16 %v535
      %v767 = vunpack.c.l.b16 %v536
      %v768 = vunpack.c.l.b16 %v537
      %v769 = vunpack.c.l.b16 %v538
      %v770 = vpack.c.b16 %v739, %v738
      %v771 = vpack.c.b16 %v741, %v740
      %v772 = vpack.c.b16 %v743, %v742
      %v773 = vpack.c.b16 %v745, %v744
      %v774 = vpack.c.b16 %v747, %v746
      %v775 = vpack.c.b16 %v749, %v748
      %v776 = vpack.c.b16 %v751, %v750
      %v777 = vpack.c.b16 %v753, %v752
      %v778 = vpack.c.b16 %v755, %v754
      %v779 = vpack.c.b16 %v757, %v756
      %v780 = vpack.c.b16 %v759, %v758
      %v781 = vpack.c.b16 %v761, %v760
      %v782 = vpack.c.b16 %v763, %v762
      %v783 = vpack.c.b16 %v765, %v764
      %v784 = vpack.c.b16 %v767, %v766
      %v785 = vpack.c.b16 %v769, %v768
      %802 = vmatprep.subr.bf16.mxu0 0
      %803 = vmatpush1.bf16.msra.mxu0 %v770
      %804 = vmatprep.subr.bf16.mxu0 0
      %805 = vmatpush1.bf16.msra.mxu0 %v771
      %806 = vmatprep.subr.bf16.mxu0 0
      %807 = vmatpush1.bf16.msra.mxu0 %v772
      %808 = vmatprep.subr.bf16.mxu0 0
      %809 = vmatpush1.bf16.msra.mxu0 %v773
      %810 = vmatprep.subr.bf16.mxu0 0
      %811 = vmatpush1.bf16.msra.mxu0 %v774
      %812 = vmatprep.subr.bf16.mxu0 0
      %813 = vmatpush1.bf16.msra.mxu0 %v775
      %814 = vmatprep.subr.bf16.mxu0 0
      %815 = vmatpush1.bf16.msra.mxu0 %v776
      %816 = vmatprep.subr.bf16.mxu0 0
      %817 = vmatpush1.bf16.msra.mxu0 %v777
      %818 = vmatprep.subr.bf16.mxu0 0
      %819 = vmatpush1.bf16.msra.mxu0 %v778
      %820 = vmatprep.subr.bf16.mxu0 0
      %821 = vmatpush1.bf16.msra.mxu0 %v779
      %822 = vmatprep.subr.bf16.mxu0 0
      %823 = vmatpush1.bf16.msra.mxu0 %v780
      %824 = vmatprep.subr.bf16.mxu0 0
      %825 = vmatpush1.bf16.msra.mxu0 %v781
      %826 = vmatprep.subr.bf16.mxu0 0
      %827 = vmatpush1.bf16.msra.mxu0 %v782
      %828 = vmatprep.subr.bf16.mxu0 0
      %829 = vmatpush1.bf16.msra.mxu0 %v783
      %830 = vmatprep.subr.bf16.mxu0 0
      %831 = vmatpush1.bf16.msra.mxu0 %v784
      %832 = vmatprep.subr.bf16.mxu0 0
      %833 = vmatpush1.bf16.msra.mxu0 %v785
      %834 = vmatprep.mubr.bf16.mxu0 %v643
      %835 = vmatmul.mubr.bf16.gmra.mrb[0].mxu0 %v642
      %v836 = vpop.f32.mrb[0].mxu0
      %v837 = vadd.f32 %v544, %v836
      %v838 = vpop.f32.mrb[0].mxu0
      %v839 = vpop.f32.mrb[0].mxu0
      %v840 = vadd.f32 %v544, %v839
      %v841 = vpop.f32.mrb[0].mxu0
      %842 = vmatprep.mubr.bf16.mxu0 %v645
      %843 = vmatmul.mubr.bf16.gmra.mrb[0].mxu0 %v644
      %v844 = vpop.f32.mrb[0].mxu0
      %v845 = vadd.f32 %v544, %v844
      %v846 = vpop.f32.mrb[0].mxu0
      %v847 = vpop.f32.mrb[0].mxu0
      %v848 = vadd.f32 %v544, %v847
      %v849 = vpop.f32.mrb[0].mxu0
      %850 = vmatprep.mubr.bf16.mxu0 %v647
      %851 = vmatmul.mubr.bf16.gmra.mrb[0].mxu0 %v646
      %v852 = vpop.f32.mrb[0].mxu0
      %v853 = vadd.f32 %v544, %v852
      %v854 = vpop.f32.mrb[0].mxu0
      %v855 = vpop.f32.mrb[0].mxu0
      %v856 = vadd.f32 %v544, %v855
      %v857 = vpop.f32.mrb[0].mxu0
      %858 = vmatprep.mubr.bf16.mxu0 %v649
      %859 = vmatmul.mubr.bf16.gmra.mrb[0].mxu0 %v648
      %v860 = vpop.f32.mrb[0].mxu0
      %v861 = vadd.f32 %v544, %v860
      %v862 = vpop.f32.mrb[0].mxu0
      %v863 = vpop.f32.mrb[0].mxu0
      %v864 = vadd.f32 %v544, %v863
      %v865 = vpop.f32.mrb[0].mxu0
      %866 = vmatprep.mubr.bf16.mxu0 %v651
      %867 = vmatmul.mubr.bf16.gmra.mrb[0].mxu0 %v650
      %v868 = vpop.f32.mrb[0].mxu0
      %v869 = vadd.f32 %v544, %v868
      %v870 = vpop.f32.mrb[0].mxu0
      %v871 = vpop.f32.mrb[0].mxu0
      %v872 = vadd.f32 %v544, %v871
      %v873 = vpop.f32.mrb[0].mxu0
      %874 = vmatprep.mubr.bf16.mxu0 %v653
      %875 = vmatmul.mubr.bf16.gmra.mrb[0].mxu0 %v652
      %v876 = vpop.f32.mrb[0].mxu0
      %v877 = vadd.f32 %v544, %v876
      %v878 = vpop.f32.mrb[0].mxu0
      %v879 = vpop.f32.mrb[0].mxu0
      %v880 = vadd.f32 %v544, %v879
      %v881 = vpop.f32.mrb[0].mxu0
      %882 = vmatprep.mubr.bf16.mxu0 %v655
      %883 = vmatmul.mubr.bf16.gmra.mrb[0].mxu0 %v654
      %v884 = vpop.f32.mrb[0].mxu0
      %v885 = vadd.f32 %v544, %v884
      %v886 = vpop.f32.mrb[0].mxu0
      %v887 = vpop.f32.mrb[0].mxu0
      %v888 = vadd.f32 %v544, %v887
      %v889 = vpop.f32.mrb[0].mxu0
      %890 = vmatprep.mubr.bf16.mxu0 %v657
      %891 = vmatmul.mubr.bf16.gmra.mrb[0].mxu0 %v656
      %v892 = vpop.f32.mrb[0].mxu0
      %v893 = vadd.f32 %v544, %v892
      %v894 = vpop.f32.mrb[0].mxu0
      %v895 = vpop.f32.mrb[0].mxu0
      %v896 = vadd.f32 %v544, %v895
      %v897 = vpop.f32.mrb[0].mxu0
      %898 = vmatprep.mubr.bf16.mxu0 %v659
      %899 = vmatmul.mubr.bf16.gmra.mrb[0].mxu0 %v658
      %v900 = vpop.f32.mrb[0].mxu0
      %v901 = vadd.f32 %v544, %v900
      %v902 = vpop.f32.mrb[0].mxu0
      %v903 = vpop.f32.mrb[0].mxu0
      %v904 = vadd.f32 %v544, %v903
      %v905 = vpop.f32.mrb[0].mxu0
      %906 = vmatprep.mubr.bf16.mxu0 %v661
      %907 = vmatmul.mubr.bf16.gmra.mrb[0].mxu0 %v660
      %v908 = vpop.f32.mrb[0].mxu0
      %v909 = vadd.f32 %v544, %v908
      %v910 = vpop.f32.mrb[0].mxu0
      %v911 = vpop.f32.mrb[0].mxu0
      %v912 = vadd.f32 %v544, %v911
      %v913 = vpop.f32.mrb[0].mxu0
      %914 = vmatprep.mubr.bf16.mxu0 %v663
      %915 = vmatmul.mubr.bf16.gmra.mrb[0].mxu0 %v662
      %v916 = vpop.f32.mrb[0].mxu0
      %v917 = vadd.f32 %v544, %v916
      %v918 = vpop.f32.mrb[0].mxu0
      %v919 = vpop.f32.mrb[0].mxu0
      %v920 = vadd.f32 %v544, %v919
      %v921 = vpop.f32.mrb[0].mxu0
      %922 = vmatprep.mubr.bf16.mxu0 %v665
      %923 = vmatmul.mubr.bf16.gmra.mrb[0].mxu0 %v664
      %v924 = vpop.f32.mrb[0].mxu0
      %v925 = vadd.f32 %v544, %v924
      %v926 = vpop.f32.mrb[0].mxu0
      %v927 = vpop.f32.mrb[0].mxu0
      %v928 = vadd.f32 %v544, %v927
      %v929 = vpop.f32.mrb[0].mxu0
      %930 = vmatprep.mubr.bf16.mxu0 %v667
      %931 = vmatmul.mubr.bf16.gmra.mrb[0].mxu0 %v666
      %v932 = vpop.f32.mrb[0].mxu0
      %v933 = vadd.f32 %v544, %v932
      %v934 = vpop.f32.mrb[0].mxu0
      %v935 = vpop.f32.mrb[0].mxu0
      %v936 = vadd.f32 %v544, %v935
      %v937 = vpop.f32.mrb[0].mxu0
      %938 = vmatprep.mubr.bf16.mxu0 %v669
      %939 = vmatmul.mubr.bf16.gmra.mrb[0].mxu0 %v668
      %v940 = vpop.f32.mrb[0].mxu0
      %v941 = vadd.f32 %v544, %v940
      %v942 = vpop.f32.mrb[0].mxu0
      %v943 = vpop.f32.mrb[0].mxu0
      %v944 = vadd.f32 %v544, %v943
      %v945 = vpop.f32.mrb[0].mxu0
      %946 = vmatprep.mubr.bf16.mxu0 %v671
      %947 = vmatmul.mubr.bf16.gmra.mrb[0].mxu0 %v670
      %v948 = vpop.f32.mrb[0].mxu0
      %v949 = vadd.f32 %v544, %v948
      %v950 = vpop.f32.mrb[0].mxu0
      %v951 = vpop.f32.mrb[0].mxu0
      %v952 = vadd.f32 %v544, %v951
      %v953 = vpop.f32.mrb[0].mxu0
      %954 = vmatprep.mubr.bf16.mxu0 %v673
      %955 = vmatmul.mubr.bf16.gmra.mrb[0].mxu0 %v672
      %v956 = vpop.f32.mrb[0].mxu0
      %v957 = vadd.f32 %v544, %v956
      %v958 = vpop.f32.mrb[0].mxu0
      %v959 = vpop.f32.mrb[0].mxu0
      %v960 = vadd.f32 %v544, %v959
      %v961 = vpop.f32.mrb[0].mxu0
      %962 = vdwg.mxu0
      %s963 = scalar_lea.vmem [#allocation2], 32
      %964 = vst [vmem:[%s963 + $0x8] sm:$0xff] %v837
      %965 = vst [vmem:[%s963 + $0x10] sm:$0xff] %v840
      %966 = vst [vmem:[%s963 + $0x28] sm:$0xff] %v845
      %967 = vst [vmem:[%s963 + $0x30] sm:$0xff] %v848
      %968 = vst [vmem:[%s963 + $0x48] sm:$0xff] %v853
      %969 = vst [vmem:[%s963 + $0x50] sm:$0xff] %v856
      %970 = vst [vmem:[%s963 + $0x68] sm:$0xff] %v861
      %971 = vst [vmem:[%s963 + $0x70] sm:$0xff] %v864
      %972 = vst [vmem:[%s963 + $0x88] sm:$0xff] %v869
      %973 = vst [vmem:[%s963 + $0x90] sm:$0xff] %v872
      %974 = vst [vmem:[%s963 + $0xa8] sm:$0xff] %v877
      %975 = vst [vmem:[%s963 + $0xb0] sm:$0xff] %v880
      %976 = vst [vmem:[%s963 + $0xc8] sm:$0xff] %v885
      %977 = vst [vmem:[%s963 + $0xd0] sm:$0xff] %v888
      %978 = vst [vmem:[%s963 + $0xe8] sm:$0xff] %v893
      %979 = vst [vmem:[%s963 + $0xf0] sm:$0xff] %v896
      %980 = vst [vmem:[%s963 + $0x108] sm:$0xff] %v901
      %981 = vst [vmem:[%s963 + $0x110] sm:$0xff] %v904
      %982 = vst [vmem:[%s963 + $0x128] sm:$0xff] %v909
      %983 = vst [vmem:[%s963 + $0x130] sm:$0xff] %v912
      %984 = vst [vmem:[%s963 + $0x148] sm:$0xff] %v917
      %985 = vst [vmem:[%s963 + $0x150] sm:$0xff] %v920
      %986 = vst [vmem:[%s963 + $0x168] sm:$0xff] %v925
      %987 = vst [vmem:[%s963 + $0x170] sm:$0xff] %v928
      %988 = vst [vmem:[%s963 + $0x188] sm:$0xff] %v933
      %989 = vst [vmem:[%s963 + $0x190] sm:$0xff] %v936
      %990 = vst [vmem:[%s963 + $0x1a8] sm:$0xff] %v941
      %991 = vst [vmem:[%s963 + $0x1b0] sm:$0xff] %v944
      %992 = vst [vmem:[%s963 + $0x1c8] sm:$0xff] %v949
      %993 = vst [vmem:[%s963 + $0x1d0] sm:$0xff] %v952
      %994 = vst [vmem:[%s963 + $0x1e8] sm:$0xff] %v957
      %995 = vst [vmem:[%s963 + $0x1f0] sm:$0xff] %v960
      %v996 = vld [vmem:[#allocation2 + $0x7] sm:$0xff]
      %v997 = vld [vmem:[#allocation2 + $0xf] sm:$0xff]
      %v998 = vld [vmem:[#allocation2 + $0x27] sm:$0xff]
      %v999 = vld [vmem:[#allocation2 + $0x2f] sm:$0xff]
      %v1000 = vld [vmem:[#allocation2 + $0x47] sm:$0xff]
      %v1001 = vld [vmem:[#allocation2 + $0x4f] sm:$0xff]
      %v1002 = vld [vmem:[#allocation2 + $0x67] sm:$0xff]
      %v1003 = vld [vmem:[#allocation2 + $0x6f] sm:$0xff]
      %v1004 = vld [vmem:[#allocation2 + $0x87] sm:$0xff]
      %v1005 = vld [vmem:[#allocation2 + $0x8f] sm:$0xff]
      %v1006 = vld [vmem:[#allocation2 + $0xa7] sm:$0xff]
      %v1007 = vld [vmem:[#allocation2 + $0xaf] sm:$0xff]
      %v1008 = vld [vmem:[#allocation2 + $0xc7] sm:$0xff]
      %v1009 = vld [vmem:[#allocation2 + $0xcf] sm:$0xff]
      %v1010 = vld [vmem:[#allocation2 + $0xe7] sm:$0xff]
      %v1011 = vld [vmem:[#allocation2 + $0xef] sm:$0xff]
      %v1012 = vld [vmem:[#allocation2 + $0x107] sm:$0xff]
      %v1013 = vld [vmem:[#allocation2 + $0x10f] sm:$0xff]
      %v1014 = vld [vmem:[#allocation2 + $0x127] sm:$0xff]
      %v1015 = vld [vmem:[#allocation2 + $0x12f] sm:$0xff]
      %v1016 = vld [vmem:[#allocation2 + $0x147] sm:$0xff]
      %v1017 = vld [vmem:[#allocation2 + $0x14f] sm:$0xff]
      %v1018 = vld [vmem:[#allocation2 + $0x167] sm:$0xff]
      %v1019 = vld [vmem:[#allocation2 + $0x16f] sm:$0xff]
      %v1020 = vld [vmem:[#allocation2 + $0x187] sm:$0xff]
      %v1021 = vld [vmem:[#allocation2 + $0x18f] sm:$0xff]
      %v1022 = vld [vmem:[#allocation2 + $0x1a7] sm:$0xff]
      %v1023 = vld [vmem:[#allocation2 + $0x1af] sm:$0xff]
      %v1024 = vld [vmem:[#allocation2 + $0x1c7] sm:$0xff]
      %v1025 = vld [vmem:[#allocation2 + $0x1cf] sm:$0xff]
      %v1026 = vld [vmem:[#allocation2 + $0x1e7] sm:$0xff]
      %v1027 = vld [vmem:[#allocation2 + $0x1ef] sm:$0xff]
      %v1028 = vpack.c.bf16 %v997, %v996
      %v1029 = vpack.c.bf16 %v999, %v998
      %v1030 = vpack.c.bf16 %v1001, %v1000
      %v1031 = vpack.c.bf16 %v1003, %v1002
      %v1032 = vpack.c.bf16 %v1005, %v1004
      %v1033 = vpack.c.bf16 %v1007, %v1006
      %v1034 = vpack.c.bf16 %v1009, %v1008
      %v1035 = vpack.c.bf16 %v1011, %v1010
      %v1036 = vpack.c.bf16 %v1013, %v1012
      %v1037 = vpack.c.bf16 %v1015, %v1014
      %v1038 = vpack.c.bf16 %v1017, %v1016
      %v1039 = vpack.c.bf16 %v1019, %v1018
      %v1040 = vpack.c.bf16 %v1021, %v1020
      %v1041 = vpack.c.bf16 %v1023, %v1022
      %v1042 = vpack.c.bf16 %v1025, %v1024
      %v1043 = vpack.c.bf16 %v1027, %v1026
      %1044 = vst [vmem:[#allocation3] sm:$0xff] %v1028
      %1045 = vst [vmem:[#allocation3 + $0x48] sm:$0xff] %v1029
      %1046 = vst [vmem:[#allocation3 + $0x90] sm:$0xff] %v1030
      %1047 = vst [vmem:[#allocation3 + $0xd8] sm:$0xff] %v1031
      %1048 = vst [vmem:[#allocation3 + $0x120] sm:$0xff] %v1032
      %1049 = vst [vmem:[#allocation3 + $0x168] sm:$0xff] %v1033
      %1050 = vst [vmem:[#allocation3 + $0x1b0] sm:$0xff] %v1034
      %1051 = vst [vmem:[#allocation3 + $0x1f8] sm:$0xff] %v1035
      %1052 = vst [vmem:[#allocation3 + $0x240] sm:$0xff] %v1036
      %1053 = vst [vmem:[#allocation3 + $0x288] sm:$0xff] %v1037
      %1054 = vst [vmem:[#allocation3 + $0x2d0] sm:$0xff] %v1038
      %1055 = vst [vmem:[#allocation3 + $0x318] sm:$0xff] %v1039
      %1056 = vst [vmem:[#allocation3 + $0x360] sm:$0xff] %v1040
      %1057 = vst [vmem:[#allocation3 + $0x3a8] sm:$0xff] %v1041
      %1058 = vst [vmem:[#allocation3 + $0x3f0] sm:$0xff] %v1042
      %1059 = vst [vmem:[#allocation3 + $0x438] sm:$0xff] %v1043
      %v1060 = vld [vmem:[#allocation2 + $0x8] sm:$0xff]
      %v1061 = vld [vmem:[#allocation2 + $0x10] sm:$0xff]
      %v1062 = vld [vmem:[#allocation2 + $0x28] sm:$0xff]
      %v1063 = vld [vmem:[#allocation2 + $0x30] sm:$0xff]
      %v1064 = vld [vmem:[#allocation2 + $0x48] sm:$0xff]
      %v1065 = vld [vmem:[#allocation2 + $0x50] sm:$0xff]
      %v1066 = vld [vmem:[#allocation2 + $0x68] sm:$0xff]
      %v1067 = vld [vmem:[#allocation2 + $0x70] sm:$0xff]
      %v1068 = vld [vmem:[#allocation2 + $0x88] sm:$0xff]
      %v1069 = vld [vmem:[#allocation2 + $0x90] sm:$0xff]
      %v1070 = vld [vmem:[#allocation2 + $0xa8] sm:$0xff]
      %v1071 = vld [vmem:[#allocation2 + $0xb0] sm:$0xff]
      %v1072 = vld [vmem:[#allocation2 + $0xc8] sm:$0xff]
      %v1073 = vld [vmem:[#allocation2 + $0xd0] sm:$0xff]
      %v1074 = vld [vmem:[#allocation2 + $0xe8] sm:$0xff]
      %v1075 = vld [vmem:[#allocation2 + $0xf0] sm:$0xff]
      %v1076 = vld [vmem:[#allocation2 + $0x108] sm:$0xff]
      %v1077 = vld [vmem:[#allocation2 + $0x110] sm:$0xff]
      %v1078 = vld [vmem:[#allocation2 + $0x128] sm:$0xff]
      %v1079 = vld [vmem:[#allocation2 + $0x130] sm:$0xff]
      %v1080 = vld [vmem:[#allocation2 + $0x148] sm:$0xff]
      %v1081 = vld [vmem:[#allocation2 + $0x150] sm:$0xff]
      %v1082 = vld [vmem:[#allocation2 + $0x168] sm:$0xff]
      %v1083 = vld [vmem:[#allocation2 + $0x170] sm:$0xff]
      %v1084 = vld [vmem:[#allocation2 + $0x188] sm:$0xff]
      %v1085 = vld [vmem:[#allocation2 + $0x190] sm:$0xff]
      %v1086 = vld [vmem:[#allocation2 + $0x1a8] sm:$0xff]
      %v1087 = vld [vmem:[#allocation2 + $0x1b0] sm:$0xff]
      %v1088 = vld [vmem:[#allocation2 + $0x1c8] sm:$0xff]
      %v1089 = vld [vmem:[#allocation2 + $0x1d0] sm:$0xff]
      %v1090 = vld [vmem:[#allocation2 + $0x1e8] sm:$0xff]
      %v1091 = vld [vmem:[#allocation2 + $0x1f0] sm:$0xff]
      %v1092 = vpack.c.bf16 %v1061, %v1060
      %v1093 = vpack.c.bf16 %v1063, %v1062
      %v1094 = vpack.c.bf16 %v1065, %v1064
      %v1095 = vpack.c.bf16 %v1067, %v1066
      %v1096 = vpack.c.bf16 %v1069, %v1068
      %v1097 = vpack.c.bf16 %v1071, %v1070
      %v1098 = vpack.c.bf16 %v1073, %v1072
      %v1099 = vpack.c.bf16 %v1075, %v1074
      %v1100 = vpack.c.bf16 %v1077, %v1076
      %v1101 = vpack.c.bf16 %v1079, %v1078
      %v1102 = vpack.c.bf16 %v1081, %v1080
      %v1103 = vpack.c.bf16 %v1083, %v1082
      %v1104 = vpack.c.bf16 %v1085, %v1084
      %v1105 = vpack.c.bf16 %v1087, %v1086
      %v1106 = vpack.c.bf16 %v1089, %v1088
      %v1107 = vpack.c.bf16 %v1091, %v1090
      %1108 = vst [vmem:[#allocation3 + $0x8] sm:$0xff] %v1092
      %1109 = vst [vmem:[#allocation3 + $0x50] sm:$0xff] %v1093
      %1110 = vst [vmem:[#allocation3 + $0x98] sm:$0xff] %v1094
      %1111 = vst [vmem:[#allocation3 + $0xe0] sm:$0xff] %v1095
      %1112 = vst [vmem:[#allocation3 + $0x128] sm:$0xff] %v1096
      %1113 = vst [vmem:[#allocation3 + $0x170] sm:$0xff] %v1097
      %1114 = vst [vmem:[#allocation3 + $0x1b8] sm:$0xff] %v1098
      %1115 = vst [vmem:[#allocation3 + $0x200] sm:$0xff] %v1099
      %1116 = vst [vmem:[#allocation3 + $0x248] sm:$0xff] %v1100
      %1117 = vst [vmem:[#allocation3 + $0x290] sm:$0xff] %v1101
      %1118 = vst [vmem:[#allocation3 + $0x2d8] sm:$0xff] %v1102
      %1119 = vst [vmem:[#allocation3 + $0x320] sm:$0xff] %v1103
      %1120 = vst [vmem:[#allocation3 + $0x368] sm:$0xff] %v1104
      %1121 = vst [vmem:[#allocation3 + $0x3b0] sm:$0xff] %v1105
      %1122 = vst [vmem:[#allocation3 + $0x3f8] sm:$0xff] %v1106
      %1123 = vst [vmem:[#allocation3 + $0x440] sm:$0xff] %v1107
      %v1124 = vld [vmem:[#allocation2 + $0x9] sm:$0xff]
      %v1125 = vld [vmem:[#allocation2 + $0x11] sm:$0xff]
      %v1126 = vld [vmem:[#allocation2 + $0x29] sm:$0xff]
      %v1127 = vld [vmem:[#allocation2 + $0x31] sm:$0xff]
      %v1128 = vld [vmem:[#allocation2 + $0x49] sm:$0xff]
      %v1129 = vld [vmem:[#allocation2 + $0x51] sm:$0xff]
      %v1130 = vld [vmem:[#allocation2 + $0x69] sm:$0xff]
      %v1131 = vld [vmem:[#allocation2 + $0x71] sm:$0xff]
      %v1132 = vld [vmem:[#allocation2 + $0x89] sm:$0xff]
      %v1133 = vld [vmem:[#allocation2 + $0x91] sm:$0xff]
      %v1134 = vld [vmem:[#allocation2 + $0xa9] sm:$0xff]
      %v1135 = vld [vmem:[#allocation2 + $0xb1] sm:$0xff]
      %v1136 = vld [vmem:[#allocation2 + $0xc9] sm:$0xff]
      %v1137 = vld [vmem:[#allocation2 + $0xd1] sm:$0xff]
      %v1138 = vld [vmem:[#allocation2 + $0xe9] sm:$0xff]
      %v1139 = vld [vmem:[#allocation2 + $0xf1] sm:$0xff]
      %v1140 = vld [vmem:[#allocation2 + $0x109] sm:$0xff]
      %v1141 = vld [vmem:[#allocation2 + $0x111] sm:$0xff]
      %v1142 = vld [vmem:[#allocation2 + $0x129] sm:$0xff]
      %v1143 = vld [vmem:[#allocation2 + $0x131] sm:$0xff]
      %v1144 = vld [vmem:[#allocation2 + $0x149] sm:$0xff]
      %v1145 = vld [vmem:[#allocation2 + $0x151] sm:$0xff]
      %v1146 = vld [vmem:[#allocation2 + $0x169] sm:$0xff]
      %v1147 = vld [vmem:[#allocation2 + $0x171] sm:$0xff]
      %v1148 = vld [vmem:[#allocation2 + $0x189] sm:$0xff]
      %v1149 = vld [vmem:[#allocation2 + $0x191] sm:$0xff]
      %v1150 = vld [vmem:[#allocation2 + $0x1a9] sm:$0xff]
      %v1151 = vld [vmem:[#allocation2 + $0x1b1] sm:$0xff]
      %v1152 = vld [vmem:[#allocation2 + $0x1c9] sm:$0xff]
      %v1153 = vld [vmem:[#allocation2 + $0x1d1] sm:$0xff]
      %v1154 = vld [vmem:[#allocation2 + $0x1e9] sm:$0xff]
      %v1155 = vld [vmem:[#allocation2 + $0x1f1] sm:$0xff]
      %v1156 = vpack.c.bf16 %v1125, %v1124
      %v1157 = vpack.c.bf16 %v1127, %v1126
      %v1158 = vpack.c.bf16 %v1129, %v1128
      %v1159 = vpack.c.bf16 %v1131, %v1130
      %v1160 = vpack.c.bf16 %v1133, %v1132
      %v1161 = vpack.c.bf16 %v1135, %v1134
      %v1162 = vpack.c.bf16 %v1137, %v1136
      %v1163 = vpack.c.bf16 %v1139, %v1138
      %v1164 = vpack.c.bf16 %v1141, %v1140
      %v1165 = vpack.c.bf16 %v1143, %v1142
      %v1166 = vpack.c.bf16 %v1145, %v1144
      %v1167 = vpack.c.bf16 %v1147, %v1146
      %v1168 = vpack.c.bf16 %v1149, %v1148
      %v1169 = vpack.c.bf16 %v1151, %v1150
      %v1170 = vpack.c.bf16 %v1153, %v1152
      %v1171 = vpack.c.bf16 %v1155, %v1154
      %1172 = vst [vmem:[#allocation3 + $0x10] sm:$0xff] %v1156
      %1173 = vst [vmem:[#allocation3 + $0x58] sm:$0xff] %v1157
      %1174 = vst [vmem:[#allocation3 + $0xa0] sm:$0xff] %v1158
      %1175 = vst [vmem:[#allocation3 + $0xe8] sm:$0xff] %v1159
      %1176 = vst [vmem:[#allocation3 + $0x130] sm:$0xff] %v1160
      %1177 = vst [vmem:[#allocation3 + $0x178] sm:$0xff] %v1161
      %1178 = vst [vmem:[#allocation3 + $0x1c0] sm:$0xff] %v1162
      %1179 = vst [vmem:[#allocation3 + $0x208] sm:$0xff] %v1163
      %1180 = vst [vmem:[#allocation3 + $0x250] sm:$0xff] %v1164
      %1181 = vst [vmem:[#allocation3 + $0x298] sm:$0xff] %v1165
      %1182 = vst [vmem:[#allocation3 + $0x2e0] sm:$0xff] %v1166
      %1183 = vst [vmem:[#allocation3 + $0x328] sm:$0xff] %v1167
      %1184 = vst [vmem:[#allocation3 + $0x370] sm:$0xff] %v1168
      %1185 = vst [vmem:[#allocation3 + $0x3b8] sm:$0xff] %v1169
      %1186 = vst [vmem:[#allocation3 + $0x400] sm:$0xff] %v1170
      %1187 = vst [vmem:[#allocation3 + $0x448] sm:$0xff] %v1171
      %v1188 = vld [vmem:[%s963 + $0x7] sm:$0xff]
      %v1189 = vld [vmem:[%s963 + $0xf] sm:$0xff]
      %v1190 = vld [vmem:[%s963 + $0x27] sm:$0xff]
      %v1191 = vld [vmem:[%s963 + $0x2f] sm:$0xff]
      %v1192 = vld [vmem:[%s963 + $0x47] sm:$0xff]
      %v1193 = vld [vmem:[%s963 + $0x4f] sm:$0xff]
      %v1194 = vld [vmem:[%s963 + $0x67] sm:$0xff]
      %v1195 = vld [vmem:[%s963 + $0x6f] sm:$0xff]
      %v1196 = vld [vmem:[%s963 + $0x87] sm:$0xff]
      %v1197 = vld [vmem:[%s963 + $0x8f] sm:$0xff]
      %v1198 = vld [vmem:[%s963 + $0xa7] sm:$0xff]
      %v1199 = vld [vmem:[%s963 + $0xaf] sm:$0xff]
      %v1200 = vld [vmem:[%s963 + $0xc7] sm:$0xff]
      %v1201 = vld [vmem:[%s963 + $0xcf] sm:$0xff]
      %v1202 = vld [vmem:[%s963 + $0xe7] sm:$0xff]
      %v1203 = vld [vmem:[%s963 + $0xef] sm:$0xff]
      %v1204 = vld [vmem:[%s963 + $0x107] sm:$0xff]
      %v1205 = vld [vmem:[%s963 + $0x10f] sm:$0xff]
      %v1206 = vld [vmem:[%s963 + $0x127] sm:$0xff]
      %v1207 = vld [vmem:[%s963 + $0x12f] sm:$0xff]
      %v1208 = vld [vmem:[%s963 + $0x147] sm:$0xff]
      %v1209 = vld [vmem:[%s963 + $0x14f] sm:$0xff]
      %v1210 = vld [vmem:[%s963 + $0x167] sm:$0xff]
      %v1211 = vld [vmem:[%s963 + $0x16f] sm:$0xff]
      %v1212 = vld [vmem:[%s963 + $0x187] sm:$0xff]
      %v1213 = vld [vmem:[%s963 + $0x18f] sm:$0xff]
      %v1214 = vld [vmem:[%s963 + $0x1a7] sm:$0xff]
      %v1215 = vld [vmem:[%s963 + $0x1af] sm:$0xff]
      %v1216 = vld [vmem:[%s963 + $0x1c7] sm:$0xff]
      %v1217 = vld [vmem:[%s963 + $0x1cf] sm:$0xff]
      %v1218 = vld [vmem:[%s963 + $0x1e7] sm:$0xff]
      %v1219 = vld [vmem:[%s963 + $0x1ef] sm:$0xff]
      %v1220 = vpack.c.bf16 %v1189, %v1188
      %v1221 = vpack.c.bf16 %v1191, %v1190
      %v1222 = vpack.c.bf16 %v1193, %v1192
      %v1223 = vpack.c.bf16 %v1195, %v1194
      %v1224 = vpack.c.bf16 %v1197, %v1196
      %v1225 = vpack.c.bf16 %v1199, %v1198
      %v1226 = vpack.c.bf16 %v1201, %v1200
      %v1227 = vpack.c.bf16 %v1203, %v1202
      %v1228 = vpack.c.bf16 %v1205, %v1204
      %v1229 = vpack.c.bf16 %v1207, %v1206
      %v1230 = vpack.c.bf16 %v1209, %v1208
      %v1231 = vpack.c.bf16 %v1211, %v1210
      %v1232 = vpack.c.bf16 %v1213, %v1212
      %v1233 = vpack.c.bf16 %v1215, %v1214
      %v1234 = vpack.c.bf16 %v1217, %v1216
      %v1235 = vpack.c.bf16 %v1219, %v1218
      %1236 = vst [vmem:[#allocation3 + $0x18] sm:$0xff] %v1220
      %1237 = vst [vmem:[#allocation3 + $0x60] sm:$0xff] %v1221
      %1238 = vst [vmem:[#allocation3 + $0xa8] sm:$0xff] %v1222
      %1239 = vst [vmem:[#allocation3 + $0xf0] sm:$0xff] %v1223
      %1240 = vst [vmem:[#allocation3 + $0x138] sm:$0xff] %v1224
      %1241 = vst [vmem:[#allocation3 + $0x180] sm:$0xff] %v1225
      %1242 = vst [vmem:[#allocation3 + $0x1c8] sm:$0xff] %v1226
      %1243 = vst [vmem:[#allocation3 + $0x210] sm:$0xff] %v1227
      %1244 = vst [vmem:[#allocation3 + $0x258] sm:$0xff] %v1228
      %1245 = vst [vmem:[#allocation3 + $0x2a0] sm:$0xff] %v1229
      %1246 = vst [vmem:[#allocation3 + $0x2e8] sm:$0xff] %v1230
      %1247 = vst [vmem:[#allocation3 + $0x330] sm:$0xff] %v1231
      %1248 = vst [vmem:[#allocation3 + $0x378] sm:$0xff] %v1232
      %1249 = vst [vmem:[#allocation3 + $0x3c0] sm:$0xff] %v1233
      %1250 = vst [vmem:[#allocation3 + $0x408] sm:$0xff] %v1234
      %1251 = vst [vmem:[#allocation3 + $0x450] sm:$0xff] %v1235
      %v1252 = vld [vmem:[%s963 + $0x8] sm:$0xff]
      %v1253 = vld [vmem:[%s963 + $0x10] sm:$0xff]
      %v1254 = vld [vmem:[%s963 + $0x28] sm:$0xff]
      %v1255 = vld [vmem:[%s963 + $0x30] sm:$0xff]
      %v1256 = vld [vmem:[%s963 + $0x48] sm:$0xff]
      %v1257 = vld [vmem:[%s963 + $0x50] sm:$0xff]
      %v1258 = vld [vmem:[%s963 + $0x68] sm:$0xff]
      %v1259 = vld [vmem:[%s963 + $0x70] sm:$0xff]
      %v1260 = vld [vmem:[%s963 + $0x88] sm:$0xff]
      %v1261 = vld [vmem:[%s963 + $0x90] sm:$0xff]
      %v1262 = vld [vmem:[%s963 + $0xa8] sm:$0xff]
      %v1263 = vld [vmem:[%s963 + $0xb0] sm:$0xff]
      %v1264 = vld [vmem:[%s963 + $0xc8] sm:$0xff]
      %v1265 = vld [vmem:[%s963 + $0xd0] sm:$0xff]
      %v1266 = vld [vmem:[%s963 + $0xe8] sm:$0xff]
      %v1267 = vld [vmem:[%s963 + $0xf0] sm:$0xff]
      %v1268 = vld [vmem:[%s963 + $0x108] sm:$0xff]
      %v1269 = vld [vmem:[%s963 + $0x110] sm:$0xff]
      %v1270 = vld [vmem:[%s963 + $0x128] sm:$0xff]
      %v1271 = vld [vmem:[%s963 + $0x130] sm:$0xff]
      %v1272 = vld [vmem:[%s963 + $0x148] sm:$0xff]
      %v1273 = vld [vmem:[%s963 + $0x150] sm:$0xff]
      %v1274 = vld [vmem:[%s963 + $0x168] sm:$0xff]
      %v1275 = vld [vmem:[%s963 + $0x170] sm:$0xff]
      %v1276 = vld [vmem:[%s963 + $0x188] sm:$0xff]
      %v1277 = vld [vmem:[%s963 + $0x190] sm:$0xff]
      %v1278 = vld [vmem:[%s963 + $0x1a8] sm:$0xff]
      %v1279 = vld [vmem:[%s963 + $0x1b0] sm:$0xff]
      %v1280 = vld [vmem:[%s963 + $0x1c8] sm:$0xff]
      %v1281 = vld [vmem:[%s963 + $0x1d0] sm:$0xff]
      %v1282 = vld [vmem:[%s963 + $0x1e8] sm:$0xff]
      %v1283 = vld [vmem:[%s963 + $0x1f0] sm:$0xff]
      %v1284 = vpack.c.bf16 %v1253, %v1252
      %v1285 = vpack.c.bf16 %v1255, %v1254
      %v1286 = vpack.c.bf16 %v1257, %v1256
      %v1287 = vpack.c.bf16 %v1259, %v1258
      %v1288 = vpack.c.bf16 %v1261, %v1260
      %v1289 = vpack.c.bf16 %v1263, %v1262
      %v1290 = vpack.c.bf16 %v1265, %v1264
      %v1291 = vpack.c.bf16 %v1267, %v1266
      %v1292 = vpack.c.bf16 %v1269, %v1268
      %v1293 = vpack.c.bf16 %v1271, %v1270
      %v1294 = vpack.c.bf16 %v1273, %v1272
      %v1295 = vpack.c.bf16 %v1275, %v1274
      %v1296 = vpack.c.bf16 %v1277, %v1276
      %v1297 = vpack.c.bf16 %v1279, %v1278
      %v1298 = vpack.c.bf16 %v1281, %v1280
      %v1299 = vpack.c.bf16 %v1283, %v1282
      %1300 = vst [vmem:[#allocation3 + $0x20] sm:$0xff] %v1284
      %1301 = vst [vmem:[#allocation3 + $0x68] sm:$0xff] %v1285
      %1302 = vst [vmem:[#allocation3 + $0xb0] sm:$0xff] %v1286
      %1303 = vst [vmem:[#allocation3 + $0xf8] sm:$0xff] %v1287
      %1304 = vst [vmem:[#allocation3 + $0x140] sm:$0xff] %v1288
      %1305 = vst [vmem:[#allocation3 + $0x188] sm:$0xff] %v1289
      %1306 = vst [vmem:[#allocation3 + $0x1d0] sm:$0xff] %v1290
      %1307 = vst [vmem:[#allocation3 + $0x218] sm:$0xff] %v1291
      %1308 = vst [vmem:[#allocation3 + $0x260] sm:$0xff] %v1292
      %1309 = vst [vmem:[#allocation3 + $0x2a8] sm:$0xff] %v1293
      %1310 = vst [vmem:[#allocation3 + $0x2f0] sm:$0xff] %v1294
      %1311 = vst [vmem:[#allocation3 + $0x338] sm:$0xff] %v1295
      %1312 = vst [vmem:[#allocation3 + $0x380] sm:$0xff] %v1296
      %1313 = vst [vmem:[#allocation3 + $0x3c8] sm:$0xff] %v1297
      %1314 = vst [vmem:[#allocation3 + $0x410] sm:$0xff] %v1298
      %1315 = vst [vmem:[#allocation3 + $0x458] sm:$0xff] %v1299
      %v1316 = vld [vmem:[%s963 + $0x9] sm:$0xff]
      %v1317 = vld [vmem:[%s963 + $0x11] sm:$0xff]
      %v1318 = vld [vmem:[%s963 + $0x29] sm:$0xff]
      %v1319 = vld [vmem:[%s963 + $0x31] sm:$0xff]
      %v1320 = vld [vmem:[%s963 + $0x49] sm:$0xff]
      %v1321 = vld [vmem:[%s963 + $0x51] sm:$0xff]
      %v1322 = vld [vmem:[%s963 + $0x69] sm:$0xff]
      %v1323 = vld [vmem:[%s963 + $0x71] sm:$0xff]
      %v1324 = vld [vmem:[%s963 + $0x89] sm:$0xff]
      %v1325 = vld [vmem:[%s963 + $0x91] sm:$0xff]
      %v1326 = vld [vmem:[%s963 + $0xa9] sm:$0xff]
      %v1327 = vld [vmem:[%s963 + $0xb1] sm:$0xff]
      %v1328 = vld [vmem:[%s963 + $0xc9] sm:$0xff]
      %v1329 = vld [vmem:[%s963 + $0xd1] sm:$0xff]
      %v1330 = vld [vmem:[%s963 + $0xe9] sm:$0xff]
      %v1331 = vld [vmem:[%s963 + $0xf1] sm:$0xff]
      %v1332 = vld [vmem:[%s963 + $0x109] sm:$0xff]
      %v1333 = vld [vmem:[%s963 + $0x111] sm:$0xff]
      %v1334 = vld [vmem:[%s963 + $0x129] sm:$0xff]
      %v1335 = vld [vmem:[%s963 + $0x131] sm:$0xff]
      %v1336 = vld [vmem:[%s963 + $0x149] sm:$0xff]
      %v1337 = vld [vmem:[%s963 + $0x151] sm:$0xff]
      %v1338 = vld [vmem:[%s963 + $0x169] sm:$0xff]
      %v1339 = vld [vmem:[%s963 + $0x171] sm:$0xff]
      %v1340 = vld [vmem:[%s963 + $0x189] sm:$0xff]
      %v1341 = vld [vmem:[%s963 + $0x191] sm:$0xff]
      %v1342 = vld [vmem:[%s963 + $0x1a9] sm:$0xff]
      %v1343 = vld [vmem:[%s963 + $0x1b1] sm:$0xff]
      %v1344 = vld [vmem:[%s963 + $0x1c9] sm:$0xff]
      %v1345 = vld [vmem:[%s963 + $0x1d1] sm:$0xff]
      %v1346 = vld [vmem:[%s963 + $0x1e9] sm:$0xff]
      %v1347 = vld [vmem:[%s963 + $0x1f1] sm:$0xff]
      %v1348 = vpack.c.bf16 %v1317, %v1316
      %v1349 = vpack.c.bf16 %v1319, %v1318
      %v1350 = vpack.c.bf16 %v1321, %v1320
      %v1351 = vpack.c.bf16 %v1323, %v1322
      %v1352 = vpack.c.bf16 %v1325, %v1324
      %v1353 = vpack.c.bf16 %v1327, %v1326
      %v1354 = vpack.c.bf16 %v1329, %v1328
      %v1355 = vpack.c.bf16 %v1331, %v1330
      %v1356 = vpack.c.bf16 %v1333, %v1332
      %v1357 = vpack.c.bf16 %v1335, %v1334
      %v1358 = vpack.c.bf16 %v1337, %v1336
      %v1359 = vpack.c.bf16 %v1339, %v1338
      %v1360 = vpack.c.bf16 %v1341, %v1340
      %v1361 = vpack.c.bf16 %v1343, %v1342
      %v1362 = vpack.c.bf16 %v1345, %v1344
      %v1363 = vpack.c.bf16 %v1347, %v1346
      %1364 = vst [vmem:[#allocation3 + $0x28] sm:$0xff] %v1348
      %1365 = vst [vmem:[#allocation3 + $0x70] sm:$0xff] %v1349
      %1366 = vst [vmem:[#allocation3 + $0xb8] sm:$0xff] %v1350
      %1367 = vst [vmem:[#allocation3 + $0x100] sm:$0xff] %v1351
      %1368 = vst [vmem:[#allocation3 + $0x148] sm:$0xff] %v1352
      %1369 = vst [vmem:[#allocation3 + $0x190] sm:$0xff] %v1353
      %1370 = vst [vmem:[#allocation3 + $0x1d8] sm:$0xff] %v1354
      %1371 = vst [vmem:[#allocation3 + $0x220] sm:$0xff] %v1355
      %1372 = vst [vmem:[#allocation3 + $0x268] sm:$0xff] %v1356
      %1373 = vst [vmem:[#allocation3 + $0x2b0] sm:$0xff] %v1357
      %1374 = vst [vmem:[#allocation3 + $0x2f8] sm:$0xff] %v1358
      %1375 = vst [vmem:[#allocation3 + $0x340] sm:$0xff] %v1359
      %1376 = vst [vmem:[#allocation3 + $0x388] sm:$0xff] %v1360
      %1377 = vst [vmem:[#allocation3 + $0x3d0] sm:$0xff] %v1361
      %1378 = vst [vmem:[#allocation3 + $0x418] sm:$0xff] %v1362
      %1379 = vst [vmem:[#allocation3 + $0x460] sm:$0xff] %v1363
      %s1380 = scalar_lea.vmem [#allocation2], 64
      %v1381 = vld [vmem:[%s1380 + $0x7] sm:$0xff]
      %v1382 = vld [vmem:[%s1380 + $0xf] sm:$0xff]
      %v1383 = vld [vmem:[%s1380 + $0x27] sm:$0xff]
      %v1384 = vld [vmem:[%s1380 + $0x2f] sm:$0xff]
      %v1385 = vld [vmem:[%s1380 + $0x47] sm:$0xff]
      %v1386 = vld [vmem:[%s1380 + $0x4f] sm:$0xff]
      %v1387 = vld [vmem:[%s1380 + $0x67] sm:$0xff]
      %v1388 = vld [vmem:[%s1380 + $0x6f] sm:$0xff]
      %v1389 = vld [vmem:[%s1380 + $0x87] sm:$0xff]
      %v1390 = vld [vmem:[%s1380 + $0x8f] sm:$0xff]
      %v1391 = vld [vmem:[%s1380 + $0xa7] sm:$0xff]
      %v1392 = vld [vmem:[%s1380 + $0xaf] sm:$0xff]
      %v1393 = vld [vmem:[%s1380 + $0xc7] sm:$0xff]
      %v1394 = vld [vmem:[%s1380 + $0xcf] sm:$0xff]
      %v1395 = vld [vmem:[%s1380 + $0xe7] sm:$0xff]
      %v1396 = vld [vmem:[%s1380 + $0xef] sm:$0xff]
      %v1397 = vld [vmem:[%s1380 + $0x107] sm:$0xff]
      %v1398 = vld [vmem:[%s1380 + $0x10f] sm:$0xff]
      %v1399 = vld [vmem:[%s1380 + $0x127] sm:$0xff]
      %v1400 = vld [vmem:[%s1380 + $0x12f] sm:$0xff]
      %v1401 = vld [vmem:[%s1380 + $0x147] sm:$0xff]
      %v1402 = vld [vmem:[%s1380 + $0x14f] sm:$0xff]
      %v1403 = vld [vmem:[%s1380 + $0x167] sm:$0xff]
      %v1404 = vld [vmem:[%s1380 + $0x16f] sm:$0xff]
      %v1405 = vld [vmem:[%s1380 + $0x187] sm:$0xff]
      %v1406 = vld [vmem:[%s1380 + $0x18f] sm:$0xff]
      %v1407 = vld [vmem:[%s1380 + $0x1a7] sm:$0xff]
      %v1408 = vld [vmem:[%s1380 + $0x1af] sm:$0xff]
      %v1409 = vld [vmem:[%s1380 + $0x1c7] sm:$0xff]
      %v1410 = vld [vmem:[%s1380 + $0x1cf] sm:$0xff]
      %v1411 = vld [vmem:[%s1380 + $0x1e7] sm:$0xff]
      %v1412 = vld [vmem:[%s1380 + $0x1ef] sm:$0xff]
      %v1413 = vpack.c.bf16 %v1382, %v1381
      %v1414 = vpack.c.bf16 %v1384, %v1383
      %v1415 = vpack.c.bf16 %v1386, %v1385
      %v1416 = vpack.c.bf16 %v1388, %v1387
      %v1417 = vpack.c.bf16 %v1390, %v1389
      %v1418 = vpack.c.bf16 %v1392, %v1391
      %v1419 = vpack.c.bf16 %v1394, %v1393
      %v1420 = vpack.c.bf16 %v1396, %v1395
      %v1421 = vpack.c.bf16 %v1398, %v1397
      %v1422 = vpack.c.bf16 %v1400, %v1399
      %v1423 = vpack.c.bf16 %v1402, %v1401
      %v1424 = vpack.c.bf16 %v1404, %v1403
      %v1425 = vpack.c.bf16 %v1406, %v1405
      %v1426 = vpack.c.bf16 %v1408, %v1407
      %v1427 = vpack.c.bf16 %v1410, %v1409
      %v1428 = vpack.c.bf16 %v1412, %v1411
      %1429 = vst [vmem:[#allocation3 + $0x30] sm:$0xff] %v1413
      %1430 = vst [vmem:[#allocation3 + $0x78] sm:$0xff] %v1414
      %1431 = vst [vmem:[#allocation3 + $0xc0] sm:$0xff] %v1415
      %1432 = vst [vmem:[#allocation3 + $0x108] sm:$0xff] %v1416
      %1433 = vst [vmem:[#allocation3 + $0x150] sm:$0xff] %v1417
      %1434 = vst [vmem:[#allocation3 + $0x198] sm:$0xff] %v1418
      %1435 = vst [vmem:[#allocation3 + $0x1e0] sm:$0xff] %v1419
      %1436 = vst [vmem:[#allocation3 + $0x228] sm:$0xff] %v1420
      %1437 = vst [vmem:[#allocation3 + $0x270] sm:$0xff] %v1421
      %1438 = vst [vmem:[#allocation3 + $0x2b8] sm:$0xff] %v1422
      %1439 = vst [vmem:[#allocation3 + $0x300] sm:$0xff] %v1423
      %1440 = vst [vmem:[#allocation3 + $0x348] sm:$0xff] %v1424
      %1441 = vst [vmem:[#allocation3 + $0x390] sm:$0xff] %v1425
      %1442 = vst [vmem:[#allocation3 + $0x3d8] sm:$0xff] %v1426
      %1443 = vst [vmem:[#allocation3 + $0x420] sm:$0xff] %v1427
      %1444 = vst [vmem:[#allocation3 + $0x468] sm:$0xff] %v1428
      %v1445 = vld [vmem:[%s1380 + $0x8] sm:$0xff]
      %v1446 = vld [vmem:[%s1380 + $0x10] sm:$0xff]
      %v1447 = vld [vmem:[%s1380 + $0x28] sm:$0xff]
      %v1448 = vld [vmem:[%s1380 + $0x30] sm:$0xff]
      %v1449 = vld [vmem:[%s1380 + $0x48] sm:$0xff]
      %v1450 = vld [vmem:[%s1380 + $0x50] sm:$0xff]
      %v1451 = vld [vmem:[%s1380 + $0x68] sm:$0xff]
      %v1452 = vld [vmem:[%s1380 + $0x70] sm:$0xff]
      %v1453 = vld [vmem:[%s1380 + $0x88] sm:$0xff]
      %v1454 = vld [vmem:[%s1380 + $0x90] sm:$0xff]
      %v1455 = vld [vmem:[%s1380 + $0xa8] sm:$0xff]
      %v1456 = vld [vmem:[%s1380 + $0xb0] sm:$0xff]
      %v1457 = vld [vmem:[%s1380 + $0xc8] sm:$0xff]
      %v1458 = vld [vmem:[%s1380 + $0xd0] sm:$0xff]
      %v1459 = vld [vmem:[%s1380 + $0xe8] sm:$0xff]
      %v1460 = vld [vmem:[%s1380 + $0xf0] sm:$0xff]
      %v1461 = vld [vmem:[%s1380 + $0x108] sm:$0xff]
      %v1462 = vld [vmem:[%s1380 + $0x110] sm:$0xff]
      %v1463 = vld [vmem:[%s1380 + $0x128] sm:$0xff]
      %v1464 = vld [vmem:[%s1380 + $0x130] sm:$0xff]
      %v1465 = vld [vmem:[%s1380 + $0x148] sm:$0xff]
      %v1466 = vld [vmem:[%s1380 + $0x150] sm:$0xff]
      %v1467 = vld [vmem:[%s1380 + $0x168] sm:$0xff]
      %v1468 = vld [vmem:[%s1380 + $0x170] sm:$0xff]
      %v1469 = vld [vmem:[%s1380 + $0x188] sm:$0xff]
      %v1470 = vld [vmem:[%s1380 + $0x190] sm:$0xff]
      %v1471 = vld [vmem:[%s1380 + $0x1a8] sm:$0xff]
      %v1472 = vld [vmem:[%s1380 + $0x1b0] sm:$0xff]
      %v1473 = vld [vmem:[%s1380 + $0x1c8] sm:$0xff]
      %v1474 = vld [vmem:[%s1380 + $0x1d0] sm:$0xff]
      %v1475 = vld [vmem:[%s1380 + $0x1e8] sm:$0xff]
      %v1476 = vld [vmem:[%s1380 + $0x1f0] sm:$0xff]
      %v1477 = vpack.c.bf16 %v1446, %v1445
      %v1478 = vpack.c.bf16 %v1448, %v1447
      %v1479 = vpack.c.bf16 %v1450, %v1449
      %v1480 = vpack.c.bf16 %v1452, %v1451
      %v1481 = vpack.c.bf16 %v1454, %v1453
      %v1482 = vpack.c.bf16 %v1456, %v1455
      %v1483 = vpack.c.bf16 %v1458, %v1457
      %v1484 = vpack.c.bf16 %v1460, %v1459
      %v1485 = vpack.c.bf16 %v1462, %v1461
      %v1486 = vpack.c.bf16 %v1464, %v1463
      %v1487 = vpack.c.bf16 %v1466, %v1465
      %v1488 = vpack.c.bf16 %v1468, %v1467
      %v1489 = vpack.c.bf16 %v1470, %v1469
      %v1490 = vpack.c.bf16 %v1472, %v1471
      %v1491 = vpack.c.bf16 %v1474, %v1473
      %v1492 = vpack.c.bf16 %v1476, %v1475
      %1493 = vst [vmem:[#allocation3 + $0x38] sm:$0xff] %v1477
      %1494 = vst [vmem:[#allocation3 + $0x80] sm:$0xff] %v1478
      %1495 = vst [vmem:[#allocation3 + $0xc8] sm:$0xff] %v1479
      %1496 = vst [vmem:[#allocation3 + $0x110] sm:$0xff] %v1480
      %1497 = vst [vmem:[#allocation3 + $0x158] sm:$0xff] %v1481
      %1498 = vst [vmem:[#allocation3 + $0x1a0] sm:$0xff] %v1482
      %1499 = vst [vmem:[#allocation3 + $0x1e8] sm:$0xff] %v1483
      %1500 = vst [vmem:[#allocation3 + $0x230] sm:$0xff] %v1484
      %1501 = vst [vmem:[#allocation3 + $0x278] sm:$0xff] %v1485
      %1502 = vst [vmem:[#allocation3 + $0x2c0] sm:$0xff] %v1486
      %1503 = vst [vmem:[#allocation3 + $0x308] sm:$0xff] %v1487
      %1504 = vst [vmem:[#allocation3 + $0x350] sm:$0xff] %v1488
      %1505 = vst [vmem:[#allocation3 + $0x398] sm:$0xff] %v1489
      %1506 = vst [vmem:[#allocation3 + $0x3e0] sm:$0xff] %v1490
      %1507 = vst [vmem:[#allocation3 + $0x428] sm:$0xff] %v1491
      %1508 = vst [vmem:[#allocation3 + $0x470] sm:$0xff] %v1492
      %v1509 = vld [vmem:[%s1380 + $0x9] sm:$0xff]
      %v1510 = vld [vmem:[%s1380 + $0x11] sm:$0xff]
      %v1511 = vld [vmem:[%s1380 + $0x29] sm:$0xff]
      %v1512 = vld [vmem:[%s1380 + $0x31] sm:$0xff]
      %v1513 = vld [vmem:[%s1380 + $0x49] sm:$0xff]
      %v1514 = vld [vmem:[%s1380 + $0x51] sm:$0xff]
      %v1515 = vld [vmem:[%s1380 + $0x69] sm:$0xff]
      %v1516 = vld [vmem:[%s1380 + $0x71] sm:$0xff]
      %v1517 = vld [vmem:[%s1380 + $0x89] sm:$0xff]
      %v1518 = vld [vmem:[%s1380 + $0x91] sm:$0xff]
      %v1519 = vld [vmem:[%s1380 + $0xa9] sm:$0xff]
      %v1520 = vld [vmem:[%s1380 + $0xb1] sm:$0xff]
      %v1521 = vld [vmem:[%s1380 + $0xc9] sm:$0xff]
      %v1522 = vld [vmem:[%s1380 + $0xd1] sm:$0xff]
      %v1523 = vld [vmem:[%s1380 + $0xe9] sm:$0xff]
      %v1524 = vld [vmem:[%s1380 + $0xf1] sm:$0xff]
      %v1525 = vld [vmem:[%s1380 + $0x109] sm:$0xff]
      %v1526 = vld [vmem:[%s1380 + $0x111] sm:$0xff]
      %v1527 = vld [vmem:[%s1380 + $0x129] sm:$0xff]
      %v1528 = vld [vmem:[%s1380 + $0x131] sm:$0xff]
      %v1529 = vld [vmem:[%s1380 + $0x149] sm:$0xff]
      %v1530 = vld [vmem:[%s1380 + $0x151] sm:$0xff]
      %v1531 = vld [vmem:[%s1380 + $0x169] sm:$0xff]
      %v1532 = vld [vmem:[%s1380 + $0x171] sm:$0xff]
      %v1533 = vld [vmem:[%s1380 + $0x189] sm:$0xff]
      %v1534 = vld [vmem:[%s1380 + $0x191] sm:$0xff]
      %v1535 = vld [vmem:[%s1380 + $0x1a9] sm:$0xff]
      %v1536 = vld [vmem:[%s1380 + $0x1b1] sm:$0xff]
      %v1537 = vld [vmem:[%s1380 + $0x1c9] sm:$0xff]
      %v1538 = vld [vmem:[%s1380 + $0x1d1] sm:$0xff]
      %v1539 = vld [vmem:[%s1380 + $0x1e9] sm:$0xff]
      %v1540 = vld [vmem:[%s1380 + $0x1f1] sm:$0xff]
      %v1541 = vpack.c.bf16 %v1510, %v1509
      %v1542 = vpack.c.bf16 %v1512, %v1511
      %v1543 = vpack.c.bf16 %v1514, %v1513
      %v1544 = vpack.c.bf16 %v1516, %v1515
      %v1545 = vpack.c.bf16 %v1518, %v1517
      %v1546 = vpack.c.bf16 %v1520, %v1519
      %v1547 = vpack.c.bf16 %v1522, %v1521
      %v1548 = vpack.c.bf16 %v1524, %v1523
      %v1549 = vpack.c.bf16 %v1526, %v1525
      %v1550 = vpack.c.bf16 %v1528, %v1527
      %v1551 = vpack.c.bf16 %v1530, %v1529
      %v1552 = vpack.c.bf16 %v1532, %v1531
      %v1553 = vpack.c.bf16 %v1534, %v1533
      %v1554 = vpack.c.bf16 %v1536, %v1535
      %v1555 = vpack.c.bf16 %v1538, %v1537
      %v1556 = vpack.c.bf16 %v1540, %v1539
      %1557 = vst [vmem:[#allocation3 + $0x40] sm:$0xff] %v1541
      %1558 = vst [vmem:[#allocation3 + $0x88] sm:$0xff] %v1542
      %1559 = vst [vmem:[#allocation3 + $0xd0] sm:$0xff] %v1543
      %1560 = vst [vmem:[#allocation3 + $0x118] sm:$0xff] %v1544
      %1561 = vst [vmem:[#allocation3 + $0x160] sm:$0xff] %v1545
      %1562 = vst [vmem:[#allocation3 + $0x1a8] sm:$0xff] %v1546
      %1563 = vst [vmem:[#allocation3 + $0x1f0] sm:$0xff] %v1547
      %1564 = vst [vmem:[#allocation3 + $0x238] sm:$0xff] %v1548
      %1565 = vst [vmem:[#allocation3 + $0x280] sm:$0xff] %v1549
      %1566 = vst [vmem:[#allocation3 + $0x2c8] sm:$0xff] %v1550
      %1567 = vst [vmem:[#allocation3 + $0x310] sm:$0xff] %v1551
      %1568 = vst [vmem:[#allocation3 + $0x358] sm:$0xff] %v1552
      %1569 = vst [vmem:[#allocation3 + $0x3a0] sm:$0xff] %v1553
      %1570 = vst [vmem:[#allocation3 + $0x3e8] sm:$0xff] %v1554
      %1571 = vst [vmem:[#allocation3 + $0x430] sm:$0xff] %v1555
      %1572 = vst [vmem:[#allocation3 + $0x478] sm:$0xff] %v1556
      %v1573 = vld [vmem:[#allocation3] sm:$0xff]
      %v1574 = vld [vmem:[#allocation3 + $0x8] sm:$0xff]
      %v1575 = vld [vmem:[#allocation3 + $0x10] sm:$0xff]
      %v1576 = vld [vmem:[#allocation3 + $0x18] sm:$0xff]
      %v1577 = vld [vmem:[#allocation3 + $0x20] sm:$0xff]
      %v1578 = vld [vmem:[#allocation3 + $0x28] sm:$0xff]
      %v1579 = vld [vmem:[#allocation3 + $0x30] sm:$0xff]
      %v1580 = vld [vmem:[#allocation3 + $0x38] sm:$0xff]
      %v1581 = vld [vmem:[#allocation3 + $0x40] sm:$0xff]
      %v1582 = vld [vmem:[#allocation3 + $0x48] sm:$0xff]
      %v1583 = vld [vmem:[#allocation3 + $0x50] sm:$0xff]
      %v1584 = vld [vmem:[#allocation3 + $0x58] sm:$0xff]
      %v1585 = vld [vmem:[#allocation3 + $0x60] sm:$0xff]
      %v1586 = vld [vmem:[#allocation3 + $0x68] sm:$0xff]
      %v1587 = vld [vmem:[#allocation3 + $0x70] sm:$0xff]
      %v1588 = vld [vmem:[#allocation3 + $0x78] sm:$0xff]
      %v1589 = vld [vmem:[#allocation3 + $0x80] sm:$0xff]
      %v1590 = vld [vmem:[#allocation3 + $0x88] sm:$0xff]
      %v1591 = vld [vmem:[#allocation3 + $0x90] sm:$0xff]
      %v1592 = vld [vmem:[#allocation3 + $0x98] sm:$0xff]
      %v1593 = vld [vmem:[#allocation3 + $0xa0] sm:$0xff]
      %v1594 = vld [vmem:[#allocation3 + $0xa8] sm:$0xff]
      %v1595 = vld [vmem:[#allocation3 + $0xb0] sm:$0xff]
      %v1596 = vld [vmem:[#allocation3 + $0xb8] sm:$0xff]
      %v1597 = vld [vmem:[#allocation3 + $0xc0] sm:$0xff]
      %v1598 = vld [vmem:[#allocation3 + $0xc8] sm:$0xff]
      %v1599 = vld [vmem:[#allocation3 + $0xd0] sm:$0xff]
      %v1600 = vld [vmem:[#allocation3 + $0xd8] sm:$0xff]
      %v1601 = vld [vmem:[#allocation3 + $0xe0] sm:$0xff]
      %v1602 = vld [vmem:[#allocation3 + $0xe8] sm:$0xff]
      %v1603 = vld [vmem:[#allocation3 + $0xf0] sm:$0xff]
      %v1604 = vld [vmem:[#allocation3 + $0xf8] sm:$0xff]
      %v1605 = vld [vmem:[#allocation3 + $0x100] sm:$0xff]
      %v1606 = vld [vmem:[#allocation3 + $0x108] sm:$0xff]
      %v1607 = vld [vmem:[#allocation3 + $0x110] sm:$0xff]
      %v1608 = vld [vmem:[#allocation3 + $0x118] sm:$0xff]
      %v1609 = vld [vmem:[#allocation3 + $0x120] sm:$0xff]
      %v1610 = vld [vmem:[#allocation3 + $0x128] sm:$0xff]
      %v1611 = vld [vmem:[#allocation3 + $0x130] sm:$0xff]
      %v1612 = vld [vmem:[#allocation3 + $0x138] sm:$0xff]
      %v1613 = vld [vmem:[#allocation3 + $0x140] sm:$0xff]
      %v1614 = vld [vmem:[#allocation3 + $0x148] sm:$0xff]
      %v1615 = vld [vmem:[#allocation3 + $0x150] sm:$0xff]
      %v1616 = vld [vmem:[#allocation3 + $0x158] sm:$0xff]
      %v1617 = vld [vmem:[#allocation3 + $0x160] sm:$0xff]
      %v1618 = vld [vmem:[#allocation3 + $0x168] sm:$0xff]
      %v1619 = vld [vmem:[#allocation3 + $0x170] sm:$0xff]
      %v1620 = vld [vmem:[#allocation3 + $0x178] sm:$0xff]
      %v1621 = vld [vmem:[#allocation3 + $0x180] sm:$0xff]
      %v1622 = vld [vmem:[#allocation3 + $0x188] sm:$0xff]
      %v1623 = vld [vmem:[#allocation3 + $0x190] sm:$0xff]
      %v1624 = vld [vmem:[#allocation3 + $0x198] sm:$0xff]
      %v1625 = vld [vmem:[#allocation3 + $0x1a0] sm:$0xff]
      %v1626 = vld [vmem:[#allocation3 + $0x1a8] sm:$0xff]
      %v1627 = vld [vmem:[#allocation3 + $0x1b0] sm:$0xff]
      %v1628 = vld [vmem:[#allocation3 + $0x1b8] sm:$0xff]
      %v1629 = vld [vmem:[#allocation3 + $0x1c0] sm:$0xff]
      %v1630 = vld [vmem:[#allocation3 + $0x1c8] sm:$0xff]
      %v1631 = vld [vmem:[#allocation3 + $0x1d0] sm:$0xff]
      %v1632 = vld [vmem:[#allocation3 + $0x1d8] sm:$0xff]
      %v1633 = vld [vmem:[#allocation3 + $0x1e0] sm:$0xff]
      %v1634 = vld [vmem:[#allocation3 + $0x1e8] sm:$0xff]
      %v1635 = vld [vmem:[#allocation3 + $0x1f0] sm:$0xff]
      %v1636 = vld [vmem:[#allocation3 + $0x1f8] sm:$0xff]
      %v1637 = vld [vmem:[#allocation3 + $0x200] sm:$0xff]
      %v1638 = vld [vmem:[#allocation3 + $0x208] sm:$0xff]
      %v1639 = vld [vmem:[#allocation3 + $0x210] sm:$0xff]
      %v1640 = vld [vmem:[#allocation3 + $0x218] sm:$0xff]
      %v1641 = vld [vmem:[#allocation3 + $0x220] sm:$0xff]
      %v1642 = vld [vmem:[#allocation3 + $0x228] sm:$0xff]
      %v1643 = vld [vmem:[#allocation3 + $0x230] sm:$0xff]
      %v1644 = vld [vmem:[#allocation3 + $0x238] sm:$0xff]
      %v1645 = vld [vmem:[#allocation3 + $0x240] sm:$0xff]
      %v1646 = vld [vmem:[#allocation3 + $0x248] sm:$0xff]
      %v1647 = vld [vmem:[#allocation3 + $0x250] sm:$0xff]
      %v1648 = vld [vmem:[#allocation3 + $0x258] sm:$0xff]
      %v1649 = vld [vmem:[#allocation3 + $0x260] sm:$0xff]
      %v1650 = vld [vmem:[#allocation3 + $0x268] sm:$0xff]
      %v1651 = vld [vmem:[#allocation3 + $0x270] sm:$0xff]
      %v1652 = vld [vmem:[#allocation3 + $0x278] sm:$0xff]
      %v1653 = vld [vmem:[#allocation3 + $0x280] sm:$0xff]
      %v1654 = vld [vmem:[#allocation3 + $0x288] sm:$0xff]
      %v1655 = vld [vmem:[#allocation3 + $0x290] sm:$0xff]
      %v1656 = vld [vmem:[#allocation3 + $0x298] sm:$0xff]
      %v1657 = vld [vmem:[#allocation3 + $0x2a0] sm:$0xff]
      %v1658 = vld [vmem:[#allocation3 + $0x2a8] sm:$0xff]
      %v1659 = vld [vmem:[#allocation3 + $0x2b0] sm:$0xff]
      %v1660 = vld [vmem:[#allocation3 + $0x2b8] sm:$0xff]
      %v1661 = vld [vmem:[#allocation3 + $0x2c0] sm:$0xff]
      %v1662 = vld [vmem:[#allocation3 + $0x2c8] sm:$0xff]
      %v1663 = vld [vmem:[#allocation3 + $0x2d0] sm:$0xff]
      %v1664 = vld [vmem:[#allocation3 + $0x2d8] sm:$0xff]
      %v1665 = vld [vmem:[#allocation3 + $0x2e0] sm:$0xff]
      %v1666 = vld [vmem:[#allocation3 + $0x2e8] sm:$0xff]
      %v1667 = vld [vmem:[#allocation3 + $0x2f0] sm:$0xff]
      %v1668 = vld [vmem:[#allocation3 + $0x2f8] sm:$0xff]
      %v1669 = vld [vmem:[#allocation3 + $0x300] sm:$0xff]
      %v1670 = vld [vmem:[#allocation3 + $0x308] sm:$0xff]
      %v1671 = vld [vmem:[#allocation3 + $0x310] sm:$0xff]
      %v1672 = vld [vmem:[#allocation3 + $0x318] sm:$0xff]
      %v1673 = vld [vmem:[#allocation3 + $0x320] sm:$0xff]
      %v1674 = vld [vmem:[#allocation3 + $0x328] sm:$0xff]
      %v1675 = vld [vmem:[#allocation3 + $0x330] sm:$0xff]
      %v1676 = vld [vmem:[#allocation3 + $0x338] sm:$0xff]
      %v1677 = vld [vmem:[#allocation3 + $0x340] sm:$0xff]
      %v1678 = vld [vmem:[#allocation3 + $0x348] sm:$0xff]
      %v1679 = vld [vmem:[#allocation3 + $0x350] sm:$0xff]
      %v1680 = vld [vmem:[#allocation3 + $0x358] sm:$0xff]
      %v1681 = vld [vmem:[#allocation3 + $0x360] sm:$0xff]
      %v1682 = vld [vmem:[#allocation3 + $0x368] sm:$0xff]
      %v1683 = vld [vmem:[#allocation3 + $0x370] sm:$0xff]
      %v1684 = vld [vmem:[#allocation3 + $0x378] sm:$0xff]
      %v1685 = vld [vmem:[#allocation3 + $0x380] sm:$0xff]
      %v1686 = vld [vmem:[#allocation3 + $0x388] sm:$0xff]
      %v1687 = vld [vmem:[#allocation3 + $0x390] sm:$0xff]
      %v1688 = vld [vmem:[#allocation3 + $0x398] sm:$0xff]
      %v1689 = vld [vmem:[#allocation3 + $0x3a0] sm:$0xff]
      %v1690 = vld [vmem:[#allocation3 + $0x3a8] sm:$0xff]
      %v1691 = vld [vmem:[#allocation3 + $0x3b0] sm:$0xff]
      %v1692 = vld [vmem:[#allocation3 + $0x3b8] sm:$0xff]
      %v1693 = vld [vmem:[#allocation3 + $0x3c0] sm:$0xff]
      %v1694 = vld [vmem:[#allocation3 + $0x3c8] sm:$0xff]
      %v1695 = vld [vmem:[#allocation3 + $0x3d0] sm:$0xff]
      %v1696 = vld [vmem:[#allocation3 + $0x3d8] sm:$0xff]
      %v1697 = vld [vmem:[#allocation3 + $0x3e0] sm:$0xff]
      %v1698 = vld [vmem:[#allocation3 + $0x3e8] sm:$0xff]
      %v1699 = vld [vmem:[#allocation3 + $0x3f0] sm:$0xff]
      %v1700 = vld [vmem:[#allocation3 + $0x3f8] sm:$0xff]
      %v1701 = vld [vmem:[#allocation3 + $0x400] sm:$0xff]
      %v1702 = vld [vmem:[#allocation3 + $0x408] sm:$0xff]
      %v1703 = vld [vmem:[#allocation3 + $0x410] sm:$0xff]
      %v1704 = vld [vmem:[#allocation3 + $0x418] sm:$0xff]
      %v1705 = vld [vmem:[#allocation3 + $0x420] sm:$0xff]
      %v1706 = vld [vmem:[#allocation3 + $0x428] sm:$0xff]
      %v1707 = vld [vmem:[#allocation3 + $0x430] sm:$0xff]
      %v1708 = vld [vmem:[#allocation3 + $0x438] sm:$0xff]
      %v1709 = vld [vmem:[#allocation3 + $0x440] sm:$0xff]
      %v1710 = vld [vmem:[#allocation3 + $0x448] sm:$0xff]
      %v1711 = vld [vmem:[#allocation3 + $0x450] sm:$0xff]
      %v1712 = vld [vmem:[#allocation3 + $0x458] sm:$0xff]
      %v1713 = vld [vmem:[#allocation3 + $0x460] sm:$0xff]
      %v1714 = vld [vmem:[#allocation3 + $0x468] sm:$0xff]
      %v1715 = vld [vmem:[#allocation3 + $0x470] sm:$0xff]
      %v1716 = vld [vmem:[#allocation3 + $0x478] sm:$0xff]
      %v1717 = vld [vmem:[%s5] sm:$0xff]
      %v1718 = vld [vmem:[%s5 + $0x8] sm:$0xff]
      %v1719 = vld [vmem:[%s5 + $0x10] sm:$0xff]
      %v1720 = vld [vmem:[%s5 + $0x18] sm:$0xff]
      %v1721 = vld [vmem:[%s5 + $0x20] sm:$0xff]
      %v1722 = vld [vmem:[%s5 + $0x28] sm:$0xff]
      %v1723 = vld [vmem:[%s5 + $0x30] sm:$0xff]
      %v1724 = vld [vmem:[%s5 + $0x38] sm:$0xff]
      %v1725 = vld [vmem:[%s5 + $0x40] sm:$0xff]
      %v1726 = vld [vmem:[%s5 + $0x48] sm:$0xff]
      %v1727 = vld [vmem:[%s5 + $0x50] sm:$0xff]
      %v1728 = vld [vmem:[%s5 + $0x58] sm:$0xff]
      %v1729 = vld [vmem:[%s5 + $0x60] sm:$0xff]
      %v1730 = vld [vmem:[%s5 + $0x68] sm:$0xff]
      %v1731 = vld [vmem:[%s5 + $0x70] sm:$0xff]
      %v1732 = vld [vmem:[%s5 + $0x78] sm:$0xff]
      %v1733 = vld [vmem:[%s5 + $0x80] sm:$0xff]
      %v1734 = vld [vmem:[%s5 + $0x88] sm:$0xff]
      %v1735 = vld [vmem:[%s5 + $0x90] sm:$0xff]
      %v1736 = vld [vmem:[%s5 + $0x98] sm:$0xff]
      %v1737 = vld [vmem:[%s5 + $0xa0] sm:$0xff]
      %v1738 = vld [vmem:[%s5 + $0xa8] sm:$0xff]
      %v1739 = vld [vmem:[%s5 + $0xb0] sm:$0xff]
      %v1740 = vld [vmem:[%s5 + $0xb8] sm:$0xff]
      %v1741 = vld [vmem:[%s5 + $0xc0] sm:$0xff]
      %v1742 = vld [vmem:[%s5 + $0xc8] sm:$0xff]
      %v1743 = vld [vmem:[%s5 + $0xd0] sm:$0xff]
      %v1744 = vld [vmem:[%s5 + $0xd8] sm:$0xff]
      %v1745 = vld [vmem:[%s5 + $0xe0] sm:$0xff]
      %v1746 = vld [vmem:[%s5 + $0xe8] sm:$0xff]
      %v1747 = vld [vmem:[%s5 + $0xf0] sm:$0xff]
      %v1748 = vld [vmem:[%s5 + $0xf8] sm:$0xff]
      %v1749 = vld [vmem:[%s5 + $0x100] sm:$0xff]
      %v1750 = vld [vmem:[%s5 + $0x108] sm:$0xff]
      %v1751 = vld [vmem:[%s5 + $0x110] sm:$0xff]
      %v1752 = vld [vmem:[%s5 + $0x118] sm:$0xff]
      %v1753 = vld [vmem:[%s5 + $0x120] sm:$0xff]
      %v1754 = vld [vmem:[%s5 + $0x128] sm:$0xff]
      %v1755 = vld [vmem:[%s5 + $0x130] sm:$0xff]
      %v1756 = vld [vmem:[%s5 + $0x138] sm:$0xff]
      %v1757 = vld [vmem:[%s5 + $0x140] sm:$0xff]
      %v1758 = vld [vmem:[%s5 + $0x148] sm:$0xff]
      %v1759 = vld [vmem:[%s5 + $0x150] sm:$0xff]
      %v1760 = vld [vmem:[%s5 + $0x158] sm:$0xff]
      %v1761 = vld [vmem:[%s5 + $0x160] sm:$0xff]
      %v1762 = vld [vmem:[%s5 + $0x168] sm:$0xff]
      %v1763 = vld [vmem:[%s5 + $0x170] sm:$0xff]
      %v1764 = vld [vmem:[%s5 + $0x178] sm:$0xff]
      %v1765 = vld [vmem:[%s5 + $0x180] sm:$0xff]
      %v1766 = vld [vmem:[%s5 + $0x188] sm:$0xff]
      %v1767 = vld [vmem:[%s5 + $0x190] sm:$0xff]
      %v1768 = vld [vmem:[%s5 + $0x198] sm:$0xff]
      %v1769 = vld [vmem:[%s5 + $0x1a0] sm:$0xff]
      %v1770 = vld [vmem:[%s5 + $0x1a8] sm:$0xff]
      %v1771 = vld [vmem:[%s5 + $0x1b0] sm:$0xff]
      %v1772 = vld [vmem:[%s5 + $0x1b8] sm:$0xff]
      %v1773 = vld [vmem:[%s5 + $0x1c0] sm:$0xff]
      %v1774 = vld [vmem:[%s5 + $0x1c8] sm:$0xff]
      %v1775 = vld [vmem:[%s5 + $0x1d0] sm:$0xff]
      %v1776 = vld [vmem:[%s5 + $0x1d8] sm:$0xff]
      %v1777 = vld [vmem:[%s5 + $0x1e0] sm:$0xff]
      %v1778 = vld [vmem:[%s5 + $0x1e8] sm:$0xff]
      %v1779 = vld [vmem:[%s5 + $0x1f0] sm:$0xff]
      %v1780 = vld [vmem:[%s5 + $0x1f8] sm:$0xff]
      %v1781 = vld [vmem:[%s5 + $0x200] sm:$0xff]
      %v1782 = vld [vmem:[%s5 + $0x208] sm:$0xff]
      %v1783 = vld [vmem:[%s5 + $0x210] sm:$0xff]
      %v1784 = vld [vmem:[%s5 + $0x218] sm:$0xff]
      %v1785 = vld [vmem:[%s5 + $0x220] sm:$0xff]
      %v1786 = vld [vmem:[%s5 + $0x228] sm:$0xff]
      %v1787 = vld [vmem:[%s5 + $0x230] sm:$0xff]
      %v1788 = vld [vmem:[%s5 + $0x238] sm:$0xff]
      %v1789 = vld [vmem:[%s5 + $0x240] sm:$0xff]
      %v1790 = vld [vmem:[%s5 + $0x248] sm:$0xff]
      %v1791 = vld [vmem:[%s5 + $0x250] sm:$0xff]
      %v1792 = vld [vmem:[%s5 + $0x258] sm:$0xff]
      %v1793 = vld [vmem:[%s5 + $0x260] sm:$0xff]
      %v1794 = vld [vmem:[%s5 + $0x268] sm:$0xff]
      %v1795 = vld [vmem:[%s5 + $0x270] sm:$0xff]
      %v1796 = vld [vmem:[%s5 + $0x278] sm:$0xff]
      %v1797 = vld [vmem:[%s5 + $0x280] sm:$0xff]
      %v1798 = vld [vmem:[%s5 + $0x288] sm:$0xff]
      %v1799 = vld [vmem:[%s5 + $0x290] sm:$0xff]
      %v1800 = vld [vmem:[%s5 + $0x298] sm:$0xff]
      %v1801 = vld [vmem:[%s5 + $0x2a0] sm:$0xff]
      %v1802 = vld [vmem:[%s5 + $0x2a8] sm:$0xff]
      %v1803 = vld [vmem:[%s5 + $0x2b0] sm:$0xff]
      %v1804 = vld [vmem:[%s5 + $0x2b8] sm:$0xff]
      %v1805 = vld [vmem:[%s5 + $0x2c0] sm:$0xff]
      %v1806 = vld [vmem:[%s5 + $0x2c8] sm:$0xff]
      %v1807 = vld [vmem:[%s5 + $0x2d0] sm:$0xff]
      %v1808 = vld [vmem:[%s5 + $0x2d8] sm:$0xff]
      %v1809 = vld [vmem:[%s5 + $0x2e0] sm:$0xff]
      %v1810 = vld [vmem:[%s5 + $0x2e8] sm:$0xff]
      %v1811 = vld [vmem:[%s5 + $0x2f0] sm:$0xff]
      %v1812 = vld [vmem:[%s5 + $0x2f8] sm:$0xff]
      %v1813 = vld [vmem:[%s5 + $0x300] sm:$0xff]
      %v1814 = vld [vmem:[%s5 + $0x308] sm:$0xff]
      %v1815 = vld [vmem:[%s5 + $0x310] sm:$0xff]
      %v1816 = vld [vmem:[%s5 + $0x318] sm:$0xff]
      %v1817 = vld [vmem:[%s5 + $0x320] sm:$0xff]
      %v1818 = vld [vmem:[%s5 + $0x328] sm:$0xff]
      %v1819 = vld [vmem:[%s5 + $0x330] sm:$0xff]
      %v1820 = vld [vmem:[%s5 + $0x338] sm:$0xff]
      %v1821 = vld [vmem:[%s5 + $0x340] sm:$0xff]
      %v1822 = vld [vmem:[%s5 + $0x348] sm:$0xff]
      %v1823 = vld [vmem:[%s5 + $0x350] sm:$0xff]
      %v1824 = vld [vmem:[%s5 + $0x358] sm:$0xff]
      %v1825 = vld [vmem:[%s5 + $0x360] sm:$0xff]
      %v1826 = vld [vmem:[%s5 + $0x368] sm:$0xff]
      %v1827 = vld [vmem:[%s5 + $0x370] sm:$0xff]
      %v1828 = vld [vmem:[%s5 + $0x378] sm:$0xff]
      %v1829 = vld [vmem:[%s5 + $0x380] sm:$0xff]
      %v1830 = vld [vmem:[%s5 + $0x388] sm:$0xff]
      %v1831 = vld [vmem:[%s5 + $0x390] sm:$0xff]
      %v1832 = vld [vmem:[%s5 + $0x398] sm:$0xff]
      %v1833 = vld [vmem:[%s5 + $0x3a0] sm:$0xff]
      %v1834 = vld [vmem:[%s5 + $0x3a8] sm:$0xff]
      %v1835 = vld [vmem:[%s5 + $0x3b0] sm:$0xff]
      %v1836 = vld [vmem:[%s5 + $0x3b8] sm:$0xff]
      %v1837 = vld [vmem:[%s5 + $0x3c0] sm:$0xff]
      %v1838 = vld [vmem:[%s5 + $0x3c8] sm:$0xff]
      %v1839 = vld [vmem:[%s5 + $0x3d0] sm:$0xff]
      %v1840 = vld [vmem:[%s5 + $0x3d8] sm:$0xff]
      %v1841 = vld [vmem:[%s5 + $0x3e0] sm:$0xff]
      %v1842 = vld [vmem:[%s5 + $0x3e8] sm:$0xff]
      %v1843 = vld [vmem:[%s5 + $0x3f0] sm:$0xff]
      %v1844 = vld [vmem:[%s5 + $0x3f8] sm:$0xff]
      %v1845 = vld [vmem:[%s5 + $0x400] sm:$0xff]
      %v1846 = vld [vmem:[%s5 + $0x408] sm:$0xff]
      %v1847 = vld [vmem:[%s5 + $0x410] sm:$0xff]
      %v1848 = vld [vmem:[%s5 + $0x418] sm:$0xff]
      %v1849 = vld [vmem:[%s5 + $0x420] sm:$0xff]
      %v1850 = vld [vmem:[%s5 + $0x428] sm:$0xff]
      %v1851 = vld [vmem:[%s5 + $0x430] sm:$0xff]
      %v1852 = vld [vmem:[%s5 + $0x438] sm:$0xff]
      %v1853 = vld [vmem:[%s5 + $0x440] sm:$0xff]
      %v1854 = vld [vmem:[%s5 + $0x448] sm:$0xff]
      %v1855 = vld [vmem:[%s5 + $0x450] sm:$0xff]
      %v1856 = vld [vmem:[%s5 + $0x458] sm:$0xff]
      %v1857 = vld [vmem:[%s5 + $0x460] sm:$0xff]
      %v1858 = vld [vmem:[%s5 + $0x468] sm:$0xff]
      %v1859 = vld [vmem:[%s5 + $0x470] sm:$0xff]
      %v1860 = vld [vmem:[%s5 + $0x478] sm:$0xff]
      %v1861 = vld [vmem:[%s6] sm:$0x3]
      %v1863 = vlaneseq
      %v1864 = vshrl.u32 %v1863, 7
      %v1865 = vsub.s32 0, %v1864
      %v1866 = vrot.slane %v1861, %v1865
      %v1867 = vlaneseq
      %v1868 = vshrl.u32 %v1867, 7
      %v1869 = vsub.s32 1, %v1868
      %v1870 = vrot.slane %v1861, %v1869
      %v2017 = vunpack.c.l.b16 %v1717
      %v2018 = vunpack.c.h.b16 %v1717
      %v2019 = vunpack.c.l.b16 %v1718
      %v2020 = vunpack.c.h.b16 %v1718
      %v2021 = vunpack.c.l.b16 %v1719
      %v2022 = vunpack.c.h.b16 %v1719
      %v2023 = vunpack.c.l.b16 %v1720
      %v2024 = vunpack.c.h.b16 %v1720
      %v2025 = vunpack.c.l.b16 %v1721
      %v2026 = vunpack.c.h.b16 %v1721
      %v2027 = vunpack.c.l.b16 %v1722
      %v2028 = vunpack.c.h.b16 %v1722
      %v2029 = vunpack.c.l.b16 %v1723
      %v2030 = vunpack.c.h.b16 %v1723
      %v2031 = vunpack.c.l.b16 %v1724
      %v2032 = vunpack.c.h.b16 %v1724
      %v2033 = vunpack.c.l.b16 %v1725
      %v2034 = vunpack.c.h.b16 %v1725
      %v2035 = vunpack.c.l.b16 %v1726
      %v2036 = vunpack.c.h.b16 %v1726
      %v2037 = vunpack.c.l.b16 %v1727
      %v2038 = vunpack.c.h.b16 %v1727
      %v2039 = vunpack.c.l.b16 %v1728
      %v2040 = vunpack.c.h.b16 %v1728
      %v2041 = vunpack.c.l.b16 %v1729
      %v2042 = vunpack.c.h.b16 %v1729
      %v2043 = vunpack.c.l.b16 %v1730
      %v2044 = vunpack.c.h.b16 %v1730
      %v2045 = vunpack.c.l.b16 %v1731
      %v2046 = vunpack.c.h.b16 %v1731
      %v2047 = vunpack.c.l.b16 %v1732
      %v2048 = vunpack.c.h.b16 %v1732
      %v2049 = vunpack.c.l.b16 %v1733
      %v2050 = vunpack.c.h.b16 %v1733
      %v2051 = vunpack.c.l.b16 %v1734
      %v2052 = vunpack.c.h.b16 %v1734
      %v2053 = vunpack.c.l.b16 %v1735
      %v2054 = vunpack.c.h.b16 %v1735
      %v2055 = vunpack.c.l.b16 %v1736
      %v2056 = vunpack.c.h.b16 %v1736
      %v2057 = vunpack.c.l.b16 %v1737
      %v2058 = vunpack.c.h.b16 %v1737
      %v2059 = vunpack.c.l.b16 %v1738
      %v2060 = vunpack.c.h.b16 %v1738
      %v2061 = vunpack.c.l.b16 %v1739
      %v2062 = vunpack.c.h.b16 %v1739
      %v2063 = vunpack.c.l.b16 %v1740
      %v2064 = vunpack.c.h.b16 %v1740
      %v2065 = vunpack.c.l.b16 %v1741
      %v2066 = vunpack.c.h.b16 %v1741
      %v2067 = vunpack.c.l.b16 %v1742
      %v2068 = vunpack.c.h.b16 %v1742
      %v2069 = vunpack.c.l.b16 %v1743
      %v2070 = vunpack.c.h.b16 %v1743
      %v2071 = vunpack.c.l.b16 %v1744
      %v2072 = vunpack.c.h.b16 %v1744
      %v2073 = vunpack.c.l.b16 %v1745
      %v2074 = vunpack.c.h.b16 %v1745
      %v2075 = vunpack.c.l.b16 %v1746
      %v2076 = vunpack.c.h.b16 %v1746
      %v2077 = vunpack.c.l.b16 %v1747
      %v2078 = vunpack.c.h.b16 %v1747
      %v2079 = vunpack.c.l.b16 %v1748
      %v2080 = vunpack.c.h.b16 %v1748
      %v2081 = vunpack.c.l.b16 %v1749
      %v2082 = vunpack.c.h.b16 %v1749
      %v2083 = vunpack.c.l.b16 %v1750
      %v2084 = vunpack.c.h.b16 %v1750
      %v2085 = vunpack.c.l.b16 %v1751
      %v2086 = vunpack.c.h.b16 %v1751
      %v2087 = vunpack.c.l.b16 %v1752
      %v2088 = vunpack.c.h.b16 %v1752
      %v2089 = vunpack.c.l.b16 %v1753
      %v2090 = vunpack.c.h.b16 %v1753
      %v2091 = vunpack.c.l.b16 %v1754
      %v2092 = vunpack.c.h.b16 %v1754
      %v2093 = vunpack.c.l.b16 %v1755
      %v2094 = vunpack.c.h.b16 %v1755
      %v2095 = vunpack.c.l.b16 %v1756
      %v2096 = vunpack.c.h.b16 %v1756
      %v2097 = vunpack.c.l.b16 %v1757
      %v2098 = vunpack.c.h.b16 %v1757
      %v2099 = vunpack.c.l.b16 %v1758
      %v2100 = vunpack.c.h.b16 %v1758
      %v2101 = vunpack.c.l.b16 %v1759
      %v2102 = vunpack.c.h.b16 %v1759
      %v2103 = vunpack.c.l.b16 %v1760
      %v2104 = vunpack.c.h.b16 %v1760
      %v2105 = vunpack.c.l.b16 %v1761
      %v2106 = vunpack.c.h.b16 %v1761
      %v2107 = vunpack.c.l.b16 %v1762
      %v2108 = vunpack.c.h.b16 %v1762
      %v2109 = vunpack.c.l.b16 %v1763
      %v2110 = vunpack.c.h.b16 %v1763
      %v2111 = vunpack.c.l.b16 %v1764
      %v2112 = vunpack.c.h.b16 %v1764
      %v2113 = vunpack.c.l.b16 %v1765
      %v2114 = vunpack.c.h.b16 %v1765
      %v2115 = vunpack.c.l.b16 %v1766
      %v2116 = vunpack.c.h.b16 %v1766
      %v2117 = vunpack.c.l.b16 %v1767
      %v2118 = vunpack.c.h.b16 %v1767
      %v2119 = vunpack.c.l.b16 %v1768
      %v2120 = vunpack.c.h.b16 %v1768
      %v2121 = vunpack.c.l.b16 %v1769
      %v2122 = vunpack.c.h.b16 %v1769
      %v2123 = vunpack.c.l.b16 %v1770
      %v2124 = vunpack.c.h.b16 %v1770
      %v2125 = vunpack.c.l.b16 %v1771
      %v2126 = vunpack.c.h.b16 %v1771
      %v2127 = vunpack.c.l.b16 %v1772
      %v2128 = vunpack.c.h.b16 %v1772
      %v2129 = vunpack.c.l.b16 %v1773
      %v2130 = vunpack.c.h.b16 %v1773
      %v2131 = vunpack.c.l.b16 %v1774
      %v2132 = vunpack.c.h.b16 %v1774
      %v2133 = vunpack.c.l.b16 %v1775
      %v2134 = vunpack.c.h.b16 %v1775
      %v2135 = vunpack.c.l.b16 %v1776
      %v2136 = vunpack.c.h.b16 %v1776
      %v2137 = vunpack.c.l.b16 %v1777
      %v2138 = vunpack.c.h.b16 %v1777
      %v2139 = vunpack.c.l.b16 %v1778
      %v2140 = vunpack.c.h.b16 %v1778
      %v2141 = vunpack.c.l.b16 %v1779
      %v2142 = vunpack.c.h.b16 %v1779
      %v2143 = vunpack.c.l.b16 %v1780
      %v2144 = vunpack.c.h.b16 %v1780
      %v2145 = vunpack.c.l.b16 %v1781
      %v2146 = vunpack.c.h.b16 %v1781
      %v2147 = vunpack.c.l.b16 %v1782
      %v2148 = vunpack.c.h.b16 %v1782
      %v2149 = vunpack.c.l.b16 %v1783
      %v2150 = vunpack.c.h.b16 %v1783
      %v2151 = vunpack.c.l.b16 %v1784
      %v2152 = vunpack.c.h.b16 %v1784
      %v2153 = vunpack.c.l.b16 %v1785
      %v2154 = vunpack.c.h.b16 %v1785
      %v2155 = vunpack.c.l.b16 %v1786
      %v2156 = vunpack.c.h.b16 %v1786
      %v2157 = vunpack.c.l.b16 %v1787
      %v2158 = vunpack.c.h.b16 %v1787
      %v2159 = vunpack.c.l.b16 %v1788
      %v2160 = vunpack.c.h.b16 %v1788
      %v2161 = vunpack.c.l.b16 %v1789
      %v2162 = vunpack.c.h.b16 %v1789
      %v2163 = vunpack.c.l.b16 %v1790
      %v2164 = vunpack.c.h.b16 %v1790
      %v2165 = vunpack.c.l.b16 %v1791
      %v2166 = vunpack.c.h.b16 %v1791
      %v2167 = vunpack.c.l.b16 %v1792
      %v2168 = vunpack.c.h.b16 %v1792
      %v2169 = vunpack.c.l.b16 %v1793
      %v2170 = vunpack.c.h.b16 %v1793
      %v2171 = vunpack.c.l.b16 %v1794
      %v2172 = vunpack.c.h.b16 %v1794
      %v2173 = vunpack.c.l.b16 %v1795
      %v2174 = vunpack.c.h.b16 %v1795
      %v2175 = vunpack.c.l.b16 %v1796
      %v2176 = vunpack.c.h.b16 %v1796
      %v2177 = vunpack.c.l.b16 %v1797
      %v2178 = vunpack.c.h.b16 %v1797
      %v2179 = vunpack.c.l.b16 %v1798
      %v2180 = vunpack.c.h.b16 %v1798
      %v2181 = vunpack.c.l.b16 %v1799
      %v2182 = vunpack.c.h.b16 %v1799
      %v2183 = vunpack.c.l.b16 %v1800
      %v2184 = vunpack.c.h.b16 %v1800
      %v2185 = vunpack.c.l.b16 %v1801
      %v2186 = vunpack.c.h.b16 %v1801
      %v2187 = vunpack.c.l.b16 %v1802
      %v2188 = vunpack.c.h.b16 %v1802
      %v2189 = vunpack.c.l.b16 %v1803
      %v2190 = vunpack.c.h.b16 %v1803
      %v2191 = vunpack.c.l.b16 %v1804
      %v2192 = vunpack.c.h.b16 %v1804
      %v2193 = vunpack.c.l.b16 %v1805
      %v2194 = vunpack.c.h.b16 %v1805
      %v2195 = vunpack.c.l.b16 %v1806
      %v2196 = vunpack.c.h.b16 %v1806
      %v2197 = vunpack.c.l.b16 %v1807
      %v2198 = vunpack.c.h.b16 %v1807
      %v2199 = vunpack.c.l.b16 %v1808
      %v2200 = vunpack.c.h.b16 %v1808
      %v2201 = vunpack.c.l.b16 %v1809
      %v2202 = vunpack.c.h.b16 %v1809
      %v2203 = vunpack.c.l.b16 %v1810
      %v2204 = vunpack.c.h.b16 %v1810
      %v2205 = vunpack.c.l.b16 %v1811
      %v2206 = vunpack.c.h.b16 %v1811
      %v2207 = vunpack.c.l.b16 %v1812
      %v2208 = vunpack.c.h.b16 %v1812
      %v2209 = vunpack.c.l.b16 %v1813
      %v2210 = vunpack.c.h.b16 %v1813
      %v2211 = vunpack.c.l.b16 %v1814
      %v2212 = vunpack.c.h.b16 %v1814
      %v2213 = vunpack.c.l.b16 %v1815
      %v2214 = vunpack.c.h.b16 %v1815
      %v2215 = vunpack.c.l.b16 %v1816
      %v2216 = vunpack.c.h.b16 %v1816
      %v2217 = vunpack.c.l.b16 %v1817
      %v2218 = vunpack.c.h.b16 %v1817
      %v2219 = vunpack.c.l.b16 %v1818
      %v2220 = vunpack.c.h.b16 %v1818
      %v2221 = vunpack.c.l.b16 %v1819
      %v2222 = vunpack.c.h.b16 %v1819
      %v2223 = vunpack.c.l.b16 %v1820
      %v2224 = vunpack.c.h.b16 %v1820
      %v2225 = vunpack.c.l.b16 %v1821
      %v2226 = vunpack.c.h.b16 %v1821
      %v2227 = vunpack.c.l.b16 %v1822
      %v2228 = vunpack.c.h.b16 %v1822
      %v2229 = vunpack.c.l.b16 %v1823
      %v2230 = vunpack.c.h.b16 %v1823
      %v2231 = vunpack.c.l.b16 %v1824
      %v2232 = vunpack.c.h.b16 %v1824
      %v2233 = vunpack.c.l.b16 %v1825
      %v2234 = vunpack.c.h.b16 %v1825
      %v2235 = vunpack.c.l.b16 %v1826
      %v2236 = vunpack.c.h.b16 %v1826
      %v2237 = vunpack.c.l.b16 %v1827
      %v2238 = vunpack.c.h.b16 %v1827
      %v2239 = vunpack.c.l.b16 %v1828
      %v2240 = vunpack.c.h.b16 %v1828
      %v2241 = vunpack.c.l.b16 %v1829
      %v2242 = vunpack.c.h.b16 %v1829
      %v2243 = vunpack.c.l.b16 %v1830
      %v2244 = vunpack.c.h.b16 %v1830
      %v2245 = vunpack.c.l.b16 %v1831
      %v2246 = vunpack.c.h.b16 %v1831
      %v2247 = vunpack.c.l.b16 %v1832
      %v2248 = vunpack.c.h.b16 %v1832
      %v2249 = vunpack.c.l.b16 %v1833
      %v2250 = vunpack.c.h.b16 %v1833
      %v2251 = vunpack.c.l.b16 %v1834
      %v2252 = vunpack.c.h.b16 %v1834
      %v2253 = vunpack.c.l.b16 %v1835
      %v2254 = vunpack.c.h.b16 %v1835
      %v2255 = vunpack.c.l.b16 %v1836
      %v2256 = vunpack.c.h.b16 %v1836
      %v2257 = vunpack.c.l.b16 %v1837
      %v2258 = vunpack.c.h.b16 %v1837
      %v2259 = vunpack.c.l.b16 %v1838
      %v2260 = vunpack.c.h.b16 %v1838
      %v2261 = vunpack.c.l.b16 %v1839
      %v2262 = vunpack.c.h.b16 %v1839
      %v2263 = vunpack.c.l.b16 %v1840
      %v2264 = vunpack.c.h.b16 %v1840
      %v2265 = vunpack.c.l.b16 %v1841
      %v2266 = vunpack.c.h.b16 %v1841
      %v2267 = vunpack.c.l.b16 %v1842
      %v2268 = vunpack.c.h.b16 %v1842
      %v2269 = vunpack.c.l.b16 %v1843
      %v2270 = vunpack.c.h.b16 %v1843
      %v2271 = vunpack.c.l.b16 %v1844
      %v2272 = vunpack.c.h.b16 %v1844
      %v2273 = vunpack.c.l.b16 %v1845
      %v2274 = vunpack.c.h.b16 %v1845
      %v2275 = vunpack.c.l.b16 %v1846
      %v2276 = vunpack.c.h.b16 %v1846
      %v2277 = vunpack.c.l.b16 %v1847
      %v2278 = vunpack.c.h.b16 %v1847
      %v2279 = vunpack.c.l.b16 %v1848
      %v2280 = vunpack.c.h.b16 %v1848
      %v2281 = vunpack.c.l.b16 %v1849
      %v2282 = vunpack.c.h.b16 %v1849
      %v2283 = vunpack.c.l.b16 %v1850
      %v2284 = vunpack.c.h.b16 %v1850
      %v2285 = vunpack.c.l.b16 %v1851
      %v2286 = vunpack.c.h.b16 %v1851
      %v2287 = vunpack.c.l.b16 %v1852
      %v2288 = vunpack.c.h.b16 %v1852
      %v2289 = vunpack.c.l.b16 %v1853
      %v2290 = vunpack.c.h.b16 %v1853
      %v2291 = vunpack.c.l.b16 %v1854
      %v2292 = vunpack.c.h.b16 %v1854
      %v2293 = vunpack.c.l.b16 %v1855
      %v2294 = vunpack.c.h.b16 %v1855
      %v2295 = vunpack.c.l.b16 %v1856
      %v2296 = vunpack.c.h.b16 %v1856
      %v2297 = vunpack.c.l.b16 %v1857
      %v2298 = vunpack.c.h.b16 %v1857
      %v2299 = vunpack.c.l.b16 %v1858
      %v2300 = vunpack.c.h.b16 %v1858
      %v2301 = vunpack.c.l.b16 %v1859
      %v2302 = vunpack.c.h.b16 %v1859
      %v2303 = vunpack.c.l.b16 %v1860
      %v2304 = vunpack.c.h.b16 %v1860
      %v2305 = vpack.c.b16 %v2019, %v2017
      %v2306 = vpack.c.b16 %v2020, %v2018
      %v2307 = vpack.c.b16 %v2023, %v2021
      %v2308 = vpack.c.b16 %v2024, %v2022
      %v2309 = vpack.c.b16 %v2027, %v2025
      %v2310 = vpack.c.b16 %v2028, %v2026
      %v2311 = vpack.c.b16 %v2031, %v2029
      %v2312 = vpack.c.b16 %v2032, %v2030
      %v2313 = vpack.c.b16 %v2035, %v2033
      %v2314 = vpack.c.b16 %v2036, %v2034
      %v2315 = vpack.c.b16 %v2039, %v2037
      %v2316 = vpack.c.b16 %v2040, %v2038
      %v2317 = vpack.c.b16 %v2043, %v2041
      %v2318 = vpack.c.b16 %v2044, %v2042
      %v2319 = vpack.c.b16 %v2047, %v2045
      %v2320 = vpack.c.b16 %v2048, %v2046
      %v2321 = vpack.c.b16 %v2051, %v2049
      %v2322 = vpack.c.b16 %v2052, %v2050
      %v2323 = vpack.c.b16 %v2055, %v2053
      %v2324 = vpack.c.b16 %v2056, %v2054
      %v2325 = vpack.c.b16 %v2059, %v2057
      %v2326 = vpack.c.b16 %v2060, %v2058
      %v2327 = vpack.c.b16 %v2063, %v2061
      %v2328 = vpack.c.b16 %v2064, %v2062
      %v2329 = vpack.c.b16 %v2067, %v2065
      %v2330 = vpack.c.b16 %v2068, %v2066
      %v2331 = vpack.c.b16 %v2071, %v2069
      %v2332 = vpack.c.b16 %v2072, %v2070
      %v2333 = vpack.c.b16 %v2075, %v2073
      %v2334 = vpack.c.b16 %v2076, %v2074
      %v2335 = vpack.c.b16 %v2079, %v2077
      %v2336 = vpack.c.b16 %v2080, %v2078
      %v2337 = vpack.c.b16 %v2083, %v2081
      %v2338 = vpack.c.b16 %v2084, %v2082
      %v2339 = vpack.c.b16 %v2087, %v2085
      %v2340 = vpack.c.b16 %v2088, %v2086
      %v2341 = vpack.c.b16 %v2091, %v2089
      %v2342 = vpack.c.b16 %v2092, %v2090
      %v2343 = vpack.c.b16 %v2095, %v2093
      %v2344 = vpack.c.b16 %v2096, %v2094
      %v2345 = vpack.c.b16 %v2099, %v2097
      %v2346 = vpack.c.b16 %v2100, %v2098
      %v2347 = vpack.c.b16 %v2103, %v2101
      %v2348 = vpack.c.b16 %v2104, %v2102
      %v2349 = vpack.c.b16 %v2107, %v2105
      %v2350 = vpack.c.b16 %v2108, %v2106
      %v2351 = vpack.c.b16 %v2111, %v2109
      %v2352 = vpack.c.b16 %v2112, %v2110
      %v2353 = vpack.c.b16 %v2115, %v2113
      %v2354 = vpack.c.b16 %v2116, %v2114
      %v2355 = vpack.c.b16 %v2119, %v2117
      %v2356 = vpack.c.b16 %v2120, %v2118
      %v2357 = vpack.c.b16 %v2123, %v2121
      %v2358 = vpack.c.b16 %v2124, %v2122
      %v2359 = vpack.c.b16 %v2127, %v2125
      %v2360 = vpack.c.b16 %v2128, %v2126
      %v2361 = vpack.c.b16 %v2131, %v2129
      %v2362 = vpack.c.b16 %v2132, %v2130
      %v2363 = vpack.c.b16 %v2135, %v2133
      %v2364 = vpack.c.b16 %v2136, %v2134
      %v2365 = vpack.c.b16 %v2139, %v2137
      %v2366 = vpack.c.b16 %v2140, %v2138
      %v2367 = vpack.c.b16 %v2143, %v2141
      %v2368 = vpack.c.b16 %v2144, %v2142
      %v2369 = vpack.c.b16 %v2147, %v2145
      %v2370 = vpack.c.b16 %v2148, %v2146
      %v2371 = vpack.c.b16 %v2151, %v2149
      %v2372 = vpack.c.b16 %v2152, %v2150
      %v2373 = vpack.c.b16 %v2155, %v2153
      %v2374 = vpack.c.b16 %v2156, %v2154
      %v2375 = vpack.c.b16 %v2159, %v2157
      %v2376 = vpack.c.b16 %v2160, %v2158
      %v2377 = vpack.c.b16 %v2163, %v2161
      %v2378 = vpack.c.b16 %v2164, %v2162
      %v2379 = vpack.c.b16 %v2167, %v2165
      %v2380 = vpack.c.b16 %v2168, %v2166
      %v2381 = vpack.c.b16 %v2171, %v2169
      %v2382 = vpack.c.b16 %v2172, %v2170
      %v2383 = vpack.c.b16 %v2175, %v2173
      %v2384 = vpack.c.b16 %v2176, %v2174
      %v2385 = vpack.c.b16 %v2179, %v2177
      %v2386 = vpack.c.b16 %v2180, %v2178
      %v2387 = vpack.c.b16 %v2183, %v2181
      %v2388 = vpack.c.b16 %v2184, %v2182
      %v2389 = vpack.c.b16 %v2187, %v2185
      %v2390 = vpack.c.b16 %v2188, %v2186
      %v2391 = vpack.c.b16 %v2191, %v2189
      %v2392 = vpack.c.b16 %v2192, %v2190
      %v2393 = vpack.c.b16 %v2195, %v2193
      %v2394 = vpack.c.b16 %v2196, %v2194
      %v2395 = vpack.c.b16 %v2199, %v2197
      %v2396 = vpack.c.b16 %v2200, %v2198
      %v2397 = vpack.c.b16 %v2203, %v2201
      %v2398 = vpack.c.b16 %v2204, %v2202
      %v2399 = vpack.c.b16 %v2207, %v2205
      %v2400 = vpack.c.b16 %v2208, %v2206
      %v2401 = vpack.c.b16 %v2211, %v2209
      %v2402 = vpack.c.b16 %v2212, %v2210
      %v2403 = vpack.c.b16 %v2215, %v2213
      %v2404 = vpack.c.b16 %v2216, %v2214
      %v2405 = vpack.c.b16 %v2219, %v2217
      %v2406 = vpack.c.b16 %v2220, %v2218
      %v2407 = vpack.c.b16 %v2223, %v2221
      %v2408 = vpack.c.b16 %v2224, %v2222
      %v2409 = vpack.c.b16 %v2227, %v2225
      %v2410 = vpack.c.b16 %v2228, %v2226
      %v2411 = vpack.c.b16 %v2231, %v2229
      %v2412 = vpack.c.b16 %v2232, %v2230
      %v2413 = vpack.c.b16 %v2235, %v2233
      %v2414 = vpack.c.b16 %v2236, %v2234
      %v2415 = vpack.c.b16 %v2239, %v2237
      %v2416 = vpack.c.b16 %v2240, %v2238
      %v2417 = vpack.c.b16 %v2243, %v2241
      %v2418 = vpack.c.b16 %v2244, %v2242
      %v2419 = vpack.c.b16 %v2247, %v2245
      %v2420 = vpack.c.b16 %v2248, %v2246
      %v2421 = vpack.c.b16 %v2251, %v2249
      %v2422 = vpack.c.b16 %v2252, %v2250
      %v2423 = vpack.c.b16 %v2255, %v2253
      %v2424 = vpack.c.b16 %v2256, %v2254
      %v2425 = vpack.c.b16 %v2259, %v2257
      %v2426 = vpack.c.b16 %v2260, %v2258
      %v2427 = vpack.c.b16 %v2263, %v2261
      %v2428 = vpack.c.b16 %v2264, %v2262
      %v2429 = vpack.c.b16 %v2267, %v2265
      %v2430 = vpack.c.b16 %v2268, %v2266
      %v2431 = vpack.c.b16 %v2271, %v2269
      %v2432 = vpack.c.b16 %v2272, %v2270
      %v2433 = vpack.c.b16 %v2275, %v2273
      %v2434 = vpack.c.b16 %v2276, %v2274
      %v2435 = vpack.c.b16 %v2279, %v2277
      %v2436 = vpack.c.b16 %v2280, %v2278
      %v2437 = vpack.c.b16 %v2283, %v2281
      %v2438 = vpack.c.b16 %v2284, %v2282
      %v2439 = vpack.c.b16 %v2287, %v2285
      %v2440 = vpack.c.b16 %v2288, %v2286
      %v2441 = vpack.c.b16 %v2291, %v2289
      %v2442 = vpack.c.b16 %v2292, %v2290
      %v2443 = vpack.c.b16 %v2295, %v2293
      %v2444 = vpack.c.b16 %v2296, %v2294
      %v2445 = vpack.c.b16 %v2299, %v2297
      %v2446 = vpack.c.b16 %v2300, %v2298
      %v2447 = vpack.c.b16 %v2303, %v2301
      %v2448 = vpack.c.b16 %v2304, %v2302
      %2593 = vmatprep.subr.bf16.mxu0 %v2306
      %2594 = vmatpush1.bf16.msra.mxu0 %v2305
      %2595 = vmatprep.subr.bf16.mxu0 %v2308
      %2596 = vmatpush1.bf16.msra.mxu0 %v2307
      %2597 = vmatprep.subr.bf16.mxu0 %v2310
      %2598 = vmatpush1.bf16.msra.mxu0 %v2309
      %2599 = vmatprep.subr.bf16.mxu0 %v2312
      %2600 = vmatpush1.bf16.msra.mxu0 %v2311
      %2601 = vmatprep.subr.bf16.mxu0 %v2314
      %2602 = vmatpush1.bf16.msra.mxu0 %v2313
      %2603 = vmatprep.subr.bf16.mxu0 %v2316
      %2604 = vmatpush1.bf16.msra.mxu0 %v2315
      %2605 = vmatprep.subr.bf16.mxu0 %v2318
      %2606 = vmatpush1.bf16.msra.mxu0 %v2317
      %2607 = vmatprep.subr.bf16.mxu0 %v2320
      %2608 = vmatpush1.bf16.msra.mxu0 %v2319
      %2609 = vmatprep.subr.bf16.mxu0 %v2322
      %2610 = vmatpush1.bf16.msra.mxu0 %v2321
      %2611 = vmatprep.subr.bf16.mxu0 %v2324
      %2612 = vmatpush1.bf16.msra.mxu0 %v2323
      %2613 = vmatprep.subr.bf16.mxu0 %v2326
      %2614 = vmatpush1.bf16.msra.mxu0 %v2325
      %2615 = vmatprep.subr.bf16.mxu0 %v2328
      %2616 = vmatpush1.bf16.msra.mxu0 %v2327
      %2617 = vmatprep.subr.bf16.mxu0 %v2330
      %2618 = vmatpush1.bf16.msra.mxu0 %v2329
      %2619 = vmatprep.subr.bf16.mxu0 %v2332
      %2620 = vmatpush1.bf16.msra.mxu0 %v2331
      %2621 = vmatprep.subr.bf16.mxu0 %v2334
      %2622 = vmatpush1.bf16.msra.mxu0 %v2333
      %2623 = vmatprep.subr.bf16.mxu0 %v2336
      %2624 = vmatpush1.bf16.msra.mxu0 %v2335
      %2625 = vmatprep.mubr.bf16.mxu0 %v1574
      %2626 = vmatmul.mubr.bf16.gmra.mrb[0].mxu0 %v1573
      %v2627 = vpop.f32.mrb[0].mxu0
      %v2628 = vadd.f32 %v1866, %v2627
      %v2629 = vpop.f32.mrb[0].mxu0
      %v2630 = vadd.f32 %v1870, %v2629
      %v2631 = vpop.f32.mrb[0].mxu0
      %v2632 = vadd.f32 %v1866, %v2631
      %v2633 = vpop.f32.mrb[0].mxu0
      %v2634 = vadd.f32 %v1870, %v2633
      %2635 = vmatprep.mubr.bf16.mxu0 %v1583
      %2636 = vmatmul.mubr.bf16.gmra.mrb[0].mxu0 %v1582
      %v2637 = vpop.f32.mrb[0].mxu0
      %v2638 = vadd.f32 %v1866, %v2637
      %v2639 = vpop.f32.mrb[0].mxu0
      %v2640 = vadd.f32 %v1870, %v2639
      %v2641 = vpop.f32.mrb[0].mxu0
      %v2642 = vadd.f32 %v1866, %v2641
      %v2643 = vpop.f32.mrb[0].mxu0
      %v2644 = vadd.f32 %v1870, %v2643
      %2645 = vmatprep.mubr.bf16.mxu0 %v1592
      %2646 = vmatmul.mubr.bf16.gmra.mrb[0].mxu0 %v1591
      %v2647 = vpop.f32.mrb[0].mxu0
      %v2648 = vadd.f32 %v1866, %v2647
      %v2649 = vpop.f32.mrb[0].mxu0
      %v2650 = vadd.f32 %v1870, %v2649
      %v2651 = vpop.f32.mrb[0].mxu0
      %v2652 = vadd.f32 %v1866, %v2651
      %v2653 = vpop.f32.mrb[0].mxu0
      %v2654 = vadd.f32 %v1870, %v2653
      %2655 = vmatprep.mubr.bf16.mxu0 %v1601
      %2656 = vmatmul.mubr.bf16.gmra.mrb[0].mxu0 %v1600
      %v2657 = vpop.f32.mrb[0].mxu0
      %v2658 = vadd.f32 %v1866, %v2657
      %v2659 = vpop.f32.mrb[0].mxu0
      %v2660 = vadd.f32 %v1870, %v2659
      %v2661 = vpop.f32.mrb[0].mxu0
      %v2662 = vadd.f32 %v1866, %v2661
      %v2663 = vpop.f32.mrb[0].mxu0
      %v2664 = vadd.f32 %v1870, %v2663
      %2665 = vmatprep.mubr.bf16.mxu0 %v1610
      %2666 = vmatmul.mubr.bf16.gmra.mrb[0].mxu0 %v1609
      %v2667 = vpop.f32.mrb[0].mxu0
      %v2668 = vadd.f32 %v1866, %v2667
      %v2669 = vpop.f32.mrb[0].mxu0
      %v2670 = vadd.f32 %v1870, %v2669
      %v2671 = vpop.f32.mrb[0].mxu0
      %v2672 = vadd.f32 %v1866, %v2671
      %v2673 = vpop.f32.mrb[0].mxu0
      %v2674 = vadd.f32 %v1870, %v2673
      %2675 = vmatprep.mubr.bf16.mxu0 %v1619
      %2676 = vmatmul.mubr.bf16.gmra.mrb[0].mxu0 %v1618
      %v2677 = vpop.f32.mrb[0].mxu0
      %v2678 = vadd.f32 %v1866, %v2677
      %v2679 = vpop.f32.mrb[0].mxu0
      %v2680 = vadd.f32 %v1870, %v2679
      %v2681 = vpop.f32.mrb[0].mxu0
      %v2682 = vadd.f32 %v1866, %v2681
      %v2683 = vpop.f32.mrb[0].mxu0
      %v2684 = vadd.f32 %v1870, %v2683
      %2685 = vmatprep.mubr.bf16.mxu0 %v1628
      %2686 = vmatmul.mubr.bf16.gmra.mrb[0].mxu0 %v1627
      %v2687 = vpop.f32.mrb[0].mxu0
      %v2688 = vadd.f32 %v1866, %v2687
      %v2689 = vpop.f32.mrb[0].mxu0
      %v2690 = vadd.f32 %v1870, %v2689
      %v2691 = vpop.f32.mrb[0].mxu0
      %v2692 = vadd.f32 %v1866, %v2691
      %v2693 = vpop.f32.mrb[0].mxu0
      %v2694 = vadd.f32 %v1870, %v2693
      %2695 = vmatprep.mubr.bf16.mxu0 %v1637
      %2696 = vmatmul.mubr.bf16.gmra.mrb[0].mxu0 %v1636
      %v2697 = vpop.f32.mrb[0].mxu0
      %v2698 = vadd.f32 %v1866, %v2697
      %v2699 = vpop.f32.mrb[0].mxu0
      %v2700 = vadd.f32 %v1870, %v2699
      %v2701 = vpop.f32.mrb[0].mxu0
      %v2702 = vadd.f32 %v1866, %v2701
      %v2703 = vpop.f32.mrb[0].mxu0
      %v2704 = vadd.f32 %v1870, %v2703
      %2705 = vmatprep.mubr.bf16.mxu0 %v1646
      %2706 = vmatmul.mubr.bf16.gmra.mrb[0].mxu0 %v1645
      %v2707 = vpop.f32.mrb[0].mxu0
      %v2708 = vadd.f32 %v1866, %v2707
      %v2709 = vpop.f32.mrb[0].mxu0
      %v2710 = vadd.f32 %v1870, %v2709
      %v2711 = vpop.f32.mrb[0].mxu0
      %v2712 = vadd.f32 %v1866, %v2711
      %v2713 = vpop.f32.mrb[0].mxu0
      %v2714 = vadd.f32 %v1870, %v2713
      %2715 = vmatprep.mubr.bf16.mxu0 %v1655
      %2716 = vmatmul.mubr.bf16.gmra.mrb[0].mxu0 %v1654
      %v2717 = vpop.f32.mrb[0].mxu0
      %v2718 = vadd.f32 %v1866, %v2717
      %v2719 = vpop.f32.mrb[0].mxu0
      %v2720 = vadd.f32 %v1870, %v2719
      %v2721 = vpop.f32.mrb[0].mxu0
      %v2722 = vadd.f32 %v1866, %v2721
      %v2723 = vpop.f32.mrb[0].mxu0
      %v2724 = vadd.f32 %v1870, %v2723
      %2725 = vmatprep.mubr.bf16.mxu0 %v1664
      %2726 = vmatmul.mubr.bf16.gmra.mrb[0].mxu0 %v1663
      %v2727 = vpop.f32.mrb[0].mxu0
      %v2728 = vadd.f32 %v1866, %v2727
      %v2729 = vpop.f32.mrb[0].mxu0
      %v2730 = vadd.f32 %v1870, %v2729
      %v2731 = vpop.f32.mrb[0].mxu0
      %v2732 = vadd.f32 %v1866, %v2731
      %v2733 = vpop.f32.mrb[0].mxu0
      %v2734 = vadd.f32 %v1870, %v2733
      %2735 = vmatprep.mubr.bf16.mxu0 %v1673
      %2736 = vmatmul.mubr.bf16.gmra.mrb[0].mxu0 %v1672
      %v2737 = vpop.f32.mrb[0].mxu0
      %v2738 = vadd.f32 %v1866, %v2737
      %v2739 = vpop.f32.mrb[0].mxu0
      %v2740 = vadd.f32 %v1870, %v2739
      %v2741 = vpop.f32.mrb[0].mxu0
      %v2742 = vadd.f32 %v1866, %v2741
      %v2743 = vpop.f32.mrb[0].mxu0
      %v2744 = vadd.f32 %v1870, %v2743
      %2745 = vmatprep.mubr.bf16.mxu0 %v1682
      %2746 = vmatmul.mubr.bf16.gmra.mrb[0].mxu0 %v1681
      %v2747 = vpop.f32.mrb[0].mxu0
      %v2748 = vadd.f32 %v1866, %v2747
      %v2749 = vpop.f32.mrb[0].mxu0
      %v2750 = vadd.f32 %v1870, %v2749
      %v2751 = vpop.f32.mrb[0].mxu0
      %v2752 = vadd.f32 %v1866, %v2751
      %v2753 = vpop.f32.mrb[0].mxu0
      %v2754 = vadd.f32 %v1870, %v2753
      %2755 = vmatprep.mubr.bf16.mxu0 %v1691
      %2756 = vmatmul.mubr.bf16.gmra.mrb[0].mxu0 %v1690
      %v2757 = vpop.f32.mrb[0].mxu0
      %v2758 = vadd.f32 %v1866, %v2757
      %v2759 = vpop.f32.mrb[0].mxu0
      %v2760 = vadd.f32 %v1870, %v2759
      %v2761 = vpop.f32.mrb[0].mxu0
      %v2762 = vadd.f32 %v1866, %v2761
      %v2763 = vpop.f32.mrb[0].mxu0
      %v2764 = vadd.f32 %v1870, %v2763
      %2765 = vmatprep.mubr.bf16.mxu0 %v1700
      %2766 = vmatmul.mubr.bf16.gmra.mrb[0].mxu0 %v1699
      %v2767 = vpop.f32.mrb[0].mxu0
      %v2768 = vadd.f32 %v1866, %v2767
      %v2769 = vpop.f32.mrb[0].mxu0
      %v2770 = vadd.f32 %v1870, %v2769
      %v2771 = vpop.f32.mrb[0].mxu0
      %v2772 = vadd.f32 %v1866, %v2771
      %v2773 = vpop.f32.mrb[0].mxu0
      %v2774 = vadd.f32 %v1870, %v2773
      %2775 = vmatprep.mubr.bf16.mxu0 %v1709
      %2776 = vmatmul.mubr.bf16.gmra.mrb[0].mxu0 %v1708
      %v2777 = vpop.f32.mrb[0].mxu0
      %v2778 = vadd.f32 %v1866, %v2777
      %v2779 = vpop.f32.mrb[0].mxu0
      %v2780 = vadd.f32 %v1870, %v2779
      %v2781 = vpop.f32.mrb[0].mxu0
      %v2782 = vadd.f32 %v1866, %v2781
      %v2783 = vpop.f32.mrb[0].mxu0
      %v2784 = vadd.f32 %v1870, %v2783
      %2785 = vdwg.mxu0
      %2786 = vmatprep.subr.bf16.mxu0 %v2338
      %2787 = vmatpush1.bf16.msra.mxu0 %v2337
      %2788 = vmatprep.subr.bf16.mxu0 %v2340
      %2789 = vmatpush1.bf16.msra.mxu0 %v2339
      %2790 = vmatprep.subr.bf16.mxu0 %v2342
      %2791 = vmatpush1.bf16.msra.mxu0 %v2341
      %2792 = vmatprep.subr.bf16.mxu0 %v2344
      %2793 = vmatpush1.bf16.msra.mxu0 %v2343
      %2794 = vmatprep.subr.bf16.mxu0 %v2346
      %2795 = vmatpush1.bf16.msra.mxu0 %v2345
      %2796 = vmatprep.subr.bf16.mxu0 %v2348
      %2797 = vmatpush1.bf16.msra.mxu0 %v2347
      %2798 = vmatprep.subr.bf16.mxu0 %v2350
      %2799 = vmatpush1.bf16.msra.mxu0 %v2349
      %2800 = vmatprep.subr.bf16.mxu0 %v2352
      %2801 = vmatpush1.bf16.msra.mxu0 %v2351
      %2802 = vmatprep.subr.bf16.mxu0 %v2354
      %2803 = vmatpush1.bf16.msra.mxu0 %v2353
      %2804 = vmatprep.subr.bf16.mxu0 %v2356
      %2805 = vmatpush1.bf16.msra.mxu0 %v2355
      %2806 = vmatprep.subr.bf16.mxu0 %v2358
      %2807 = vmatpush1.bf16.msra.mxu0 %v2357
      %2808 = vmatprep.subr.bf16.mxu0 %v2360
      %2809 = vmatpush1.bf16.msra.mxu0 %v2359
      %2810 = vmatprep.subr.bf16.mxu0 %v2362
      %2811 = vmatpush1.bf16.msra.mxu0 %v2361
      %2812 = vmatprep.subr.bf16.mxu0 %v2364
      %2813 = vmatpush1.bf16.msra.mxu0 %v2363
      %2814 = vmatprep.subr.bf16.mxu0 %v2366
      %2815 = vmatpush1.bf16.msra.mxu0 %v2365
      %2816 = vmatprep.subr.bf16.mxu0 %v2368
      %2817 = vmatpush1.bf16.msra.mxu0 %v2367
      %2818 = vmatprep.mubr.bf16.mxu0 %v1576
      %2819 = vmatmul.mubr.bf16.gmra.mrb[0].mxu0 %v1575
      %v2820 = vpop.f32.mrb[0].mxu0
      %v2821 = vadd.f32 %v2628, %v2820
      %v2822 = vpop.f32.mrb[0].mxu0
      %v2823 = vadd.f32 %v2630, %v2822
      %v2824 = vpop.f32.mrb[0].mxu0
      %v2825 = vadd.f32 %v2632, %v2824
      %v2826 = vpop.f32.mrb[0].mxu0
      %v2827 = vadd.f32 %v2634, %v2826
      %2828 = vmatprep.mubr.bf16.mxu0 %v1585
      %2829 = vmatmul.mubr.bf16.gmra.mrb[0].mxu0 %v1584
      %v2830 = vpop.f32.mrb[0].mxu0
      %v2831 = vadd.f32 %v2638, %v2830
      %v2832 = vpop.f32.mrb[0].mxu0
      %v2833 = vadd.f32 %v2640, %v2832
      %v2834 = vpop.f32.mrb[0].mxu0
      %v2835 = vadd.f32 %v2642, %v2834
      %v2836 = vpop.f32.mrb[0].mxu0
      %v2837 = vadd.f32 %v2644, %v2836
      %2838 = vmatprep.mubr.bf16.mxu0 %v1594
      %2839 = vmatmul.mubr.bf16.gmra.mrb[0].mxu0 %v1593
      %v2840 = vpop.f32.mrb[0].mxu0
      %v2841 = vadd.f32 %v2648, %v2840
      %v2842 = vpop.f32.mrb[0].mxu0
      %v2843 = vadd.f32 %v2650, %v2842
      %v2844 = vpop.f32.mrb[0].mxu0
      %v2845 = vadd.f32 %v2652, %v2844
      %v2846 = vpop.f32.mrb[0].mxu0
      %v2847 = vadd.f32 %v2654, %v2846
      %2848 = vmatprep.mubr.bf16.mxu0 %v1603
      %2849 = vmatmul.mubr.bf16.gmra.mrb[0].mxu0 %v1602
      %v2850 = vpop.f32.mrb[0].mxu0
      %v2851 = vadd.f32 %v2658, %v2850
      %v2852 = vpop.f32.mrb[0].mxu0
      %v2853 = vadd.f32 %v2660, %v2852
      %v2854 = vpop.f32.mrb[0].mxu0
      %v2855 = vadd.f32 %v2662, %v2854
      %v2856 = vpop.f32.mrb[0].mxu0
      %v2857 = vadd.f32 %v2664, %v2856
      %2858 = vmatprep.mubr.bf16.mxu0 %v1612
      %2859 = vmatmul.mubr.bf16.gmra.mrb[0].mxu0 %v1611
      %v2860 = vpop.f32.mrb[0].mxu0
      %v2861 = vadd.f32 %v2668, %v2860
      %v2862 = vpop.f32.mrb[0].mxu0
      %v2863 = vadd.f32 %v2670, %v2862
      %v2864 = vpop.f32.mrb[0].mxu0
      %v2865 = vadd.f32 %v2672, %v2864
      %v2866 = vpop.f32.mrb[0].mxu0
      %v2867 = vadd.f32 %v2674, %v2866
      %2868 = vmatprep.mubr.bf16.mxu0 %v1621
      %2869 = vmatmul.mubr.bf16.gmra.mrb[0].mxu0 %v1620
      %v2870 = vpop.f32.mrb[0].mxu0
      %v2871 = vadd.f32 %v2678, %v2870
      %v2872 = vpop.f32.mrb[0].mxu0
      %v2873 = vadd.f32 %v2680, %v2872
      %v2874 = vpop.f32.mrb[0].mxu0
      %v2875 = vadd.f32 %v2682, %v2874
      %v2876 = vpop.f32.mrb[0].mxu0
      %v2877 = vadd.f32 %v2684, %v2876
      %2878 = vmatprep.mubr.bf16.mxu0 %v1630
      %2879 = vmatmul.mubr.bf16.gmra.mrb[0].mxu0 %v1629
      %v2880 = vpop.f32.mrb[0].mxu0
      %v2881 = vadd.f32 %v2688, %v2880
      %v2882 = vpop.f32.mrb[0].mxu0
      %v2883 = vadd.f32 %v2690, %v2882
      %v2884 = vpop.f32.mrb[0].mxu0
      %v2885 = vadd.f32 %v2692, %v2884
      %v2886 = vpop.f32.mrb[0].mxu0
      %v2887 = vadd.f32 %v2694, %v2886
      %2888 = vmatprep.mubr.bf16.mxu0 %v1639
      %2889 = vmatmul.mubr.bf16.gmra.mrb[0].mxu0 %v1638
      %v2890 = vpop.f32.mrb[0].mxu0
      %v2891 = vadd.f32 %v2698, %v2890
      %v2892 = vpop.f32.mrb[0].mxu0
      %v2893 = vadd.f32 %v2700, %v2892
      %v2894 = vpop.f32.mrb[0].mxu0
      %v2895 = vadd.f32 %v2702, %v2894
      %v2896 = vpop.f32.mrb[0].mxu0
      %v2897 = vadd.f32 %v2704, %v2896
      %2898 = vmatprep.mubr.bf16.mxu0 %v1648
      %2899 = vmatmul.mubr.bf16.gmra.mrb[0].mxu0 %v1647
      %v2900 = vpop.f32.mrb[0].mxu0
      %v2901 = vadd.f32 %v2708, %v2900
      %v2902 = vpop.f32.mrb[0].mxu0
      %v2903 = vadd.f32 %v2710, %v2902
      %v2904 = vpop.f32.mrb[0].mxu0
      %v2905 = vadd.f32 %v2712, %v2904
      %v2906 = vpop.f32.mrb[0].mxu0
      %v2907 = vadd.f32 %v2714, %v2906
      %2908 = vmatprep.mubr.bf16.mxu0 %v1657
      %2909 = vmatmul.mubr.bf16.gmra.mrb[0].mxu0 %v1656
      %v2910 = vpop.f32.mrb[0].mxu0
      %v2911 = vadd.f32 %v2718, %v2910
      %v2912 = vpop.f32.mrb[0].mxu0
      %v2913 = vadd.f32 %v2720, %v2912
      %v2914 = vpop.f32.mrb[0].mxu0
      %v2915 = vadd.f32 %v2722, %v2914
      %v2916 = vpop.f32.mrb[0].mxu0
      %v2917 = vadd.f32 %v2724, %v2916
      %2918 = vmatprep.mubr.bf16.mxu0 %v1666
      %2919 = vmatmul.mubr.bf16.gmra.mrb[0].mxu0 %v1665
      %v2920 = vpop.f32.mrb[0].mxu0
      %v2921 = vadd.f32 %v2728, %v2920
      %v2922 = vpop.f32.mrb[0].mxu0
      %v2923 = vadd.f32 %v2730, %v2922
      %v2924 = vpop.f32.mrb[0].mxu0
      %v2925 = vadd.f32 %v2732, %v2924
      %v2926 = vpop.f32.mrb[0].mxu0
      %v2927 = vadd.f32 %v2734, %v2926
      %2928 = vmatprep.mubr.bf16.mxu0 %v1675
      %2929 = vmatmul.mubr.bf16.gmra.mrb[0].mxu0 %v1674
      %v2930 = vpop.f32.mrb[0].mxu0
      %v2931 = vadd.f32 %v2738, %v2930
      %v2932 = vpop.f32.mrb[0].mxu0
      %v2933 = vadd.f32 %v2740, %v2932
      %v2934 = vpop.f32.mrb[0].mxu0
      %v2935 = vadd.f32 %v2742, %v2934
      %v2936 = vpop.f32.mrb[0].mxu0
      %v2937 = vadd.f32 %v2744, %v2936
      %2938 = vmatprep.mubr.bf16.mxu0 %v1684
      %2939 = vmatmul.mubr.bf16.gmra.mrb[0].mxu0 %v1683
      %v2940 = vpop.f32.mrb[0].mxu0
      %v2941 = vadd.f32 %v2748, %v2940
      %v2942 = vpop.f32.mrb[0].mxu0
      %v2943 = vadd.f32 %v2750, %v2942
      %v2944 = vpop.f32.mrb[0].mxu0
      %v2945 = vadd.f32 %v2752, %v2944
      %v2946 = vpop.f32.mrb[0].mxu0
      %v2947 = vadd.f32 %v2754, %v2946
      %2948 = vmatprep.mubr.bf16.mxu0 %v1693
      %2949 = vmatmul.mubr.bf16.gmra.mrb[0].mxu0 %v1692
      %v2950 = vpop.f32.mrb[0].mxu0
      %v2951 = vadd.f32 %v2758, %v2950
      %v2952 = vpop.f32.mrb[0].mxu0
      %v2953 = vadd.f32 %v2760, %v2952
      %v2954 = vpop.f32.mrb[0].mxu0
      %v2955 = vadd.f32 %v2762, %v2954
      %v2956 = vpop.f32.mrb[0].mxu0
      %v2957 = vadd.f32 %v2764, %v2956
      %2958 = vmatprep.mubr.bf16.mxu0 %v1702
      %2959 = vmatmul.mubr.bf16.gmra.mrb[0].mxu0 %v1701
      %v2960 = vpop.f32.mrb[0].mxu0
      %v2961 = vadd.f32 %v2768, %v2960
      %v2962 = vpop.f32.mrb[0].mxu0
      %v2963 = vadd.f32 %v2770, %v2962
      %v2964 = vpop.f32.mrb[0].mxu0
      %v2965 = vadd.f32 %v2772, %v2964
      %v2966 = vpop.f32.mrb[0].mxu0
      %v2967 = vadd.f32 %v2774, %v2966
      %2968 = vmatprep.mubr.bf16.mxu0 %v1711
      %2969 = vmatmul.mubr.bf16.gmra.mrb[0].mxu0 %v1710
      %v2970 = vpop.f32.mrb[0].mxu0
      %v2971 = vadd.f32 %v2778, %v2970
      %v2972 = vpop.f32.mrb[0].mxu0
      %v2973 = vadd.f32 %v2780, %v2972
      %v2974 = vpop.f32.mrb[0].mxu0
      %v2975 = vadd.f32 %v2782, %v2974
      %v2976 = vpop.f32.mrb[0].mxu0
      %v2977 = vadd.f32 %v2784, %v2976
      %2978 = vdwg.mxu0
      %2979 = vmatprep.subr.bf16.mxu0 %v2370
      %2980 = vmatpush1.bf16.msra.mxu0 %v2369
      %2981 = vmatprep.subr.bf16.mxu0 %v2372
      %2982 = vmatpush1.bf16.msra.mxu0 %v2371
      %2983 = vmatprep.subr.bf16.mxu0 %v2374
      %2984 = vmatpush1.bf16.msra.mxu0 %v2373
      %2985 = vmatprep.subr.bf16.mxu0 %v2376
      %2986 = vmatpush1.bf16.msra.mxu0 %v2375
      %2987 = vmatprep.subr.bf16.mxu0 %v2378
      %2988 = vmatpush1.bf16.msra.mxu0 %v2377
      %2989 = vmatprep.subr.bf16.mxu0 %v2380
      %2990 = vmatpush1.bf16.msra.mxu0 %v2379
      %2991 = vmatprep.subr.bf16.mxu0 %v2382
      %2992 = vmatpush1.bf16.msra.mxu0 %v2381
      %2993 = vmatprep.subr.bf16.mxu0 %v2384
      %2994 = vmatpush1.bf16.msra.mxu0 %v2383
      %2995 = vmatprep.subr.bf16.mxu0 %v2386
      %2996 = vmatpush1.bf16.msra.mxu0 %v2385
      %2997 = vmatprep.subr.bf16.mxu0 %v2388
      %2998 = vmatpush1.bf16.msra.mxu0 %v2387
      %2999 = vmatprep.subr.bf16.mxu0 %v2390
      %3000 = vmatpush1.bf16.msra.mxu0 %v2389
      %3001 = vmatprep.subr.bf16.mxu0 %v2392
      %3002 = vmatpush1.bf16.msra.mxu0 %v2391
      %3003 = vmatprep.subr.bf16.mxu0 %v2394
      %3004 = vmatpush1.bf16.msra.mxu0 %v2393
      %3005 = vmatprep.subr.bf16.mxu0 %v2396
      %3006 = vmatpush1.bf16.msra.mxu0 %v2395
      %3007 = vmatprep.subr.bf16.mxu0 %v2398
      %3008 = vmatpush1.bf16.msra.mxu0 %v2397
      %3009 = vmatprep.subr.bf16.mxu0 %v2400
      %3010 = vmatpush1.bf16.msra.mxu0 %v2399
      %3011 = vmatprep.mubr.bf16.mxu0 %v1578
      %3012 = vmatmul.mubr.bf16.gmra.mrb[0].mxu0 %v1577
      %v3013 = vpop.f32.mrb[0].mxu0
      %v3014 = vadd.f32 %v2821, %v3013
      %v3015 = vpop.f32.mrb[0].mxu0
      %v3016 = vadd.f32 %v2823, %v3015
      %v3017 = vpop.f32.mrb[0].mxu0
      %v3018 = vadd.f32 %v2825, %v3017
      %v3019 = vpop.f32.mrb[0].mxu0
      %v3020 = vadd.f32 %v2827, %v3019
      %3021 = vmatprep.mubr.bf16.mxu0 %v1587
      %3022 = vmatmul.mubr.bf16.gmra.mrb[0].mxu0 %v1586
      %v3023 = vpop.f32.mrb[0].mxu0
      %v3024 = vadd.f32 %v2831, %v3023
      %v3025 = vpop.f32.mrb[0].mxu0
      %v3026 = vadd.f32 %v2833, %v3025
      %v3027 = vpop.f32.mrb[0].mxu0
      %v3028 = vadd.f32 %v2835, %v3027
      %v3029 = vpop.f32.mrb[0].mxu0
      %v3030 = vadd.f32 %v2837, %v3029
      %3031 = vmatprep.mubr.bf16.mxu0 %v1596
      %3032 = vmatmul.mubr.bf16.gmra.mrb[0].mxu0 %v1595
      %v3033 = vpop.f32.mrb[0].mxu0
      %v3034 = vadd.f32 %v2841, %v3033
      %v3035 = vpop.f32.mrb[0].mxu0
      %v3036 = vadd.f32 %v2843, %v3035
      %v3037 = vpop.f32.mrb[0].mxu0
      %v3038 = vadd.f32 %v2845, %v3037
      %v3039 = vpop.f32.mrb[0].mxu0
      %v3040 = vadd.f32 %v2847, %v3039
      %3041 = vmatprep.mubr.bf16.mxu0 %v1605
      %3042 = vmatmul.mubr.bf16.gmra.mrb[0].mxu0 %v1604
      %v3043 = vpop.f32.mrb[0].mxu0
      %v3044 = vadd.f32 %v2851, %v3043
      %v3045 = vpop.f32.mrb[0].mxu0
      %v3046 = vadd.f32 %v2853, %v3045
      %v3047 = vpop.f32.mrb[0].mxu0
      %v3048 = vadd.f32 %v2855, %v3047
      %v3049 = vpop.f32.mrb[0].mxu0
      %v3050 = vadd.f32 %v2857, %v3049
      %3051 = vmatprep.mubr.bf16.mxu0 %v1614
      %3052 = vmatmul.mubr.bf16.gmra.mrb[0].mxu0 %v1613
      %v3053 = vpop.f32.mrb[0].mxu0
      %v3054 = vadd.f32 %v2861, %v3053
      %v3055 = vpop.f32.mrb[0].mxu0
      %v3056 = vadd.f32 %v2863, %v3055
      %v3057 = vpop.f32.mrb[0].mxu0
      %v3058 = vadd.f32 %v2865, %v3057
      %v3059 = vpop.f32.mrb[0].mxu0
      %v3060 = vadd.f32 %v2867, %v3059
      %3061 = vmatprep.mubr.bf16.mxu0 %v1623
      %3062 = vmatmul.mubr.bf16.gmra.mrb[0].mxu0 %v1622
      %v3063 = vpop.f32.mrb[0].mxu0
      %v3064 = vadd.f32 %v2871, %v3063
      %v3065 = vpop.f32.mrb[0].mxu0
      %v3066 = vadd.f32 %v2873, %v3065
      %v3067 = vpop.f32.mrb[0].mxu0
      %v3068 = vadd.f32 %v2875, %v3067
      %v3069 = vpop.f32.mrb[0].mxu0
      %v3070 = vadd.f32 %v2877, %v3069
      %3071 = vmatprep.mubr.bf16.mxu0 %v1632
      %3072 = vmatmul.mubr.bf16.gmra.mrb[0].mxu0 %v1631
      %v3073 = vpop.f32.mrb[0].mxu0
      %v3074 = vadd.f32 %v2881, %v3073
      %v3075 = vpop.f32.mrb[0].mxu0
      %v3076 = vadd.f32 %v2883, %v3075
      %v3077 = vpop.f32.mrb[0].mxu0
      %v3078 = vadd.f32 %v2885, %v3077
      %v3079 = vpop.f32.mrb[0].mxu0
      %v3080 = vadd.f32 %v2887, %v3079
      %3081 = vmatprep.mubr.bf16.mxu0 %v1641
      %3082 = vmatmul.mubr.bf16.gmra.mrb[0].mxu0 %v1640
      %v3083 = vpop.f32.mrb[0].mxu0
      %v3084 = vadd.f32 %v2891, %v3083
      %v3085 = vpop.f32.mrb[0].mxu0
      %v3086 = vadd.f32 %v2893, %v3085
      %v3087 = vpop.f32.mrb[0].mxu0
      %v3088 = vadd.f32 %v2895, %v3087
      %v3089 = vpop.f32.mrb[0].mxu0
      %v3090 = vadd.f32 %v2897, %v3089
      %3091 = vmatprep.mubr.bf16.mxu0 %v1650
      %3092 = vmatmul.mubr.bf16.gmra.mrb[0].mxu0 %v1649
      %v3093 = vpop.f32.mrb[0].mxu0
      %v3094 = vadd.f32 %v2901, %v3093
      %v3095 = vpop.f32.mrb[0].mxu0
      %v3096 = vadd.f32 %v2903, %v3095
      %v3097 = vpop.f32.mrb[0].mxu0
      %v3098 = vadd.f32 %v2905, %v3097
      %v3099 = vpop.f32.mrb[0].mxu0
      %v3100 = vadd.f32 %v2907, %v3099
      %3101 = vmatprep.mubr.bf16.mxu0 %v1659
      %3102 = vmatmul.mubr.bf16.gmra.mrb[0].mxu0 %v1658
      %v3103 = vpop.f32.mrb[0].mxu0
      %v3104 = vadd.f32 %v2911, %v3103
      %v3105 = vpop.f32.mrb[0].mxu0
      %v3106 = vadd.f32 %v2913, %v3105
      %v3107 = vpop.f32.mrb[0].mxu0
      %v3108 = vadd.f32 %v2915, %v3107
      %v3109 = vpop.f32.mrb[0].mxu0
      %v3110 = vadd.f32 %v2917, %v3109
      %3111 = vmatprep.mubr.bf16.mxu0 %v1668
      %3112 = vmatmul.mubr.bf16.gmra.mrb[0].mxu0 %v1667
      %v3113 = vpop.f32.mrb[0].mxu0
      %v3114 = vadd.f32 %v2921, %v3113
      %v3115 = vpop.f32.mrb[0].mxu0
      %v3116 = vadd.f32 %v2923, %v3115
      %v3117 = vpop.f32.mrb[0].mxu0
      %v3118 = vadd.f32 %v2925, %v3117
      %v3119 = vpop.f32.mrb[0].mxu0
      %v3120 = vadd.f32 %v2927, %v3119
      %3121 = vmatprep.mubr.bf16.mxu0 %v1677
      %3122 = vmatmul.mubr.bf16.gmra.mrb[0].mxu0 %v1676
      %v3123 = vpop.f32.mrb[0].mxu0
      %v3124 = vadd.f32 %v2931, %v3123
      %v3125 = vpop.f32.mrb[0].mxu0
      %v3126 = vadd.f32 %v2933, %v3125
      %v3127 = vpop.f32.mrb[0].mxu0
      %v3128 = vadd.f32 %v2935, %v3127
      %v3129 = vpop.f32.mrb[0].mxu0
      %v3130 = vadd.f32 %v2937, %v3129
      %3131 = vmatprep.mubr.bf16.mxu0 %v1686
      %3132 = vmatmul.mubr.bf16.gmra.mrb[0].mxu0 %v1685
      %v3133 = vpop.f32.mrb[0].mxu0
      %v3134 = vadd.f32 %v2941, %v3133
      %v3135 = vpop.f32.mrb[0].mxu0
      %v3136 = vadd.f32 %v2943, %v3135
      %v3137 = vpop.f32.mrb[0].mxu0
      %v3138 = vadd.f32 %v2945, %v3137
      %v3139 = vpop.f32.mrb[0].mxu0
      %v3140 = vadd.f32 %v2947, %v3139
      %3141 = vmatprep.mubr.bf16.mxu0 %v1695
      %3142 = vmatmul.mubr.bf16.gmra.mrb[0].mxu0 %v1694
      %v3143 = vpop.f32.mrb[0].mxu0
      %v3144 = vadd.f32 %v2951, %v3143
      %v3145 = vpop.f32.mrb[0].mxu0
      %v3146 = vadd.f32 %v2953, %v3145
      %v3147 = vpop.f32.mrb[0].mxu0
      %v3148 = vadd.f32 %v2955, %v3147
      %v3149 = vpop.f32.mrb[0].mxu0
      %v3150 = vadd.f32 %v2957, %v3149
      %3151 = vmatprep.mubr.bf16.mxu0 %v1704
      %3152 = vmatmul.mubr.bf16.gmra.mrb[0].mxu0 %v1703
      %v3153 = vpop.f32.mrb[0].mxu0
      %v3154 = vadd.f32 %v2961, %v3153
      %v3155 = vpop.f32.mrb[0].mxu0
      %v3156 = vadd.f32 %v2963, %v3155
      %v3157 = vpop.f32.mrb[0].mxu0
      %v3158 = vadd.f32 %v2965, %v3157
      %v3159 = vpop.f32.mrb[0].mxu0
      %v3160 = vadd.f32 %v2967, %v3159
      %3161 = vmatprep.mubr.bf16.mxu0 %v1713
      %3162 = vmatmul.mubr.bf16.gmra.mrb[0].mxu0 %v1712
      %v3163 = vpop.f32.mrb[0].mxu0
      %v3164 = vadd.f32 %v2971, %v3163
      %v3165 = vpop.f32.mrb[0].mxu0
      %v3166 = vadd.f32 %v2973, %v3165
      %v3167 = vpop.f32.mrb[0].mxu0
      %v3168 = vadd.f32 %v2975, %v3167
      %v3169 = vpop.f32.mrb[0].mxu0
      %v3170 = vadd.f32 %v2977, %v3169
      %3171 = vdwg.mxu0
      %3172 = vmatprep.subr.bf16.mxu0 %v2402
      %3173 = vmatpush1.bf16.msra.mxu0 %v2401
      %3174 = vmatprep.subr.bf16.mxu0 %v2404
      %3175 = vmatpush1.bf16.msra.mxu0 %v2403
      %3176 = vmatprep.subr.bf16.mxu0 %v2406
      %3177 = vmatpush1.bf16.msra.mxu0 %v2405
      %3178 = vmatprep.subr.bf16.mxu0 %v2408
      %3179 = vmatpush1.bf16.msra.mxu0 %v2407
      %3180 = vmatprep.subr.bf16.mxu0 %v2410
      %3181 = vmatpush1.bf16.msra.mxu0 %v2409
      %3182 = vmatprep.subr.bf16.mxu0 %v2412
      %3183 = vmatpush1.bf16.msra.mxu0 %v2411
      %3184 = vmatprep.subr.bf16.mxu0 %v2414
      %3185 = vmatpush1.bf16.msra.mxu0 %v2413
      %3186 = vmatprep.subr.bf16.mxu0 %v2416
      %3187 = vmatpush1.bf16.msra.mxu0 %v2415
      %3188 = vmatprep.subr.bf16.mxu0 %v2418
      %3189 = vmatpush1.bf16.msra.mxu0 %v2417
      %3190 = vmatprep.subr.bf16.mxu0 %v2420
      %3191 = vmatpush1.bf16.msra.mxu0 %v2419
      %3192 = vmatprep.subr.bf16.mxu0 %v2422
      %3193 = vmatpush1.bf16.msra.mxu0 %v2421
      %3194 = vmatprep.subr.bf16.mxu0 %v2424
      %3195 = vmatpush1.bf16.msra.mxu0 %v2423
      %3196 = vmatprep.subr.bf16.mxu0 %v2426
      %3197 = vmatpush1.bf16.msra.mxu0 %v2425
      %3198 = vmatprep.subr.bf16.mxu0 %v2428
      %3199 = vmatpush1.bf16.msra.mxu0 %v2427
      %3200 = vmatprep.subr.bf16.mxu0 %v2430
      %3201 = vmatpush1.bf16.msra.mxu0 %v2429
      %3202 = vmatprep.subr.bf16.mxu0 %v2432
      %3203 = vmatpush1.bf16.msra.mxu0 %v2431
      %3204 = vmatprep.mubr.bf16.mxu0 %v1580
      %3205 = vmatmul.mubr.bf16.gmra.mrb[0].mxu0 %v1579
      %v3206 = vpop.f32.mrb[0].mxu0
      %v3207 = vadd.f32 %v3014, %v3206
      %v3208 = vpop.f32.mrb[0].mxu0
      %v3209 = vadd.f32 %v3016, %v3208
      %v3210 = vpop.f32.mrb[0].mxu0
      %v3211 = vadd.f32 %v3018, %v3210
      %v3212 = vpop.f32.mrb[0].mxu0
      %v3213 = vadd.f32 %v3020, %v3212
      %3214 = vmatprep.mubr.bf16.mxu0 %v1589
      %3215 = vmatmul.mubr.bf16.gmra.mrb[0].mxu0 %v1588
      %v3216 = vpop.f32.mrb[0].mxu0
      %v3217 = vadd.f32 %v3024, %v3216
      %v3218 = vpop.f32.mrb[0].mxu0
      %v3219 = vadd.f32 %v3026, %v3218
      %v3220 = vpop.f32.mrb[0].mxu0
      %v3221 = vadd.f32 %v3028, %v3220
      %v3222 = vpop.f32.mrb[0].mxu0
      %v3223 = vadd.f32 %v3030, %v3222
      %3224 = vmatprep.mubr.bf16.mxu0 %v1598
      %3225 = vmatmul.mubr.bf16.gmra.mrb[0].mxu0 %v1597
      %v3226 = vpop.f32.mrb[0].mxu0
      %v3227 = vadd.f32 %v3034, %v3226
      %v3228 = vpop.f32.mrb[0].mxu0
      %v3229 = vadd.f32 %v3036, %v3228
      %v3230 = vpop.f32.mrb[0].mxu0
      %v3231 = vadd.f32 %v3038, %v3230
      %v3232 = vpop.f32.mrb[0].mxu0
      %v3233 = vadd.f32 %v3040, %v3232
      %3234 = vmatprep.mubr.bf16.mxu0 %v1607
      %3235 = vmatmul.mubr.bf16.gmra.mrb[0].mxu0 %v1606
      %v3236 = vpop.f32.mrb[0].mxu0
      %v3237 = vadd.f32 %v3044, %v3236
      %v3238 = vpop.f32.mrb[0].mxu0
      %v3239 = vadd.f32 %v3046, %v3238
      %v3240 = vpop.f32.mrb[0].mxu0
      %v3241 = vadd.f32 %v3048, %v3240
      %v3242 = vpop.f32.mrb[0].mxu0
      %v3243 = vadd.f32 %v3050, %v3242
      %3244 = vmatprep.mubr.bf16.mxu0 %v1616
      %3245 = vmatmul.mubr.bf16.gmra.mrb[0].mxu0 %v1615
      %v3246 = vpop.f32.mrb[0].mxu0
      %v3247 = vadd.f32 %v3054, %v3246
      %v3248 = vpop.f32.mrb[0].mxu0
      %v3249 = vadd.f32 %v3056, %v3248
      %v3250 = vpop.f32.mrb[0].mxu0
      %v3251 = vadd.f32 %v3058, %v3250
      %v3252 = vpop.f32.mrb[0].mxu0
      %v3253 = vadd.f32 %v3060, %v3252
      %3254 = vmatprep.mubr.bf16.mxu0 %v1625
      %3255 = vmatmul.mubr.bf16.gmra.mrb[0].mxu0 %v1624
      %v3256 = vpop.f32.mrb[0].mxu0
      %v3257 = vadd.f32 %v3064, %v3256
      %v3258 = vpop.f32.mrb[0].mxu0
      %v3259 = vadd.f32 %v3066, %v3258
      %v3260 = vpop.f32.mrb[0].mxu0
      %v3261 = vadd.f32 %v3068, %v3260
      %v3262 = vpop.f32.mrb[0].mxu0
      %v3263 = vadd.f32 %v3070, %v3262
      %3264 = vmatprep.mubr.bf16.mxu0 %v1634
      %3265 = vmatmul.mubr.bf16.gmra.mrb[0].mxu0 %v1633
      %v3266 = vpop.f32.mrb[0].mxu0
      %v3267 = vadd.f32 %v3074, %v3266
      %v3268 = vpop.f32.mrb[0].mxu0
      %v3269 = vadd.f32 %v3076, %v3268
      %v3270 = vpop.f32.mrb[0].mxu0
      %v3271 = vadd.f32 %v3078, %v3270
      %v3272 = vpop.f32.mrb[0].mxu0
      %v3273 = vadd.f32 %v3080, %v3272
      %3274 = vmatprep.mubr.bf16.mxu0 %v1643
      %3275 = vmatmul.mubr.bf16.gmra.mrb[0].mxu0 %v1642
      %v3276 = vpop.f32.mrb[0].mxu0
      %v3277 = vadd.f32 %v3084, %v3276
      %v3278 = vpop.f32.mrb[0].mxu0
      %v3279 = vadd.f32 %v3086, %v3278
      %v3280 = vpop.f32.mrb[0].mxu0
      %v3281 = vadd.f32 %v3088, %v3280
      %v3282 = vpop.f32.mrb[0].mxu0
      %v3283 = vadd.f32 %v3090, %v3282
      %3284 = vmatprep.mubr.bf16.mxu0 %v1652
      %3285 = vmatmul.mubr.bf16.gmra.mrb[0].mxu0 %v1651
      %v3286 = vpop.f32.mrb[0].mxu0
      %v3287 = vadd.f32 %v3094, %v3286
      %v3288 = vpop.f32.mrb[0].mxu0
      %v3289 = vadd.f32 %v3096, %v3288
      %v3290 = vpop.f32.mrb[0].mxu0
      %v3291 = vadd.f32 %v3098, %v3290
      %v3292 = vpop.f32.mrb[0].mxu0
      %v3293 = vadd.f32 %v3100, %v3292
      %3294 = vmatprep.mubr.bf16.mxu0 %v1661
      %3295 = vmatmul.mubr.bf16.gmra.mrb[0].mxu0 %v1660
      %v3296 = vpop.f32.mrb[0].mxu0
      %v3297 = vadd.f32 %v3104, %v3296
      %v3298 = vpop.f32.mrb[0].mxu0
      %v3299 = vadd.f32 %v3106, %v3298
      %v3300 = vpop.f32.mrb[0].mxu0
      %v3301 = vadd.f32 %v3108, %v3300
      %v3302 = vpop.f32.mrb[0].mxu0
      %v3303 = vadd.f32 %v3110, %v3302
      %3304 = vmatprep.mubr.bf16.mxu0 %v1670
      %3305 = vmatmul.mubr.bf16.gmra.mrb[0].mxu0 %v1669
      %v3306 = vpop.f32.mrb[0].mxu0
      %v3307 = vadd.f32 %v3114, %v3306
      %v3308 = vpop.f32.mrb[0].mxu0
      %v3309 = vadd.f32 %v3116, %v3308
      %v3310 = vpop.f32.mrb[0].mxu0
      %v3311 = vadd.f32 %v3118, %v3310
      %v3312 = vpop.f32.mrb[0].mxu0
      %v3313 = vadd.f32 %v3120, %v3312
      %3314 = vmatprep.mubr.bf16.mxu0 %v1679
      %3315 = vmatmul.mubr.bf16.gmra.mrb[0].mxu0 %v1678
      %v3316 = vpop.f32.mrb[0].mxu0
      %v3317 = vadd.f32 %v3124, %v3316
      %v3318 = vpop.f32.mrb[0].mxu0
      %v3319 = vadd.f32 %v3126, %v3318
      %v3320 = vpop.f32.mrb[0].mxu0
      %v3321 = vadd.f32 %v3128, %v3320
      %v3322 = vpop.f32.mrb[0].mxu0
      %v3323 = vadd.f32 %v3130, %v3322
      %3324 = vmatprep.mubr.bf16.mxu0 %v1688
      %3325 = vmatmul.mubr.bf16.gmra.mrb[0].mxu0 %v1687
      %v3326 = vpop.f32.mrb[0].mxu0
      %v3327 = vadd.f32 %v3134, %v3326
      %v3328 = vpop.f32.mrb[0].mxu0
      %v3329 = vadd.f32 %v3136, %v3328
      %v3330 = vpop.f32.mrb[0].mxu0
      %v3331 = vadd.f32 %v3138, %v3330
      %v3332 = vpop.f32.mrb[0].mxu0
      %v3333 = vadd.f32 %v3140, %v3332
      %3334 = vmatprep.mubr.bf16.mxu0 %v1697
      %3335 = vmatmul.mubr.bf16.gmra.mrb[0].mxu0 %v1696
      %v3336 = vpop.f32.mrb[0].mxu0
      %v3337 = vadd.f32 %v3144, %v3336
      %v3338 = vpop.f32.mrb[0].mxu0
      %v3339 = vadd.f32 %v3146, %v3338
      %v3340 = vpop.f32.mrb[0].mxu0
      %v3341 = vadd.f32 %v3148, %v3340
      %v3342 = vpop.f32.mrb[0].mxu0
      %v3343 = vadd.f32 %v3150, %v3342
      %3344 = vmatprep.mubr.bf16.mxu0 %v1706
      %3345 = vmatmul.mubr.bf16.gmra.mrb[0].mxu0 %v1705
      %v3346 = vpop.f32.mrb[0].mxu0
      %v3347 = vadd.f32 %v3154, %v3346
      %v3348 = vpop.f32.mrb[0].mxu0
      %v3349 = vadd.f32 %v3156, %v3348
      %v3350 = vpop.f32.mrb[0].mxu0
      %v3351 = vadd.f32 %v3158, %v3350
      %v3352 = vpop.f32.mrb[0].mxu0
      %v3353 = vadd.f32 %v3160, %v3352
      %3354 = vmatprep.mubr.bf16.mxu0 %v1715
      %3355 = vmatmul.mubr.bf16.gmra.mrb[0].mxu0 %v1714
      %v3356 = vpop.f32.mrb[0].mxu0
      %v3357 = vadd.f32 %v3164, %v3356
      %v3358 = vpop.f32.mrb[0].mxu0
      %v3359 = vadd.f32 %v3166, %v3358
      %v3360 = vpop.f32.mrb[0].mxu0
      %v3361 = vadd.f32 %v3168, %v3360
      %v3362 = vpop.f32.mrb[0].mxu0
      %v3363 = vadd.f32 %v3170, %v3362
      %3364 = vdwg.mxu0
      %3365 = vmatprep.subr.bf16.mxu0 %v2434
      %3366 = vmatpush1.bf16.msra.mxu0 %v2433
      %3367 = vmatprep.subr.bf16.mxu0 %v2436
      %3368 = vmatpush1.bf16.msra.mxu0 %v2435
      %3369 = vmatprep.subr.bf16.mxu0 %v2438
      %3370 = vmatpush1.bf16.msra.mxu0 %v2437
      %3371 = vmatprep.subr.bf16.mxu0 %v2440
      %3372 = vmatpush1.bf16.msra.mxu0 %v2439
      %3373 = vmatprep.subr.bf16.mxu0 %v2442
      %3374 = vmatpush1.bf16.msra.mxu0 %v2441
      %3375 = vmatprep.subr.bf16.mxu0 %v2444
      %3376 = vmatpush1.bf16.msra.mxu0 %v2443
      %3377 = vmatprep.subr.bf16.mxu0 %v2446
      %3378 = vmatpush1.bf16.msra.mxu0 %v2445
      %3379 = vmatprep.subr.bf16.mxu0 %v2448
      %3380 = vmatpush1.bf16.msra.mxu0 %v2447
      %3381 = vmatprep.subr.bf16.mxu0 0
      %3382 = vmatpush1.bf16.msra.mxu0 0
      %3383 = vmatprep.subr.bf16.mxu0 0
      %3384 = vmatpush1.bf16.msra.mxu0 0
      %3385 = vmatprep.subr.bf16.mxu0 0
      %3386 = vmatpush1.bf16.msra.mxu0 0
      %3387 = vmatprep.subr.bf16.mxu0 0
      %3388 = vmatpush1.bf16.msra.mxu0 0
      %3389 = vmatprep.subr.bf16.mxu0 0
      %3390 = vmatpush1.bf16.msra.mxu0 0
      %3391 = vmatprep.subr.bf16.mxu0 0
      %3392 = vmatpush1.bf16.msra.mxu0 0
      %3393 = vmatprep.subr.bf16.mxu0 0
      %3394 = vmatpush1.bf16.msra.mxu0 0
      %3395 = vmatprep.subr.bf16.mxu0 0
      %3396 = vmatpush1.bf16.msra.mxu0 0
      %3397 = vmatprep.mubr.bf16.mxu0 0
      %3398 = vmatmul.mubr.bf16.gmra.mrb[0].mxu0 %v1581
      %v3399 = vpop.f32.mrb[0].mxu0
      %v3400 = vadd.f32 %v3207, %v3399
      %v3401 = vpop.f32.mrb[0].mxu0
      %v3402 = vadd.f32 %v3209, %v3401
      %v3403 = vpop.f32.mrb[0].mxu0
      %v3404 = vadd.f32 %v3211, %v3403
      %v3405 = vpop.f32.mrb[0].mxu0
      %v3406 = vadd.f32 %v3213, %v3405
      %3407 = vmatprep.mubr.bf16.mxu0 0
      %3408 = vmatmul.mubr.bf16.gmra.mrb[0].mxu0 %v1590
      %v3409 = vpop.f32.mrb[0].mxu0
      %v3410 = vadd.f32 %v3217, %v3409
      %v3411 = vpop.f32.mrb[0].mxu0
      %v3412 = vadd.f32 %v3219, %v3411
      %v3413 = vpop.f32.mrb[0].mxu0
      %v3414 = vadd.f32 %v3221, %v3413
      %v3415 = vpop.f32.mrb[0].mxu0
      %v3416 = vadd.f32 %v3223, %v3415
      %3417 = vmatprep.mubr.bf16.mxu0 0
      %3418 = vmatmul.mubr.bf16.gmra.mrb[0].mxu0 %v1599
      %v3419 = vpop.f32.mrb[0].mxu0
      %v3420 = vadd.f32 %v3227, %v3419
      %v3421 = vpop.f32.mrb[0].mxu0
      %v3422 = vadd.f32 %v3229, %v3421
      %v3423 = vpop.f32.mrb[0].mxu0
      %v3424 = vadd.f32 %v3231, %v3423
      %v3425 = vpop.f32.mrb[0].mxu0
      %v3426 = vadd.f32 %v3233, %v3425
      %3427 = vmatprep.mubr.bf16.mxu0 0
      %3428 = vmatmul.mubr.bf16.gmra.mrb[0].mxu0 %v1608
      %v3429 = vpop.f32.mrb[0].mxu0
      %v3430 = vadd.f32 %v3237, %v3429
      %v3431 = vpop.f32.mrb[0].mxu0
      %v3432 = vadd.f32 %v3239, %v3431
      %v3433 = vpop.f32.mrb[0].mxu0
      %v3434 = vadd.f32 %v3241, %v3433
      %v3435 = vpop.f32.mrb[0].mxu0
      %v3436 = vadd.f32 %v3243, %v3435
      %3437 = vmatprep.mubr.bf16.mxu0 0
      %3438 = vmatmul.mubr.bf16.gmra.mrb[0].mxu0 %v1617
      %v3439 = vpop.f32.mrb[0].mxu0
      %v3440 = vadd.f32 %v3247, %v3439
      %v3441 = vpop.f32.mrb[0].mxu0
      %v3442 = vadd.f32 %v3249, %v3441
      %v3443 = vpop.f32.mrb[0].mxu0
      %v3444 = vadd.f32 %v3251, %v3443
      %v3445 = vpop.f32.mrb[0].mxu0
      %v3446 = vadd.f32 %v3253, %v3445
      %3447 = vmatprep.mubr.bf16.mxu0 0
      %3448 = vmatmul.mubr.bf16.gmra.mrb[0].mxu0 %v1626
      %v3449 = vpop.f32.mrb[0].mxu0
      %v3450 = vadd.f32 %v3257, %v3449
      %v3451 = vpop.f32.mrb[0].mxu0
      %v3452 = vadd.f32 %v3259, %v3451
      %v3453 = vpop.f32.mrb[0].mxu0
      %v3454 = vadd.f32 %v3261, %v3453
      %v3455 = vpop.f32.mrb[0].mxu0
      %v3456 = vadd.f32 %v3263, %v3455
      %3457 = vmatprep.mubr.bf16.mxu0 0
      %3458 = vmatmul.mubr.bf16.gmra.mrb[0].mxu0 %v1635
      %v3459 = vpop.f32.mrb[0].mxu0
      %v3460 = vadd.f32 %v3267, %v3459
      %v3461 = vpop.f32.mrb[0].mxu0
      %v3462 = vadd.f32 %v3269, %v3461
      %v3463 = vpop.f32.mrb[0].mxu0
      %v3464 = vadd.f32 %v3271, %v3463
      %v3465 = vpop.f32.mrb[0].mxu0
      %v3466 = vadd.f32 %v3273, %v3465
      %3467 = vmatprep.mubr.bf16.mxu0 0
      %3468 = vmatmul.mubr.bf16.gmra.mrb[0].mxu0 %v1644
      %v3469 = vpop.f32.mrb[0].mxu0
      %v3470 = vadd.f32 %v3277, %v3469
      %v3471 = vpop.f32.mrb[0].mxu0
      %v3472 = vadd.f32 %v3279, %v3471
      %v3473 = vpop.f32.mrb[0].mxu0
      %v3474 = vadd.f32 %v3281, %v3473
      %v3475 = vpop.f32.mrb[0].mxu0
      %v3476 = vadd.f32 %v3283, %v3475
      %3477 = vmatprep.mubr.bf16.mxu0 0
      %3478 = vmatmul.mubr.bf16.gmra.mrb[0].mxu0 %v1653
      %v3479 = vpop.f32.mrb[0].mxu0
      %v3480 = vadd.f32 %v3287, %v3479
      %v3481 = vpop.f32.mrb[0].mxu0
      %v3482 = vadd.f32 %v3289, %v3481
      %v3483 = vpop.f32.mrb[0].mxu0
      %v3484 = vadd.f32 %v3291, %v3483
      %v3485 = vpop.f32.mrb[0].mxu0
      %v3486 = vadd.f32 %v3293, %v3485
      %3487 = vmatprep.mubr.bf16.mxu0 0
      %3488 = vmatmul.mubr.bf16.gmra.mrb[0].mxu0 %v1662
      %v3489 = vpop.f32.mrb[0].mxu0
      %v3490 = vadd.f32 %v3297, %v3489
      %v3491 = vpop.f32.mrb[0].mxu0
      %v3492 = vadd.f32 %v3299, %v3491
      %v3493 = vpop.f32.mrb[0].mxu0
      %v3494 = vadd.f32 %v3301, %v3493
      %v3495 = vpop.f32.mrb[0].mxu0
      %v3496 = vadd.f32 %v3303, %v3495
      %3497 = vmatprep.mubr.bf16.mxu0 0
      %3498 = vmatmul.mubr.bf16.gmra.mrb[0].mxu0 %v1671
      %v3499 = vpop.f32.mrb[0].mxu0
      %v3500 = vadd.f32 %v3307, %v3499
      %v3501 = vpop.f32.mrb[0].mxu0
      %v3502 = vadd.f32 %v3309, %v3501
      %v3503 = vpop.f32.mrb[0].mxu0
      %v3504 = vadd.f32 %v3311, %v3503
      %v3505 = vpop.f32.mrb[0].mxu0
      %v3506 = vadd.f32 %v3313, %v3505
      %3507 = vmatprep.mubr.bf16.mxu0 0
      %3508 = vmatmul.mubr.bf16.gmra.mrb[0].mxu0 %v1680
      %v3509 = vpop.f32.mrb[0].mxu0
      %v3510 = vadd.f32 %v3317, %v3509
      %v3511 = vpop.f32.mrb[0].mxu0
      %v3512 = vadd.f32 %v3319, %v3511
      %v3513 = vpop.f32.mrb[0].mxu0
      %v3514 = vadd.f32 %v3321, %v3513
      %v3515 = vpop.f32.mrb[0].mxu0
      %v3516 = vadd.f32 %v3323, %v3515
      %3517 = vmatprep.mubr.bf16.mxu0 0
      %3518 = vmatmul.mubr.bf16.gmra.mrb[0].mxu0 %v1689
      %v3519 = vpop.f32.mrb[0].mxu0
      %v3520 = vadd.f32 %v3327, %v3519
      %v3521 = vpop.f32.mrb[0].mxu0
      %v3522 = vadd.f32 %v3329, %v3521
      %v3523 = vpop.f32.mrb[0].mxu0
      %v3524 = vadd.f32 %v3331, %v3523
      %v3525 = vpop.f32.mrb[0].mxu0
      %v3526 = vadd.f32 %v3333, %v3525
      %3527 = vmatprep.mubr.bf16.mxu0 0
      %3528 = vmatmul.mubr.bf16.gmra.mrb[0].mxu0 %v1698
      %v3529 = vpop.f32.mrb[0].mxu0
      %v3530 = vadd.f32 %v3337, %v3529
      %v3531 = vpop.f32.mrb[0].mxu0
      %v3532 = vadd.f32 %v3339, %v3531
      %v3533 = vpop.f32.mrb[0].mxu0
      %v3534 = vadd.f32 %v3341, %v3533
      %v3535 = vpop.f32.mrb[0].mxu0
      %v3536 = vadd.f32 %v3343, %v3535
      %3537 = vmatprep.mubr.bf16.mxu0 0
      %3538 = vmatmul.mubr.bf16.gmra.mrb[0].mxu0 %v1707
      %v3539 = vpop.f32.mrb[0].mxu0
      %v3540 = vadd.f32 %v3347, %v3539
      %v3541 = vpop.f32.mrb[0].mxu0
      %v3542 = vadd.f32 %v3349, %v3541
      %v3543 = vpop.f32.mrb[0].mxu0
      %v3544 = vadd.f32 %v3351, %v3543
      %v3545 = vpop.f32.mrb[0].mxu0
      %v3546 = vadd.f32 %v3353, %v3545
      %3547 = vmatprep.mubr.bf16.mxu0 0
      %3548 = vmatmul.mubr.bf16.gmra.mrb[0].mxu0 %v1716
      %v3549 = vpop.f32.mrb[0].mxu0
      %v3550 = vadd.f32 %v3357, %v3549
      %v3551 = vpop.f32.mrb[0].mxu0
      %v3552 = vadd.f32 %v3359, %v3551
      %v3553 = vpop.f32.mrb[0].mxu0
      %v3554 = vadd.f32 %v3361, %v3553
      %v3555 = vpop.f32.mrb[0].mxu0
      %v3556 = vadd.f32 %v3363, %v3555
      %3557 = vdwg.mxu0
      %vm3558 = vcmp.ge.f32.partialorder %v3400, 0.0
      %vm3559 = vcmp.ge.f32.partialorder %v3402, 0.0
      %vm3560 = vcmp.ge.f32.partialorder %v3404, 0.0
      %vm3561 = vcmp.ge.f32.partialorder %v3406, 0.0
      %vm3562 = vcmp.ge.f32.partialorder %v3410, 0.0
      %vm3563 = vcmp.ge.f32.partialorder %v3412, 0.0
      %vm3564 = vcmp.ge.f32.partialorder %v3414, 0.0
      %vm3565 = vcmp.ge.f32.partialorder %v3416, 0.0
      %vm3566 = vcmp.ge.f32.partialorder %v3420, 0.0
      %vm3567 = vcmp.ge.f32.partialorder %v3422, 0.0
      %vm3568 = vcmp.ge.f32.partialorder %v3424, 0.0
      %vm3569 = vcmp.ge.f32.partialorder %v3426, 0.0
      %vm3570 = vcmp.ge.f32.partialorder %v3430, 0.0
      %vm3571 = vcmp.ge.f32.partialorder %v3432, 0.0
      %vm3572 = vcmp.ge.f32.partialorder %v3434, 0.0
      %vm3573 = vcmp.ge.f32.partialorder %v3436, 0.0
      %vm3574 = vcmp.ge.f32.partialorder %v3440, 0.0
      %vm3575 = vcmp.ge.f32.partialorder %v3442, 0.0
      %vm3576 = vcmp.ge.f32.partialorder %v3444, 0.0
      %vm3577 = vcmp.ge.f32.partialorder %v3446, 0.0
      %vm3578 = vcmp.ge.f32.partialorder %v3450, 0.0
      %vm3579 = vcmp.ge.f32.partialorder %v3452, 0.0
      %vm3580 = vcmp.ge.f32.partialorder %v3454, 0.0
      %vm3581 = vcmp.ge.f32.partialorder %v3456, 0.0
      %vm3582 = vcmp.ge.f32.partialorder %v3460, 0.0
      %vm3583 = vcmp.ge.f32.partialorder %v3462, 0.0
      %vm3584 = vcmp.ge.f32.partialorder %v3464, 0.0
      %vm3585 = vcmp.ge.f32.partialorder %v3466, 0.0
      %vm3586 = vcmp.ge.f32.partialorder %v3470, 0.0
      %vm3587 = vcmp.ge.f32.partialorder %v3472, 0.0
      %vm3588 = vcmp.ge.f32.partialorder %v3474, 0.0
      %vm3589 = vcmp.ge.f32.partialorder %v3476, 0.0
      %vm3590 = vcmp.ge.f32.partialorder %v3480, 0.0
      %vm3591 = vcmp.ge.f32.partialorder %v3482, 0.0
      %vm3592 = vcmp.ge.f32.partialorder %v3484, 0.0
      %vm3593 = vcmp.ge.f32.partialorder %v3486, 0.0
      %vm3594 = vcmp.ge.f32.partialorder %v3490, 0.0
      %vm3595 = vcmp.ge.f32.partialorder %v3492, 0.0
      %vm3596 = vcmp.ge.f32.partialorder %v3494, 0.0
      %vm3597 = vcmp.ge.f32.partialorder %v3496, 0.0
      %vm3598 = vcmp.ge.f32.partialorder %v3500, 0.0
      %vm3599 = vcmp.ge.f32.partialorder %v3502, 0.0
      %vm3600 = vcmp.ge.f32.partialorder %v3504, 0.0
      %vm3601 = vcmp.ge.f32.partialorder %v3506, 0.0
      %vm3602 = vcmp.ge.f32.partialorder %v3510, 0.0
      %vm3603 = vcmp.ge.f32.partialorder %v3512, 0.0
      %vm3604 = vcmp.ge.f32.partialorder %v3514, 0.0
      %vm3605 = vcmp.ge.f32.partialorder %v3516, 0.0
      %vm3606 = vcmp.ge.f32.partialorder %v3520, 0.0
      %vm3607 = vcmp.ge.f32.partialorder %v3522, 0.0
      %vm3608 = vcmp.ge.f32.partialorder %v3524, 0.0
      %vm3609 = vcmp.ge.f32.partialorder %v3526, 0.0
      %vm3610 = vcmp.ge.f32.partialorder %v3530, 0.0
      %vm3611 = vcmp.ge.f32.partialorder %v3532, 0.0
      %vm3612 = vcmp.ge.f32.partialorder %v3534, 0.0
      %vm3613 = vcmp.ge.f32.partialorder %v3536, 0.0
      %vm3614 = vcmp.ge.f32.partialorder %v3540, 0.0
      %vm3615 = vcmp.ge.f32.partialorder %v3542, 0.0
      %vm3616 = vcmp.ge.f32.partialorder %v3544, 0.0
      %vm3617 = vcmp.ge.f32.partialorder %v3546, 0.0
      %vm3618 = vcmp.ge.f32.partialorder %v3550, 0.0
      %vm3619 = vcmp.ge.f32.partialorder %v3552, 0.0
      %vm3620 = vcmp.ge.f32.partialorder %v3554, 0.0
      %vm3621 = vcmp.ge.f32.partialorder %v3556, 0.0
      %v3622 = vmul.f32 %v3400, 0.01
      %v3623 = vmul.f32 %v3402, 0.01
      %v3624 = vmul.f32 %v3404, 0.01
      %v3625 = vmul.f32 %v3406, 0.01
      %v3626 = vmul.f32 %v3410, 0.01
      %v3627 = vmul.f32 %v3412, 0.01
      %v3628 = vmul.f32 %v3414, 0.01
      %v3629 = vmul.f32 %v3416, 0.01
      %v3630 = vmul.f32 %v3420, 0.01
      %v3631 = vmul.f32 %v3422, 0.01
      %v3632 = vmul.f32 %v3424, 0.01
      %v3633 = vmul.f32 %v3426, 0.01
      %v3634 = vmul.f32 %v3430, 0.01
      %v3635 = vmul.f32 %v3432, 0.01
      %v3636 = vmul.f32 %v3434, 0.01
      %v3637 = vmul.f32 %v3436, 0.01
      %v3638 = vmul.f32 %v3440, 0.01
      %v3639 = vmul.f32 %v3442, 0.01
      %v3640 = vmul.f32 %v3444, 0.01
      %v3641 = vmul.f32 %v3446, 0.01
      %v3642 = vmul.f32 %v3450, 0.01
      %v3643 = vmul.f32 %v3452, 0.01
      %v3644 = vmul.f32 %v3454, 0.01
      %v3645 = vmul.f32 %v3456, 0.01
      %v3646 = vmul.f32 %v3460, 0.01
      %v3647 = vmul.f32 %v3462, 0.01
      %v3648 = vmul.f32 %v3464, 0.01
      %v3649 = vmul.f32 %v3466, 0.01
      %v3650 = vmul.f32 %v3470, 0.01
      %v3651 = vmul.f32 %v3472, 0.01
      %v3652 = vmul.f32 %v3474, 0.01
      %v3653 = vmul.f32 %v3476, 0.01
      %v3654 = vmul.f32 %v3480, 0.01
      %v3655 = vmul.f32 %v3482, 0.01
      %v3656 = vmul.f32 %v3484, 0.01
      %v3657 = vmul.f32 %v3486, 0.01
      %v3658 = vmul.f32 %v3490, 0.01
      %v3659 = vmul.f32 %v3492, 0.01
      %v3660 = vmul.f32 %v3494, 0.01
      %v3661 = vmul.f32 %v3496, 0.01
      %v3662 = vmul.f32 %v3500, 0.01
      %v3663 = vmul.f32 %v3502, 0.01
      %v3664 = vmul.f32 %v3504, 0.01
      %v3665 = vmul.f32 %v3506, 0.01
      %v3666 = vmul.f32 %v3510, 0.01
      %v3667 = vmul.f32 %v3512, 0.01
      %v3668 = vmul.f32 %v3514, 0.01
      %v3669 = vmul.f32 %v3516, 0.01
      %v3670 = vmul.f32 %v3520, 0.01
      %v3671 = vmul.f32 %v3522, 0.01
      %v3672 = vmul.f32 %v3524, 0.01
      %v3673 = vmul.f32 %v3526, 0.01
      %v3674 = vmul.f32 %v3530, 0.01
      %v3675 = vmul.f32 %v3532, 0.01
      %v3676 = vmul.f32 %v3534, 0.01
      %v3677 = vmul.f32 %v3536, 0.01
      %v3678 = vmul.f32 %v3540, 0.01
      %v3679 = vmul.f32 %v3542, 0.01
      %v3680 = vmul.f32 %v3544, 0.01
      %v3681 = vmul.f32 %v3546, 0.01
      %v3682 = vmul.f32 %v3550, 0.01
      %v3683 = vmul.f32 %v3552, 0.01
      %v3684 = vmul.f32 %v3554, 0.01
      %v3685 = vmul.f32 %v3556, 0.01
      %v3686 = vsel %vm3558, %v3400, %v3622
      %v3687 = vsel %vm3559, %v3402, %v3623
      %v3688 = vsel %vm3560, %v3404, %v3624
      %v3689 = vsel %vm3561, %v3406, %v3625
      %v3690 = vsel %vm3562, %v3410, %v3626
      %v3691 = vsel %vm3563, %v3412, %v3627
      %v3692 = vsel %vm3564, %v3414, %v3628
      %v3693 = vsel %vm3565, %v3416, %v3629
      %v3694 = vsel %vm3566, %v3420, %v3630
      %v3695 = vsel %vm3567, %v3422, %v3631
      %v3696 = vsel %vm3568, %v3424, %v3632
      %v3697 = vsel %vm3569, %v3426, %v3633
      %v3698 = vsel %vm3570, %v3430, %v3634
      %v3699 = vsel %vm3571, %v3432, %v3635
      %v3700 = vsel %vm3572, %v3434, %v3636
      %v3701 = vsel %vm3573, %v3436, %v3637
      %v3702 = vsel %vm3574, %v3440, %v3638
      %v3703 = vsel %vm3575, %v3442, %v3639
      %v3704 = vsel %vm3576, %v3444, %v3640
      %v3705 = vsel %vm3577, %v3446, %v3641
      %v3706 = vsel %vm3578, %v3450, %v3642
      %v3707 = vsel %vm3579, %v3452, %v3643
      %v3708 = vsel %vm3580, %v3454, %v3644
      %v3709 = vsel %vm3581, %v3456, %v3645
      %v3710 = vsel %vm3582, %v3460, %v3646
      %v3711 = vsel %vm3583, %v3462, %v3647
      %v3712 = vsel %vm3584, %v3464, %v3648
      %v3713 = vsel %vm3585, %v3466, %v3649
      %v3714 = vsel %vm3586, %v3470, %v3650
      %v3715 = vsel %vm3587, %v3472, %v3651
      %v3716 = vsel %vm3588, %v3474, %v3652
      %v3717 = vsel %vm3589, %v3476, %v3653
      %v3718 = vsel %vm3590, %v3480, %v3654
      %v3719 = vsel %vm3591, %v3482, %v3655
      %v3720 = vsel %vm3592, %v3484, %v3656
      %v3721 = vsel %vm3593, %v3486, %v3657
      %v3722 = vsel %vm3594, %v3490, %v3658
      %v3723 = vsel %vm3595, %v3492, %v3659
      %v3724 = vsel %vm3596, %v3494, %v3660
      %v3725 = vsel %vm3597, %v3496, %v3661
      %v3726 = vsel %vm3598, %v3500, %v3662
      %v3727 = vsel %vm3599, %v3502, %v3663
      %v3728 = vsel %vm3600, %v3504, %v3664
      %v3729 = vsel %vm3601, %v3506, %v3665
      %v3730 = vsel %vm3602, %v3510, %v3666
      %v3731 = vsel %vm3603, %v3512, %v3667
      %v3732 = vsel %vm3604, %v3514, %v3668
      %v3733 = vsel %vm3605, %v3516, %v3669
      %v3734 = vsel %vm3606, %v3520, %v3670
      %v3735 = vsel %vm3607, %v3522, %v3671
      %v3736 = vsel %vm3608, %v3524, %v3672
      %v3737 = vsel %vm3609, %v3526, %v3673
      %v3738 = vsel %vm3610, %v3530, %v3674
      %v3739 = vsel %vm3611, %v3532, %v3675
      %v3740 = vsel %vm3612, %v3534, %v3676
      %v3741 = vsel %vm3613, %v3536, %v3677
      %v3742 = vsel %vm3614, %v3540, %v3678
      %v3743 = vsel %vm3615, %v3542, %v3679
      %v3744 = vsel %vm3616, %v3544, %v3680
      %v3745 = vsel %vm3617, %v3546, %v3681
      %v3746 = vsel %vm3618, %v3550, %v3682
      %v3747 = vsel %vm3619, %v3552, %v3683
      %v3748 = vsel %vm3620, %v3554, %v3684
      %v3749 = vsel %vm3621, %v3556, %v3685
      %v3750 = vld [vmem:[%s7] sm:$0x3]
      %v3752 = vlaneseq
      %v3753 = vshrl.u32 %v3752, 7
      %v3754 = vsub.s32 0, %v3753
      %v3755 = vrot.slane %v3750, %v3754
      %v3756 = vlaneseq
      %v3757 = vshrl.u32 %v3756, 7
      %v3758 = vsub.s32 1, %v3757
      %v3759 = vrot.slane %v3750, %v3758
      %v3762 = vmul.f32 %v3686, %v3755
      %v3763 = vmul.f32 %v3687, %v3759
      %v3764 = vmul.f32 %v3688, %v3755
      %v3765 = vmul.f32 %v3689, %v3759
      %v3766 = vmul.f32 %v3690, %v3755
      %v3767 = vmul.f32 %v3691, %v3759
      %v3768 = vmul.f32 %v3692, %v3755
      %v3769 = vmul.f32 %v3693, %v3759
      %v3770 = vmul.f32 %v3694, %v3755
      %v3771 = vmul.f32 %v3695, %v3759
      %v3772 = vmul.f32 %v3696, %v3755
      %v3773 = vmul.f32 %v3697, %v3759
      %v3774 = vmul.f32 %v3698, %v3755
      %v3775 = vmul.f32 %v3699, %v3759
      %v3776 = vmul.f32 %v3700, %v3755
      %v3777 = vmul.f32 %v3701, %v3759
      %v3778 = vmul.f32 %v3702, %v3755
      %v3779 = vmul.f32 %v3703, %v3759
      %v3780 = vmul.f32 %v3704, %v3755
      %v3781 = vmul.f32 %v3705, %v3759
      %v3782 = vmul.f32 %v3706, %v3755
      %v3783 = vmul.f32 %v3707, %v3759
      %v3784 = vmul.f32 %v3708, %v3755
      %v3785 = vmul.f32 %v3709, %v3759
      %v3786 = vmul.f32 %v3710, %v3755
      %v3787 = vmul.f32 %v3711, %v3759
      %v3788 = vmul.f32 %v3712, %v3755
      %v3789 = vmul.f32 %v3713, %v3759
      %v3790 = vmul.f32 %v3714, %v3755
      %v3791 = vmul.f32 %v3715, %v3759
      %v3792 = vmul.f32 %v3716, %v3755
      %v3793 = vmul.f32 %v3717, %v3759
      %v3794 = vmul.f32 %v3718, %v3755
      %v3795 = vmul.f32 %v3719, %v3759
      %v3796 = vmul.f32 %v3720, %v3755
      %v3797 = vmul.f32 %v3721, %v3759
      %v3798 = vmul.f32 %v3722, %v3755
      %v3799 = vmul.f32 %v3723, %v3759
      %v3800 = vmul.f32 %v3724, %v3755
      %v3801 = vmul.f32 %v3725, %v3759
      %v3802 = vmul.f32 %v3726, %v3755
      %v3803 = vmul.f32 %v3727, %v3759
      %v3804 = vmul.f32 %v3728, %v3755
      %v3805 = vmul.f32 %v3729, %v3759
      %v3806 = vmul.f32 %v3730, %v3755
      %v3807 = vmul.f32 %v3731, %v3759
      %v3808 = vmul.f32 %v3732, %v3755
      %v3809 = vmul.f32 %v3733, %v3759
      %v3810 = vmul.f32 %v3734, %v3755
      %v3811 = vmul.f32 %v3735, %v3759
      %v3812 = vmul.f32 %v3736, %v3755
      %v3813 = vmul.f32 %v3737, %v3759
      %v3814 = vmul.f32 %v3738, %v3755
      %v3815 = vmul.f32 %v3739, %v3759
      %v3816 = vmul.f32 %v3740, %v3755
      %v3817 = vmul.f32 %v3741, %v3759
      %v3818 = vmul.f32 %v3742, %v3755
      %v3819 = vmul.f32 %v3743, %v3759
      %v3820 = vmul.f32 %v3744, %v3755
      %v3821 = vmul.f32 %v3745, %v3759
      %v3822 = vmul.f32 %v3746, %v3755
      %v3823 = vmul.f32 %v3747, %v3759
      %v3824 = vmul.f32 %v3748, %v3755
      %v3825 = vmul.f32 %v3749, %v3759
      %v3826 = vld [vmem:[%s8] sm:$0x3]
      %v3828 = vlaneseq
      %v3829 = vshrl.u32 %v3828, 7
      %v3830 = vsub.s32 0, %v3829
      %v3831 = vrot.slane %v3826, %v3830
      %v3832 = vlaneseq
      %v3833 = vshrl.u32 %v3832, 7
      %v3834 = vsub.s32 1, %v3833
      %v3835 = vrot.slane %v3826, %v3834
      %v3838 = vadd.f32 %v3762, %v3831
      %v3839 = vadd.f32 %v3763, %v3835
      %v3840 = vadd.f32 %v3764, %v3831
      %v3841 = vadd.f32 %v3765, %v3835
      %v3842 = vadd.f32 %v3766, %v3831
      %v3843 = vadd.f32 %v3767, %v3835
      %v3844 = vadd.f32 %v3768, %v3831
      %v3845 = vadd.f32 %v3769, %v3835
      %v3846 = vadd.f32 %v3770, %v3831
      %v3847 = vadd.f32 %v3771, %v3835
      %v3848 = vadd.f32 %v3772, %v3831
      %v3849 = vadd.f32 %v3773, %v3835
      %v3850 = vadd.f32 %v3774, %v3831
      %v3851 = vadd.f32 %v3775, %v3835
      %v3852 = vadd.f32 %v3776, %v3831
      %v3853 = vadd.f32 %v3777, %v3835
      %v3854 = vadd.f32 %v3778, %v3831
      %v3855 = vadd.f32 %v3779, %v3835
      %v3856 = vadd.f32 %v3780, %v3831
      %v3857 = vadd.f32 %v3781, %v3835
      %v3858 = vadd.f32 %v3782, %v3831
      %v3859 = vadd.f32 %v3783, %v3835
      %v3860 = vadd.f32 %v3784, %v3831
      %v3861 = vadd.f32 %v3785, %v3835
      %v3862 = vadd.f32 %v3786, %v3831
      %v3863 = vadd.f32 %v3787, %v3835
      %v3864 = vadd.f32 %v3788, %v3831
      %v3865 = vadd.f32 %v3789, %v3835
      %v3866 = vadd.f32 %v3790, %v3831
      %v3867 = vadd.f32 %v3791, %v3835
      %v3868 = vadd.f32 %v3792, %v3831
      %v3869 = vadd.f32 %v3793, %v3835
      %v3870 = vadd.f32 %v3794, %v3831
      %v3871 = vadd.f32 %v3795, %v3835
      %v3872 = vadd.f32 %v3796, %v3831
      %v3873 = vadd.f32 %v3797, %v3835
      %v3874 = vadd.f32 %v3798, %v3831
      %v3875 = vadd.f32 %v3799, %v3835
      %v3876 = vadd.f32 %v3800, %v3831
      %v3877 = vadd.f32 %v3801, %v3835
      %v3878 = vadd.f32 %v3802, %v3831
      %v3879 = vadd.f32 %v3803, %v3835
      %v3880 = vadd.f32 %v3804, %v3831
      %v3881 = vadd.f32 %v3805, %v3835
      %v3882 = vadd.f32 %v3806, %v3831
      %v3883 = vadd.f32 %v3807, %v3835
      %v3884 = vadd.f32 %v3808, %v3831
      %v3885 = vadd.f32 %v3809, %v3835
      %v3886 = vadd.f32 %v3810, %v3831
      %v3887 = vadd.f32 %v3811, %v3835
      %v3888 = vadd.f32 %v3812, %v3831
      %v3889 = vadd.f32 %v3813, %v3835
      %v3890 = vadd.f32 %v3814, %v3831
      %v3891 = vadd.f32 %v3815, %v3835
      %v3892 = vadd.f32 %v3816, %v3831
      %v3893 = vadd.f32 %v3817, %v3835
      %v3894 = vadd.f32 %v3818, %v3831
      %v3895 = vadd.f32 %v3819, %v3835
      %v3896 = vadd.f32 %v3820, %v3831
      %v3897 = vadd.f32 %v3821, %v3835
      %v3898 = vadd.f32 %v3822, %v3831
      %v3899 = vadd.f32 %v3823, %v3835
      %v3900 = vadd.f32 %v3824, %v3831
      %v3901 = vadd.f32 %v3825, %v3835
      %3902 = vxpose.xlu0.b32.start [1/16] %v3838, 128
      %3903 = vxpose.xlu0.b32.cont [2/16] %v3840, 128
      %3904 = vxpose.xlu0.b32.cont [3/16] %v3842, 128
      %3905 = vxpose.xlu0.b32.cont [4/16] %v3844, 128
      %3906 = vxpose.xlu0.b32.cont [5/16] %v3846, 128
      %3907 = vxpose.xlu0.b32.cont [6/16] %v3848, 128
      %3908 = vxpose.xlu0.b32.cont [7/16] %v3850, 128
      %3909 = vxpose.xlu0.b32.cont [8/16] %v3852, 128
      %3910 = vxpose.xlu0.b32.cont [9/16] %v3854, 128
      %3911 = vxpose.xlu0.b32.cont [10/16] %v3856, 128
      %3912 = vxpose.xlu0.b32.cont [11/16] %v3858, 128
      %3913 = vxpose.xlu0.b32.cont [12/16] %v3860, 128
      %3914 = vxpose.xlu0.b32.cont [13/16] %v3862, 128
      %3915 = vxpose.xlu0.b32.cont [14/16] %v3864, 128
      %3916 = vxpose.xlu0.b32.cont [15/16] %v3866, 128
      %3917 = vxpose.xlu0.b32.end [16/16] %v3868, 128
      %v3918 = vpop.trf.xlu0
      %v3919 = vpop.trf.xlu0
      %v3920 = vpop.trf.xlu0
      %v3921 = vpop.trf.xlu0
      %v3922 = vpop.trf.xlu0
      %v3923 = vpop.trf.xlu0
      %v3924 = vpop.trf.xlu0
      %v3925 = vpop.trf.xlu0
      %v3926 = vpop.trf.xlu0
      %v3927 = vpop.trf.xlu0
      %v3928 = vpop.trf.xlu0
      %v3929 = vpop.trf.xlu0
      %v3930 = vpop.trf.xlu0
      %v3931 = vpop.trf.xlu0
      %v3932 = vpop.trf.xlu0
      %v3933 = vpop.trf.xlu0
      %3934 = vxpose.xlu0.b32.start [1/16] %v3839, 128
      %3935 = vxpose.xlu0.b32.cont [2/16] %v3841, 128
      %3936 = vxpose.xlu0.b32.cont [3/16] %v3843, 128
      %3937 = vxpose.xlu0.b32.cont [4/16] %v3845, 128
      %3938 = vxpose.xlu0.b32.cont [5/16] %v3847, 128
      %3939 = vxpose.xlu0.b32.cont [6/16] %v3849, 128
      %3940 = vxpose.xlu0.b32.cont [7/16] %v3851, 128
      %3941 = vxpose.xlu0.b32.cont [8/16] %v3853, 128
      %3942 = vxpose.xlu0.b32.cont [9/16] %v3855, 128
      %3943 = vxpose.xlu0.b32.cont [10/16] %v3857, 128
      %3944 = vxpose.xlu0.b32.cont [11/16] %v3859, 128
      %3945 = vxpose.xlu0.b32.cont [12/16] %v3861, 128
      %3946 = vxpose.xlu0.b32.cont [13/16] %v3863, 128
      %3947 = vxpose.xlu0.b32.cont [14/16] %v3865, 128
      %3948 = vxpose.xlu0.b32.cont [15/16] %v3867, 128
      %3949 = vxpose.xlu0.b32.end [16/16] %v3869, 128
      %v3950 = vpop.trf.xlu0
      %v3951 = vpop.trf.xlu0
      %v3952 = vpop.trf.xlu0
      %v3953 = vpop.trf.xlu0
      %v3954 = vpop.trf.xlu0
      %v3955 = vpop.trf.xlu0
      %v3956 = vpop.trf.xlu0
      %v3957 = vpop.trf.xlu0
      %v3958 = vpop.trf.xlu0
      %v3959 = vpop.trf.xlu0
      %v3960 = vpop.trf.xlu0
      %v3961 = vpop.trf.xlu0
      %v3962 = vpop.trf.xlu0
      %v3963 = vpop.trf.xlu0
      %v3964 = vpop.trf.xlu0
      %v3965 = vpop.trf.xlu0
      %3966 = vxpose.xlu0.b32.start [1/16] %v3870, 128
      %3967 = vxpose.xlu0.b32.cont [2/16] %v3872, 128
      %3968 = vxpose.xlu0.b32.cont [3/16] %v3874, 128
      %3969 = vxpose.xlu0.b32.cont [4/16] %v3876, 128
      %3970 = vxpose.xlu0.b32.cont [5/16] %v3878, 128
      %3971 = vxpose.xlu0.b32.cont [6/16] %v3880, 128
      %3972 = vxpose.xlu0.b32.cont [7/16] %v3882, 128
      %3973 = vxpose.xlu0.b32.cont [8/16] %v3884, 128
      %3974 = vxpose.xlu0.b32.cont [9/16] %v3886, 128
      %3975 = vxpose.xlu0.b32.cont [10/16] %v3888, 128
      %3976 = vxpose.xlu0.b32.cont [11/16] %v3890, 128
      %3977 = vxpose.xlu0.b32.cont [12/16] %v3892, 128
      %3978 = vxpose.xlu0.b32.cont [13/16] %v3894, 128
      %3979 = vxpose.xlu0.b32.cont [14/16] %v3896, 128
      %3980 = vxpose.xlu0.b32.cont [15/16] %v3898, 128
      %3981 = vxpose.xlu0.b32.end [16/16] %v3900, 128
      %v3982 = vpop.trf.xlu0
      %v3983 = vpop.trf.xlu0
      %v3984 = vpop.trf.xlu0
      %v3985 = vpop.trf.xlu0
      %v3986 = vpop.trf.xlu0
      %v3987 = vpop.trf.xlu0
      %v3988 = vpop.trf.xlu0
      %v3989 = vpop.trf.xlu0
      %v3990 = vpop.trf.xlu0
      %v3991 = vpop.trf.xlu0
      %v3992 = vpop.trf.xlu0
      %v3993 = vpop.trf.xlu0
      %v3994 = vpop.trf.xlu0
      %v3995 = vpop.trf.xlu0
      %v3996 = vpop.trf.xlu0
      %v3997 = vpop.trf.xlu0
      %3998 = vxpose.xlu0.b32.start [1/16] %v3871, 128
      %3999 = vxpose.xlu0.b32.cont [2/16] %v3873, 128
      %4000 = vxpose.xlu0.b32.cont [3/16] %v3875, 128
      %4001 = vxpose.xlu0.b32.cont [4/16] %v3877, 128
      %4002 = vxpose.xlu0.b32.cont [5/16] %v3879, 128
      %4003 = vxpose.xlu0.b32.cont [6/16] %v3881, 128
      %4004 = vxpose.xlu0.b32.cont [7/16] %v3883, 128
      %4005 = vxpose.xlu0.b32.cont [8/16] %v3885, 128
      %4006 = vxpose.xlu0.b32.cont [9/16] %v3887, 128
      %4007 = vxpose.xlu0.b32.cont [10/16] %v3889, 128
      %4008 = vxpose.xlu0.b32.cont [11/16] %v3891, 128
      %4009 = vxpose.xlu0.b32.cont [12/16] %v3893, 128
      %4010 = vxpose.xlu0.b32.cont [13/16] %v3895, 128
      %4011 = vxpose.xlu0.b32.cont [14/16] %v3897, 128
      %4012 = vxpose.xlu0.b32.cont [15/16] %v3899, 128
      %4013 = vxpose.xlu0.b32.end [16/16] %v3901, 128
      %v4014 = vpop.trf.xlu0
      %v4015 = vpop.trf.xlu0
      %v4016 = vpop.trf.xlu0
      %v4017 = vpop.trf.xlu0
      %v4018 = vpop.trf.xlu0
      %v4019 = vpop.trf.xlu0
      %v4020 = vpop.trf.xlu0
      %v4021 = vpop.trf.xlu0
      %v4022 = vpop.trf.xlu0
      %v4023 = vpop.trf.xlu0
      %v4024 = vpop.trf.xlu0
      %v4025 = vpop.trf.xlu0
      %v4026 = vpop.trf.xlu0
      %v4027 = vpop.trf.xlu0
      %v4028 = vpop.trf.xlu0
      %v4029 = vpop.trf.xlu0
      %v4030 = vpack.c.bf16 %v3919, %v3918
      %v4031 = vpack.c.bf16 %v3983, %v3982
      %v4032 = vpack.c.bf16 %v3921, %v3920
      %v4033 = vpack.c.bf16 %v3985, %v3984
      %v4034 = vpack.c.bf16 %v3923, %v3922
      %v4035 = vpack.c.bf16 %v3987, %v3986
      %v4036 = vpack.c.bf16 %v3925, %v3924
      %v4037 = vpack.c.bf16 %v3989, %v3988
      %v4038 = vpack.c.bf16 %v3927, %v3926
      %v4039 = vpack.c.bf16 %v3991, %v3990
      %v4040 = vpack.c.bf16 %v3929, %v3928
      %v4041 = vpack.c.bf16 %v3993, %v3992
      %v4042 = vpack.c.bf16 %v3931, %v3930
      %v4043 = vpack.c.bf16 %v3995, %v3994
      %v4044 = vpack.c.bf16 %v3933, %v3932
      %v4045 = vpack.c.bf16 %v3997, %v3996
      %v4046 = vpack.c.bf16 %v3951, %v3950
      %v4047 = vpack.c.bf16 %v4015, %v4014
      %v4048 = vpack.c.bf16 %v3953, %v3952
      %v4049 = vpack.c.bf16 %v4017, %v4016
      %v4050 = vpack.c.bf16 %v3955, %v3954
      %v4051 = vpack.c.bf16 %v4019, %v4018
      %v4052 = vpack.c.bf16 %v3957, %v3956
      %v4053 = vpack.c.bf16 %v4021, %v4020
      %v4054 = vpack.c.bf16 %v3959, %v3958
      %v4055 = vpack.c.bf16 %v4023, %v4022
      %v4056 = vpack.c.bf16 %v3961, %v3960
      %v4057 = vpack.c.bf16 %v4025, %v4024
      %v4058 = vpack.c.bf16 %v3963, %v3962
      %v4059 = vpack.c.bf16 %v4027, %v4026
      %v4060 = vpack.c.bf16 %v3965, %v3964
      %v4061 = vpack.c.bf16 %v4029, %v4028
      %4062 = vst [vmem:[#allocation4] sm:$0xff] %v4030
      %4063 = vst [vmem:[#allocation4 + $0x8] sm:$0xff] %v4031
      %4064 = vst [vmem:[#allocation4 + $0x10] sm:$0xff] %v4032
      %4065 = vst [vmem:[#allocation4 + $0x18] sm:$0xff] %v4033
      %4066 = vst [vmem:[#allocation4 + $0x20] sm:$0xff] %v4034
      %4067 = vst [vmem:[#allocation4 + $0x28] sm:$0xff] %v4035
      %4068 = vst [vmem:[#allocation4 + $0x30] sm:$0xff] %v4036
      %4069 = vst [vmem:[#allocation4 + $0x38] sm:$0xff] %v4037
      %4070 = vst [vmem:[#allocation4 + $0x40] sm:$0xff] %v4038
      %4071 = vst [vmem:[#allocation4 + $0x48] sm:$0xff] %v4039
      %4072 = vst [vmem:[#allocation4 + $0x50] sm:$0xff] %v4040
      %4073 = vst [vmem:[#allocation4 + $0x58] sm:$0xff] %v4041
      %4074 = vst [vmem:[#allocation4 + $0x60] sm:$0xff] %v4042
      %4075 = vst [vmem:[#allocation4 + $0x68] sm:$0xff] %v4043
      %4076 = vst [vmem:[#allocation4 + $0x70] sm:$0xff] %v4044
      %4077 = vst [vmem:[#allocation4 + $0x78] sm:$0xff] %v4045
      %4078 = vst [vmem:[#allocation4 + $0x80] sm:$0xff] %v4046
      %4079 = vst [vmem:[#allocation4 + $0x88] sm:$0xff] %v4047
      %4080 = vst [vmem:[#allocation4 + $0x90] sm:$0xff] %v4048
      %4081 = vst [vmem:[#allocation4 + $0x98] sm:$0xff] %v4049
      %4082 = vst [vmem:[#allocation4 + $0xa0] sm:$0xff] %v4050
      %4083 = vst [vmem:[#allocation4 + $0xa8] sm:$0xff] %v4051
      %4084 = vst [vmem:[#allocation4 + $0xb0] sm:$0xff] %v4052
      %4085 = vst [vmem:[#allocation4 + $0xb8] sm:$0xff] %v4053
      %4086 = vst [vmem:[#allocation4 + $0xc0] sm:$0xff] %v4054
      %4087 = vst [vmem:[#allocation4 + $0xc8] sm:$0xff] %v4055
      %4088 = vst [vmem:[#allocation4 + $0xd0] sm:$0xff] %v4056
      %4089 = vst [vmem:[#allocation4 + $0xd8] sm:$0xff] %v4057
      %4090 = vst [vmem:[#allocation4 + $0xe0] sm:$0xff] %v4058
      %4091 = vst [vmem:[#allocation4 + $0xe8] sm:$0xff] %v4059
      %4092 = vst [vmem:[#allocation4 + $0xf0] sm:$0xff] %v4060
      %4093 = vst [vmem:[#allocation4 + $0xf8] sm:$0xff] %v4061
      %v4094 = vld [vmem:[%s391] sm:$0xff]
      %v4095 = vld [vmem:[%s391 + $0x8] sm:$0xff]
      %v4096 = vld [vmem:[%s391 + $0x10] sm:$0xff]
      %v4097 = vld [vmem:[%s391 + $0x18] sm:$0xff]
      %v4098 = vld [vmem:[%s391 + $0x20] sm:$0xff]
      %v4099 = vld [vmem:[%s391 + $0x28] sm:$0xff]
      %v4100 = vld [vmem:[%s391 + $0x30] sm:$0xff]
      %v4101 = vld [vmem:[%s391 + $0x38] sm:$0xff]
      %v4102 = vld [vmem:[%s391 + $0x40] sm:$0xff]
      %v4103 = vld [vmem:[%s391 + $0x48] sm:$0xff]
      %v4104 = vld [vmem:[%s391 + $0x50] sm:$0xff]
      %v4105 = vld [vmem:[%s391 + $0x58] sm:$0xff]
      %v4106 = vld [vmem:[%s391 + $0x60] sm:$0xff]
      %v4107 = vld [vmem:[%s391 + $0x68] sm:$0xff]
      %v4108 = vld [vmem:[%s391 + $0x70] sm:$0xff]
      %v4109 = vld [vmem:[%s391 + $0x78] sm:$0xff]
      %v4110 = vld [vmem:[%s391 + $0x80] sm:$0xff]
      %v4111 = vld [vmem:[%s391 + $0x88] sm:$0xff]
      %v4112 = vld [vmem:[%s391 + $0x90] sm:$0xff]
      %v4113 = vld [vmem:[%s391 + $0x98] sm:$0xff]
      %v4114 = vld [vmem:[%s391 + $0xa0] sm:$0xff]
      %v4115 = vld [vmem:[%s391 + $0xa8] sm:$0xff]
      %v4116 = vld [vmem:[%s391 + $0xb0] sm:$0xff]
      %v4117 = vld [vmem:[%s391 + $0xb8] sm:$0xff]
      %v4118 = vld [vmem:[%s391 + $0xc0] sm:$0xff]
      %v4119 = vld [vmem:[%s391 + $0xc8] sm:$0xff]
      %v4120 = vld [vmem:[%s391 + $0xd0] sm:$0xff]
      %v4121 = vld [vmem:[%s391 + $0xd8] sm:$0xff]
      %v4122 = vld [vmem:[%s391 + $0xe0] sm:$0xff]
      %v4123 = vld [vmem:[%s391 + $0xe8] sm:$0xff]
      %v4124 = vld [vmem:[%s391 + $0xf0] sm:$0xff]
      %v4125 = vld [vmem:[%s391 + $0xf8] sm:$0xff]
      %v4126 = vld [vmem:[%s3] sm:$0xf]
      %v4127 = vld [vmem:[%s3 + $0x4] sm:$0xf]
      %v4128 = vld [vmem:[%s3 + $0x8] sm:$0xf]
      %v4129 = vld [vmem:[%s3 + $0xc] sm:$0xf]
      %v4130 = vld [vmem:[%s3 + $0x10] sm:$0xf]
      %v4131 = vld [vmem:[%s3 + $0x14] sm:$0xf]
      %v4132 = vld [vmem:[%s3 + $0x18] sm:$0xf]
      %v4133 = vld [vmem:[%s3 + $0x1c] sm:$0xf]
      %v4134 = vld [vmem:[%s3 + $0x20] sm:$0xf]
      %v4135 = vld [vmem:[%s3 + $0x24] sm:$0xf]
      %v4136 = vld [vmem:[%s3 + $0x28] sm:$0xf]
      %v4137 = vld [vmem:[%s3 + $0x2c] sm:$0xf]
      %v4138 = vld [vmem:[%s3 + $0x30] sm:$0xf]
      %v4139 = vld [vmem:[%s3 + $0x34] sm:$0xf]
      %v4140 = vld [vmem:[%s3 + $0x38] sm:$0xf]
      %v4141 = vld [vmem:[%s3 + $0x3c] sm:$0xf]
      %v4142 = vld [vmem:[%s3 + $0x40] sm:$0xf]
      %v4143 = vld [vmem:[%s3 + $0x44] sm:$0xf]
      %v4144 = vld [vmem:[%s3 + $0x48] sm:$0xf]
      %v4145 = vld [vmem:[%s3 + $0x4c] sm:$0xf]
      %v4146 = vld [vmem:[%s3 + $0x50] sm:$0xf]
      %v4147 = vld [vmem:[%s3 + $0x54] sm:$0xf]
      %v4148 = vld [vmem:[%s3 + $0x58] sm:$0xf]
      %v4149 = vld [vmem:[%s3 + $0x5c] sm:$0xf]
      %v4150 = vld [vmem:[%s3 + $0x60] sm:$0xf]
      %v4151 = vld [vmem:[%s3 + $0x64] sm:$0xf]
      %v4152 = vld [vmem:[%s3 + $0x68] sm:$0xf]
      %v4153 = vld [vmem:[%s3 + $0x6c] sm:$0xf]
      %v4154 = vld [vmem:[%s3 + $0x70] sm:$0xf]
      %v4155 = vld [vmem:[%s3 + $0x74] sm:$0xf]
      %v4156 = vld [vmem:[%s3 + $0x78] sm:$0xf]
      %v4157 = vld [vmem:[%s3 + $0x7c] sm:$0xf]
      %v4158 = vld [vmem:[%s4] sm:$0x1]
      %v4160 = vlaneseq
      %v4161 = vshrl.u32 %v4160, 7
      %v4162 = vsub.s32 0, %v4161
      %v4163 = vrot.slane %v4158, %v4162
      %v4197 = vunpack.c.l.b16 %v4094
      %v4198 = vunpack.c.h.b16 %v4094
      %v4199 = vunpack.c.l.b16 %v4095
      %v4200 = vunpack.c.h.b16 %v4095
      %v4201 = vunpack.c.l.b16 %v4096
      %v4202 = vunpack.c.h.b16 %v4096
      %v4203 = vunpack.c.l.b16 %v4097
      %v4204 = vunpack.c.h.b16 %v4097
      %v4205 = vunpack.c.l.b16 %v4098
      %v4206 = vunpack.c.h.b16 %v4098
      %v4207 = vunpack.c.l.b16 %v4099
      %v4208 = vunpack.c.h.b16 %v4099
      %v4209 = vunpack.c.l.b16 %v4100
      %v4210 = vunpack.c.h.b16 %v4100
      %v4211 = vunpack.c.l.b16 %v4101
      %v4212 = vunpack.c.h.b16 %v4101
      %v4213 = vunpack.c.l.b16 %v4102
      %v4214 = vunpack.c.h.b16 %v4102
      %v4215 = vunpack.c.l.b16 %v4103
      %v4216 = vunpack.c.h.b16 %v4103
      %v4217 = vunpack.c.l.b16 %v4104
      %v4218 = vunpack.c.h.b16 %v4104
      %v4219 = vunpack.c.l.b16 %v4105
      %v4220 = vunpack.c.h.b16 %v4105
      %v4221 = vunpack.c.l.b16 %v4106
      %v4222 = vunpack.c.h.b16 %v4106
      %v4223 = vunpack.c.l.b16 %v4107
      %v4224 = vunpack.c.h.b16 %v4107
      %v4225 = vunpack.c.l.b16 %v4108
      %v4226 = vunpack.c.h.b16 %v4108
      %v4227 = vunpack.c.l.b16 %v4109
      %v4228 = vunpack.c.h.b16 %v4109
      %v4229 = vunpack.c.l.b16 %v4110
      %v4230 = vunpack.c.h.b16 %v4110
      %v4231 = vunpack.c.l.b16 %v4111
      %v4232 = vunpack.c.h.b16 %v4111
      %v4233 = vunpack.c.l.b16 %v4112
      %v4234 = vunpack.c.h.b16 %v4112
      %v4235 = vunpack.c.l.b16 %v4113
      %v4236 = vunpack.c.h.b16 %v4113
      %v4237 = vunpack.c.l.b16 %v4114
      %v4238 = vunpack.c.h.b16 %v4114
      %v4239 = vunpack.c.l.b16 %v4115
      %v4240 = vunpack.c.h.b16 %v4115
      %v4241 = vunpack.c.l.b16 %v4116
      %v4242 = vunpack.c.h.b16 %v4116
      %v4243 = vunpack.c.l.b16 %v4117
      %v4244 = vunpack.c.h.b16 %v4117
      %v4245 = vunpack.c.l.b16 %v4118
      %v4246 = vunpack.c.h.b16 %v4118
      %v4247 = vunpack.c.l.b16 %v4119
      %v4248 = vunpack.c.h.b16 %v4119
      %v4249 = vunpack.c.l.b16 %v4120
      %v4250 = vunpack.c.h.b16 %v4120
      %v4251 = vunpack.c.l.b16 %v4121
      %v4252 = vunpack.c.h.b16 %v4121
      %v4253 = vunpack.c.l.b16 %v4122
      %v4254 = vunpack.c.h.b16 %v4122
      %v4255 = vunpack.c.l.b16 %v4123
      %v4256 = vunpack.c.h.b16 %v4123
      %v4257 = vunpack.c.l.b16 %v4124
      %v4258 = vunpack.c.h.b16 %v4124
      %v4259 = vunpack.c.l.b16 %v4125
      %v4260 = vunpack.c.h.b16 %v4125
      %v4261 = vpack.c.b16 %v4199, %v4197
      %v4262 = vpack.c.b16 %v4200, %v4198
      %v4263 = vpack.c.b16 %v4203, %v4201
      %v4264 = vpack.c.b16 %v4204, %v4202
      %v4265 = vpack.c.b16 %v4207, %v4205
      %v4266 = vpack.c.b16 %v4208, %v4206
      %v4267 = vpack.c.b16 %v4211, %v4209
      %v4268 = vpack.c.b16 %v4212, %v4210
      %v4269 = vpack.c.b16 %v4215, %v4213
      %v4270 = vpack.c.b16 %v4216, %v4214
      %v4271 = vpack.c.b16 %v4219, %v4217
      %v4272 = vpack.c.b16 %v4220, %v4218
      %v4273 = vpack.c.b16 %v4223, %v4221
      %v4274 = vpack.c.b16 %v4224, %v4222
      %v4275 = vpack.c.b16 %v4227, %v4225
      %v4276 = vpack.c.b16 %v4228, %v4226
      %v4277 = vpack.c.b16 %v4231, %v4229
      %v4278 = vpack.c.b16 %v4232, %v4230
      %v4279 = vpack.c.b16 %v4235, %v4233
      %v4280 = vpack.c.b16 %v4236, %v4234
      %v4281 = vpack.c.b16 %v4239, %v4237
      %v4282 = vpack.c.b16 %v4240, %v4238
      %v4283 = vpack.c.b16 %v4243, %v4241
      %v4284 = vpack.c.b16 %v4244, %v4242
      %v4285 = vpack.c.b16 %v4247, %v4245
      %v4286 = vpack.c.b16 %v4248, %v4246
      %v4287 = vpack.c.b16 %v4251, %v4249
      %v4288 = vpack.c.b16 %v4252, %v4250
      %v4289 = vpack.c.b16 %v4255, %v4253
      %v4290 = vpack.c.b16 %v4256, %v4254
      %v4291 = vpack.c.b16 %v4259, %v4257
      %v4292 = vpack.c.b16 %v4260, %v4258
      %v4357 = vunpack.c.l.b16 %v4126
      %v4358 = vunpack.c.l.b16 %v4127
      %v4359 = vunpack.c.l.b16 %v4128
      %v4360 = vunpack.c.l.b16 %v4129
      %v4361 = vunpack.c.l.b16 %v4130
      %v4362 = vunpack.c.l.b16 %v4131
      %v4363 = vunpack.c.l.b16 %v4132
      %v4364 = vunpack.c.l.b16 %v4133
      %v4365 = vunpack.c.l.b16 %v4134
      %v4366 = vunpack.c.l.b16 %v4135
      %v4367 = vunpack.c.l.b16 %v4136
      %v4368 = vunpack.c.l.b16 %v4137
      %v4369 = vunpack.c.l.b16 %v4138
      %v4370 = vunpack.c.l.b16 %v4139
      %v4371 = vunpack.c.l.b16 %v4140
      %v4372 = vunpack.c.l.b16 %v4141
      %v4373 = vunpack.c.l.b16 %v4142
      %v4374 = vunpack.c.l.b16 %v4143
      %v4375 = vunpack.c.l.b16 %v4144
      %v4376 = vunpack.c.l.b16 %v4145
      %v4377 = vunpack.c.l.b16 %v4146
      %v4378 = vunpack.c.l.b16 %v4147
      %v4379 = vunpack.c.l.b16 %v4148
      %v4380 = vunpack.c.l.b16 %v4149
      %v4381 = vunpack.c.l.b16 %v4150
      %v4382 = vunpack.c.l.b16 %v4151
      %v4383 = vunpack.c.l.b16 %v4152
      %v4384 = vunpack.c.l.b16 %v4153
      %v4385 = vunpack.c.l.b16 %v4154
      %v4386 = vunpack.c.l.b16 %v4155
      %v4387 = vunpack.c.l.b16 %v4156
      %v4388 = vunpack.c.l.b16 %v4157
      %v4389 = vpack.c.b16 %v4358, %v4357
      %v4390 = vpack.c.b16 %v4360, %v4359
      %v4391 = vpack.c.b16 %v4362, %v4361
      %v4392 = vpack.c.b16 %v4364, %v4363
      %v4393 = vpack.c.b16 %v4366, %v4365
      %v4394 = vpack.c.b16 %v4368, %v4367
      %v4395 = vpack.c.b16 %v4370, %v4369
      %v4396 = vpack.c.b16 %v4372, %v4371
      %v4397 = vpack.c.b16 %v4374, %v4373
      %v4398 = vpack.c.b16 %v4376, %v4375
      %v4399 = vpack.c.b16 %v4378, %v4377
      %v4400 = vpack.c.b16 %v4380, %v4379
      %v4401 = vpack.c.b16 %v4382, %v4381
      %v4402 = vpack.c.b16 %v4384, %v4383
      %v4403 = vpack.c.b16 %v4386, %v4385
      %v4404 = vpack.c.b16 %v4388, %v4387
      %4421 = vmatprep.subr.bf16.mxu0 0
      %4422 = vmatpush1.bf16.msra.mxu0 %v4389
      %4423 = vmatprep.subr.bf16.mxu0 0
      %4424 = vmatpush1.bf16.msra.mxu0 %v4390
      %4425 = vmatprep.subr.bf16.mxu0 0
      %4426 = vmatpush1.bf16.msra.mxu0 %v4391
      %4427 = vmatprep.subr.bf16.mxu0 0
      %4428 = vmatpush1.bf16.msra.mxu0 %v4392
      %4429 = vmatprep.subr.bf16.mxu0 0
      %4430 = vmatpush1.bf16.msra.mxu0 %v4393
      %4431 = vmatprep.subr.bf16.mxu0 0
      %4432 = vmatpush1.bf16.msra.mxu0 %v4394
      %4433 = vmatprep.subr.bf16.mxu0 0
      %4434 = vmatpush1.bf16.msra.mxu0 %v4395
      %4435 = vmatprep.subr.bf16.mxu0 0
      %4436 = vmatpush1.bf16.msra.mxu0 %v4396
      %4437 = vmatprep.subr.bf16.mxu0 0
      %4438 = vmatpush1.bf16.msra.mxu0 %v4397
      %4439 = vmatprep.subr.bf16.mxu0 0
      %4440 = vmatpush1.bf16.msra.mxu0 %v4398
      %4441 = vmatprep.subr.bf16.mxu0 0
      %4442 = vmatpush1.bf16.msra.mxu0 %v4399
      %4443 = vmatprep.subr.bf16.mxu0 0
      %4444 = vmatpush1.bf16.msra.mxu0 %v4400
      %4445 = vmatprep.subr.bf16.mxu0 0
      %4446 = vmatpush1.bf16.msra.mxu0 %v4401
      %4447 = vmatprep.subr.bf16.mxu0 0
      %4448 = vmatpush1.bf16.msra.mxu0 %v4402
      %4449 = vmatprep.subr.bf16.mxu0 0
      %4450 = vmatpush1.bf16.msra.mxu0 %v4403
      %4451 = vmatprep.subr.bf16.mxu0 0
      %4452 = vmatpush1.bf16.msra.mxu0 %v4404
      %4453 = vmatprep.mubr.bf16.mxu0 %v4262
      %4454 = vmatmul.mubr.bf16.gmra.mrb[0].mxu0 %v4261
      %v4455 = vpop.f32.mrb[0].mxu0
      %v4456 = vadd.f32 %v4163, %v4455
      %v4457 = vpop.f32.mrb[0].mxu0
      %v4458 = vpop.f32.mrb[0].mxu0
      %v4459 = vadd.f32 %v4163, %v4458
      %v4460 = vpop.f32.mrb[0].mxu0
      %4461 = vmatprep.mubr.bf16.mxu0 %v4264
      %4462 = vmatmul.mubr.bf16.gmra.mrb[0].mxu0 %v4263
      %v4463 = vpop.f32.mrb[0].mxu0
      %v4464 = vadd.f32 %v4163, %v4463
      %v4465 = vpop.f32.mrb[0].mxu0
      %v4466 = vpop.f32.mrb[0].mxu0
      %v4467 = vadd.f32 %v4163, %v4466
      %v4468 = vpop.f32.mrb[0].mxu0
      %4469 = vmatprep.mubr.bf16.mxu0 %v4266
      %4470 = vmatmul.mubr.bf16.gmra.mrb[0].mxu0 %v4265
      %v4471 = vpop.f32.mrb[0].mxu0
      %v4472 = vadd.f32 %v4163, %v4471
      %v4473 = vpop.f32.mrb[0].mxu0
      %v4474 = vpop.f32.mrb[0].mxu0
      %v4475 = vadd.f32 %v4163, %v4474
      %v4476 = vpop.f32.mrb[0].mxu0
      %4477 = vmatprep.mubr.bf16.mxu0 %v4268
      %4478 = vmatmul.mubr.bf16.gmra.mrb[0].mxu0 %v4267
      %v4479 = vpop.f32.mrb[0].mxu0
      %v4480 = vadd.f32 %v4163, %v4479
      %v4481 = vpop.f32.mrb[0].mxu0
      %v4482 = vpop.f32.mrb[0].mxu0
      %v4483 = vadd.f32 %v4163, %v4482
      %v4484 = vpop.f32.mrb[0].mxu0
      %4485 = vmatprep.mubr.bf16.mxu0 %v4270
      %4486 = vmatmul.mubr.bf16.gmra.mrb[0].mxu0 %v4269
      %v4487 = vpop.f32.mrb[0].mxu0
      %v4488 = vadd.f32 %v4163, %v4487
      %v4489 = vpop.f32.mrb[0].mxu0
      %v4490 = vpop.f32.mrb[0].mxu0
      %v4491 = vadd.f32 %v4163, %v4490
      %v4492 = vpop.f32.mrb[0].mxu0
      %4493 = vmatprep.mubr.bf16.mxu0 %v4272
      %4494 = vmatmul.mubr.bf16.gmra.mrb[0].mxu0 %v4271
      %v4495 = vpop.f32.mrb[0].mxu0
      %v4496 = vadd.f32 %v4163, %v4495
      %v4497 = vpop.f32.mrb[0].mxu0
      %v4498 = vpop.f32.mrb[0].mxu0
      %v4499 = vadd.f32 %v4163, %v4498
      %v4500 = vpop.f32.mrb[0].mxu0
      %4501 = vmatprep.mubr.bf16.mxu0 %v4274
      %4502 = vmatmul.mubr.bf16.gmra.mrb[0].mxu0 %v4273
      %v4503 = vpop.f32.mrb[0].mxu0
      %v4504 = vadd.f32 %v4163, %v4503
      %v4505 = vpop.f32.mrb[0].mxu0
      %v4506 = vpop.f32.mrb[0].mxu0
      %v4507 = vadd.f32 %v4163, %v4506
      %v4508 = vpop.f32.mrb[0].mxu0
      %4509 = vmatprep.mubr.bf16.mxu0 %v4276
      %4510 = vmatmul.mubr.bf16.gmra.mrb[0].mxu0 %v4275
      %v4511 = vpop.f32.mrb[0].mxu0
      %v4512 = vadd.f32 %v4163, %v4511
      %v4513 = vpop.f32.mrb[0].mxu0
      %v4514 = vpop.f32.mrb[0].mxu0
      %v4515 = vadd.f32 %v4163, %v4514
      %v4516 = vpop.f32.mrb[0].mxu0
      %4517 = vmatprep.mubr.bf16.mxu0 %v4278
      %4518 = vmatmul.mubr.bf16.gmra.mrb[0].mxu0 %v4277
      %v4519 = vpop.f32.mrb[0].mxu0
      %v4520 = vadd.f32 %v4163, %v4519
      %v4521 = vpop.f32.mrb[0].mxu0
      %v4522 = vpop.f32.mrb[0].mxu0
      %v4523 = vadd.f32 %v4163, %v4522
      %v4524 = vpop.f32.mrb[0].mxu0
      %4525 = vmatprep.mubr.bf16.mxu0 %v4280
      %4526 = vmatmul.mubr.bf16.gmra.mrb[0].mxu0 %v4279
      %v4527 = vpop.f32.mrb[0].mxu0
      %v4528 = vadd.f32 %v4163, %v4527
      %v4529 = vpop.f32.mrb[0].mxu0
      %v4530 = vpop.f32.mrb[0].mxu0
      %v4531 = vadd.f32 %v4163, %v4530
      %v4532 = vpop.f32.mrb[0].mxu0
      %4533 = vmatprep.mubr.bf16.mxu0 %v4282
      %4534 = vmatmul.mubr.bf16.gmra.mrb[0].mxu0 %v4281
      %v4535 = vpop.f32.mrb[0].mxu0
      %v4536 = vadd.f32 %v4163, %v4535
      %v4537 = vpop.f32.mrb[0].mxu0
      %v4538 = vpop.f32.mrb[0].mxu0
      %v4539 = vadd.f32 %v4163, %v4538
      %v4540 = vpop.f32.mrb[0].mxu0
      %4541 = vmatprep.mubr.bf16.mxu0 %v4284
      %4542 = vmatmul.mubr.bf16.gmra.mrb[0].mxu0 %v4283
      %v4543 = vpop.f32.mrb[0].mxu0
      %v4544 = vadd.f32 %v4163, %v4543
      %v4545 = vpop.f32.mrb[0].mxu0
      %v4546 = vpop.f32.mrb[0].mxu0
      %v4547 = vadd.f32 %v4163, %v4546
      %v4548 = vpop.f32.mrb[0].mxu0
      %4549 = vmatprep.mubr.bf16.mxu0 %v4286
      %4550 = vmatmul.mubr.bf16.gmra.mrb[0].mxu0 %v4285
      %v4551 = vpop.f32.mrb[0].mxu0
      %v4552 = vadd.f32 %v4163, %v4551
      %v4553 = vpop.f32.mrb[0].mxu0
      %v4554 = vpop.f32.mrb[0].mxu0
      %v4555 = vadd.f32 %v4163, %v4554
      %v4556 = vpop.f32.mrb[0].mxu0
      %4557 = vmatprep.mubr.bf16.mxu0 %v4288
      %4558 = vmatmul.mubr.bf16.gmra.mrb[0].mxu0 %v4287
      %v4559 = vpop.f32.mrb[0].mxu0
      %v4560 = vadd.f32 %v4163, %v4559
      %v4561 = vpop.f32.mrb[0].mxu0
      %v4562 = vpop.f32.mrb[0].mxu0
      %v4563 = vadd.f32 %v4163, %v4562
      %v4564 = vpop.f32.mrb[0].mxu0
      %4565 = vmatprep.mubr.bf16.mxu0 %v4290
      %4566 = vmatmul.mubr.bf16.gmra.mrb[0].mxu0 %v4289
      %v4567 = vpop.f32.mrb[0].mxu0
      %v4568 = vadd.f32 %v4163, %v4567
      %v4569 = vpop.f32.mrb[0].mxu0
      %v4570 = vpop.f32.mrb[0].mxu0
      %v4571 = vadd.f32 %v4163, %v4570
      %v4572 = vpop.f32.mrb[0].mxu0
      %4573 = vmatprep.mubr.bf16.mxu0 %v4292
      %4574 = vmatmul.mubr.bf16.gmra.mrb[0].mxu0 %v4291
      %v4575 = vpop.f32.mrb[0].mxu0
      %v4576 = vadd.f32 %v4163, %v4575
      %v4577 = vpop.f32.mrb[0].mxu0
      %v4578 = vpop.f32.mrb[0].mxu0
      %v4579 = vadd.f32 %v4163, %v4578
      %v4580 = vpop.f32.mrb[0].mxu0
      %4581 = vdwg.mxu0
      %4582 = vst [vmem:[%s963 + $0x8] sm:$0xff] %v4456
      %4583 = vst [vmem:[%s963 + $0x10] sm:$0xff] %v4459
      %4584 = vst [vmem:[%s963 + $0x28] sm:$0xff] %v4464
      %4585 = vst [vmem:[%s963 + $0x30] sm:$0xff] %v4467
      %4586 = vst [vmem:[%s963 + $0x48] sm:$0xff] %v4472
      %4587 = vst [vmem:[%s963 + $0x50] sm:$0xff] %v4475
      %4588 = vst [vmem:[%s963 + $0x68] sm:$0xff] %v4480
      %4589 = vst [vmem:[%s963 + $0x70] sm:$0xff] %v4483
      %4590 = vst [vmem:[%s963 + $0x88] sm:$0xff] %v4488
      %4591 = vst [vmem:[%s963 + $0x90] sm:$0xff] %v4491
      %4592 = vst [vmem:[%s963 + $0xa8] sm:$0xff] %v4496
      %4593 = vst [vmem:[%s963 + $0xb0] sm:$0xff] %v4499
      %4594 = vst [vmem:[%s963 + $0xc8] sm:$0xff] %v4504
      %4595 = vst [vmem:[%s963 + $0xd0] sm:$0xff] %v4507
      %4596 = vst [vmem:[%s963 + $0xe8] sm:$0xff] %v4512
      %4597 = vst [vmem:[%s963 + $0xf0] sm:$0xff] %v4515
      %4598 = vst [vmem:[%s963 + $0x108] sm:$0xff] %v4520
      %4599 = vst [vmem:[%s963 + $0x110] sm:$0xff] %v4523
      %4600 = vst [vmem:[%s963 + $0x128] sm:$0xff] %v4528
      %4601 = vst [vmem:[%s963 + $0x130] sm:$0xff] %v4531
      %4602 = vst [vmem:[%s963 + $0x148] sm:$0xff] %v4536
      %4603 = vst [vmem:[%s963 + $0x150] sm:$0xff] %v4539
      %4604 = vst [vmem:[%s963 + $0x168] sm:$0xff] %v4544
      %4605 = vst [vmem:[%s963 + $0x170] sm:$0xff] %v4547
      %4606 = vst [vmem:[%s963 + $0x188] sm:$0xff] %v4552
      %4607 = vst [vmem:[%s963 + $0x190] sm:$0xff] %v4555
      %4608 = vst [vmem:[%s963 + $0x1a8] sm:$0xff] %v4560
      %4609 = vst [vmem:[%s963 + $0x1b0] sm:$0xff] %v4563
      %4610 = vst [vmem:[%s963 + $0x1c8] sm:$0xff] %v4568
      %4611 = vst [vmem:[%s963 + $0x1d0] sm:$0xff] %v4571
      %4612 = vst [vmem:[%s963 + $0x1e8] sm:$0xff] %v4576
      %4613 = vst [vmem:[%s963 + $0x1f0] sm:$0xff] %v4579
      %v4614 = vld [vmem:[#allocation2 + $0x7] sm:$0xff]
      %v4615 = vld [vmem:[#allocation2 + $0xf] sm:$0xff]
      %v4616 = vld [vmem:[#allocation2 + $0x27] sm:$0xff]
      %v4617 = vld [vmem:[#allocation2 + $0x2f] sm:$0xff]
      %v4618 = vld [vmem:[#allocation2 + $0x47] sm:$0xff]
      %v4619 = vld [vmem:[#allocation2 + $0x4f] sm:$0xff]
      %v4620 = vld [vmem:[#allocation2 + $0x67] sm:$0xff]
      %v4621 = vld [vmem:[#allocation2 + $0x6f] sm:$0xff]
      %v4622 = vld [vmem:[#allocation2 + $0x87] sm:$0xff]
      %v4623 = vld [vmem:[#allocation2 + $0x8f] sm:$0xff]
      %v4624 = vld [vmem:[#allocation2 + $0xa7] sm:$0xff]
      %v4625 = vld [vmem:[#allocation2 + $0xaf] sm:$0xff]
      %v4626 = vld [vmem:[#allocation2 + $0xc7] sm:$0xff]
      %v4627 = vld [vmem:[#allocation2 + $0xcf] sm:$0xff]
      %v4628 = vld [vmem:[#allocation2 + $0xe7] sm:$0xff]
      %v4629 = vld [vmem:[#allocation2 + $0xef] sm:$0xff]
      %v4630 = vld [vmem:[#allocation2 + $0x107] sm:$0xff]
      %v4631 = vld [vmem:[#allocation2 + $0x10f] sm:$0xff]
      %v4632 = vld [vmem:[#allocation2 + $0x127] sm:$0xff]
      %v4633 = vld [vmem:[#allocation2 + $0x12f] sm:$0xff]
      %v4634 = vld [vmem:[#allocation2 + $0x147] sm:$0xff]
      %v4635 = vld [vmem:[#allocation2 + $0x14f] sm:$0xff]
      %v4636 = vld [vmem:[#allocation2 + $0x167] sm:$0xff]
      %v4637 = vld [vmem:[#allocation2 + $0x16f] sm:$0xff]
      %v4638 = vld [vmem:[#allocation2 + $0x187] sm:$0xff]
      %v4639 = vld [vmem:[#allocation2 + $0x18f] sm:$0xff]
      %v4640 = vld [vmem:[#allocation2 + $0x1a7] sm:$0xff]
      %v4641 = vld [vmem:[#allocation2 + $0x1af] sm:$0xff]
      %v4642 = vld [vmem:[#allocation2 + $0x1c7] sm:$0xff]
      %v4643 = vld [vmem:[#allocation2 + $0x1cf] sm:$0xff]
      %v4644 = vld [vmem:[#allocation2 + $0x1e7] sm:$0xff]
      %v4645 = vld [vmem:[#allocation2 + $0x1ef] sm:$0xff]
      %v4646 = vpack.c.bf16 %v4615, %v4614
      %v4647 = vpack.c.bf16 %v4617, %v4616
      %v4648 = vpack.c.bf16 %v4619, %v4618
      %v4649 = vpack.c.bf16 %v4621, %v4620
      %v4650 = vpack.c.bf16 %v4623, %v4622
      %v4651 = vpack.c.bf16 %v4625, %v4624
      %v4652 = vpack.c.bf16 %v4627, %v4626
      %v4653 = vpack.c.bf16 %v4629, %v4628
      %v4654 = vpack.c.bf16 %v4631, %v4630
      %v4655 = vpack.c.bf16 %v4633, %v4632
      %v4656 = vpack.c.bf16 %v4635, %v4634
      %v4657 = vpack.c.bf16 %v4637, %v4636
      %v4658 = vpack.c.bf16 %v4639, %v4638
      %v4659 = vpack.c.bf16 %v4641, %v4640
      %v4660 = vpack.c.bf16 %v4643, %v4642
      %v4661 = vpack.c.bf16 %v4645, %v4644
      %4662 = vst [vmem:[#allocation3] sm:$0xff] %v4646
      %4663 = vst [vmem:[#allocation3 + $0x48] sm:$0xff] %v4647
      %4664 = vst [vmem:[#allocation3 + $0x90] sm:$0xff] %v4648
      %4665 = vst [vmem:[#allocation3 + $0xd8] sm:$0xff] %v4649
      %4666 = vst [vmem:[#allocation3 + $0x120] sm:$0xff] %v4650
      %4667 = vst [vmem:[#allocation3 + $0x168] sm:$0xff] %v4651
      %4668 = vst [vmem:[#allocation3 + $0x1b0] sm:$0xff] %v4652
      %4669 = vst [vmem:[#allocation3 + $0x1f8] sm:$0xff] %v4653
      %4670 = vst [vmem:[#allocation3 + $0x240] sm:$0xff] %v4654
      %4671 = vst [vmem:[#allocation3 + $0x288] sm:$0xff] %v4655
      %4672 = vst [vmem:[#allocation3 + $0x2d0] sm:$0xff] %v4656
      %4673 = vst [vmem:[#allocation3 + $0x318] sm:$0xff] %v4657
      %4674 = vst [vmem:[#allocation3 + $0x360] sm:$0xff] %v4658
      %4675 = vst [vmem:[#allocation3 + $0x3a8] sm:$0xff] %v4659
      %4676 = vst [vmem:[#allocation3 + $0x3f0] sm:$0xff] %v4660
      %4677 = vst [vmem:[#allocation3 + $0x438] sm:$0xff] %v4661
      %v4678 = vld [vmem:[#allocation2 + $0x8] sm:$0xff]
      %v4679 = vld [vmem:[#allocation2 + $0x10] sm:$0xff]
      %v4680 = vld [vmem:[#allocation2 + $0x28] sm:$0xff]
      %v4681 = vld [vmem:[#allocation2 + $0x30] sm:$0xff]
      %v4682 = vld [vmem:[#allocation2 + $0x48] sm:$0xff]
      %v4683 = vld [vmem:[#allocation2 + $0x50] sm:$0xff]
      %v4684 = vld [vmem:[#allocation2 + $0x68] sm:$0xff]
      %v4685 = vld [vmem:[#allocation2 + $0x70] sm:$0xff]
      %v4686 = vld [vmem:[#allocation2 + $0x88] sm:$0xff]
      %v4687 = vld [vmem:[#allocation2 + $0x90] sm:$0xff]
      %v4688 = vld [vmem:[#allocation2 + $0xa8] sm:$0xff]
      %v4689 = vld [vmem:[#allocation2 + $0xb0] sm:$0xff]
      %v4690 = vld [vmem:[#allocation2 + $0xc8] sm:$0xff]
      %v4691 = vld [vmem:[#allocation2 + $0xd0] sm:$0xff]
      %v4692 = vld [vmem:[#allocation2 + $0xe8] sm:$0xff]
      %v4693 = vld [vmem:[#allocation2 + $0xf0] sm:$0xff]
      %v4694 = vld [vmem:[#allocation2 + $0x108] sm:$0xff]
      %v4695 = vld [vmem:[#allocation2 + $0x110] sm:$0xff]
      %v4696 = vld [vmem:[#allocation2 + $0x128] sm:$0xff]
      %v4697 = vld [vmem:[#allocation2 + $0x130] sm:$0xff]
      %v4698 = vld [vmem:[#allocation2 + $0x148] sm:$0xff]
      %v4699 = vld [vmem:[#allocation2 + $0x150] sm:$0xff]
      %v4700 = vld [vmem:[#allocation2 + $0x168] sm:$0xff]
      %v4701 = vld [vmem:[#allocation2 + $0x170] sm:$0xff]
      %v4702 = vld [vmem:[#allocation2 + $0x188] sm:$0xff]
      %v4703 = vld [vmem:[#allocation2 + $0x190] sm:$0xff]
      %v4704 = vld [vmem:[#allocation2 + $0x1a8] sm:$0xff]
      %v4705 = vld [vmem:[#allocation2 + $0x1b0] sm:$0xff]
      %v4706 = vld [vmem:[#allocation2 + $0x1c8] sm:$0xff]
      %v4707 = vld [vmem:[#allocation2 + $0x1d0] sm:$0xff]
      %v4708 = vld [vmem:[#allocation2 + $0x1e8] sm:$0xff]
      %v4709 = vld [vmem:[#allocation2 + $0x1f0] sm:$0xff]
      %v4710 = vpack.c.bf16 %v4679, %v4678
      %v4711 = vpack.c.bf16 %v4681, %v4680
      %v4712 = vpack.c.bf16 %v4683, %v4682
      %v4713 = vpack.c.bf16 %v4685, %v4684
      %v4714 = vpack.c.bf16 %v4687, %v4686
      %v4715 = vpack.c.bf16 %v4689, %v4688
      %v4716 = vpack.c.bf16 %v4691, %v4690
      %v4717 = vpack.c.bf16 %v4693, %v4692
      %v4718 = vpack.c.bf16 %v4695, %v4694
      %v4719 = vpack.c.bf16 %v4697, %v4696
      %v4720 = vpack.c.bf16 %v4699, %v4698
      %v4721 = vpack.c.bf16 %v4701, %v4700
      %v4722 = vpack.c.bf16 %v4703, %v4702
      %v4723 = vpack.c.bf16 %v4705, %v4704
      %v4724 = vpack.c.bf16 %v4707, %v4706
      %v4725 = vpack.c.bf16 %v4709, %v4708
      %4726 = vst [vmem:[#allocation3 + $0x8] sm:$0xff] %v4710
      %4727 = vst [vmem:[#allocation3 + $0x50] sm:$0xff] %v4711
      %4728 = vst [vmem:[#allocation3 + $0x98] sm:$0xff] %v4712
      %4729 = vst [vmem:[#allocation3 + $0xe0] sm:$0xff] %v4713
      %4730 = vst [vmem:[#allocation3 + $0x128] sm:$0xff] %v4714
      %4731 = vst [vmem:[#allocation3 + $0x170] sm:$0xff] %v4715
      %4732 = vst [vmem:[#allocation3 + $0x1b8] sm:$0xff] %v4716
      %4733 = vst [vmem:[#allocation3 + $0x200] sm:$0xff] %v4717
      %4734 = vst [vmem:[#allocation3 + $0x248] sm:$0xff] %v4718
      %4735 = vst [vmem:[#allocation3 + $0x290] sm:$0xff] %v4719
      %4736 = vst [vmem:[#allocation3 + $0x2d8] sm:$0xff] %v4720
      %4737 = vst [vmem:[#allocation3 + $0x320] sm:$0xff] %v4721
      %4738 = vst [vmem:[#allocation3 + $0x368] sm:$0xff] %v4722
      %4739 = vst [vmem:[#allocation3 + $0x3b0] sm:$0xff] %v4723
      %4740 = vst [vmem:[#allocation3 + $0x3f8] sm:$0xff] %v4724
      %4741 = vst [vmem:[#allocation3 + $0x440] sm:$0xff] %v4725
      %v4742 = vld [vmem:[#allocation2 + $0x9] sm:$0xff]
      %v4743 = vld [vmem:[#allocation2 + $0x11] sm:$0xff]
      %v4744 = vld [vmem:[#allocation2 + $0x29] sm:$0xff]
      %v4745 = vld [vmem:[#allocation2 + $0x31] sm:$0xff]
      %v4746 = vld [vmem:[#allocation2 + $0x49] sm:$0xff]
      %v4747 = vld [vmem:[#allocation2 + $0x51] sm:$0xff]
      %v4748 = vld [vmem:[#allocation2 + $0x69] sm:$0xff]
      %v4749 = vld [vmem:[#allocation2 + $0x71] sm:$0xff]
      %v4750 = vld [vmem:[#allocation2 + $0x89] sm:$0xff]
      %v4751 = vld [vmem:[#allocation2 + $0x91] sm:$0xff]
      %v4752 = vld [vmem:[#allocation2 + $0xa9] sm:$0xff]
      %v4753 = vld [vmem:[#allocation2 + $0xb1] sm:$0xff]
      %v4754 = vld [vmem:[#allocation2 + $0xc9] sm:$0xff]
      %v4755 = vld [vmem:[#allocation2 + $0xd1] sm:$0xff]
      %v4756 = vld [vmem:[#allocation2 + $0xe9] sm:$0xff]
      %v4757 = vld [vmem:[#allocation2 + $0xf1] sm:$0xff]
      %v4758 = vld [vmem:[#allocation2 + $0x109] sm:$0xff]
      %v4759 = vld [vmem:[#allocation2 + $0x111] sm:$0xff]
      %v4760 = vld [vmem:[#allocation2 + $0x129] sm:$0xff]
      %v4761 = vld [vmem:[#allocation2 + $0x131] sm:$0xff]
      %v4762 = vld [vmem:[#allocation2 + $0x149] sm:$0xff]
      %v4763 = vld [vmem:[#allocation2 + $0x151] sm:$0xff]
      %v4764 = vld [vmem:[#allocation2 + $0x169] sm:$0xff]
      %v4765 = vld [vmem:[#allocation2 + $0x171] sm:$0xff]
      %v4766 = vld [vmem:[#allocation2 + $0x189] sm:$0xff]
      %v4767 = vld [vmem:[#allocation2 + $0x191] sm:$0xff]
      %v4768 = vld [vmem:[#allocation2 + $0x1a9] sm:$0xff]
      %v4769 = vld [vmem:[#allocation2 + $0x1b1] sm:$0xff]
      %v4770 = vld [vmem:[#allocation2 + $0x1c9] sm:$0xff]
      %v4771 = vld [vmem:[#allocation2 + $0x1d1] sm:$0xff]
      %v4772 = vld [vmem:[#allocation2 + $0x1e9] sm:$0xff]
      %v4773 = vld [vmem:[#allocation2 + $0x1f1] sm:$0xff]
      %v4774 = vpack.c.bf16 %v4743, %v4742
      %v4775 = vpack.c.bf16 %v4745, %v4744
      %v4776 = vpack.c.bf16 %v4747, %v4746
      %v4777 = vpack.c.bf16 %v4749, %v4748
      %v4778 = vpack.c.bf16 %v4751, %v4750
      %v4779 = vpack.c.bf16 %v4753, %v4752
      %v4780 = vpack.c.bf16 %v4755, %v4754
      %v4781 = vpack.c.bf16 %v4757, %v4756
      %v4782 = vpack.c.bf16 %v4759, %v4758
      %v4783 = vpack.c.bf16 %v4761, %v4760
      %v4784 = vpack.c.bf16 %v4763, %v4762
      %v4785 = vpack.c.bf16 %v4765, %v4764
      %v4786 = vpack.c.bf16 %v4767, %v4766
      %v4787 = vpack.c.bf16 %v4769, %v4768
      %v4788 = vpack.c.bf16 %v4771, %v4770
      %v4789 = vpack.c.bf16 %v4773, %v4772
      %4790 = vst [vmem:[#allocation3 + $0x10] sm:$0xff] %v4774
      %4791 = vst [vmem:[#allocation3 + $0x58] sm:$0xff] %v4775
      %4792 = vst [vmem:[#allocation3 + $0xa0] sm:$0xff] %v4776
      %4793 = vst [vmem:[#allocation3 + $0xe8] sm:$0xff] %v4777
      %4794 = vst [vmem:[#allocation3 + $0x130] sm:$0xff] %v4778
      %4795 = vst [vmem:[#allocation3 + $0x178] sm:$0xff] %v4779
      %4796 = vst [vmem:[#allocation3 + $0x1c0] sm:$0xff] %v4780
      %4797 = vst [vmem:[#allocation3 + $0x208] sm:$0xff] %v4781
      %4798 = vst [vmem:[#allocation3 + $0x250] sm:$0xff] %v4782
      %4799 = vst [vmem:[#allocation3 + $0x298] sm:$0xff] %v4783
      %4800 = vst [vmem:[#allocation3 + $0x2e0] sm:$0xff] %v4784
      %4801 = vst [vmem:[#allocation3 + $0x328] sm:$0xff] %v4785
      %4802 = vst [vmem:[#allocation3 + $0x370] sm:$0xff] %v4786
      %4803 = vst [vmem:[#allocation3 + $0x3b8] sm:$0xff] %v4787
      %4804 = vst [vmem:[#allocation3 + $0x400] sm:$0xff] %v4788
      %4805 = vst [vmem:[#allocation3 + $0x448] sm:$0xff] %v4789
      %v4806 = vld [vmem:[%s963 + $0x7] sm:$0xff]
      %v4807 = vld [vmem:[%s963 + $0xf] sm:$0xff]
      %v4808 = vld [vmem:[%s963 + $0x27] sm:$0xff]
      %v4809 = vld [vmem:[%s963 + $0x2f] sm:$0xff]
      %v4810 = vld [vmem:[%s963 + $0x47] sm:$0xff]
      %v4811 = vld [vmem:[%s963 + $0x4f] sm:$0xff]
      %v4812 = vld [vmem:[%s963 + $0x67] sm:$0xff]
      %v4813 = vld [vmem:[%s963 + $0x6f] sm:$0xff]
      %v4814 = vld [vmem:[%s963 + $0x87] sm:$0xff]
      %v4815 = vld [vmem:[%s963 + $0x8f] sm:$0xff]
      %v4816 = vld [vmem:[%s963 + $0xa7] sm:$0xff]
      %v4817 = vld [vmem:[%s963 + $0xaf] sm:$0xff]
      %v4818 = vld [vmem:[%s963 + $0xc7] sm:$0xff]
      %v4819 = vld [vmem:[%s963 + $0xcf] sm:$0xff]
      %v4820 = vld [vmem:[%s963 + $0xe7] sm:$0xff]
      %v4821 = vld [vmem:[%s963 + $0xef] sm:$0xff]
      %v4822 = vld [vmem:[%s963 + $0x107] sm:$0xff]
      %v4823 = vld [vmem:[%s963 + $0x10f] sm:$0xff]
      %v4824 = vld [vmem:[%s963 + $0x127] sm:$0xff]
      %v4825 = vld [vmem:[%s963 + $0x12f] sm:$0xff]
      %v4826 = vld [vmem:[%s963 + $0x147] sm:$0xff]
      %v4827 = vld [vmem:[%s963 + $0x14f] sm:$0xff]
      %v4828 = vld [vmem:[%s963 + $0x167] sm:$0xff]
      %v4829 = vld [vmem:[%s963 + $0x16f] sm:$0xff]
      %v4830 = vld [vmem:[%s963 + $0x187] sm:$0xff]
      %v4831 = vld [vmem:[%s963 + $0x18f] sm:$0xff]
      %v4832 = vld [vmem:[%s963 + $0x1a7] sm:$0xff]
      %v4833 = vld [vmem:[%s963 + $0x1af] sm:$0xff]
      %v4834 = vld [vmem:[%s963 + $0x1c7] sm:$0xff]
      %v4835 = vld [vmem:[%s963 + $0x1cf] sm:$0xff]
      %v4836 = vld [vmem:[%s963 + $0x1e7] sm:$0xff]
      %v4837 = vld [vmem:[%s963 + $0x1ef] sm:$0xff]
      %v4838 = vpack.c.bf16 %v4807, %v4806
      %v4839 = vpack.c.bf16 %v4809, %v4808
      %v4840 = vpack.c.bf16 %v4811, %v4810
      %v4841 = vpack.c.bf16 %v4813, %v4812
      %v4842 = vpack.c.bf16 %v4815, %v4814
      %v4843 = vpack.c.bf16 %v4817, %v4816
      %v4844 = vpack.c.bf16 %v4819, %v4818
      %v4845 = vpack.c.bf16 %v4821, %v4820
      %v4846 = vpack.c.bf16 %v4823, %v4822
      %v4847 = vpack.c.bf16 %v4825, %v4824
      %v4848 = vpack.c.bf16 %v4827, %v4826
      %v4849 = vpack.c.bf16 %v4829, %v4828
      %v4850 = vpack.c.bf16 %v4831, %v4830
      %v4851 = vpack.c.bf16 %v4833, %v4832
      %v4852 = vpack.c.bf16 %v4835, %v4834
      %v4853 = vpack.c.bf16 %v4837, %v4836
      %4854 = vst [vmem:[#allocation3 + $0x18] sm:$0xff] %v4838
      %4855 = vst [vmem:[#allocation3 + $0x60] sm:$0xff] %v4839
      %4856 = vst [vmem:[#allocation3 + $0xa8] sm:$0xff] %v4840
      %4857 = vst [vmem:[#allocation3 + $0xf0] sm:$0xff] %v4841
      %4858 = vst [vmem:[#allocation3 + $0x138] sm:$0xff] %v4842
      %4859 = vst [vmem:[#allocation3 + $0x180] sm:$0xff] %v4843
      %4860 = vst [vmem:[#allocation3 + $0x1c8] sm:$0xff] %v4844
      %4861 = vst [vmem:[#allocation3 + $0x210] sm:$0xff] %v4845
      %4862 = vst [vmem:[#allocation3 + $0x258] sm:$0xff] %v4846
      %4863 = vst [vmem:[#allocation3 + $0x2a0] sm:$0xff] %v4847
      %4864 = vst [vmem:[#allocation3 + $0x2e8] sm:$0xff] %v4848
      %4865 = vst [vmem:[#allocation3 + $0x330] sm:$0xff] %v4849
      %4866 = vst [vmem:[#allocation3 + $0x378] sm:$0xff] %v4850
      %4867 = vst [vmem:[#allocation3 + $0x3c0] sm:$0xff] %v4851
      %4868 = vst [vmem:[#allocation3 + $0x408] sm:$0xff] %v4852
      %4869 = vst [vmem:[#allocation3 + $0x450] sm:$0xff] %v4853
      %v4870 = vld [vmem:[%s963 + $0x8] sm:$0xff]
      %v4871 = vld [vmem:[%s963 + $0x10] sm:$0xff]
      %v4872 = vld [vmem:[%s963 + $0x28] sm:$0xff]
      %v4873 = vld [vmem:[%s963 + $0x30] sm:$0xff]
      %v4874 = vld [vmem:[%s963 + $0x48] sm:$0xff]
      %v4875 = vld [vmem:[%s963 + $0x50] sm:$0xff]
      %v4876 = vld [vmem:[%s963 + $0x68] sm:$0xff]
      %v4877 = vld [vmem:[%s963 + $0x70] sm:$0xff]
      %v4878 = vld [vmem:[%s963 + $0x88] sm:$0xff]
      %v4879 = vld [vmem:[%s963 + $0x90] sm:$0xff]
      %v4880 = vld [vmem:[%s963 + $0xa8] sm:$0xff]
      %v4881 = vld [vmem:[%s963 + $0xb0] sm:$0xff]
      %v4882 = vld [vmem:[%s963 + $0xc8] sm:$0xff]
      %v4883 = vld [vmem:[%s963 + $0xd0] sm:$0xff]
      %v4884 = vld [vmem:[%s963 + $0xe8] sm:$0xff]
      %v4885 = vld [vmem:[%s963 + $0xf0] sm:$0xff]
      %v4886 = vld [vmem:[%s963 + $0x108] sm:$0xff]
      %v4887 = vld [vmem:[%s963 + $0x110] sm:$0xff]
      %v4888 = vld [vmem:[%s963 + $0x128] sm:$0xff]
      %v4889 = vld [vmem:[%s963 + $0x130] sm:$0xff]
      %v4890 = vld [vmem:[%s963 + $0x148] sm:$0xff]
      %v4891 = vld [vmem:[%s963 + $0x150] sm:$0xff]
      %v4892 = vld [vmem:[%s963 + $0x168] sm:$0xff]
      %v4893 = vld [vmem:[%s963 + $0x170] sm:$0xff]
      %v4894 = vld [vmem:[%s963 + $0x188] sm:$0xff]
      %v4895 = vld [vmem:[%s963 + $0x190] sm:$0xff]
      %v4896 = vld [vmem:[%s963 + $0x1a8] sm:$0xff]
      %v4897 = vld [vmem:[%s963 + $0x1b0] sm:$0xff]
      %v4898 = vld [vmem:[%s963 + $0x1c8] sm:$0xff]
      %v4899 = vld [vmem:[%s963 + $0x1d0] sm:$0xff]
      %v4900 = vld [vmem:[%s963 + $0x1e8] sm:$0xff]
      %v4901 = vld [vmem:[%s963 + $0x1f0] sm:$0xff]
      %v4902 = vpack.c.bf16 %v4871, %v4870
      %v4903 = vpack.c.bf16 %v4873, %v4872
      %v4904 = vpack.c.bf16 %v4875, %v4874
      %v4905 = vpack.c.bf16 %v4877, %v4876
      %v4906 = vpack.c.bf16 %v4879, %v4878
      %v4907 = vpack.c.bf16 %v4881, %v4880
      %v4908 = vpack.c.bf16 %v4883, %v4882
      %v4909 = vpack.c.bf16 %v4885, %v4884
      %v4910 = vpack.c.bf16 %v4887, %v4886
      %v4911 = vpack.c.bf16 %v4889, %v4888
      %v4912 = vpack.c.bf16 %v4891, %v4890
      %v4913 = vpack.c.bf16 %v4893, %v4892
      %v4914 = vpack.c.bf16 %v4895, %v4894
      %v4915 = vpack.c.bf16 %v4897, %v4896
      %v4916 = vpack.c.bf16 %v4899, %v4898
      %v4917 = vpack.c.bf16 %v4901, %v4900
      %4918 = vst [vmem:[#allocation3 + $0x20] sm:$0xff] %v4902
      %4919 = vst [vmem:[#allocation3 + $0x68] sm:$0xff] %v4903
      %4920 = vst [vmem:[#allocation3 + $0xb0] sm:$0xff] %v4904
      %4921 = vst [vmem:[#allocation3 + $0xf8] sm:$0xff] %v4905
      %4922 = vst [vmem:[#allocation3 + $0x140] sm:$0xff] %v4906
      %4923 = vst [vmem:[#allocation3 + $0x188] sm:$0xff] %v4907
      %4924 = vst [vmem:[#allocation3 + $0x1d0] sm:$0xff] %v4908
      %4925 = vst [vmem:[#allocation3 + $0x218] sm:$0xff] %v4909
      %4926 = vst [vmem:[#allocation3 + $0x260] sm:$0xff] %v4910
      %4927 = vst [vmem:[#allocation3 + $0x2a8] sm:$0xff] %v4911
      %4928 = vst [vmem:[#allocation3 + $0x2f0] sm:$0xff] %v4912
      %4929 = vst [vmem:[#allocation3 + $0x338] sm:$0xff] %v4913
      %4930 = vst [vmem:[#allocation3 + $0x380] sm:$0xff] %v4914
      %4931 = vst [vmem:[#allocation3 + $0x3c8] sm:$0xff] %v4915
      %4932 = vst [vmem:[#allocation3 + $0x410] sm:$0xff] %v4916
      %4933 = vst [vmem:[#allocation3 + $0x458] sm:$0xff] %v4917
      %v4934 = vld [vmem:[%s963 + $0x9] sm:$0xff]
      %v4935 = vld [vmem:[%s963 + $0x11] sm:$0xff]
      %v4936 = vld [vmem:[%s963 + $0x29] sm:$0xff]
      %v4937 = vld [vmem:[%s963 + $0x31] sm:$0xff]
      %v4938 = vld [vmem:[%s963 + $0x49] sm:$0xff]
      %v4939 = vld [vmem:[%s963 + $0x51] sm:$0xff]
      %v4940 = vld [vmem:[%s963 + $0x69] sm:$0xff]
      %v4941 = vld [vmem:[%s963 + $0x71] sm:$0xff]
      %v4942 = vld [vmem:[%s963 + $0x89] sm:$0xff]
      %v4943 = vld [vmem:[%s963 + $0x91] sm:$0xff]
      %v4944 = vld [vmem:[%s963 + $0xa9] sm:$0xff]
      %v4945 = vld [vmem:[%s963 + $0xb1] sm:$0xff]
      %v4946 = vld [vmem:[%s963 + $0xc9] sm:$0xff]
      %v4947 = vld [vmem:[%s963 + $0xd1] sm:$0xff]
      %v4948 = vld [vmem:[%s963 + $0xe9] sm:$0xff]
      %v4949 = vld [vmem:[%s963 + $0xf1] sm:$0xff]
      %v4950 = vld [vmem:[%s963 + $0x109] sm:$0xff]
      %v4951 = vld [vmem:[%s963 + $0x111] sm:$0xff]
      %v4952 = vld [vmem:[%s963 + $0x129] sm:$0xff]
      %v4953 = vld [vmem:[%s963 + $0x131] sm:$0xff]
      %v4954 = vld [vmem:[%s963 + $0x149] sm:$0xff]
      %v4955 = vld [vmem:[%s963 + $0x151] sm:$0xff]
      %v4956 = vld [vmem:[%s963 + $0x169] sm:$0xff]
      %v4957 = vld [vmem:[%s963 + $0x171] sm:$0xff]
      %v4958 = vld [vmem:[%s963 + $0x189] sm:$0xff]
      %v4959 = vld [vmem:[%s963 + $0x191] sm:$0xff]
      %v4960 = vld [vmem:[%s963 + $0x1a9] sm:$0xff]
      %v4961 = vld [vmem:[%s963 + $0x1b1] sm:$0xff]
      %v4962 = vld [vmem:[%s963 + $0x1c9] sm:$0xff]
      %v4963 = vld [vmem:[%s963 + $0x1d1] sm:$0xff]
      %v4964 = vld [vmem:[%s963 + $0x1e9] sm:$0xff]
      %v4965 = vld [vmem:[%s963 + $0x1f1] sm:$0xff]
      %v4966 = vpack.c.bf16 %v4935, %v4934
      %v4967 = vpack.c.bf16 %v4937, %v4936
      %v4968 = vpack.c.bf16 %v4939, %v4938
      %v4969 = vpack.c.bf16 %v4941, %v4940
      %v4970 = vpack.c.bf16 %v4943, %v4942
      %v4971 = vpack.c.bf16 %v4945, %v4944
      %v4972 = vpack.c.bf16 %v4947, %v4946
      %v4973 = vpack.c.bf16 %v4949, %v4948
      %v4974 = vpack.c.bf16 %v4951, %v4950
      %v4975 = vpack.c.bf16 %v4953, %v4952
      %v4976 = vpack.c.bf16 %v4955, %v4954
      %v4977 = vpack.c.bf16 %v4957, %v4956
      %v4978 = vpack.c.bf16 %v4959, %v4958
      %v4979 = vpack.c.bf16 %v4961, %v4960
      %v4980 = vpack.c.bf16 %v4963, %v4962
      %v4981 = vpack.c.bf16 %v4965, %v4964
      %4982 = vst [vmem:[#allocation3 + $0x28] sm:$0xff] %v4966
      %4983 = vst [vmem:[#allocation3 + $0x70] sm:$0xff] %v4967
      %4984 = vst [vmem:[#allocation3 + $0xb8] sm:$0xff] %v4968
      %4985 = vst [vmem:[#allocation3 + $0x100] sm:$0xff] %v4969
      %4986 = vst [vmem:[#allocation3 + $0x148] sm:$0xff] %v4970
      %4987 = vst [vmem:[#allocation3 + $0x190] sm:$0xff] %v4971
      %4988 = vst [vmem:[#allocation3 + $0x1d8] sm:$0xff] %v4972
      %4989 = vst [vmem:[#allocation3 + $0x220] sm:$0xff] %v4973
      %4990 = vst [vmem:[#allocation3 + $0x268] sm:$0xff] %v4974
      %4991 = vst [vmem:[#allocation3 + $0x2b0] sm:$0xff] %v4975
      %4992 = vst [vmem:[#allocation3 + $0x2f8] sm:$0xff] %v4976
      %4993 = vst [vmem:[#allocation3 + $0x340] sm:$0xff] %v4977
      %4994 = vst [vmem:[#allocation3 + $0x388] sm:$0xff] %v4978
      %4995 = vst [vmem:[#allocation3 + $0x3d0] sm:$0xff] %v4979
      %4996 = vst [vmem:[#allocation3 + $0x418] sm:$0xff] %v4980
      %4997 = vst [vmem:[#allocation3 + $0x460] sm:$0xff] %v4981
      %v4998 = vld [vmem:[%s1380 + $0x7] sm:$0xff]
      %v4999 = vld [vmem:[%s1380 + $0xf] sm:$0xff]
      %v5000 = vld [vmem:[%s1380 + $0x27] sm:$0xff]
      %v5001 = vld [vmem:[%s1380 + $0x2f] sm:$0xff]
      %v5002 = vld [vmem:[%s1380 + $0x47] sm:$0xff]
      %v5003 = vld [vmem:[%s1380 + $0x4f] sm:$0xff]
      %v5004 = vld [vmem:[%s1380 + $0x67] sm:$0xff]
      %v5005 = vld [vmem:[%s1380 + $0x6f] sm:$0xff]
      %v5006 = vld [vmem:[%s1380 + $0x87] sm:$0xff]
      %v5007 = vld [vmem:[%s1380 + $0x8f] sm:$0xff]
      %v5008 = vld [vmem:[%s1380 + $0xa7] sm:$0xff]
      %v5009 = vld [vmem:[%s1380 + $0xaf] sm:$0xff]
      %v5010 = vld [vmem:[%s1380 + $0xc7] sm:$0xff]
      %v5011 = vld [vmem:[%s1380 + $0xcf] sm:$0xff]
      %v5012 = vld [vmem:[%s1380 + $0xe7] sm:$0xff]
      %v5013 = vld [vmem:[%s1380 + $0xef] sm:$0xff]
      %v5014 = vld [vmem:[%s1380 + $0x107] sm:$0xff]
      %v5015 = vld [vmem:[%s1380 + $0x10f] sm:$0xff]
      %v5016 = vld [vmem:[%s1380 + $0x127] sm:$0xff]
      %v5017 = vld [vmem:[%s1380 + $0x12f] sm:$0xff]
      %v5018 = vld [vmem:[%s1380 + $0x147] sm:$0xff]
      %v5019 = vld [vmem:[%s1380 + $0x14f] sm:$0xff]
      %v5020 = vld [vmem:[%s1380 + $0x167] sm:$0xff]
      %v5021 = vld [vmem:[%s1380 + $0x16f] sm:$0xff]
      %v5022 = vld [vmem:[%s1380 + $0x187] sm:$0xff]
      %v5023 = vld [vmem:[%s1380 + $0x18f] sm:$0xff]
      %v5024 = vld [vmem:[%s1380 + $0x1a7] sm:$0xff]
      %v5025 = vld [vmem:[%s1380 + $0x1af] sm:$0xff]
      %v5026 = vld [vmem:[%s1380 + $0x1c7] sm:$0xff]
      %v5027 = vld [vmem:[%s1380 + $0x1cf] sm:$0xff]
      %v5028 = vld [vmem:[%s1380 + $0x1e7] sm:$0xff]
      %v5029 = vld [vmem:[%s1380 + $0x1ef] sm:$0xff]
      %v5030 = vpack.c.bf16 %v4999, %v4998
      %v5031 = vpack.c.bf16 %v5001, %v5000
      %v5032 = vpack.c.bf16 %v5003, %v5002
      %v5033 = vpack.c.bf16 %v5005, %v5004
      %v5034 = vpack.c.bf16 %v5007, %v5006
      %v5035 = vpack.c.bf16 %v5009, %v5008
      %v5036 = vpack.c.bf16 %v5011, %v5010
      %v5037 = vpack.c.bf16 %v5013, %v5012
      %v5038 = vpack.c.bf16 %v5015, %v5014
      %v5039 = vpack.c.bf16 %v5017, %v5016
      %v5040 = vpack.c.bf16 %v5019, %v5018
      %v5041 = vpack.c.bf16 %v5021, %v5020
      %v5042 = vpack.c.bf16 %v5023, %v5022
      %v5043 = vpack.c.bf16 %v5025, %v5024
      %v5044 = vpack.c.bf16 %v5027, %v5026
      %v5045 = vpack.c.bf16 %v5029, %v5028
      %5046 = vst [vmem:[#allocation3 + $0x30] sm:$0xff] %v5030
      %5047 = vst [vmem:[#allocation3 + $0x78] sm:$0xff] %v5031
      %5048 = vst [vmem:[#allocation3 + $0xc0] sm:$0xff] %v5032
      %5049 = vst [vmem:[#allocation3 + $0x108] sm:$0xff] %v5033
      %5050 = vst [vmem:[#allocation3 + $0x150] sm:$0xff] %v5034
      %5051 = vst [vmem:[#allocation3 + $0x198] sm:$0xff] %v5035
      %5052 = vst [vmem:[#allocation3 + $0x1e0] sm:$0xff] %v5036
      %5053 = vst [vmem:[#allocation3 + $0x228] sm:$0xff] %v5037
      %5054 = vst [vmem:[#allocation3 + $0x270] sm:$0xff] %v5038
      %5055 = vst [vmem:[#allocation3 + $0x2b8] sm:$0xff] %v5039
      %5056 = vst [vmem:[#allocation3 + $0x300] sm:$0xff] %v5040
      %5057 = vst [vmem:[#allocation3 + $0x348] sm:$0xff] %v5041
      %5058 = vst [vmem:[#allocation3 + $0x390] sm:$0xff] %v5042
      %5059 = vst [vmem:[#allocation3 + $0x3d8] sm:$0xff] %v5043
      %5060 = vst [vmem:[#allocation3 + $0x420] sm:$0xff] %v5044
      %5061 = vst [vmem:[#allocation3 + $0x468] sm:$0xff] %v5045
      %v5062 = vld [vmem:[%s1380 + $0x8] sm:$0xff]
      %v5063 = vld [vmem:[%s1380 + $0x10] sm:$0xff]
      %v5064 = vld [vmem:[%s1380 + $0x28] sm:$0xff]
      %v5065 = vld [vmem:[%s1380 + $0x30] sm:$0xff]
      %v5066 = vld [vmem:[%s1380 + $0x48] sm:$0xff]
      %v5067 = vld [vmem:[%s1380 + $0x50] sm:$0xff]
      %v5068 = vld [vmem:[%s1380 + $0x68] sm:$0xff]
      %v5069 = vld [vmem:[%s1380 + $0x70] sm:$0xff]
      %v5070 = vld [vmem:[%s1380 + $0x88] sm:$0xff]
      %v5071 = vld [vmem:[%s1380 + $0x90] sm:$0xff]
      %v5072 = vld [vmem:[%s1380 + $0xa8] sm:$0xff]
      %v5073 = vld [vmem:[%s1380 + $0xb0] sm:$0xff]
      %v5074 = vld [vmem:[%s1380 + $0xc8] sm:$0xff]
      %v5075 = vld [vmem:[%s1380 + $0xd0] sm:$0xff]
      %v5076 = vld [vmem:[%s1380 + $0xe8] sm:$0xff]
      %v5077 = vld [vmem:[%s1380 + $0xf0] sm:$0xff]
      %v5078 = vld [vmem:[%s1380 + $0x108] sm:$0xff]
      %v5079 = vld [vmem:[%s1380 + $0x110] sm:$0xff]
      %v5080 = vld [vmem:[%s1380 + $0x128] sm:$0xff]
      %v5081 = vld [vmem:[%s1380 + $0x130] sm:$0xff]
      %v5082 = vld [vmem:[%s1380 + $0x148] sm:$0xff]
      %v5083 = vld [vmem:[%s1380 + $0x150] sm:$0xff]
      %v5084 = vld [vmem:[%s1380 + $0x168] sm:$0xff]
      %v5085 = vld [vmem:[%s1380 + $0x170] sm:$0xff]
      %v5086 = vld [vmem:[%s1380 + $0x188] sm:$0xff]
      %v5087 = vld [vmem:[%s1380 + $0x190] sm:$0xff]
      %v5088 = vld [vmem:[%s1380 + $0x1a8] sm:$0xff]
      %v5089 = vld [vmem:[%s1380 + $0x1b0] sm:$0xff]
      %v5090 = vld [vmem:[%s1380 + $0x1c8] sm:$0xff]
      %v5091 = vld [vmem:[%s1380 + $0x1d0] sm:$0xff]
      %v5092 = vld [vmem:[%s1380 + $0x1e8] sm:$0xff]
      %v5093 = vld [vmem:[%s1380 + $0x1f0] sm:$0xff]
      %v5094 = vpack.c.bf16 %v5063, %v5062
      %v5095 = vpack.c.bf16 %v5065, %v5064
      %v5096 = vpack.c.bf16 %v5067, %v5066
      %v5097 = vpack.c.bf16 %v5069, %v5068
      %v5098 = vpack.c.bf16 %v5071, %v5070
      %v5099 = vpack.c.bf16 %v5073, %v5072
      %v5100 = vpack.c.bf16 %v5075, %v5074
      %v5101 = vpack.c.bf16 %v5077, %v5076
      %v5102 = vpack.c.bf16 %v5079, %v5078
      %v5103 = vpack.c.bf16 %v5081, %v5080
      %v5104 = vpack.c.bf16 %v5083, %v5082
      %v5105 = vpack.c.bf16 %v5085, %v5084
      %v5106 = vpack.c.bf16 %v5087, %v5086
      %v5107 = vpack.c.bf16 %v5089, %v5088
      %v5108 = vpack.c.bf16 %v5091, %v5090
      %v5109 = vpack.c.bf16 %v5093, %v5092
      %5110 = vst [vmem:[#allocation3 + $0x38] sm:$0xff] %v5094
      %5111 = vst [vmem:[#allocation3 + $0x80] sm:$0xff] %v5095
      %5112 = vst [vmem:[#allocation3 + $0xc8] sm:$0xff] %v5096
      %5113 = vst [vmem:[#allocation3 + $0x110] sm:$0xff] %v5097
      %5114 = vst [vmem:[#allocation3 + $0x158] sm:$0xff] %v5098
      %5115 = vst [vmem:[#allocation3 + $0x1a0] sm:$0xff] %v5099
      %5116 = vst [vmem:[#allocation3 + $0x1e8] sm:$0xff] %v5100
      %5117 = vst [vmem:[#allocation3 + $0x230] sm:$0xff] %v5101
      %5118 = vst [vmem:[#allocation3 + $0x278] sm:$0xff] %v5102
      %5119 = vst [vmem:[#allocation3 + $0x2c0] sm:$0xff] %v5103
      %5120 = vst [vmem:[#allocation3 + $0x308] sm:$0xff] %v5104
      %5121 = vst [vmem:[#allocation3 + $0x350] sm:$0xff] %v5105
      %5122 = vst [vmem:[#allocation3 + $0x398] sm:$0xff] %v5106
      %5123 = vst [vmem:[#allocation3 + $0x3e0] sm:$0xff] %v5107
      %5124 = vst [vmem:[#allocation3 + $0x428] sm:$0xff] %v5108
      %5125 = vst [vmem:[#allocation3 + $0x470] sm:$0xff] %v5109
      %v5126 = vld [vmem:[%s1380 + $0x9] sm:$0xff]
      %v5127 = vld [vmem:[%s1380 + $0x11] sm:$0xff]
      %v5128 = vld [vmem:[%s1380 + $0x29] sm:$0xff]
      %v5129 = vld [vmem:[%s1380 + $0x31] sm:$0xff]
      %v5130 = vld [vmem:[%s1380 + $0x49] sm:$0xff]
      %v5131 = vld [vmem:[%s1380 + $0x51] sm:$0xff]
      %v5132 = vld [vmem:[%s1380 + $0x69] sm:$0xff]
      %v5133 = vld [vmem:[%s1380 + $0x71] sm:$0xff]
      %v5134 = vld [vmem:[%s1380 + $0x89] sm:$0xff]
      %v5135 = vld [vmem:[%s1380 + $0x91] sm:$0xff]
      %v5136 = vld [vmem:[%s1380 + $0xa9] sm:$0xff]
      %v5137 = vld [vmem:[%s1380 + $0xb1] sm:$0xff]
      %v5138 = vld [vmem:[%s1380 + $0xc9] sm:$0xff]
      %v5139 = vld [vmem:[%s1380 + $0xd1] sm:$0xff]
      %v5140 = vld [vmem:[%s1380 + $0xe9] sm:$0xff]
      %v5141 = vld [vmem:[%s1380 + $0xf1] sm:$0xff]
      %v5142 = vld [vmem:[%s1380 + $0x109] sm:$0xff]
      %v5143 = vld [vmem:[%s1380 + $0x111] sm:$0xff]
      %v5144 = vld [vmem:[%s1380 + $0x129] sm:$0xff]
      %v5145 = vld [vmem:[%s1380 + $0x131] sm:$0xff]
      %v5146 = vld [vmem:[%s1380 + $0x149] sm:$0xff]
      %v5147 = vld [vmem:[%s1380 + $0x151] sm:$0xff]
      %v5148 = vld [vmem:[%s1380 + $0x169] sm:$0xff]
      %v5149 = vld [vmem:[%s1380 + $0x171] sm:$0xff]
      %v5150 = vld [vmem:[%s1380 + $0x189] sm:$0xff]
      %v5151 = vld [vmem:[%s1380 + $0x191] sm:$0xff]
      %v5152 = vld [vmem:[%s1380 + $0x1a9] sm:$0xff]
      %v5153 = vld [vmem:[%s1380 + $0x1b1] sm:$0xff]
      %v5154 = vld [vmem:[%s1380 + $0x1c9] sm:$0xff]
      %v5155 = vld [vmem:[%s1380 + $0x1d1] sm:$0xff]
      %v5156 = vld [vmem:[%s1380 + $0x1e9] sm:$0xff]
      %v5157 = vld [vmem:[%s1380 + $0x1f1] sm:$0xff]
      %v5158 = vpack.c.bf16 %v5127, %v5126
      %v5159 = vpack.c.bf16 %v5129, %v5128
      %v5160 = vpack.c.bf16 %v5131, %v5130
      %v5161 = vpack.c.bf16 %v5133, %v5132
      %v5162 = vpack.c.bf16 %v5135, %v5134
      %v5163 = vpack.c.bf16 %v5137, %v5136
      %v5164 = vpack.c.bf16 %v5139, %v5138
      %v5165 = vpack.c.bf16 %v5141, %v5140
      %v5166 = vpack.c.bf16 %v5143, %v5142
      %v5167 = vpack.c.bf16 %v5145, %v5144
      %v5168 = vpack.c.bf16 %v5147, %v5146
      %v5169 = vpack.c.bf16 %v5149, %v5148
      %v5170 = vpack.c.bf16 %v5151, %v5150
      %v5171 = vpack.c.bf16 %v5153, %v5152
      %v5172 = vpack.c.bf16 %v5155, %v5154
      %v5173 = vpack.c.bf16 %v5157, %v5156
      %5174 = vst [vmem:[#allocation3 + $0x40] sm:$0xff] %v5158
      %5175 = vst [vmem:[#allocation3 + $0x88] sm:$0xff] %v5159
      %5176 = vst [vmem:[#allocation3 + $0xd0] sm:$0xff] %v5160
      %5177 = vst [vmem:[#allocation3 + $0x118] sm:$0xff] %v5161
      %5178 = vst [vmem:[#allocation3 + $0x160] sm:$0xff] %v5162
      %5179 = vst [vmem:[#allocation3 + $0x1a8] sm:$0xff] %v5163
      %5180 = vst [vmem:[#allocation3 + $0x1f0] sm:$0xff] %v5164
      %5181 = vst [vmem:[#allocation3 + $0x238] sm:$0xff] %v5165
      %5182 = vst [vmem:[#allocation3 + $0x280] sm:$0xff] %v5166
      %5183 = vst [vmem:[#allocation3 + $0x2c8] sm:$0xff] %v5167
      %5184 = vst [vmem:[#allocation3 + $0x310] sm:$0xff] %v5168
      %5185 = vst [vmem:[#allocation3 + $0x358] sm:$0xff] %v5169
      %5186 = vst [vmem:[#allocation3 + $0x3a0] sm:$0xff] %v5170
      %5187 = vst [vmem:[#allocation3 + $0x3e8] sm:$0xff] %v5171
      %5188 = vst [vmem:[#allocation3 + $0x430] sm:$0xff] %v5172
      %5189 = vst [vmem:[#allocation3 + $0x478] sm:$0xff] %v5173
      %v5190 = vld [vmem:[#allocation3] sm:$0xff]
      %v5191 = vld [vmem:[#allocation3 + $0x8] sm:$0xff]
      %v5192 = vld [vmem:[#allocation3 + $0x10] sm:$0xff]
      %v5193 = vld [vmem:[#allocation3 + $0x18] sm:$0xff]
      %v5194 = vld [vmem:[#allocation3 + $0x20] sm:$0xff]
      %v5195 = vld [vmem:[#allocation3 + $0x28] sm:$0xff]
      %v5196 = vld [vmem:[#allocation3 + $0x30] sm:$0xff]
      %v5197 = vld [vmem:[#allocation3 + $0x38] sm:$0xff]
      %v5198 = vld [vmem:[#allocation3 + $0x40] sm:$0xff]
      %v5199 = vld [vmem:[#allocation3 + $0x48] sm:$0xff]
      %v5200 = vld [vmem:[#allocation3 + $0x50] sm:$0xff]
      %v5201 = vld [vmem:[#allocation3 + $0x58] sm:$0xff]
      %v5202 = vld [vmem:[#allocation3 + $0x60] sm:$0xff]
      %v5203 = vld [vmem:[#allocation3 + $0x68] sm:$0xff]
      %v5204 = vld [vmem:[#allocation3 + $0x70] sm:$0xff]
      %v5205 = vld [vmem:[#allocation3 + $0x78] sm:$0xff]
      %v5206 = vld [vmem:[#allocation3 + $0x80] sm:$0xff]
      %v5207 = vld [vmem:[#allocation3 + $0x88] sm:$0xff]
      %v5208 = vld [vmem:[#allocation3 + $0x90] sm:$0xff]
      %v5209 = vld [vmem:[#allocation3 + $0x98] sm:$0xff]
      %v5210 = vld [vmem:[#allocation3 + $0xa0] sm:$0xff]
      %v5211 = vld [vmem:[#allocation3 + $0xa8] sm:$0xff]
      %v5212 = vld [vmem:[#allocation3 + $0xb0] sm:$0xff]
      %v5213 = vld [vmem:[#allocation3 + $0xb8] sm:$0xff]
      %v5214 = vld [vmem:[#allocation3 + $0xc0] sm:$0xff]
      %v5215 = vld [vmem:[#allocation3 + $0xc8] sm:$0xff]
      %v5216 = vld [vmem:[#allocation3 + $0xd0] sm:$0xff]
      %v5217 = vld [vmem:[#allocation3 + $0xd8] sm:$0xff]
      %v5218 = vld [vmem:[#allocation3 + $0xe0] sm:$0xff]
      %v5219 = vld [vmem:[#allocation3 + $0xe8] sm:$0xff]
      %v5220 = vld [vmem:[#allocation3 + $0xf0] sm:$0xff]
      %v5221 = vld [vmem:[#allocation3 + $0xf8] sm:$0xff]
      %v5222 = vld [vmem:[#allocation3 + $0x100] sm:$0xff]
      %v5223 = vld [vmem:[#allocation3 + $0x108] sm:$0xff]
      %v5224 = vld [vmem:[#allocation3 + $0x110] sm:$0xff]
      %v5225 = vld [vmem:[#allocation3 + $0x118] sm:$0xff]
      %v5226 = vld [vmem:[#allocation3 + $0x120] sm:$0xff]
      %v5227 = vld [vmem:[#allocation3 + $0x128] sm:$0xff]
      %v5228 = vld [vmem:[#allocation3 + $0x130] sm:$0xff]
      %v5229 = vld [vmem:[#allocation3 + $0x138] sm:$0xff]
      %v5230 = vld [vmem:[#allocation3 + $0x140] sm:$0xff]
      %v5231 = vld [vmem:[#allocation3 + $0x148] sm:$0xff]
      %v5232 = vld [vmem:[#allocation3 + $0x150] sm:$0xff]
      %v5233 = vld [vmem:[#allocation3 + $0x158] sm:$0xff]
      %v5234 = vld [vmem:[#allocation3 + $0x160] sm:$0xff]
      %v5235 = vld [vmem:[#allocation3 + $0x168] sm:$0xff]
      %v5236 = vld [vmem:[#allocation3 + $0x170] sm:$0xff]
      %v5237 = vld [vmem:[#allocation3 + $0x178] sm:$0xff]
      %v5238 = vld [vmem:[#allocation3 + $0x180] sm:$0xff]
      %v5239 = vld [vmem:[#allocation3 + $0x188] sm:$0xff]
      %v5240 = vld [vmem:[#allocation3 + $0x190] sm:$0xff]
      %v5241 = vld [vmem:[#allocation3 + $0x198] sm:$0xff]
      %v5242 = vld [vmem:[#allocation3 + $0x1a0] sm:$0xff]
      %v5243 = vld [vmem:[#allocation3 + $0x1a8] sm:$0xff]
      %v5244 = vld [vmem:[#allocation3 + $0x1b0] sm:$0xff]
      %v5245 = vld [vmem:[#allocation3 + $0x1b8] sm:$0xff]
      %v5246 = vld [vmem:[#allocation3 + $0x1c0] sm:$0xff]
      %v5247 = vld [vmem:[#allocation3 + $0x1c8] sm:$0xff]
      %v5248 = vld [vmem:[#allocation3 + $0x1d0] sm:$0xff]
      %v5249 = vld [vmem:[#allocation3 + $0x1d8] sm:$0xff]
      %v5250 = vld [vmem:[#allocation3 + $0x1e0] sm:$0xff]
      %v5251 = vld [vmem:[#allocation3 + $0x1e8] sm:$0xff]
      %v5252 = vld [vmem:[#allocation3 + $0x1f0] sm:$0xff]
      %v5253 = vld [vmem:[#allocation3 + $0x1f8] sm:$0xff]
      %v5254 = vld [vmem:[#allocation3 + $0x200] sm:$0xff]
      %v5255 = vld [vmem:[#allocation3 + $0x208] sm:$0xff]
      %v5256 = vld [vmem:[#allocation3 + $0x210] sm:$0xff]
      %v5257 = vld [vmem:[#allocation3 + $0x218] sm:$0xff]
      %v5258 = vld [vmem:[#allocation3 + $0x220] sm:$0xff]
      %v5259 = vld [vmem:[#allocation3 + $0x228] sm:$0xff]
      %v5260 = vld [vmem:[#allocation3 + $0x230] sm:$0xff]
      %v5261 = vld [vmem:[#allocation3 + $0x238] sm:$0xff]
      %v5262 = vld [vmem:[#allocation3 + $0x240] sm:$0xff]
      %v5263 = vld [vmem:[#allocation3 + $0x248] sm:$0xff]
      %v5264 = vld [vmem:[#allocation3 + $0x250] sm:$0xff]
      %v5265 = vld [vmem:[#allocation3 + $0x258] sm:$0xff]
      %v5266 = vld [vmem:[#allocation3 + $0x260] sm:$0xff]
      %v5267 = vld [vmem:[#allocation3 + $0x268] sm:$0xff]
      %v5268 = vld [vmem:[#allocation3 + $0x270] sm:$0xff]
      %v5269 = vld [vmem:[#allocation3 + $0x278] sm:$0xff]
      %v5270 = vld [vmem:[#allocation3 + $0x280] sm:$0xff]
      %v5271 = vld [vmem:[#allocation3 + $0x288] sm:$0xff]
      %v5272 = vld [vmem:[#allocation3 + $0x290] sm:$0xff]
      %v5273 = vld [vmem:[#allocation3 + $0x298] sm:$0xff]
      %v5274 = vld [vmem:[#allocation3 + $0x2a0] sm:$0xff]
      %v5275 = vld [vmem:[#allocation3 + $0x2a8] sm:$0xff]
      %v5276 = vld [vmem:[#allocation3 + $0x2b0] sm:$0xff]
      %v5277 = vld [vmem:[#allocation3 + $0x2b8] sm:$0xff]
      %v5278 = vld [vmem:[#allocation3 + $0x2c0] sm:$0xff]
      %v5279 = vld [vmem:[#allocation3 + $0x2c8] sm:$0xff]
      %v5280 = vld [vmem:[#allocation3 + $0x2d0] sm:$0xff]
      %v5281 = vld [vmem:[#allocation3 + $0x2d8] sm:$0xff]
      %v5282 = vld [vmem:[#allocation3 + $0x2e0] sm:$0xff]
      %v5283 = vld [vmem:[#allocation3 + $0x2e8] sm:$0xff]
      %v5284 = vld [vmem:[#allocation3 + $0x2f0] sm:$0xff]
      %v5285 = vld [vmem:[#allocation3 + $0x2f8] sm:$0xff]
      %v5286 = vld [vmem:[#allocation3 + $0x300] sm:$0xff]
      %v5287 = vld [vmem:[#allocation3 + $0x308] sm:$0xff]
      %v5288 = vld [vmem:[#allocation3 + $0x310] sm:$0xff]
      %v5289 = vld [vmem:[#allocation3 + $0x318] sm:$0xff]
      %v5290 = vld [vmem:[#allocation3 + $0x320] sm:$0xff]
      %v5291 = vld [vmem:[#allocation3 + $0x328] sm:$0xff]
      %v5292 = vld [vmem:[#allocation3 + $0x330] sm:$0xff]
      %v5293 = vld [vmem:[#allocation3 + $0x338] sm:$0xff]
      %v5294 = vld [vmem:[#allocation3 + $0x340] sm:$0xff]
      %v5295 = vld [vmem:[#allocation3 + $0x348] sm:$0xff]
      %v5296 = vld [vmem:[#allocation3 + $0x350] sm:$0xff]
      %v5297 = vld [vmem:[#allocation3 + $0x358] sm:$0xff]
      %v5298 = vld [vmem:[#allocation3 + $0x360] sm:$0xff]
      %v5299 = vld [vmem:[#allocation3 + $0x368] sm:$0xff]
      %v5300 = vld [vmem:[#allocation3 + $0x370] sm:$0xff]
      %v5301 = vld [vmem:[#allocation3 + $0x378] sm:$0xff]
      %v5302 = vld [vmem:[#allocation3 + $0x380] sm:$0xff]
      %v5303 = vld [vmem:[#allocation3 + $0x388] sm:$0xff]
      %v5304 = vld [vmem:[#allocation3 + $0x390] sm:$0xff]
      %v5305 = vld [vmem:[#allocation3 + $0x398] sm:$0xff]
      %v5306 = vld [vmem:[#allocation3 + $0x3a0] sm:$0xff]
      %v5307 = vld [vmem:[#allocation3 + $0x3a8] sm:$0xff]
      %v5308 = vld [vmem:[#allocation3 + $0x3b0] sm:$0xff]
      %v5309 = vld [vmem:[#allocation3 + $0x3b8] sm:$0xff]
      %v5310 = vld [vmem:[#allocation3 + $0x3c0] sm:$0xff]
      %v5311 = vld [vmem:[#allocation3 + $0x3c8] sm:$0xff]
      %v5312 = vld [vmem:[#allocation3 + $0x3d0] sm:$0xff]
      %v5313 = vld [vmem:[#allocation3 + $0x3d8] sm:$0xff]
      %v5314 = vld [vmem:[#allocation3 + $0x3e0] sm:$0xff]
      %v5315 = vld [vmem:[#allocation3 + $0x3e8] sm:$0xff]
      %v5316 = vld [vmem:[#allocation3 + $0x3f0] sm:$0xff]
      %v5317 = vld [vmem:[#allocation3 + $0x3f8] sm:$0xff]
      %v5318 = vld [vmem:[#allocation3 + $0x400] sm:$0xff]
      %v5319 = vld [vmem:[#allocation3 + $0x408] sm:$0xff]
      %v5320 = vld [vmem:[#allocation3 + $0x410] sm:$0xff]
      %v5321 = vld [vmem:[#allocation3 + $0x418] sm:$0xff]
      %v5322 = vld [vmem:[#allocation3 + $0x420] sm:$0xff]
      %v5323 = vld [vmem:[#allocation3 + $0x428] sm:$0xff]
      %v5324 = vld [vmem:[#allocation3 + $0x430] sm:$0xff]
      %v5325 = vld [vmem:[#allocation3 + $0x438] sm:$0xff]
      %v5326 = vld [vmem:[#allocation3 + $0x440] sm:$0xff]
      %v5327 = vld [vmem:[#allocation3 + $0x448] sm:$0xff]
      %v5328 = vld [vmem:[#allocation3 + $0x450] sm:$0xff]
      %v5329 = vld [vmem:[#allocation3 + $0x458] sm:$0xff]
      %v5330 = vld [vmem:[#allocation3 + $0x460] sm:$0xff]
      %v5331 = vld [vmem:[#allocation3 + $0x468] sm:$0xff]
      %v5332 = vld [vmem:[#allocation3 + $0x470] sm:$0xff]
      %v5333 = vld [vmem:[#allocation3 + $0x478] sm:$0xff]
      %v5334 = vld [vmem:[%s5] sm:$0xff]
      %v5335 = vld [vmem:[%s5 + $0x8] sm:$0xff]
      %v5336 = vld [vmem:[%s5 + $0x10] sm:$0xff]
      %v5337 = vld [vmem:[%s5 + $0x18] sm:$0xff]
      %v5338 = vld [vmem:[%s5 + $0x20] sm:$0xff]
      %v5339 = vld [vmem:[%s5 + $0x28] sm:$0xff]
      %v5340 = vld [vmem:[%s5 + $0x30] sm:$0xff]
      %v5341 = vld [vmem:[%s5 + $0x38] sm:$0xff]
      %v5342 = vld [vmem:[%s5 + $0x40] sm:$0xff]
      %v5343 = vld [vmem:[%s5 + $0x48] sm:$0xff]
      %v5344 = vld [vmem:[%s5 + $0x50] sm:$0xff]
      %v5345 = vld [vmem:[%s5 + $0x58] sm:$0xff]
      %v5346 = vld [vmem:[%s5 + $0x60] sm:$0xff]
      %v5347 = vld [vmem:[%s5 + $0x68] sm:$0xff]
      %v5348 = vld [vmem:[%s5 + $0x70] sm:$0xff]
      %v5349 = vld [vmem:[%s5 + $0x78] sm:$0xff]
      %v5350 = vld [vmem:[%s5 + $0x80] sm:$0xff]
      %v5351 = vld [vmem:[%s5 + $0x88] sm:$0xff]
      %v5352 = vld [vmem:[%s5 + $0x90] sm:$0xff]
      %v5353 = vld [vmem:[%s5 + $0x98] sm:$0xff]
      %v5354 = vld [vmem:[%s5 + $0xa0] sm:$0xff]
      %v5355 = vld [vmem:[%s5 + $0xa8] sm:$0xff]
      %v5356 = vld [vmem:[%s5 + $0xb0] sm:$0xff]
      %v5357 = vld [vmem:[%s5 + $0xb8] sm:$0xff]
      %v5358 = vld [vmem:[%s5 + $0xc0] sm:$0xff]
      %v5359 = vld [vmem:[%s5 + $0xc8] sm:$0xff]
      %v5360 = vld [vmem:[%s5 + $0xd0] sm:$0xff]
      %v5361 = vld [vmem:[%s5 + $0xd8] sm:$0xff]
      %v5362 = vld [vmem:[%s5 + $0xe0] sm:$0xff]
      %v5363 = vld [vmem:[%s5 + $0xe8] sm:$0xff]
      %v5364 = vld [vmem:[%s5 + $0xf0] sm:$0xff]
      %v5365 = vld [vmem:[%s5 + $0xf8] sm:$0xff]
      %v5366 = vld [vmem:[%s5 + $0x100] sm:$0xff]
      %v5367 = vld [vmem:[%s5 + $0x108] sm:$0xff]
      %v5368 = vld [vmem:[%s5 + $0x110] sm:$0xff]
      %v5369 = vld [vmem:[%s5 + $0x118] sm:$0xff]
      %v5370 = vld [vmem:[%s5 + $0x120] sm:$0xff]
      %v5371 = vld [vmem:[%s5 + $0x128] sm:$0xff]
      %v5372 = vld [vmem:[%s5 + $0x130] sm:$0xff]
      %v5373 = vld [vmem:[%s5 + $0x138] sm:$0xff]
      %v5374 = vld [vmem:[%s5 + $0x140] sm:$0xff]
      %v5375 = vld [vmem:[%s5 + $0x148] sm:$0xff]
      %v5376 = vld [vmem:[%s5 + $0x150] sm:$0xff]
      %v5377 = vld [vmem:[%s5 + $0x158] sm:$0xff]
      %v5378 = vld [vmem:[%s5 + $0x160] sm:$0xff]
      %v5379 = vld [vmem:[%s5 + $0x168] sm:$0xff]
      %v5380 = vld [vmem:[%s5 + $0x170] sm:$0xff]
      %v5381 = vld [vmem:[%s5 + $0x178] sm:$0xff]
      %v5382 = vld [vmem:[%s5 + $0x180] sm:$0xff]
      %v5383 = vld [vmem:[%s5 + $0x188] sm:$0xff]
      %v5384 = vld [vmem:[%s5 + $0x190] sm:$0xff]
      %v5385 = vld [vmem:[%s5 + $0x198] sm:$0xff]
      %v5386 = vld [vmem:[%s5 + $0x1a0] sm:$0xff]
      %v5387 = vld [vmem:[%s5 + $0x1a8] sm:$0xff]
      %v5388 = vld [vmem:[%s5 + $0x1b0] sm:$0xff]
      %v5389 = vld [vmem:[%s5 + $0x1b8] sm:$0xff]
      %v5390 = vld [vmem:[%s5 + $0x1c0] sm:$0xff]
      %v5391 = vld [vmem:[%s5 + $0x1c8] sm:$0xff]
      %v5392 = vld [vmem:[%s5 + $0x1d0] sm:$0xff]
      %v5393 = vld [vmem:[%s5 + $0x1d8] sm:$0xff]
      %v5394 = vld [vmem:[%s5 + $0x1e0] sm:$0xff]
      %v5395 = vld [vmem:[%s5 + $0x1e8] sm:$0xff]
      %v5396 = vld [vmem:[%s5 + $0x1f0] sm:$0xff]
      %v5397 = vld [vmem:[%s5 + $0x1f8] sm:$0xff]
      %v5398 = vld [vmem:[%s5 + $0x200] sm:$0xff]
      %v5399 = vld [vmem:[%s5 + $0x208] sm:$0xff]
      %v5400 = vld [vmem:[%s5 + $0x210] sm:$0xff]
      %v5401 = vld [vmem:[%s5 + $0x218] sm:$0xff]
      %v5402 = vld [vmem:[%s5 + $0x220] sm:$0xff]
      %v5403 = vld [vmem:[%s5 + $0x228] sm:$0xff]
      %v5404 = vld [vmem:[%s5 + $0x230] sm:$0xff]
      %v5405 = vld [vmem:[%s5 + $0x238] sm:$0xff]
      %v5406 = vld [vmem:[%s5 + $0x240] sm:$0xff]
      %v5407 = vld [vmem:[%s5 + $0x248] sm:$0xff]
      %v5408 = vld [vmem:[%s5 + $0x250] sm:$0xff]
      %v5409 = vld [vmem:[%s5 + $0x258] sm:$0xff]
      %v5410 = vld [vmem:[%s5 + $0x260] sm:$0xff]
      %v5411 = vld [vmem:[%s5 + $0x268] sm:$0xff]
      %v5412 = vld [vmem:[%s5 + $0x270] sm:$0xff]
      %v5413 = vld [vmem:[%s5 + $0x278] sm:$0xff]
      %v5414 = vld [vmem:[%s5 + $0x280] sm:$0xff]
      %v5415 = vld [vmem:[%s5 + $0x288] sm:$0xff]
      %v5416 = vld [vmem:[%s5 + $0x290] sm:$0xff]
      %v5417 = vld [vmem:[%s5 + $0x298] sm:$0xff]
      %v5418 = vld [vmem:[%s5 + $0x2a0] sm:$0xff]
      %v5419 = vld [vmem:[%s5 + $0x2a8] sm:$0xff]
      %v5420 = vld [vmem:[%s5 + $0x2b0] sm:$0xff]
      %v5421 = vld [vmem:[%s5 + $0x2b8] sm:$0xff]
      %v5422 = vld [vmem:[%s5 + $0x2c0] sm:$0xff]
      %v5423 = vld [vmem:[%s5 + $0x2c8] sm:$0xff]
      %v5424 = vld [vmem:[%s5 + $0x2d0] sm:$0xff]
      %v5425 = vld [vmem:[%s5 + $0x2d8] sm:$0xff]
      %v5426 = vld [vmem:[%s5 + $0x2e0] sm:$0xff]
      %v5427 = vld [vmem:[%s5 + $0x2e8] sm:$0xff]
      %v5428 = vld [vmem:[%s5 + $0x2f0] sm:$0xff]
      %v5429 = vld [vmem:[%s5 + $0x2f8] sm:$0xff]
      %v5430 = vld [vmem:[%s5 + $0x300] sm:$0xff]
      %v5431 = vld [vmem:[%s5 + $0x308] sm:$0xff]
      %v5432 = vld [vmem:[%s5 + $0x310] sm:$0xff]
      %v5433 = vld [vmem:[%s5 + $0x318] sm:$0xff]
      %v5434 = vld [vmem:[%s5 + $0x320] sm:$0xff]
      %v5435 = vld [vmem:[%s5 + $0x328] sm:$0xff]
      %v5436 = vld [vmem:[%s5 + $0x330] sm:$0xff]
      %v5437 = vld [vmem:[%s5 + $0x338] sm:$0xff]
      %v5438 = vld [vmem:[%s5 + $0x340] sm:$0xff]
      %v5439 = vld [vmem:[%s5 + $0x348] sm:$0xff]
      %v5440 = vld [vmem:[%s5 + $0x350] sm:$0xff]
      %v5441 = vld [vmem:[%s5 + $0x358] sm:$0xff]
      %v5442 = vld [vmem:[%s5 + $0x360] sm:$0xff]
      %v5443 = vld [vmem:[%s5 + $0x368] sm:$0xff]
      %v5444 = vld [vmem:[%s5 + $0x370] sm:$0xff]
      %v5445 = vld [vmem:[%s5 + $0x378] sm:$0xff]
      %v5446 = vld [vmem:[%s5 + $0x380] sm:$0xff]
      %v5447 = vld [vmem:[%s5 + $0x388] sm:$0xff]
      %v5448 = vld [vmem:[%s5 + $0x390] sm:$0xff]
      %v5449 = vld [vmem:[%s5 + $0x398] sm:$0xff]
      %v5450 = vld [vmem:[%s5 + $0x3a0] sm:$0xff]
      %v5451 = vld [vmem:[%s5 + $0x3a8] sm:$0xff]
      %v5452 = vld [vmem:[%s5 + $0x3b0] sm:$0xff]
      %v5453 = vld [vmem:[%s5 + $0x3b8] sm:$0xff]
      %v5454 = vld [vmem:[%s5 + $0x3c0] sm:$0xff]
      %v5455 = vld [vmem:[%s5 + $0x3c8] sm:$0xff]
      %v5456 = vld [vmem:[%s5 + $0x3d0] sm:$0xff]
      %v5457 = vld [vmem:[%s5 + $0x3d8] sm:$0xff]
      %v5458 = vld [vmem:[%s5 + $0x3e0] sm:$0xff]
      %v5459 = vld [vmem:[%s5 + $0x3e8] sm:$0xff]
      %v5460 = vld [vmem:[%s5 + $0x3f0] sm:$0xff]
      %v5461 = vld [vmem:[%s5 + $0x3f8] sm:$0xff]
      %v5462 = vld [vmem:[%s5 + $0x400] sm:$0xff]
      %v5463 = vld [vmem:[%s5 + $0x408] sm:$0xff]
      %v5464 = vld [vmem:[%s5 + $0x410] sm:$0xff]
      %v5465 = vld [vmem:[%s5 + $0x418] sm:$0xff]
      %v5466 = vld [vmem:[%s5 + $0x420] sm:$0xff]
      %v5467 = vld [vmem:[%s5 + $0x428] sm:$0xff]
      %v5468 = vld [vmem:[%s5 + $0x430] sm:$0xff]
      %v5469 = vld [vmem:[%s5 + $0x438] sm:$0xff]
      %v5470 = vld [vmem:[%s5 + $0x440] sm:$0xff]
      %v5471 = vld [vmem:[%s5 + $0x448] sm:$0xff]
      %v5472 = vld [vmem:[%s5 + $0x450] sm:$0xff]
      %v5473 = vld [vmem:[%s5 + $0x458] sm:$0xff]
      %v5474 = vld [vmem:[%s5 + $0x460] sm:$0xff]
      %v5475 = vld [vmem:[%s5 + $0x468] sm:$0xff]
      %v5476 = vld [vmem:[%s5 + $0x470] sm:$0xff]
      %v5477 = vld [vmem:[%s5 + $0x478] sm:$0xff]
      %v5478 = vld [vmem:[%s6] sm:$0x3]
      %v5480 = vlaneseq
      %v5481 = vshrl.u32 %v5480, 7
      %v5482 = vsub.s32 0, %v5481
      %v5483 = vrot.slane %v5478, %v5482
      %v5484 = vlaneseq
      %v5485 = vshrl.u32 %v5484, 7
      %v5486 = vsub.s32 1, %v5485
      %v5487 = vrot.slane %v5478, %v5486
      %v5634 = vunpack.c.l.b16 %v5334
      %v5635 = vunpack.c.h.b16 %v5334
      %v5636 = vunpack.c.l.b16 %v5335
      %v5637 = vunpack.c.h.b16 %v5335
      %v5638 = vunpack.c.l.b16 %v5336
      %v5639 = vunpack.c.h.b16 %v5336
      %v5640 = vunpack.c.l.b16 %v5337
      %v5641 = vunpack.c.h.b16 %v5337
      %v5642 = vunpack.c.l.b16 %v5338
      %v5643 = vunpack.c.h.b16 %v5338
      %v5644 = vunpack.c.l.b16 %v5339
      %v5645 = vunpack.c.h.b16 %v5339
      %v5646 = vunpack.c.l.b16 %v5340
      %v5647 = vunpack.c.h.b16 %v5340
      %v5648 = vunpack.c.l.b16 %v5341
      %v5649 = vunpack.c.h.b16 %v5341
      %v5650 = vunpack.c.l.b16 %v5342
      %v5651 = vunpack.c.h.b16 %v5342
      %v5652 = vunpack.c.l.b16 %v5343
      %v5653 = vunpack.c.h.b16 %v5343
      %v5654 = vunpack.c.l.b16 %v5344
      %v5655 = vunpack.c.h.b16 %v5344
      %v5656 = vunpack.c.l.b16 %v5345
      %v5657 = vunpack.c.h.b16 %v5345
      %v5658 = vunpack.c.l.b16 %v5346
      %v5659 = vunpack.c.h.b16 %v5346
      %v5660 = vunpack.c.l.b16 %v5347
      %v5661 = vunpack.c.h.b16 %v5347
      %v5662 = vunpack.c.l.b16 %v5348
      %v5663 = vunpack.c.h.b16 %v5348
      %v5664 = vunpack.c.l.b16 %v5349
      %v5665 = vunpack.c.h.b16 %v5349
      %v5666 = vunpack.c.l.b16 %v5350
      %v5667 = vunpack.c.h.b16 %v5350
      %v5668 = vunpack.c.l.b16 %v5351
      %v5669 = vunpack.c.h.b16 %v5351
      %v5670 = vunpack.c.l.b16 %v5352
      %v5671 = vunpack.c.h.b16 %v5352
      %v5672 = vunpack.c.l.b16 %v5353
      %v5673 = vunpack.c.h.b16 %v5353
      %v5674 = vunpack.c.l.b16 %v5354
      %v5675 = vunpack.c.h.b16 %v5354
      %v5676 = vunpack.c.l.b16 %v5355
      %v5677 = vunpack.c.h.b16 %v5355
      %v5678 = vunpack.c.l.b16 %v5356
      %v5679 = vunpack.c.h.b16 %v5356
      %v5680 = vunpack.c.l.b16 %v5357
      %v5681 = vunpack.c.h.b16 %v5357
      %v5682 = vunpack.c.l.b16 %v5358
      %v5683 = vunpack.c.h.b16 %v5358
      %v5684 = vunpack.c.l.b16 %v5359
      %v5685 = vunpack.c.h.b16 %v5359
      %v5686 = vunpack.c.l.b16 %v5360
      %v5687 = vunpack.c.h.b16 %v5360
      %v5688 = vunpack.c.l.b16 %v5361
      %v5689 = vunpack.c.h.b16 %v5361
      %v5690 = vunpack.c.l.b16 %v5362
      %v5691 = vunpack.c.h.b16 %v5362
      %v5692 = vunpack.c.l.b16 %v5363
      %v5693 = vunpack.c.h.b16 %v5363
      %v5694 = vunpack.c.l.b16 %v5364
      %v5695 = vunpack.c.h.b16 %v5364
      %v5696 = vunpack.c.l.b16 %v5365
      %v5697 = vunpack.c.h.b16 %v5365
      %v5698 = vunpack.c.l.b16 %v5366
      %v5699 = vunpack.c.h.b16 %v5366
      %v5700 = vunpack.c.l.b16 %v5367
      %v5701 = vunpack.c.h.b16 %v5367
      %v5702 = vunpack.c.l.b16 %v5368
      %v5703 = vunpack.c.h.b16 %v5368
      %v5704 = vunpack.c.l.b16 %v5369
      %v5705 = vunpack.c.h.b16 %v5369
      %v5706 = vunpack.c.l.b16 %v5370
      %v5707 = vunpack.c.h.b16 %v5370
      %v5708 = vunpack.c.l.b16 %v5371
      %v5709 = vunpack.c.h.b16 %v5371
      %v5710 = vunpack.c.l.b16 %v5372
      %v5711 = vunpack.c.h.b16 %v5372
      %v5712 = vunpack.c.l.b16 %v5373
      %v5713 = vunpack.c.h.b16 %v5373
      %v5714 = vunpack.c.l.b16 %v5374
      %v5715 = vunpack.c.h.b16 %v5374
      %v5716 = vunpack.c.l.b16 %v5375
      %v5717 = vunpack.c.h.b16 %v5375
      %v5718 = vunpack.c.l.b16 %v5376
      %v5719 = vunpack.c.h.b16 %v5376
      %v5720 = vunpack.c.l.b16 %v5377
      %v5721 = vunpack.c.h.b16 %v5377
      %v5722 = vunpack.c.l.b16 %v5378
      %v5723 = vunpack.c.h.b16 %v5378
      %v5724 = vunpack.c.l.b16 %v5379
      %v5725 = vunpack.c.h.b16 %v5379
      %v5726 = vunpack.c.l.b16 %v5380
      %v5727 = vunpack.c.h.b16 %v5380
      %v5728 = vunpack.c.l.b16 %v5381
      %v5729 = vunpack.c.h.b16 %v5381
      %v5730 = vunpack.c.l.b16 %v5382
      %v5731 = vunpack.c.h.b16 %v5382
      %v5732 = vunpack.c.l.b16 %v5383
      %v5733 = vunpack.c.h.b16 %v5383
      %v5734 = vunpack.c.l.b16 %v5384
      %v5735 = vunpack.c.h.b16 %v5384
      %v5736 = vunpack.c.l.b16 %v5385
      %v5737 = vunpack.c.h.b16 %v5385
      %v5738 = vunpack.c.l.b16 %v5386
      %v5739 = vunpack.c.h.b16 %v5386
      %v5740 = vunpack.c.l.b16 %v5387
      %v5741 = vunpack.c.h.b16 %v5387
      %v5742 = vunpack.c.l.b16 %v5388
      %v5743 = vunpack.c.h.b16 %v5388
      %v5744 = vunpack.c.l.b16 %v5389
      %v5745 = vunpack.c.h.b16 %v5389
      %v5746 = vunpack.c.l.b16 %v5390
      %v5747 = vunpack.c.h.b16 %v5390
      %v5748 = vunpack.c.l.b16 %v5391
      %v5749 = vunpack.c.h.b16 %v5391
      %v5750 = vunpack.c.l.b16 %v5392
      %v5751 = vunpack.c.h.b16 %v5392
      %v5752 = vunpack.c.l.b16 %v5393
      %v5753 = vunpack.c.h.b16 %v5393
      %v5754 = vunpack.c.l.b16 %v5394
      %v5755 = vunpack.c.h.b16 %v5394
      %v5756 = vunpack.c.l.b16 %v5395
      %v5757 = vunpack.c.h.b16 %v5395
      %v5758 = vunpack.c.l.b16 %v5396
      %v5759 = vunpack.c.h.b16 %v5396
      %v5760 = vunpack.c.l.b16 %v5397
      %v5761 = vunpack.c.h.b16 %v5397
      %v5762 = vunpack.c.l.b16 %v5398
      %v5763 = vunpack.c.h.b16 %v5398
      %v5764 = vunpack.c.l.b16 %v5399
      %v5765 = vunpack.c.h.b16 %v5399
      %v5766 = vunpack.c.l.b16 %v5400
      %v5767 = vunpack.c.h.b16 %v5400
      %v5768 = vunpack.c.l.b16 %v5401
      %v5769 = vunpack.c.h.b16 %v5401
      %v5770 = vunpack.c.l.b16 %v5402
      %v5771 = vunpack.c.h.b16 %v5402
      %v5772 = vunpack.c.l.b16 %v5403
      %v5773 = vunpack.c.h.b16 %v5403
      %v5774 = vunpack.c.l.b16 %v5404
      %v5775 = vunpack.c.h.b16 %v5404
      %v5776 = vunpack.c.l.b16 %v5405
      %v5777 = vunpack.c.h.b16 %v5405
      %v5778 = vunpack.c.l.b16 %v5406
      %v5779 = vunpack.c.h.b16 %v5406
      %v5780 = vunpack.c.l.b16 %v5407
      %v5781 = vunpack.c.h.b16 %v5407
      %v5782 = vunpack.c.l.b16 %v5408
      %v5783 = vunpack.c.h.b16 %v5408
      %v5784 = vunpack.c.l.b16 %v5409
      %v5785 = vunpack.c.h.b16 %v5409
      %v5786 = vunpack.c.l.b16 %v5410
      %v5787 = vunpack.c.h.b16 %v5410
      %v5788 = vunpack.c.l.b16 %v5411
      %v5789 = vunpack.c.h.b16 %v5411
      %v5790 = vunpack.c.l.b16 %v5412
      %v5791 = vunpack.c.h.b16 %v5412
      %v5792 = vunpack.c.l.b16 %v5413
      %v5793 = vunpack.c.h.b16 %v5413
      %v5794 = vunpack.c.l.b16 %v5414
      %v5795 = vunpack.c.h.b16 %v5414
      %v5796 = vunpack.c.l.b16 %v5415
      %v5797 = vunpack.c.h.b16 %v5415
      %v5798 = vunpack.c.l.b16 %v5416
      %v5799 = vunpack.c.h.b16 %v5416
      %v5800 = vunpack.c.l.b16 %v5417
      %v5801 = vunpack.c.h.b16 %v5417
      %v5802 = vunpack.c.l.b16 %v5418
      %v5803 = vunpack.c.h.b16 %v5418
      %v5804 = vunpack.c.l.b16 %v5419
      %v5805 = vunpack.c.h.b16 %v5419
      %v5806 = vunpack.c.l.b16 %v5420
      %v5807 = vunpack.c.h.b16 %v5420
      %v5808 = vunpack.c.l.b16 %v5421
      %v5809 = vunpack.c.h.b16 %v5421
      %v5810 = vunpack.c.l.b16 %v5422
      %v5811 = vunpack.c.h.b16 %v5422
      %v5812 = vunpack.c.l.b16 %v5423
      %v5813 = vunpack.c.h.b16 %v5423
      %v5814 = vunpack.c.l.b16 %v5424
      %v5815 = vunpack.c.h.b16 %v5424
      %v5816 = vunpack.c.l.b16 %v5425
      %v5817 = vunpack.c.h.b16 %v5425
      %v5818 = vunpack.c.l.b16 %v5426
      %v5819 = vunpack.c.h.b16 %v5426
      %v5820 = vunpack.c.l.b16 %v5427
      %v5821 = vunpack.c.h.b16 %v5427
      %v5822 = vunpack.c.l.b16 %v5428
      %v5823 = vunpack.c.h.b16 %v5428
      %v5824 = vunpack.c.l.b16 %v5429
      %v5825 = vunpack.c.h.b16 %v5429
      %v5826 = vunpack.c.l.b16 %v5430
      %v5827 = vunpack.c.h.b16 %v5430
      %v5828 = vunpack.c.l.b16 %v5431
      %v5829 = vunpack.c.h.b16 %v5431
      %v5830 = vunpack.c.l.b16 %v5432
      %v5831 = vunpack.c.h.b16 %v5432
      %v5832 = vunpack.c.l.b16 %v5433
      %v5833 = vunpack.c.h.b16 %v5433
      %v5834 = vunpack.c.l.b16 %v5434
      %v5835 = vunpack.c.h.b16 %v5434
      %v5836 = vunpack.c.l.b16 %v5435
      %v5837 = vunpack.c.h.b16 %v5435
      %v5838 = vunpack.c.l.b16 %v5436
      %v5839 = vunpack.c.h.b16 %v5436
      %v5840 = vunpack.c.l.b16 %v5437
      %v5841 = vunpack.c.h.b16 %v5437
      %v5842 = vunpack.c.l.b16 %v5438
      %v5843 = vunpack.c.h.b16 %v5438
      %v5844 = vunpack.c.l.b16 %v5439
      %v5845 = vunpack.c.h.b16 %v5439
      %v5846 = vunpack.c.l.b16 %v5440
      %v5847 = vunpack.c.h.b16 %v5440
      %v5848 = vunpack.c.l.b16 %v5441
      %v5849 = vunpack.c.h.b16 %v5441
      %v5850 = vunpack.c.l.b16 %v5442
      %v5851 = vunpack.c.h.b16 %v5442
      %v5852 = vunpack.c.l.b16 %v5443
      %v5853 = vunpack.c.h.b16 %v5443
      %v5854 = vunpack.c.l.b16 %v5444
      %v5855 = vunpack.c.h.b16 %v5444
      %v5856 = vunpack.c.l.b16 %v5445
      %v5857 = vunpack.c.h.b16 %v5445
      %v5858 = vunpack.c.l.b16 %v5446
      %v5859 = vunpack.c.h.b16 %v5446
      %v5860 = vunpack.c.l.b16 %v5447
      %v5861 = vunpack.c.h.b16 %v5447
      %v5862 = vunpack.c.l.b16 %v5448
      %v5863 = vunpack.c.h.b16 %v5448
      %v5864 = vunpack.c.l.b16 %v5449
      %v5865 = vunpack.c.h.b16 %v5449
      %v5866 = vunpack.c.l.b16 %v5450
      %v5867 = vunpack.c.h.b16 %v5450
      %v5868 = vunpack.c.l.b16 %v5451
      %v5869 = vunpack.c.h.b16 %v5451
      %v5870 = vunpack.c.l.b16 %v5452
      %v5871 = vunpack.c.h.b16 %v5452
      %v5872 = vunpack.c.l.b16 %v5453
      %v5873 = vunpack.c.h.b16 %v5453
      %v5874 = vunpack.c.l.b16 %v5454
      %v5875 = vunpack.c.h.b16 %v5454
      %v5876 = vunpack.c.l.b16 %v5455
      %v5877 = vunpack.c.h.b16 %v5455
      %v5878 = vunpack.c.l.b16 %v5456
      %v5879 = vunpack.c.h.b16 %v5456
      %v5880 = vunpack.c.l.b16 %v5457
      %v5881 = vunpack.c.h.b16 %v5457
      %v5882 = vunpack.c.l.b16 %v5458
      %v5883 = vunpack.c.h.b16 %v5458
      %v5884 = vunpack.c.l.b16 %v5459
      %v5885 = vunpack.c.h.b16 %v5459
      %v5886 = vunpack.c.l.b16 %v5460
      %v5887 = vunpack.c.h.b16 %v5460
      %v5888 = vunpack.c.l.b16 %v5461
      %v5889 = vunpack.c.h.b16 %v5461
      %v5890 = vunpack.c.l.b16 %v5462
      %v5891 = vunpack.c.h.b16 %v5462
      %v5892 = vunpack.c.l.b16 %v5463
      %v5893 = vunpack.c.h.b16 %v5463
      %v5894 = vunpack.c.l.b16 %v5464
      %v5895 = vunpack.c.h.b16 %v5464
      %v5896 = vunpack.c.l.b16 %v5465
      %v5897 = vunpack.c.h.b16 %v5465
      %v5898 = vunpack.c.l.b16 %v5466
      %v5899 = vunpack.c.h.b16 %v5466
      %v5900 = vunpack.c.l.b16 %v5467
      %v5901 = vunpack.c.h.b16 %v5467
      %v5902 = vunpack.c.l.b16 %v5468
      %v5903 = vunpack.c.h.b16 %v5468
      %v5904 = vunpack.c.l.b16 %v5469
      %v5905 = vunpack.c.h.b16 %v5469
      %v5906 = vunpack.c.l.b16 %v5470
      %v5907 = vunpack.c.h.b16 %v5470
      %v5908 = vunpack.c.l.b16 %v5471
      %v5909 = vunpack.c.h.b16 %v5471
      %v5910 = vunpack.c.l.b16 %v5472
      %v5911 = vunpack.c.h.b16 %v5472
      %v5912 = vunpack.c.l.b16 %v5473
      %v5913 = vunpack.c.h.b16 %v5473
      %v5914 = vunpack.c.l.b16 %v5474
      %v5915 = vunpack.c.h.b16 %v5474
      %v5916 = vunpack.c.l.b16 %v5475
      %v5917 = vunpack.c.h.b16 %v5475
      %v5918 = vunpack.c.l.b16 %v5476
      %v5919 = vunpack.c.h.b16 %v5476
      %v5920 = vunpack.c.l.b16 %v5477
      %v5921 = vunpack.c.h.b16 %v5477
      %v5922 = vpack.c.b16 %v5636, %v5634
      %v5923 = vpack.c.b16 %v5637, %v5635
      %v5924 = vpack.c.b16 %v5640, %v5638
      %v5925 = vpack.c.b16 %v5641, %v5639
      %v5926 = vpack.c.b16 %v5644, %v5642
      %v5927 = vpack.c.b16 %v5645, %v5643
      %v5928 = vpack.c.b16 %v5648, %v5646
      %v5929 = vpack.c.b16 %v5649, %v5647
      %v5930 = vpack.c.b16 %v5652, %v5650
      %v5931 = vpack.c.b16 %v5653, %v5651
      %v5932 = vpack.c.b16 %v5656, %v5654
      %v5933 = vpack.c.b16 %v5657, %v5655
      %v5934 = vpack.c.b16 %v5660, %v5658
      %v5935 = vpack.c.b16 %v5661, %v5659
      %v5936 = vpack.c.b16 %v5664, %v5662
      %v5937 = vpack.c.b16 %v5665, %v5663
      %v5938 = vpack.c.b16 %v5668, %v5666
      %v5939 = vpack.c.b16 %v5669, %v5667
      %v5940 = vpack.c.b16 %v5672, %v5670
      %v5941 = vpack.c.b16 %v5673, %v5671
      %v5942 = vpack.c.b16 %v5676, %v5674
      %v5943 = vpack.c.b16 %v5677, %v5675
      %v5944 = vpack.c.b16 %v5680, %v5678
      %v5945 = vpack.c.b16 %v5681, %v5679
      %v5946 = vpack.c.b16 %v5684, %v5682
      %v5947 = vpack.c.b16 %v5685, %v5683
      %v5948 = vpack.c.b16 %v5688, %v5686
      %v5949 = vpack.c.b16 %v5689, %v5687
      %v5950 = vpack.c.b16 %v5692, %v5690
      %v5951 = vpack.c.b16 %v5693, %v5691
      %v5952 = vpack.c.b16 %v5696, %v5694
      %v5953 = vpack.c.b16 %v5697, %v5695
      %v5954 = vpack.c.b16 %v5700, %v5698
      %v5955 = vpack.c.b16 %v5701, %v5699
      %v5956 = vpack.c.b16 %v5704, %v5702
      %v5957 = vpack.c.b16 %v5705, %v5703
      %v5958 = vpack.c.b16 %v5708, %v5706
      %v5959 = vpack.c.b16 %v5709, %v5707
      %v5960 = vpack.c.b16 %v5712, %v5710
      %v5961 = vpack.c.b16 %v5713, %v5711
      %v5962 = vpack.c.b16 %v5716, %v5714
      %v5963 = vpack.c.b16 %v5717, %v5715
      %v5964 = vpack.c.b16 %v5720, %v5718
      %v5965 = vpack.c.b16 %v5721, %v5719
      %v5966 = vpack.c.b16 %v5724, %v5722
      %v5967 = vpack.c.b16 %v5725, %v5723
      %v5968 = vpack.c.b16 %v5728, %v5726
      %v5969 = vpack.c.b16 %v5729, %v5727
      %v5970 = vpack.c.b16 %v5732, %v5730
      %v5971 = vpack.c.b16 %v5733, %v5731
      %v5972 = vpack.c.b16 %v5736, %v5734
      %v5973 = vpack.c.b16 %v5737, %v5735
      %v5974 = vpack.c.b16 %v5740, %v5738
      %v5975 = vpack.c.b16 %v5741, %v5739
      %v5976 = vpack.c.b16 %v5744, %v5742
      %v5977 = vpack.c.b16 %v5745, %v5743
      %v5978 = vpack.c.b16 %v5748, %v5746
      %v5979 = vpack.c.b16 %v5749, %v5747
      %v5980 = vpack.c.b16 %v5752, %v5750
      %v5981 = vpack.c.b16 %v5753, %v5751
      %v5982 = vpack.c.b16 %v5756, %v5754
      %v5983 = vpack.c.b16 %v5757, %v5755
      %v5984 = vpack.c.b16 %v5760, %v5758
      %v5985 = vpack.c.b16 %v5761, %v5759
      %v5986 = vpack.c.b16 %v5764, %v5762
      %v5987 = vpack.c.b16 %v5765, %v5763
      %v5988 = vpack.c.b16 %v5768, %v5766
      %v5989 = vpack.c.b16 %v5769, %v5767
      %v5990 = vpack.c.b16 %v5772, %v5770
      %v5991 = vpack.c.b16 %v5773, %v5771
      %v5992 = vpack.c.b16 %v5776, %v5774
      %v5993 = vpack.c.b16 %v5777, %v5775
      %v5994 = vpack.c.b16 %v5780, %v5778
      %v5995 = vpack.c.b16 %v5781, %v5779
      %v5996 = vpack.c.b16 %v5784, %v5782
      %v5997 = vpack.c.b16 %v5785, %v5783
      %v5998 = vpack.c.b16 %v5788, %v5786
      %v5999 = vpack.c.b16 %v5789, %v5787
      %v6000 = vpack.c.b16 %v5792, %v5790
      %v6001 = vpack.c.b16 %v5793, %v5791
      %v6002 = vpack.c.b16 %v5796, %v5794
      %v6003 = vpack.c.b16 %v5797, %v5795
      %v6004 = vpack.c.b16 %v5800, %v5798
      %v6005 = vpack.c.b16 %v5801, %v5799
      %v6006 = vpack.c.b16 %v5804, %v5802
      %v6007 = vpack.c.b16 %v5805, %v5803
      %v6008 = vpack.c.b16 %v5808, %v5806
      %v6009 = vpack.c.b16 %v5809, %v5807
      %v6010 = vpack.c.b16 %v5812, %v5810
      %v6011 = vpack.c.b16 %v5813, %v5811
      %v6012 = vpack.c.b16 %v5816, %v5814
      %v6013 = vpack.c.b16 %v5817, %v5815
      %v6014 = vpack.c.b16 %v5820, %v5818
      %v6015 = vpack.c.b16 %v5821, %v5819
      %v6016 = vpack.c.b16 %v5824, %v5822
      %v6017 = vpack.c.b16 %v5825, %v5823
      %v6018 = vpack.c.b16 %v5828, %v5826
      %v6019 = vpack.c.b16 %v5829, %v5827
      %v6020 = vpack.c.b16 %v5832, %v5830
      %v6021 = vpack.c.b16 %v5833, %v5831
      %v6022 = vpack.c.b16 %v5836, %v5834
      %v6023 = vpack.c.b16 %v5837, %v5835
      %v6024 = vpack.c.b16 %v5840, %v5838
      %v6025 = vpack.c.b16 %v5841, %v5839
      %v6026 = vpack.c.b16 %v5844, %v5842
      %v6027 = vpack.c.b16 %v5845, %v5843
      %v6028 = vpack.c.b16 %v5848, %v5846
      %v6029 = vpack.c.b16 %v5849, %v5847
      %v6030 = vpack.c.b16 %v5852, %v5850
      %v6031 = vpack.c.b16 %v5853, %v5851
      %v6032 = vpack.c.b16 %v5856, %v5854
      %v6033 = vpack.c.b16 %v5857, %v5855
      %v6034 = vpack.c.b16 %v5860, %v5858
      %v6035 = vpack.c.b16 %v5861, %v5859
      %v6036 = vpack.c.b16 %v5864, %v5862
      %v6037 = vpack.c.b16 %v5865, %v5863
      %v6038 = vpack.c.b16 %v5868, %v5866
      %v6039 = vpack.c.b16 %v5869, %v5867
      %v6040 = vpack.c.b16 %v5872, %v5870
      %v6041 = vpack.c.b16 %v5873, %v5871
      %v6042 = vpack.c.b16 %v5876, %v5874
      %v6043 = vpack.c.b16 %v5877, %v5875
      %v6044 = vpack.c.b16 %v5880, %v5878
      %v6045 = vpack.c.b16 %v5881, %v5879
      %v6046 = vpack.c.b16 %v5884, %v5882
      %v6047 = vpack.c.b16 %v5885, %v5883
      %v6048 = vpack.c.b16 %v5888, %v5886
      %v6049 = vpack.c.b16 %v5889, %v5887
      %v6050 = vpack.c.b16 %v5892, %v5890
      %v6051 = vpack.c.b16 %v5893, %v5891
      %v6052 = vpack.c.b16 %v5896, %v5894
      %v6053 = vpack.c.b16 %v5897, %v5895
      %v6054 = vpack.c.b16 %v5900, %v5898
      %v6055 = vpack.c.b16 %v5901, %v5899
      %v6056 = vpack.c.b16 %v5904, %v5902
      %v6057 = vpack.c.b16 %v5905, %v5903
      %v6058 = vpack.c.b16 %v5908, %v5906
      %v6059 = vpack.c.b16 %v5909, %v5907
      %v6060 = vpack.c.b16 %v5912, %v5910
      %v6061 = vpack.c.b16 %v5913, %v5911
      %v6062 = vpack.c.b16 %v5916, %v5914
      %v6063 = vpack.c.b16 %v5917, %v5915
      %v6064 = vpack.c.b16 %v5920, %v5918
      %v6065 = vpack.c.b16 %v5921, %v5919
      %6210 = vmatprep.subr.bf16.mxu0 %v5923
      %6211 = vmatpush1.bf16.msra.mxu0 %v5922
      %6212 = vmatprep.subr.bf16.mxu0 %v5925
      %6213 = vmatpush1.bf16.msra.mxu0 %v5924
      %6214 = vmatprep.subr.bf16.mxu0 %v5927
      %6215 = vmatpush1.bf16.msra.mxu0 %v5926
      %6216 = vmatprep.subr.bf16.mxu0 %v5929
      %6217 = vmatpush1.bf16.msra.mxu0 %v5928
      %6218 = vmatprep.subr.bf16.mxu0 %v5931
      %6219 = vmatpush1.bf16.msra.mxu0 %v5930
      %6220 = vmatprep.subr.bf16.mxu0 %v5933
      %6221 = vmatpush1.bf16.msra.mxu0 %v5932
      %6222 = vmatprep.subr.bf16.mxu0 %v5935
      %6223 = vmatpush1.bf16.msra.mxu0 %v5934
      %6224 = vmatprep.subr.bf16.mxu0 %v5937
      %6225 = vmatpush1.bf16.msra.mxu0 %v5936
      %6226 = vmatprep.subr.bf16.mxu0 %v5939
      %6227 = vmatpush1.bf16.msra.mxu0 %v5938
      %6228 = vmatprep.subr.bf16.mxu0 %v5941
      %6229 = vmatpush1.bf16.msra.mxu0 %v5940
      %6230 = vmatprep.subr.bf16.mxu0 %v5943
      %6231 = vmatpush1.bf16.msra.mxu0 %v5942
      %6232 = vmatprep.subr.bf16.mxu0 %v5945
      %6233 = vmatpush1.bf16.msra.mxu0 %v5944
      %6234 = vmatprep.subr.bf16.mxu0 %v5947
      %6235 = vmatpush1.bf16.msra.mxu0 %v5946
      %6236 = vmatprep.subr.bf16.mxu0 %v5949
      %6237 = vmatpush1.bf16.msra.mxu0 %v5948
      %6238 = vmatprep.subr.bf16.mxu0 %v5951
      %6239 = vmatpush1.bf16.msra.mxu0 %v5950
      %6240 = vmatprep.subr.bf16.mxu0 %v5953
      %6241 = vmatpush1.bf16.msra.mxu0 %v5952
      %6242 = vmatprep.mubr.bf16.mxu0 %v5191
      %6243 = vmatmul.mubr.bf16.gmra.mrb[0].mxu0 %v5190
      %v6244 = vpop.f32.mrb[0].mxu0
      %v6245 = vadd.f32 %v5483, %v6244
      %v6246 = vpop.f32.mrb[0].mxu0
      %v6247 = vadd.f32 %v5487, %v6246
      %v6248 = vpop.f32.mrb[0].mxu0
      %v6249 = vadd.f32 %v5483, %v6248
      %v6250 = vpop.f32.mrb[0].mxu0
      %v6251 = vadd.f32 %v5487, %v6250
      %6252 = vmatprep.mubr.bf16.mxu0 %v5200
      %6253 = vmatmul.mubr.bf16.gmra.mrb[0].mxu0 %v5199
      %v6254 = vpop.f32.mrb[0].mxu0
      %v6255 = vadd.f32 %v5483, %v6254
      %v6256 = vpop.f32.mrb[0].mxu0
      %v6257 = vadd.f32 %v5487, %v6256
      %v6258 = vpop.f32.mrb[0].mxu0
      %v6259 = vadd.f32 %v5483, %v6258
      %v6260 = vpop.f32.mrb[0].mxu0
      %v6261 = vadd.f32 %v5487, %v6260
      %6262 = vmatprep.mubr.bf16.mxu0 %v5209
      %6263 = vmatmul.mubr.bf16.gmra.mrb[0].mxu0 %v5208
      %v6264 = vpop.f32.mrb[0].mxu0
      %v6265 = vadd.f32 %v5483, %v6264
      %v6266 = vpop.f32.mrb[0].mxu0
      %v6267 = vadd.f32 %v5487, %v6266
      %v6268 = vpop.f32.mrb[0].mxu0
      %v6269 = vadd.f32 %v5483, %v6268
      %v6270 = vpop.f32.mrb[0].mxu0
      %v6271 = vadd.f32 %v5487, %v6270
      %6272 = vmatprep.mubr.bf16.mxu0 %v5218
      %6273 = vmatmul.mubr.bf16.gmra.mrb[0].mxu0 %v5217
      %v6274 = vpop.f32.mrb[0].mxu0
      %v6275 = vadd.f32 %v5483, %v6274
      %v6276 = vpop.f32.mrb[0].mxu0
      %v6277 = vadd.f32 %v5487, %v6276
      %v6278 = vpop.f32.mrb[0].mxu0
      %v6279 = vadd.f32 %v5483, %v6278
      %v6280 = vpop.f32.mrb[0].mxu0
      %v6281 = vadd.f32 %v5487, %v6280
      %6282 = vmatprep.mubr.bf16.mxu0 %v5227
      %6283 = vmatmul.mubr.bf16.gmra.mrb[0].mxu0 %v5226
      %v6284 = vpop.f32.mrb[0].mxu0
      %v6285 = vadd.f32 %v5483, %v6284
      %v6286 = vpop.f32.mrb[0].mxu0
      %v6287 = vadd.f32 %v5487, %v6286
      %v6288 = vpop.f32.mrb[0].mxu0
      %v6289 = vadd.f32 %v5483, %v6288
      %v6290 = vpop.f32.mrb[0].mxu0
      %v6291 = vadd.f32 %v5487, %v6290
      %6292 = vmatprep.mubr.bf16.mxu0 %v5236
      %6293 = vmatmul.mubr.bf16.gmra.mrb[0].mxu0 %v5235
      %v6294 = vpop.f32.mrb[0].mxu0
      %v6295 = vadd.f32 %v5483, %v6294
      %v6296 = vpop.f32.mrb[0].mxu0
      %v6297 = vadd.f32 %v5487, %v6296
      %v6298 = vpop.f32.mrb[0].mxu0
      %v6299 = vadd.f32 %v5483, %v6298
      %v6300 = vpop.f32.mrb[0].mxu0
      %v6301 = vadd.f32 %v5487, %v6300
      %6302 = vmatprep.mubr.bf16.mxu0 %v5245
      %6303 = vmatmul.mubr.bf16.gmra.mrb[0].mxu0 %v5244
      %v6304 = vpop.f32.mrb[0].mxu0
      %v6305 = vadd.f32 %v5483, %v6304
      %v6306 = vpop.f32.mrb[0].mxu0
      %v6307 = vadd.f32 %v5487, %v6306
      %v6308 = vpop.f32.mrb[0].mxu0
      %v6309 = vadd.f32 %v5483, %v6308
      %v6310 = vpop.f32.mrb[0].mxu0
      %v6311 = vadd.f32 %v5487, %v6310
      %6312 = vmatprep.mubr.bf16.mxu0 %v5254
      %6313 = vmatmul.mubr.bf16.gmra.mrb[0].mxu0 %v5253
      %v6314 = vpop.f32.mrb[0].mxu0
      %v6315 = vadd.f32 %v5483, %v6314
      %v6316 = vpop.f32.mrb[0].mxu0
      %v6317 = vadd.f32 %v5487, %v6316
      %v6318 = vpop.f32.mrb[0].mxu0
      %v6319 = vadd.f32 %v5483, %v6318
      %v6320 = vpop.f32.mrb[0].mxu0
      %v6321 = vadd.f32 %v5487, %v6320
      %6322 = vmatprep.mubr.bf16.mxu0 %v5263
      %6323 = vmatmul.mubr.bf16.gmra.mrb[0].mxu0 %v5262
      %v6324 = vpop.f32.mrb[0].mxu0
      %v6325 = vadd.f32 %v5483, %v6324
      %v6326 = vpop.f32.mrb[0].mxu0
      %v6327 = vadd.f32 %v5487, %v6326
      %v6328 = vpop.f32.mrb[0].mxu0
      %v6329 = vadd.f32 %v5483, %v6328
      %v6330 = vpop.f32.mrb[0].mxu0
      %v6331 = vadd.f32 %v5487, %v6330
      %6332 = vmatprep.mubr.bf16.mxu0 %v5272
      %6333 = vmatmul.mubr.bf16.gmra.mrb[0].mxu0 %v5271
      %v6334 = vpop.f32.mrb[0].mxu0
      %v6335 = vadd.f32 %v5483, %v6334
      %v6336 = vpop.f32.mrb[0].mxu0
      %v6337 = vadd.f32 %v5487, %v6336
      %v6338 = vpop.f32.mrb[0].mxu0
      %v6339 = vadd.f32 %v5483, %v6338
      %v6340 = vpop.f32.mrb[0].mxu0
      %v6341 = vadd.f32 %v5487, %v6340
      %6342 = vmatprep.mubr.bf16.mxu0 %v5281
      %6343 = vmatmul.mubr.bf16.gmra.mrb[0].mxu0 %v5280
      %v6344 = vpop.f32.mrb[0].mxu0
      %v6345 = vadd.f32 %v5483, %v6344
      %v6346 = vpop.f32.mrb[0].mxu0
      %v6347 = vadd.f32 %v5487, %v6346
      %v6348 = vpop.f32.mrb[0].mxu0
      %v6349 = vadd.f32 %v5483, %v6348
      %v6350 = vpop.f32.mrb[0].mxu0
      %v6351 = vadd.f32 %v5487, %v6350
      %6352 = vmatprep.mubr.bf16.mxu0 %v5290
      %6353 = vmatmul.mubr.bf16.gmra.mrb[0].mxu0 %v5289
      %v6354 = vpop.f32.mrb[0].mxu0
      %v6355 = vadd.f32 %v5483, %v6354
      %v6356 = vpop.f32.mrb[0].mxu0
      %v6357 = vadd.f32 %v5487, %v6356
      %v6358 = vpop.f32.mrb[0].mxu0
      %v6359 = vadd.f32 %v5483, %v6358
      %v6360 = vpop.f32.mrb[0].mxu0
      %v6361 = vadd.f32 %v5487, %v6360
      %6362 = vmatprep.mubr.bf16.mxu0 %v5299
      %6363 = vmatmul.mubr.bf16.gmra.mrb[0].mxu0 %v5298
      %v6364 = vpop.f32.mrb[0].mxu0
      %v6365 = vadd.f32 %v5483, %v6364
      %v6366 = vpop.f32.mrb[0].mxu0
      %v6367 = vadd.f32 %v5487, %v6366
      %v6368 = vpop.f32.mrb[0].mxu0
      %v6369 = vadd.f32 %v5483, %v6368
      %v6370 = vpop.f32.mrb[0].mxu0
      %v6371 = vadd.f32 %v5487, %v6370
      %6372 = vmatprep.mubr.bf16.mxu0 %v5308
      %6373 = vmatmul.mubr.bf16.gmra.mrb[0].mxu0 %v5307
      %v6374 = vpop.f32.mrb[0].mxu0
      %v6375 = vadd.f32 %v5483, %v6374
      %v6376 = vpop.f32.mrb[0].mxu0
      %v6377 = vadd.f32 %v5487, %v6376
      %v6378 = vpop.f32.mrb[0].mxu0
      %v6379 = vadd.f32 %v5483, %v6378
      %v6380 = vpop.f32.mrb[0].mxu0
      %v6381 = vadd.f32 %v5487, %v6380
      %6382 = vmatprep.mubr.bf16.mxu0 %v5317
      %6383 = vmatmul.mubr.bf16.gmra.mrb[0].mxu0 %v5316
      %v6384 = vpop.f32.mrb[0].mxu0
      %v6385 = vadd.f32 %v5483, %v6384
      %v6386 = vpop.f32.mrb[0].mxu0
      %v6387 = vadd.f32 %v5487, %v6386
      %v6388 = vpop.f32.mrb[0].mxu0
      %v6389 = vadd.f32 %v5483, %v6388
      %v6390 = vpop.f32.mrb[0].mxu0
      %v6391 = vadd.f32 %v5487, %v6390
      %6392 = vmatprep.mubr.bf16.mxu0 %v5326
      %6393 = vmatmul.mubr.bf16.gmra.mrb[0].mxu0 %v5325
      %v6394 = vpop.f32.mrb[0].mxu0
      %v6395 = vadd.f32 %v5483, %v6394
      %v6396 = vpop.f32.mrb[0].mxu0
      %v6397 = vadd.f32 %v5487, %v6396
      %v6398 = vpop.f32.mrb[0].mxu0
      %v6399 = vadd.f32 %v5483, %v6398
      %v6400 = vpop.f32.mrb[0].mxu0
      %v6401 = vadd.f32 %v5487, %v6400
      %6402 = vdwg.mxu0
      %6403 = vmatprep.subr.bf16.mxu0 %v5955
      %6404 = vmatpush1.bf16.msra.mxu0 %v5954
      %6405 = vmatprep.subr.bf16.mxu0 %v5957
      %6406 = vmatpush1.bf16.msra.mxu0 %v5956
      %6407 = vmatprep.subr.bf16.mxu0 %v5959
      %6408 = vmatpush1.bf16.msra.mxu0 %v5958
      %6409 = vmatprep.subr.bf16.mxu0 %v5961
      %6410 = vmatpush1.bf16.msra.mxu0 %v5960
      %6411 = vmatprep.subr.bf16.mxu0 %v5963
      %6412 = vmatpush1.bf16.msra.mxu0 %v5962
      %6413 = vmatprep.subr.bf16.mxu0 %v5965
      %6414 = vmatpush1.bf16.msra.mxu0 %v5964
      %6415 = vmatprep.subr.bf16.mxu0 %v5967
      %6416 = vmatpush1.bf16.msra.mxu0 %v5966
      %6417 = vmatprep.subr.bf16.mxu0 %v5969
      %6418 = vmatpush1.bf16.msra.mxu0 %v5968
      %6419 = vmatprep.subr.bf16.mxu0 %v5971
      %6420 = vmatpush1.bf16.msra.mxu0 %v5970
      %6421 = vmatprep.subr.bf16.mxu0 %v5973
      %6422 = vmatpush1.bf16.msra.mxu0 %v5972
      %6423 = vmatprep.subr.bf16.mxu0 %v5975
      %6424 = vmatpush1.bf16.msra.mxu0 %v5974
      %6425 = vmatprep.subr.bf16.mxu0 %v5977
      %6426 = vmatpush1.bf16.msra.mxu0 %v5976
      %6427 = vmatprep.subr.bf16.mxu0 %v5979
      %6428 = vmatpush1.bf16.msra.mxu0 %v5978
      %6429 = vmatprep.subr.bf16.mxu0 %v5981
      %6430 = vmatpush1.bf16.msra.mxu0 %v5980
      %6431 = vmatprep.subr.bf16.mxu0 %v5983
      %6432 = vmatpush1.bf16.msra.mxu0 %v5982
      %6433 = vmatprep.subr.bf16.mxu0 %v5985
      %6434 = vmatpush1.bf16.msra.mxu0 %v5984
      %6435 = vmatprep.mubr.bf16.mxu0 %v5193
      %6436 = vmatmul.mubr.bf16.gmra.mrb[0].mxu0 %v5192
      %v6437 = vpop.f32.mrb[0].mxu0
      %v6438 = vadd.f32 %v6245, %v6437
      %v6439 = vpop.f32.mrb[0].mxu0
      %v6440 = vadd.f32 %v6247, %v6439
      %v6441 = vpop.f32.mrb[0].mxu0
      %v6442 = vadd.f32 %v6249, %v6441
      %v6443 = vpop.f32.mrb[0].mxu0
      %v6444 = vadd.f32 %v6251, %v6443
      %6445 = vmatprep.mubr.bf16.mxu0 %v5202
      %6446 = vmatmul.mubr.bf16.gmra.mrb[0].mxu0 %v5201
      %v6447 = vpop.f32.mrb[0].mxu0
      %v6448 = vadd.f32 %v6255, %v6447
      %v6449 = vpop.f32.mrb[0].mxu0
      %v6450 = vadd.f32 %v6257, %v6449
      %v6451 = vpop.f32.mrb[0].mxu0
      %v6452 = vadd.f32 %v6259, %v6451
      %v6453 = vpop.f32.mrb[0].mxu0
      %v6454 = vadd.f32 %v6261, %v6453
      %6455 = vmatprep.mubr.bf16.mxu0 %v5211
      %6456 = vmatmul.mubr.bf16.gmra.mrb[0].mxu0 %v5210
      %v6457 = vpop.f32.mrb[0].mxu0
      %v6458 = vadd.f32 %v6265, %v6457
      %v6459 = vpop.f32.mrb[0].mxu0
      %v6460 = vadd.f32 %v6267, %v6459
      %v6461 = vpop.f32.mrb[0].mxu0
      %v6462 = vadd.f32 %v6269, %v6461
      %v6463 = vpop.f32.mrb[0].mxu0
      %v6464 = vadd.f32 %v6271, %v6463
      %6465 = vmatprep.mubr.bf16.mxu0 %v5220
      %6466 = vmatmul.mubr.bf16.gmra.mrb[0].mxu0 %v5219
      %v6467 = vpop.f32.mrb[0].mxu0
      %v6468 = vadd.f32 %v6275, %v6467
      %v6469 = vpop.f32.mrb[0].mxu0
      %v6470 = vadd.f32 %v6277, %v6469
      %v6471 = vpop.f32.mrb[0].mxu0
      %v6472 = vadd.f32 %v6279, %v6471
      %v6473 = vpop.f32.mrb[0].mxu0
      %v6474 = vadd.f32 %v6281, %v6473
      %6475 = vmatprep.mubr.bf16.mxu0 %v5229
      %6476 = vmatmul.mubr.bf16.gmra.mrb[0].mxu0 %v5228
      %v6477 = vpop.f32.mrb[0].mxu0
      %v6478 = vadd.f32 %v6285, %v6477
      %v6479 = vpop.f32.mrb[0].mxu0
      %v6480 = vadd.f32 %v6287, %v6479
      %v6481 = vpop.f32.mrb[0].mxu0
      %v6482 = vadd.f32 %v6289, %v6481
      %v6483 = vpop.f32.mrb[0].mxu0
      %v6484 = vadd.f32 %v6291, %v6483
      %6485 = vmatprep.mubr.bf16.mxu0 %v5238
      %6486 = vmatmul.mubr.bf16.gmra.mrb[0].mxu0 %v5237
      %v6487 = vpop.f32.mrb[0].mxu0
      %v6488 = vadd.f32 %v6295, %v6487
      %v6489 = vpop.f32.mrb[0].mxu0
      %v6490 = vadd.f32 %v6297, %v6489
      %v6491 = vpop.f32.mrb[0].mxu0
      %v6492 = vadd.f32 %v6299, %v6491
      %v6493 = vpop.f32.mrb[0].mxu0
      %v6494 = vadd.f32 %v6301, %v6493
      %6495 = vmatprep.mubr.bf16.mxu0 %v5247
      %6496 = vmatmul.mubr.bf16.gmra.mrb[0].mxu0 %v5246
      %v6497 = vpop.f32.mrb[0].mxu0
      %v6498 = vadd.f32 %v6305, %v6497
      %v6499 = vpop.f32.mrb[0].mxu0
      %v6500 = vadd.f32 %v6307, %v6499
      %v6501 = vpop.f32.mrb[0].mxu0
      %v6502 = vadd.f32 %v6309, %v6501
      %v6503 = vpop.f32.mrb[0].mxu0
      %v6504 = vadd.f32 %v6311, %v6503
      %6505 = vmatprep.mubr.bf16.mxu0 %v5256
      %6506 = vmatmul.mubr.bf16.gmra.mrb[0].mxu0 %v5255
      %v6507 = vpop.f32.mrb[0].mxu0
      %v6508 = vadd.f32 %v6315, %v6507
      %v6509 = vpop.f32.mrb[0].mxu0
      %v6510 = vadd.f32 %v6317, %v6509
      %v6511 = vpop.f32.mrb[0].mxu0
      %v6512 = vadd.f32 %v6319, %v6511
      %v6513 = vpop.f32.mrb[0].mxu0
      %v6514 = vadd.f32 %v6321, %v6513
      %6515 = vmatprep.mubr.bf16.mxu0 %v5265
      %6516 = vmatmul.mubr.bf16.gmra.mrb[0].mxu0 %v5264
      %v6517 = vpop.f32.mrb[0].mxu0
      %v6518 = vadd.f32 %v6325, %v6517
      %v6519 = vpop.f32.mrb[0].mxu0
      %v6520 = vadd.f32 %v6327, %v6519
      %v6521 = vpop.f32.mrb[0].mxu0
      %v6522 = vadd.f32 %v6329, %v6521
      %v6523 = vpop.f32.mrb[0].mxu0
      %v6524 = vadd.f32 %v6331, %v6523
      %6525 = vmatprep.mubr.bf16.mxu0 %v5274
      %6526 = vmatmul.mubr.bf16.gmra.mrb[0].mxu0 %v5273
      %v6527 = vpop.f32.mrb[0].mxu0
      %v6528 = vadd.f32 %v6335, %v6527
      %v6529 = vpop.f32.mrb[0].mxu0
      %v6530 = vadd.f32 %v6337, %v6529
      %v6531 = vpop.f32.mrb[0].mxu0
      %v6532 = vadd.f32 %v6339, %v6531
      %v6533 = vpop.f32.mrb[0].mxu0
      %v6534 = vadd.f32 %v6341, %v6533
      %6535 = vmatprep.mubr.bf16.mxu0 %v5283
      %6536 = vmatmul.mubr.bf16.gmra.mrb[0].mxu0 %v5282
      %v6537 = vpop.f32.mrb[0].mxu0
      %v6538 = vadd.f32 %v6345, %v6537
      %v6539 = vpop.f32.mrb[0].mxu0
      %v6540 = vadd.f32 %v6347, %v6539
      %v6541 = vpop.f32.mrb[0].mxu0
      %v6542 = vadd.f32 %v6349, %v6541
      %v6543 = vpop.f32.mrb[0].mxu0
      %v6544 = vadd.f32 %v6351, %v6543
      %6545 = vmatprep.mubr.bf16.mxu0 %v5292
      %6546 = vmatmul.mubr.bf16.gmra.mrb[0].mxu0 %v5291
      %v6547 = vpop.f32.mrb[0].mxu0
      %v6548 = vadd.f32 %v6355, %v6547
      %v6549 = vpop.f32.mrb[0].mxu0
      %v6550 = vadd.f32 %v6357, %v6549
      %v6551 = vpop.f32.mrb[0].mxu0
      %v6552 = vadd.f32 %v6359, %v6551
      %v6553 = vpop.f32.mrb[0].mxu0
      %v6554 = vadd.f32 %v6361, %v6553
      %6555 = vmatprep.mubr.bf16.mxu0 %v5301
      %6556 = vmatmul.mubr.bf16.gmra.mrb[0].mxu0 %v5300
      %v6557 = vpop.f32.mrb[0].mxu0
      %v6558 = vadd.f32 %v6365, %v6557
      %v6559 = vpop.f32.mrb[0].mxu0
      %v6560 = vadd.f32 %v6367, %v6559
      %v6561 = vpop.f32.mrb[0].mxu0
      %v6562 = vadd.f32 %v6369, %v6561
      %v6563 = vpop.f32.mrb[0].mxu0
      %v6564 = vadd.f32 %v6371, %v6563
      %6565 = vmatprep.mubr.bf16.mxu0 %v5310
      %6566 = vmatmul.mubr.bf16.gmra.mrb[0].mxu0 %v5309
      %v6567 = vpop.f32.mrb[0].mxu0
      %v6568 = vadd.f32 %v6375, %v6567
      %v6569 = vpop.f32.mrb[0].mxu0
      %v6570 = vadd.f32 %v6377, %v6569
      %v6571 = vpop.f32.mrb[0].mxu0
      %v6572 = vadd.f32 %v6379, %v6571
      %v6573 = vpop.f32.mrb[0].mxu0
      %v6574 = vadd.f32 %v6381, %v6573
      %6575 = vmatprep.mubr.bf16.mxu0 %v5319
      %6576 = vmatmul.mubr.bf16.gmra.mrb[0].mxu0 %v5318
      %v6577 = vpop.f32.mrb[0].mxu0
      %v6578 = vadd.f32 %v6385, %v6577
      %v6579 = vpop.f32.mrb[0].mxu0
      %v6580 = vadd.f32 %v6387, %v6579
      %v6581 = vpop.f32.mrb[0].mxu0
      %v6582 = vadd.f32 %v6389, %v6581
      %v6583 = vpop.f32.mrb[0].mxu0
      %v6584 = vadd.f32 %v6391, %v6583
      %6585 = vmatprep.mubr.bf16.mxu0 %v5328
      %6586 = vmatmul.mubr.bf16.gmra.mrb[0].mxu0 %v5327
      %v6587 = vpop.f32.mrb[0].mxu0
      %v6588 = vadd.f32 %v6395, %v6587
      %v6589 = vpop.f32.mrb[0].mxu0
      %v6590 = vadd.f32 %v6397, %v6589
      %v6591 = vpop.f32.mrb[0].mxu0
      %v6592 = vadd.f32 %v6399, %v6591
      %v6593 = vpop.f32.mrb[0].mxu0
      %v6594 = vadd.f32 %v6401, %v6593
      %6595 = vdwg.mxu0
      %6596 = vmatprep.subr.bf16.mxu0 %v5987
      %6597 = vmatpush1.bf16.msra.mxu0 %v5986
      %6598 = vmatprep.subr.bf16.mxu0 %v5989
      %6599 = vmatpush1.bf16.msra.mxu0 %v5988
      %6600 = vmatprep.subr.bf16.mxu0 %v5991
      %6601 = vmatpush1.bf16.msra.mxu0 %v5990
      %6602 = vmatprep.subr.bf16.mxu0 %v5993
      %6603 = vmatpush1.bf16.msra.mxu0 %v5992
      %6604 = vmatprep.subr.bf16.mxu0 %v5995
      %6605 = vmatpush1.bf16.msra.mxu0 %v5994
      %6606 = vmatprep.subr.bf16.mxu0 %v5997
      %6607 = vmatpush1.bf16.msra.mxu0 %v5996
      %6608 = vmatprep.subr.bf16.mxu0 %v5999
      %6609 = vmatpush1.bf16.msra.mxu0 %v5998
      %6610 = vmatprep.subr.bf16.mxu0 %v6001
      %6611 = vmatpush1.bf16.msra.mxu0 %v6000
      %6612 = vmatprep.subr.bf16.mxu0 %v6003
      %6613 = vmatpush1.bf16.msra.mxu0 %v6002
      %6614 = vmatprep.subr.bf16.mxu0 %v6005
      %6615 = vmatpush1.bf16.msra.mxu0 %v6004
      %6616 = vmatprep.subr.bf16.mxu0 %v6007
      %6617 = vmatpush1.bf16.msra.mxu0 %v6006
      %6618 = vmatprep.subr.bf16.mxu0 %v6009
      %6619 = vmatpush1.bf16.msra.mxu0 %v6008
      %6620 = vmatprep.subr.bf16.mxu0 %v6011
      %6621 = vmatpush1.bf16.msra.mxu0 %v6010
      %6622 = vmatprep.subr.bf16.mxu0 %v6013
      %6623 = vmatpush1.bf16.msra.mxu0 %v6012
      %6624 = vmatprep.subr.bf16.mxu0 %v6015
      %6625 = vmatpush1.bf16.msra.mxu0 %v6014
      %6626 = vmatprep.subr.bf16.mxu0 %v6017
      %6627 = vmatpush1.bf16.msra.mxu0 %v6016
      %6628 = vmatprep.mubr.bf16.mxu0 %v5195
      %6629 = vmatmul.mubr.bf16.gmra.mrb[0].mxu0 %v5194
      %v6630 = vpop.f32.mrb[0].mxu0
      %v6631 = vadd.f32 %v6438, %v6630
      %v6632 = vpop.f32.mrb[0].mxu0
      %v6633 = vadd.f32 %v6440, %v6632
      %v6634 = vpop.f32.mrb[0].mxu0
      %v6635 = vadd.f32 %v6442, %v6634
      %v6636 = vpop.f32.mrb[0].mxu0
      %v6637 = vadd.f32 %v6444, %v6636
      %6638 = vmatprep.mubr.bf16.mxu0 %v5204
      %6639 = vmatmul.mubr.bf16.gmra.mrb[0].mxu0 %v5203
      %v6640 = vpop.f32.mrb[0].mxu0
      %v6641 = vadd.f32 %v6448, %v6640
      %v6642 = vpop.f32.mrb[0].mxu0
      %v6643 = vadd.f32 %v6450, %v6642
      %v6644 = vpop.f32.mrb[0].mxu0
      %v6645 = vadd.f32 %v6452, %v6644
      %v6646 = vpop.f32.mrb[0].mxu0
      %v6647 = vadd.f32 %v6454, %v6646
      %6648 = vmatprep.mubr.bf16.mxu0 %v5213
      %6649 = vmatmul.mubr.bf16.gmra.mrb[0].mxu0 %v5212
      %v6650 = vpop.f32.mrb[0].mxu0
      %v6651 = vadd.f32 %v6458, %v6650
      %v6652 = vpop.f32.mrb[0].mxu0
      %v6653 = vadd.f32 %v6460, %v6652
      %v6654 = vpop.f32.mrb[0].mxu0
      %v6655 = vadd.f32 %v6462, %v6654
      %v6656 = vpop.f32.mrb[0].mxu0
      %v6657 = vadd.f32 %v6464, %v6656
      %6658 = vmatprep.mubr.bf16.mxu0 %v5222
      %6659 = vmatmul.mubr.bf16.gmra.mrb[0].mxu0 %v5221
      %v6660 = vpop.f32.mrb[0].mxu0
      %v6661 = vadd.f32 %v6468, %v6660
      %v6662 = vpop.f32.mrb[0].mxu0
      %v6663 = vadd.f32 %v6470, %v6662
      %v6664 = vpop.f32.mrb[0].mxu0
      %v6665 = vadd.f32 %v6472, %v6664
      %v6666 = vpop.f32.mrb[0].mxu0
      %v6667 = vadd.f32 %v6474, %v6666
      %6668 = vmatprep.mubr.bf16.mxu0 %v5231
      %6669 = vmatmul.mubr.bf16.gmra.mrb[0].mxu0 %v5230
      %v6670 = vpop.f32.mrb[0].mxu0
      %v6671 = vadd.f32 %v6478, %v6670
      %v6672 = vpop.f32.mrb[0].mxu0
      %v6673 = vadd.f32 %v6480, %v6672
      %v6674 = vpop.f32.mrb[0].mxu0
      %v6675 = vadd.f32 %v6482, %v6674
      %v6676 = vpop.f32.mrb[0].mxu0
      %v6677 = vadd.f32 %v6484, %v6676
      %6678 = vmatprep.mubr.bf16.mxu0 %v5240
      %6679 = vmatmul.mubr.bf16.gmra.mrb[0].mxu0 %v5239
      %v6680 = vpop.f32.mrb[0].mxu0
      %v6681 = vadd.f32 %v6488, %v6680
      %v6682 = vpop.f32.mrb[0].mxu0
      %v6683 = vadd.f32 %v6490, %v6682
      %v6684 = vpop.f32.mrb[0].mxu0
      %v6685 = vadd.f32 %v6492, %v6684
      %v6686 = vpop.f32.mrb[0].mxu0
      %v6687 = vadd.f32 %v6494, %v6686
      %6688 = vmatprep.mubr.bf16.mxu0 %v5249
      %6689 = vmatmul.mubr.bf16.gmra.mrb[0].mxu0 %v5248
      %v6690 = vpop.f32.mrb[0].mxu0
      %v6691 = vadd.f32 %v6498, %v6690
      %v6692 = vpop.f32.mrb[0].mxu0
      %v6693 = vadd.f32 %v6500, %v6692
      %v6694 = vpop.f32.mrb[0].mxu0
      %v6695 = vadd.f32 %v6502, %v6694
      %v6696 = vpop.f32.mrb[0].mxu0
      %v6697 = vadd.f32 %v6504, %v6696
      %6698 = vmatprep.mubr.bf16.mxu0 %v5258
      %6699 = vmatmul.mubr.bf16.gmra.mrb[0].mxu0 %v5257
      %v6700 = vpop.f32.mrb[0].mxu0
      %v6701 = vadd.f32 %v6508, %v6700
      %v6702 = vpop.f32.mrb[0].mxu0
      %v6703 = vadd.f32 %v6510, %v6702
      %v6704 = vpop.f32.mrb[0].mxu0
      %v6705 = vadd.f32 %v6512, %v6704
      %v6706 = vpop.f32.mrb[0].mxu0
      %v6707 = vadd.f32 %v6514, %v6706
      %6708 = vmatprep.mubr.bf16.mxu0 %v5267
      %6709 = vmatmul.mubr.bf16.gmra.mrb[0].mxu0 %v5266
      %v6710 = vpop.f32.mrb[0].mxu0
      %v6711 = vadd.f32 %v6518, %v6710
      %v6712 = vpop.f32.mrb[0].mxu0
      %v6713 = vadd.f32 %v6520, %v6712
      %v6714 = vpop.f32.mrb[0].mxu0
      %v6715 = vadd.f32 %v6522, %v6714
      %v6716 = vpop.f32.mrb[0].mxu0
      %v6717 = vadd.f32 %v6524, %v6716
      %6718 = vmatprep.mubr.bf16.mxu0 %v5276
      %6719 = vmatmul.mubr.bf16.gmra.mrb[0].mxu0 %v5275
      %v6720 = vpop.f32.mrb[0].mxu0
      %v6721 = vadd.f32 %v6528, %v6720
      %v6722 = vpop.f32.mrb[0].mxu0
      %v6723 = vadd.f32 %v6530, %v6722
      %v6724 = vpop.f32.mrb[0].mxu0
      %v6725 = vadd.f32 %v6532, %v6724
      %v6726 = vpop.f32.mrb[0].mxu0
      %v6727 = vadd.f32 %v6534, %v6726
      %6728 = vmatprep.mubr.bf16.mxu0 %v5285
      %6729 = vmatmul.mubr.bf16.gmra.mrb[0].mxu0 %v5284
      %v6730 = vpop.f32.mrb[0].mxu0
      %v6731 = vadd.f32 %v6538, %v6730
      %v6732 = vpop.f32.mrb[0].mxu0
      %v6733 = vadd.f32 %v6540, %v6732
      %v6734 = vpop.f32.mrb[0].mxu0
      %v6735 = vadd.f32 %v6542, %v6734
      %v6736 = vpop.f32.mrb[0].mxu0
      %v6737 = vadd.f32 %v6544, %v6736
      %6738 = vmatprep.mubr.bf16.mxu0 %v5294
      %6739 = vmatmul.mubr.bf16.gmra.mrb[0].mxu0 %v5293
      %v6740 = vpop.f32.mrb[0].mxu0
      %v6741 = vadd.f32 %v6548, %v6740
      %v6742 = vpop.f32.mrb[0].mxu0
      %v6743 = vadd.f32 %v6550, %v6742
      %v6744 = vpop.f32.mrb[0].mxu0
      %v6745 = vadd.f32 %v6552, %v6744
      %v6746 = vpop.f32.mrb[0].mxu0
      %v6747 = vadd.f32 %v6554, %v6746
      %6748 = vmatprep.mubr.bf16.mxu0 %v5303
      %6749 = vmatmul.mubr.bf16.gmra.mrb[0].mxu0 %v5302
      %v6750 = vpop.f32.mrb[0].mxu0
      %v6751 = vadd.f32 %v6558, %v6750
      %v6752 = vpop.f32.mrb[0].mxu0
      %v6753 = vadd.f32 %v6560, %v6752
      %v6754 = vpop.f32.mrb[0].mxu0
      %v6755 = vadd.f32 %v6562, %v6754
      %v6756 = vpop.f32.mrb[0].mxu0
      %v6757 = vadd.f32 %v6564, %v6756
      %6758 = vmatprep.mubr.bf16.mxu0 %v5312
      %6759 = vmatmul.mubr.bf16.gmra.mrb[0].mxu0 %v5311
      %v6760 = vpop.f32.mrb[0].mxu0
      %v6761 = vadd.f32 %v6568, %v6760
      %v6762 = vpop.f32.mrb[0].mxu0
      %v6763 = vadd.f32 %v6570, %v6762
      %v6764 = vpop.f32.mrb[0].mxu0
      %v6765 = vadd.f32 %v6572, %v6764
      %v6766 = vpop.f32.mrb[0].mxu0
      %v6767 = vadd.f32 %v6574, %v6766
      %6768 = vmatprep.mubr.bf16.mxu0 %v5321
      %6769 = vmatmul.mubr.bf16.gmra.mrb[0].mxu0 %v5320
      %v6770 = vpop.f32.mrb[0].mxu0
      %v6771 = vadd.f32 %v6578, %v6770
      %v6772 = vpop.f32.mrb[0].mxu0
      %v6773 = vadd.f32 %v6580, %v6772
      %v6774 = vpop.f32.mrb[0].mxu0
      %v6775 = vadd.f32 %v6582, %v6774
      %v6776 = vpop.f32.mrb[0].mxu0
      %v6777 = vadd.f32 %v6584, %v6776
      %6778 = vmatprep.mubr.bf16.mxu0 %v5330
      %6779 = vmatmul.mubr.bf16.gmra.mrb[0].mxu0 %v5329
      %v6780 = vpop.f32.mrb[0].mxu0
      %v6781 = vadd.f32 %v6588, %v6780
      %v6782 = vpop.f32.mrb[0].mxu0
      %v6783 = vadd.f32 %v6590, %v6782
      %v6784 = vpop.f32.mrb[0].mxu0
      %v6785 = vadd.f32 %v6592, %v6784
      %v6786 = vpop.f32.mrb[0].mxu0
      %v6787 = vadd.f32 %v6594, %v6786
      %6788 = vdwg.mxu0
      %6789 = vmatprep.subr.bf16.mxu0 %v6019
      %6790 = vmatpush1.bf16.msra.mxu0 %v6018
      %6791 = vmatprep.subr.bf16.mxu0 %v6021
      %6792 = vmatpush1.bf16.msra.mxu0 %v6020
      %6793 = vmatprep.subr.bf16.mxu0 %v6023
      %6794 = vmatpush1.bf16.msra.mxu0 %v6022
      %6795 = vmatprep.subr.bf16.mxu0 %v6025
      %6796 = vmatpush1.bf16.msra.mxu0 %v6024
      %6797 = vmatprep.subr.bf16.mxu0 %v6027
      %6798 = vmatpush1.bf16.msra.mxu0 %v6026
      %6799 = vmatprep.subr.bf16.mxu0 %v6029
      %6800 = vmatpush1.bf16.msra.mxu0 %v6028
      %6801 = vmatprep.subr.bf16.mxu0 %v6031
      %6802 = vmatpush1.bf16.msra.mxu0 %v6030
      %6803 = vmatprep.subr.bf16.mxu0 %v6033
      %6804 = vmatpush1.bf16.msra.mxu0 %v6032
      %6805 = vmatprep.subr.bf16.mxu0 %v6035
      %6806 = vmatpush1.bf16.msra.mxu0 %v6034
      %6807 = vmatprep.subr.bf16.mxu0 %v6037
      %6808 = vmatpush1.bf16.msra.mxu0 %v6036
      %6809 = vmatprep.subr.bf16.mxu0 %v6039
      %6810 = vmatpush1.bf16.msra.mxu0 %v6038
      %6811 = vmatprep.subr.bf16.mxu0 %v6041
      %6812 = vmatpush1.bf16.msra.mxu0 %v6040
      %6813 = vmatprep.subr.bf16.mxu0 %v6043
      %6814 = vmatpush1.bf16.msra.mxu0 %v6042
      %6815 = vmatprep.subr.bf16.mxu0 %v6045
      %6816 = vmatpush1.bf16.msra.mxu0 %v6044
      %6817 = vmatprep.subr.bf16.mxu0 %v6047
      %6818 = vmatpush1.bf16.msra.mxu0 %v6046
      %6819 = vmatprep.subr.bf16.mxu0 %v6049
      %6820 = vmatpush1.bf16.msra.mxu0 %v6048
      %6821 = vmatprep.mubr.bf16.mxu0 %v5197
      %6822 = vmatmul.mubr.bf16.gmra.mrb[0].mxu0 %v5196
      %v6823 = vpop.f32.mrb[0].mxu0
      %v6824 = vadd.f32 %v6631, %v6823
      %v6825 = vpop.f32.mrb[0].mxu0
      %v6826 = vadd.f32 %v6633, %v6825
      %v6827 = vpop.f32.mrb[0].mxu0
      %v6828 = vadd.f32 %v6635, %v6827
      %v6829 = vpop.f32.mrb[0].mxu0
      %v6830 = vadd.f32 %v6637, %v6829
      %6831 = vmatprep.mubr.bf16.mxu0 %v5206
      %6832 = vmatmul.mubr.bf16.gmra.mrb[0].mxu0 %v5205
      %v6833 = vpop.f32.mrb[0].mxu0
      %v6834 = vadd.f32 %v6641, %v6833
      %v6835 = vpop.f32.mrb[0].mxu0
      %v6836 = vadd.f32 %v6643, %v6835
      %v6837 = vpop.f32.mrb[0].mxu0
      %v6838 = vadd.f32 %v6645, %v6837
      %v6839 = vpop.f32.mrb[0].mxu0
      %v6840 = vadd.f32 %v6647, %v6839
      %6841 = vmatprep.mubr.bf16.mxu0 %v5215
      %6842 = vmatmul.mubr.bf16.gmra.mrb[0].mxu0 %v5214
      %v6843 = vpop.f32.mrb[0].mxu0
      %v6844 = vadd.f32 %v6651, %v6843
      %v6845 = vpop.f32.mrb[0].mxu0
      %v6846 = vadd.f32 %v6653, %v6845
      %v6847 = vpop.f32.mrb[0].mxu0
      %v6848 = vadd.f32 %v6655, %v6847
      %v6849 = vpop.f32.mrb[0].mxu0
      %v6850 = vadd.f32 %v6657, %v6849
      %6851 = vmatprep.mubr.bf16.mxu0 %v5224
      %6852 = vmatmul.mubr.bf16.gmra.mrb[0].mxu0 %v5223
      %v6853 = vpop.f32.mrb[0].mxu0
      %v6854 = vadd.f32 %v6661, %v6853
      %v6855 = vpop.f32.mrb[0].mxu0
      %v6856 = vadd.f32 %v6663, %v6855
      %v6857 = vpop.f32.mrb[0].mxu0
      %v6858 = vadd.f32 %v6665, %v6857
      %v6859 = vpop.f32.mrb[0].mxu0
      %v6860 = vadd.f32 %v6667, %v6859
      %6861 = vmatprep.mubr.bf16.mxu0 %v5233
      %6862 = vmatmul.mubr.bf16.gmra.mrb[0].mxu0 %v5232
      %v6863 = vpop.f32.mrb[0].mxu0
      %v6864 = vadd.f32 %v6671, %v6863
      %v6865 = vpop.f32.mrb[0].mxu0
      %v6866 = vadd.f32 %v6673, %v6865
      %v6867 = vpop.f32.mrb[0].mxu0
      %v6868 = vadd.f32 %v6675, %v6867
      %v6869 = vpop.f32.mrb[0].mxu0
      %v6870 = vadd.f32 %v6677, %v6869
      %6871 = vmatprep.mubr.bf16.mxu0 %v5242
      %6872 = vmatmul.mubr.bf16.gmra.mrb[0].mxu0 %v5241
      %v6873 = vpop.f32.mrb[0].mxu0
      %v6874 = vadd.f32 %v6681, %v6873
      %v6875 = vpop.f32.mrb[0].mxu0
      %v6876 = vadd.f32 %v6683, %v6875
      %v6877 = vpop.f32.mrb[0].mxu0
      %v6878 = vadd.f32 %v6685, %v6877
      %v6879 = vpop.f32.mrb[0].mxu0
      %v6880 = vadd.f32 %v6687, %v6879
      %6881 = vmatprep.mubr.bf16.mxu0 %v5251
      %6882 = vmatmul.mubr.bf16.gmra.mrb[0].mxu0 %v5250
      %v6883 = vpop.f32.mrb[0].mxu0
      %v6884 = vadd.f32 %v6691, %v6883
      %v6885 = vpop.f32.mrb[0].mxu0
      %v6886 = vadd.f32 %v6693, %v6885
      %v6887 = vpop.f32.mrb[0].mxu0
      %v6888 = vadd.f32 %v6695, %v6887
      %v6889 = vpop.f32.mrb[0].mxu0
      %v6890 = vadd.f32 %v6697, %v6889
      %6891 = vmatprep.mubr.bf16.mxu0 %v5260
      %6892 = vmatmul.mubr.bf16.gmra.mrb[0].mxu0 %v5259
      %v6893 = vpop.f32.mrb[0].mxu0
      %v6894 = vadd.f32 %v6701, %v6893
      %v6895 = vpop.f32.mrb[0].mxu0
      %v6896 = vadd.f32 %v6703, %v6895
      %v6897 = vpop.f32.mrb[0].mxu0
      %v6898 = vadd.f32 %v6705, %v6897
      %v6899 = vpop.f32.mrb[0].mxu0
      %v6900 = vadd.f32 %v6707, %v6899
      %6901 = vmatprep.mubr.bf16.mxu0 %v5269
      %6902 = vmatmul.mubr.bf16.gmra.mrb[0].mxu0 %v5268
      %v6903 = vpop.f32.mrb[0].mxu0
      %v6904 = vadd.f32 %v6711, %v6903
      %v6905 = vpop.f32.mrb[0].mxu0
      %v6906 = vadd.f32 %v6713, %v6905
      %v6907 = vpop.f32.mrb[0].mxu0
      %v6908 = vadd.f32 %v6715, %v6907
      %v6909 = vpop.f32.mrb[0].mxu0
      %v6910 = vadd.f32 %v6717, %v6909
      %6911 = vmatprep.mubr.bf16.mxu0 %v5278
      %6912 = vmatmul.mubr.bf16.gmra.mrb[0].mxu0 %v5277
      %v6913 = vpop.f32.mrb[0].mxu0
      %v6914 = vadd.f32 %v6721, %v6913
      %v6915 = vpop.f32.mrb[0].mxu0
      %v6916 = vadd.f32 %v6723, %v6915
      %v6917 = vpop.f32.mrb[0].mxu0
      %v6918 = vadd.f32 %v6725, %v6917
      %v6919 = vpop.f32.mrb[0].mxu0
      %v6920 = vadd.f32 %v6727, %v6919
      %6921 = vmatprep.mubr.bf16.mxu0 %v5287
      %6922 = vmatmul.mubr.bf16.gmra.mrb[0].mxu0 %v5286
      %v6923 = vpop.f32.mrb[0].mxu0
      %v6924 = vadd.f32 %v6731, %v6923
      %v6925 = vpop.f32.mrb[0].mxu0
      %v6926 = vadd.f32 %v6733, %v6925
      %v6927 = vpop.f32.mrb[0].mxu0
      %v6928 = vadd.f32 %v6735, %v6927
      %v6929 = vpop.f32.mrb[0].mxu0
      %v6930 = vadd.f32 %v6737, %v6929
      %6931 = vmatprep.mubr.bf16.mxu0 %v5296
      %6932 = vmatmul.mubr.bf16.gmra.mrb[0].mxu0 %v5295
      %v6933 = vpop.f32.mrb[0].mxu0
      %v6934 = vadd.f32 %v6741, %v6933
      %v6935 = vpop.f32.mrb[0].mxu0
      %v6936 = vadd.f32 %v6743, %v6935
      %v6937 = vpop.f32.mrb[0].mxu0
      %v6938 = vadd.f32 %v6745, %v6937
      %v6939 = vpop.f32.mrb[0].mxu0
      %v6940 = vadd.f32 %v6747, %v6939
      %6941 = vmatprep.mubr.bf16.mxu0 %v5305
      %6942 = vmatmul.mubr.bf16.gmra.mrb[0].mxu0 %v5304
      %v6943 = vpop.f32.mrb[0].mxu0
      %v6944 = vadd.f32 %v6751, %v6943
      %v6945 = vpop.f32.mrb[0].mxu0
      %v6946 = vadd.f32 %v6753, %v6945
      %v6947 = vpop.f32.mrb[0].mxu0
      %v6948 = vadd.f32 %v6755, %v6947
      %v6949 = vpop.f32.mrb[0].mxu0
      %v6950 = vadd.f32 %v6757, %v6949
      %6951 = vmatprep.mubr.bf16.mxu0 %v5314
      %6952 = vmatmul.mubr.bf16.gmra.mrb[0].mxu0 %v5313
      %v6953 = vpop.f32.mrb[0].mxu0
      %v6954 = vadd.f32 %v6761, %v6953
      %v6955 = vpop.f32.mrb[0].mxu0
      %v6956 = vadd.f32 %v6763, %v6955
      %v6957 = vpop.f32.mrb[0].mxu0
      %v6958 = vadd.f32 %v6765, %v6957
      %v6959 = vpop.f32.mrb[0].mxu0
      %v6960 = vadd.f32 %v6767, %v6959
      %6961 = vmatprep.mubr.bf16.mxu0 %v5323
      %6962 = vmatmul.mubr.bf16.gmra.mrb[0].mxu0 %v5322
      %v6963 = vpop.f32.mrb[0].mxu0
      %v6964 = vadd.f32 %v6771, %v6963
      %v6965 = vpop.f32.mrb[0].mxu0
      %v6966 = vadd.f32 %v6773, %v6965
      %v6967 = vpop.f32.mrb[0].mxu0
      %v6968 = vadd.f32 %v6775, %v6967
      %v6969 = vpop.f32.mrb[0].mxu0
      %v6970 = vadd.f32 %v6777, %v6969
      %6971 = vmatprep.mubr.bf16.mxu0 %v5332
      %6972 = vmatmul.mubr.bf16.gmra.mrb[0].mxu0 %v5331
      %v6973 = vpop.f32.mrb[0].mxu0
      %v6974 = vadd.f32 %v6781, %v6973
      %v6975 = vpop.f32.mrb[0].mxu0
      %v6976 = vadd.f32 %v6783, %v6975
      %v6977 = vpop.f32.mrb[0].mxu0
      %v6978 = vadd.f32 %v6785, %v6977
      %v6979 = vpop.f32.mrb[0].mxu0
      %v6980 = vadd.f32 %v6787, %v6979
      %6981 = vdwg.mxu0
      %6982 = vmatprep.subr.bf16.mxu0 %v6051
      %6983 = vmatpush1.bf16.msra.mxu0 %v6050
      %6984 = vmatprep.subr.bf16.mxu0 %v6053
      %6985 = vmatpush1.bf16.msra.mxu0 %v6052
      %6986 = vmatprep.subr.bf16.mxu0 %v6055
      %6987 = vmatpush1.bf16.msra.mxu0 %v6054
      %6988 = vmatprep.subr.bf16.mxu0 %v6057
      %6989 = vmatpush1.bf16.msra.mxu0 %v6056
      %6990 = vmatprep.subr.bf16.mxu0 %v6059
      %6991 = vmatpush1.bf16.msra.mxu0 %v6058
      %6992 = vmatprep.subr.bf16.mxu0 %v6061
      %6993 = vmatpush1.bf16.msra.mxu0 %v6060
      %6994 = vmatprep.subr.bf16.mxu0 %v6063
      %6995 = vmatpush1.bf16.msra.mxu0 %v6062
      %6996 = vmatprep.subr.bf16.mxu0 %v6065
      %6997 = vmatpush1.bf16.msra.mxu0 %v6064
      %6998 = vmatprep.subr.bf16.mxu0 0
      %6999 = vmatpush1.bf16.msra.mxu0 0
      %7000 = vmatprep.subr.bf16.mxu0 0
      %7001 = vmatpush1.bf16.msra.mxu0 0
      %7002 = vmatprep.subr.bf16.mxu0 0
      %7003 = vmatpush1.bf16.msra.mxu0 0
      %7004 = vmatprep.subr.bf16.mxu0 0
      %7005 = vmatpush1.bf16.msra.mxu0 0
      %7006 = vmatprep.subr.bf16.mxu0 0
      %7007 = vmatpush1.bf16.msra.mxu0 0
      %7008 = vmatprep.subr.bf16.mxu0 0
      %7009 = vmatpush1.bf16.msra.mxu0 0
      %7010 = vmatprep.subr.bf16.mxu0 0
      %7011 = vmatpush1.bf16.msra.mxu0 0
      %7012 = vmatprep.subr.bf16.mxu0 0
      %7013 = vmatpush1.bf16.msra.mxu0 0
      %7014 = vmatprep.mubr.bf16.mxu0 0
      %7015 = vmatmul.mubr.bf16.gmra.mrb[0].mxu0 %v5198
      %v7016 = vpop.f32.mrb[0].mxu0
      %v7017 = vadd.f32 %v6824, %v7016
      %v7018 = vpop.f32.mrb[0].mxu0
      %v7019 = vadd.f32 %v6826, %v7018
      %v7020 = vpop.f32.mrb[0].mxu0
      %v7021 = vadd.f32 %v6828, %v7020
      %v7022 = vpop.f32.mrb[0].mxu0
      %v7023 = vadd.f32 %v6830, %v7022
      %7024 = vmatprep.mubr.bf16.mxu0 0
      %7025 = vmatmul.mubr.bf16.gmra.mrb[0].mxu0 %v5207
      %v7026 = vpop.f32.mrb[0].mxu0
      %v7027 = vadd.f32 %v6834, %v7026
      %v7028 = vpop.f32.mrb[0].mxu0
      %v7029 = vadd.f32 %v6836, %v7028
      %v7030 = vpop.f32.mrb[0].mxu0
      %v7031 = vadd.f32 %v6838, %v7030
      %v7032 = vpop.f32.mrb[0].mxu0
      %v7033 = vadd.f32 %v6840, %v7032
      %7034 = vmatprep.mubr.bf16.mxu0 0
      %7035 = vmatmul.mubr.bf16.gmra.mrb[0].mxu0 %v5216
      %v7036 = vpop.f32.mrb[0].mxu0
      %v7037 = vadd.f32 %v6844, %v7036
      %v7038 = vpop.f32.mrb[0].mxu0
      %v7039 = vadd.f32 %v6846, %v7038
      %v7040 = vpop.f32.mrb[0].mxu0
      %v7041 = vadd.f32 %v6848, %v7040
      %v7042 = vpop.f32.mrb[0].mxu0
      %v7043 = vadd.f32 %v6850, %v7042
      %7044 = vmatprep.mubr.bf16.mxu0 0
      %7045 = vmatmul.mubr.bf16.gmra.mrb[0].mxu0 %v5225
      %v7046 = vpop.f32.mrb[0].mxu0
      %v7047 = vadd.f32 %v6854, %v7046
      %v7048 = vpop.f32.mrb[0].mxu0
      %v7049 = vadd.f32 %v6856, %v7048
      %v7050 = vpop.f32.mrb[0].mxu0
      %v7051 = vadd.f32 %v6858, %v7050
      %v7052 = vpop.f32.mrb[0].mxu0
      %v7053 = vadd.f32 %v6860, %v7052
      %7054 = vmatprep.mubr.bf16.mxu0 0
      %7055 = vmatmul.mubr.bf16.gmra.mrb[0].mxu0 %v5234
      %v7056 = vpop.f32.mrb[0].mxu0
      %v7057 = vadd.f32 %v6864, %v7056
      %v7058 = vpop.f32.mrb[0].mxu0
      %v7059 = vadd.f32 %v6866, %v7058
      %v7060 = vpop.f32.mrb[0].mxu0
      %v7061 = vadd.f32 %v6868, %v7060
      %v7062 = vpop.f32.mrb[0].mxu0
      %v7063 = vadd.f32 %v6870, %v7062
      %7064 = vmatprep.mubr.bf16.mxu0 0
      %7065 = vmatmul.mubr.bf16.gmra.mrb[0].mxu0 %v5243
      %v7066 = vpop.f32.mrb[0].mxu0
      %v7067 = vadd.f32 %v6874, %v7066
      %v7068 = vpop.f32.mrb[0].mxu0
      %v7069 = vadd.f32 %v6876, %v7068
      %v7070 = vpop.f32.mrb[0].mxu0
      %v7071 = vadd.f32 %v6878, %v7070
      %v7072 = vpop.f32.mrb[0].mxu0
      %v7073 = vadd.f32 %v6880, %v7072
      %7074 = vmatprep.mubr.bf16.mxu0 0
      %7075 = vmatmul.mubr.bf16.gmra.mrb[0].mxu0 %v5252
      %v7076 = vpop.f32.mrb[0].mxu0
      %v7077 = vadd.f32 %v6884, %v7076
      %v7078 = vpop.f32.mrb[0].mxu0
      %v7079 = vadd.f32 %v6886, %v7078
      %v7080 = vpop.f32.mrb[0].mxu0
      %v7081 = vadd.f32 %v6888, %v7080
      %v7082 = vpop.f32.mrb[0].mxu0
      %v7083 = vadd.f32 %v6890, %v7082
      %7084 = vmatprep.mubr.bf16.mxu0 0
      %7085 = vmatmul.mubr.bf16.gmra.mrb[0].mxu0 %v5261
      %v7086 = vpop.f32.mrb[0].mxu0
      %v7087 = vadd.f32 %v6894, %v7086
      %v7088 = vpop.f32.mrb[0].mxu0
      %v7089 = vadd.f32 %v6896, %v7088
      %v7090 = vpop.f32.mrb[0].mxu0
      %v7091 = vadd.f32 %v6898, %v7090
      %v7092 = vpop.f32.mrb[0].mxu0
      %v7093 = vadd.f32 %v6900, %v7092
      %7094 = vmatprep.mubr.bf16.mxu0 0
      %7095 = vmatmul.mubr.bf16.gmra.mrb[0].mxu0 %v5270
      %v7096 = vpop.f32.mrb[0].mxu0
      %v7097 = vadd.f32 %v6904, %v7096
      %v7098 = vpop.f32.mrb[0].mxu0
      %v7099 = vadd.f32 %v6906, %v7098
      %v7100 = vpop.f32.mrb[0].mxu0
      %v7101 = vadd.f32 %v6908, %v7100
      %v7102 = vpop.f32.mrb[0].mxu0
      %v7103 = vadd.f32 %v6910, %v7102
      %7104 = vmatprep.mubr.bf16.mxu0 0
      %7105 = vmatmul.mubr.bf16.gmra.mrb[0].mxu0 %v5279
      %v7106 = vpop.f32.mrb[0].mxu0
      %v7107 = vadd.f32 %v6914, %v7106
      %v7108 = vpop.f32.mrb[0].mxu0
      %v7109 = vadd.f32 %v6916, %v7108
      %v7110 = vpop.f32.mrb[0].mxu0
      %v7111 = vadd.f32 %v6918, %v7110
      %v7112 = vpop.f32.mrb[0].mxu0
      %v7113 = vadd.f32 %v6920, %v7112
      %7114 = vmatprep.mubr.bf16.mxu0 0
      %7115 = vmatmul.mubr.bf16.gmra.mrb[0].mxu0 %v5288
      %v7116 = vpop.f32.mrb[0].mxu0
      %v7117 = vadd.f32 %v6924, %v7116
      %v7118 = vpop.f32.mrb[0].mxu0
      %v7119 = vadd.f32 %v6926, %v7118
      %v7120 = vpop.f32.mrb[0].mxu0
      %v7121 = vadd.f32 %v6928, %v7120
      %v7122 = vpop.f32.mrb[0].mxu0
      %v7123 = vadd.f32 %v6930, %v7122
      %7124 = vmatprep.mubr.bf16.mxu0 0
      %7125 = vmatmul.mubr.bf16.gmra.mrb[0].mxu0 %v5297
      %v7126 = vpop.f32.mrb[0].mxu0
      %v7127 = vadd.f32 %v6934, %v7126
      %v7128 = vpop.f32.mrb[0].mxu0
      %v7129 = vadd.f32 %v6936, %v7128
      %v7130 = vpop.f32.mrb[0].mxu0
      %v7131 = vadd.f32 %v6938, %v7130
      %v7132 = vpop.f32.mrb[0].mxu0
      %v7133 = vadd.f32 %v6940, %v7132
      %7134 = vmatprep.mubr.bf16.mxu0 0
      %7135 = vmatmul.mubr.bf16.gmra.mrb[0].mxu0 %v5306
      %v7136 = vpop.f32.mrb[0].mxu0
      %v7137 = vadd.f32 %v6944, %v7136
      %v7138 = vpop.f32.mrb[0].mxu0
      %v7139 = vadd.f32 %v6946, %v7138
      %v7140 = vpop.f32.mrb[0].mxu0
      %v7141 = vadd.f32 %v6948, %v7140
      %v7142 = vpop.f32.mrb[0].mxu0
      %v7143 = vadd.f32 %v6950, %v7142
      %7144 = vmatprep.mubr.bf16.mxu0 0
      %7145 = vmatmul.mubr.bf16.gmra.mrb[0].mxu0 %v5315
      %v7146 = vpop.f32.mrb[0].mxu0
      %v7147 = vadd.f32 %v6954, %v7146
      %v7148 = vpop.f32.mrb[0].mxu0
      %v7149 = vadd.f32 %v6956, %v7148
      %v7150 = vpop.f32.mrb[0].mxu0
      %v7151 = vadd.f32 %v6958, %v7150
      %v7152 = vpop.f32.mrb[0].mxu0
      %v7153 = vadd.f32 %v6960, %v7152
      %7154 = vmatprep.mubr.bf16.mxu0 0
      %7155 = vmatmul.mubr.bf16.gmra.mrb[0].mxu0 %v5324
      %v7156 = vpop.f32.mrb[0].mxu0
      %v7157 = vadd.f32 %v6964, %v7156
      %v7158 = vpop.f32.mrb[0].mxu0
      %v7159 = vadd.f32 %v6966, %v7158
      %v7160 = vpop.f32.mrb[0].mxu0
      %v7161 = vadd.f32 %v6968, %v7160
      %v7162 = vpop.f32.mrb[0].mxu0
      %v7163 = vadd.f32 %v6970, %v7162
      %7164 = vmatprep.mubr.bf16.mxu0 0
      %7165 = vmatmul.mubr.bf16.gmra.mrb[0].mxu0 %v5333
      %v7166 = vpop.f32.mrb[0].mxu0
      %v7167 = vadd.f32 %v6974, %v7166
      %v7168 = vpop.f32.mrb[0].mxu0
      %v7169 = vadd.f32 %v6976, %v7168
      %v7170 = vpop.f32.mrb[0].mxu0
      %v7171 = vadd.f32 %v6978, %v7170
      %v7172 = vpop.f32.mrb[0].mxu0
      %v7173 = vadd.f32 %v6980, %v7172
      %7174 = vdwg.mxu0
      %vm7175 = vcmp.ge.f32.partialorder %v7017, 0.0
      %vm7176 = vcmp.ge.f32.partialorder %v7019, 0.0
      %vm7177 = vcmp.ge.f32.partialorder %v7021, 0.0
      %vm7178 = vcmp.ge.f32.partialorder %v7023, 0.0
      %vm7179 = vcmp.ge.f32.partialorder %v7027, 0.0
      %vm7180 = vcmp.ge.f32.partialorder %v7029, 0.0
      %vm7181 = vcmp.ge.f32.partialorder %v7031, 0.0
      %vm7182 = vcmp.ge.f32.partialorder %v7033, 0.0
      %vm7183 = vcmp.ge.f32.partialorder %v7037, 0.0
      %vm7184 = vcmp.ge.f32.partialorder %v7039, 0.0
      %vm7185 = vcmp.ge.f32.partialorder %v7041, 0.0
      %vm7186 = vcmp.ge.f32.partialorder %v7043, 0.0
      %vm7187 = vcmp.ge.f32.partialorder %v7047, 0.0
      %vm7188 = vcmp.ge.f32.partialorder %v7049, 0.0
      %vm7189 = vcmp.ge.f32.partialorder %v7051, 0.0
      %vm7190 = vcmp.ge.f32.partialorder %v7053, 0.0
      %vm7191 = vcmp.ge.f32.partialorder %v7057, 0.0
      %vm7192 = vcmp.ge.f32.partialorder %v7059, 0.0
      %vm7193 = vcmp.ge.f32.partialorder %v7061, 0.0
      %vm7194 = vcmp.ge.f32.partialorder %v7063, 0.0
      %vm7195 = vcmp.ge.f32.partialorder %v7067, 0.0
      %vm7196 = vcmp.ge.f32.partialorder %v7069, 0.0
      %vm7197 = vcmp.ge.f32.partialorder %v7071, 0.0
      %vm7198 = vcmp.ge.f32.partialorder %v7073, 0.0
      %vm7199 = vcmp.ge.f32.partialorder %v7077, 0.0
      %vm7200 = vcmp.ge.f32.partialorder %v7079, 0.0
      %vm7201 = vcmp.ge.f32.partialorder %v7081, 0.0
      %vm7202 = vcmp.ge.f32.partialorder %v7083, 0.0
      %vm7203 = vcmp.ge.f32.partialorder %v7087, 0.0
      %vm7204 = vcmp.ge.f32.partialorder %v7089, 0.0
      %vm7205 = vcmp.ge.f32.partialorder %v7091, 0.0
      %vm7206 = vcmp.ge.f32.partialorder %v7093, 0.0
      %vm7207 = vcmp.ge.f32.partialorder %v7097, 0.0
      %vm7208 = vcmp.ge.f32.partialorder %v7099, 0.0
      %vm7209 = vcmp.ge.f32.partialorder %v7101, 0.0
      %vm7210 = vcmp.ge.f32.partialorder %v7103, 0.0
      %vm7211 = vcmp.ge.f32.partialorder %v7107, 0.0
      %vm7212 = vcmp.ge.f32.partialorder %v7109, 0.0
      %vm7213 = vcmp.ge.f32.partialorder %v7111, 0.0
      %vm7214 = vcmp.ge.f32.partialorder %v7113, 0.0
      %vm7215 = vcmp.ge.f32.partialorder %v7117, 0.0
      %vm7216 = vcmp.ge.f32.partialorder %v7119, 0.0
      %vm7217 = vcmp.ge.f32.partialorder %v7121, 0.0
      %vm7218 = vcmp.ge.f32.partialorder %v7123, 0.0
      %vm7219 = vcmp.ge.f32.partialorder %v7127, 0.0
      %vm7220 = vcmp.ge.f32.partialorder %v7129, 0.0
      %vm7221 = vcmp.ge.f32.partialorder %v7131, 0.0
      %vm7222 = vcmp.ge.f32.partialorder %v7133, 0.0
      %vm7223 = vcmp.ge.f32.partialorder %v7137, 0.0
      %vm7224 = vcmp.ge.f32.partialorder %v7139, 0.0
      %vm7225 = vcmp.ge.f32.partialorder %v7141, 0.0
      %vm7226 = vcmp.ge.f32.partialorder %v7143, 0.0
      %vm7227 = vcmp.ge.f32.partialorder %v7147, 0.0
      %vm7228 = vcmp.ge.f32.partialorder %v7149, 0.0
      %vm7229 = vcmp.ge.f32.partialorder %v7151, 0.0
      %vm7230 = vcmp.ge.f32.partialorder %v7153, 0.0
      %vm7231 = vcmp.ge.f32.partialorder %v7157, 0.0
      %vm7232 = vcmp.ge.f32.partialorder %v7159, 0.0
      %vm7233 = vcmp.ge.f32.partialorder %v7161, 0.0
      %vm7234 = vcmp.ge.f32.partialorder %v7163, 0.0
      %vm7235 = vcmp.ge.f32.partialorder %v7167, 0.0
      %vm7236 = vcmp.ge.f32.partialorder %v7169, 0.0
      %vm7237 = vcmp.ge.f32.partialorder %v7171, 0.0
      %vm7238 = vcmp.ge.f32.partialorder %v7173, 0.0
      %v7239 = vmul.f32 %v7017, 0.01
      %v7240 = vmul.f32 %v7019, 0.01
      %v7241 = vmul.f32 %v7021, 0.01
      %v7242 = vmul.f32 %v7023, 0.01
      %v7243 = vmul.f32 %v7027, 0.01
      %v7244 = vmul.f32 %v7029, 0.01
      %v7245 = vmul.f32 %v7031, 0.01
      %v7246 = vmul.f32 %v7033, 0.01
      %v7247 = vmul.f32 %v7037, 0.01
      %v7248 = vmul.f32 %v7039, 0.01
      %v7249 = vmul.f32 %v7041, 0.01
      %v7250 = vmul.f32 %v7043, 0.01
      %v7251 = vmul.f32 %v7047, 0.01
      %v7252 = vmul.f32 %v7049, 0.01
      %v7253 = vmul.f32 %v7051, 0.01
      %v7254 = vmul.f32 %v7053, 0.01
      %v7255 = vmul.f32 %v7057, 0.01
      %v7256 = vmul.f32 %v7059, 0.01
      %v7257 = vmul.f32 %v7061, 0.01
      %v7258 = vmul.f32 %v7063, 0.01
      %v7259 = vmul.f32 %v7067, 0.01
      %v7260 = vmul.f32 %v7069, 0.01
      %v7261 = vmul.f32 %v7071, 0.01
      %v7262 = vmul.f32 %v7073, 0.01
      %v7263 = vmul.f32 %v7077, 0.01
      %v7264 = vmul.f32 %v7079, 0.01
      %v7265 = vmul.f32 %v7081, 0.01
      %v7266 = vmul.f32 %v7083, 0.01
      %v7267 = vmul.f32 %v7087, 0.01
      %v7268 = vmul.f32 %v7089, 0.01
      %v7269 = vmul.f32 %v7091, 0.01
      %v7270 = vmul.f32 %v7093, 0.01
      %v7271 = vmul.f32 %v7097, 0.01
      %v7272 = vmul.f32 %v7099, 0.01
      %v7273 = vmul.f32 %v7101, 0.01
      %v7274 = vmul.f32 %v7103, 0.01
      %v7275 = vmul.f32 %v7107, 0.01
      %v7276 = vmul.f32 %v7109, 0.01
      %v7277 = vmul.f32 %v7111, 0.01
      %v7278 = vmul.f32 %v7113, 0.01
      %v7279 = vmul.f32 %v7117, 0.01
      %v7280 = vmul.f32 %v7119, 0.01
      %v7281 = vmul.f32 %v7121, 0.01
      %v7282 = vmul.f32 %v7123, 0.01
      %v7283 = vmul.f32 %v7127, 0.01
      %v7284 = vmul.f32 %v7129, 0.01
      %v7285 = vmul.f32 %v7131, 0.01
      %v7286 = vmul.f32 %v7133, 0.01
      %v7287 = vmul.f32 %v7137, 0.01
      %v7288 = vmul.f32 %v7139, 0.01
      %v7289 = vmul.f32 %v7141, 0.01
      %v7290 = vmul.f32 %v7143, 0.01
      %v7291 = vmul.f32 %v7147, 0.01
      %v7292 = vmul.f32 %v7149, 0.01
      %v7293 = vmul.f32 %v7151, 0.01
      %v7294 = vmul.f32 %v7153, 0.01
      %v7295 = vmul.f32 %v7157, 0.01
      %v7296 = vmul.f32 %v7159, 0.01
      %v7297 = vmul.f32 %v7161, 0.01
      %v7298 = vmul.f32 %v7163, 0.01
      %v7299 = vmul.f32 %v7167, 0.01
      %v7300 = vmul.f32 %v7169, 0.01
      %v7301 = vmul.f32 %v7171, 0.01
      %v7302 = vmul.f32 %v7173, 0.01
      %v7303 = vsel %vm7175, %v7017, %v7239
      %v7304 = vsel %vm7176, %v7019, %v7240
      %v7305 = vsel %vm7177, %v7021, %v7241
      %v7306 = vsel %vm7178, %v7023, %v7242
      %v7307 = vsel %vm7179, %v7027, %v7243
      %v7308 = vsel %vm7180, %v7029, %v7244
      %v7309 = vsel %vm7181, %v7031, %v7245
      %v7310 = vsel %vm7182, %v7033, %v7246
      %v7311 = vsel %vm7183, %v7037, %v7247
      %v7312 = vsel %vm7184, %v7039, %v7248
      %v7313 = vsel %vm7185, %v7041, %v7249
      %v7314 = vsel %vm7186, %v7043, %v7250
      %v7315 = vsel %vm7187, %v7047, %v7251
      %v7316 = vsel %vm7188, %v7049, %v7252
      %v7317 = vsel %vm7189, %v7051, %v7253
      %v7318 = vsel %vm7190, %v7053, %v7254
      %v7319 = vsel %vm7191, %v7057, %v7255
      %v7320 = vsel %vm7192, %v7059, %v7256
      %v7321 = vsel %vm7193, %v7061, %v7257
      %v7322 = vsel %vm7194, %v7063, %v7258
      %v7323 = vsel %vm7195, %v7067, %v7259
      %v7324 = vsel %vm7196, %v7069, %v7260
      %v7325 = vsel %vm7197, %v7071, %v7261
      %v7326 = vsel %vm7198, %v7073, %v7262
      %v7327 = vsel %vm7199, %v7077, %v7263
      %v7328 = vsel %vm7200, %v7079, %v7264
      %v7329 = vsel %vm7201, %v7081, %v7265
      %v7330 = vsel %vm7202, %v7083, %v7266
      %v7331 = vsel %vm7203, %v7087, %v7267
      %v7332 = vsel %vm7204, %v7089, %v7268
      %v7333 = vsel %vm7205, %v7091, %v7269
      %v7334 = vsel %vm7206, %v7093, %v7270
      %v7335 = vsel %vm7207, %v7097, %v7271
      %v7336 = vsel %vm7208, %v7099, %v7272
      %v7337 = vsel %vm7209, %v7101, %v7273
      %v7338 = vsel %vm7210, %v7103, %v7274
      %v7339 = vsel %vm7211, %v7107, %v7275
      %v7340 = vsel %vm7212, %v7109, %v7276
      %v7341 = vsel %vm7213, %v7111, %v7277
      %v7342 = vsel %vm7214, %v7113, %v7278
      %v7343 = vsel %vm7215, %v7117, %v7279
      %v7344 = vsel %vm7216, %v7119, %v7280
      %v7345 = vsel %vm7217, %v7121, %v7281
      %v7346 = vsel %vm7218, %v7123, %v7282
      %v7347 = vsel %vm7219, %v7127, %v7283
      %v7348 = vsel %vm7220, %v7129, %v7284
      %v7349 = vsel %vm7221, %v7131, %v7285
      %v7350 = vsel %vm7222, %v7133, %v7286
      %v7351 = vsel %vm7223, %v7137, %v7287
      %v7352 = vsel %vm7224, %v7139, %v7288
      %v7353 = vsel %vm7225, %v7141, %v7289
      %v7354 = vsel %vm7226, %v7143, %v7290
      %v7355 = vsel %vm7227, %v7147, %v7291
      %v7356 = vsel %vm7228, %v7149, %v7292
      %v7357 = vsel %vm7229, %v7151, %v7293
      %v7358 = vsel %vm7230, %v7153, %v7294
      %v7359 = vsel %vm7231, %v7157, %v7295
      %v7360 = vsel %vm7232, %v7159, %v7296
      %v7361 = vsel %vm7233, %v7161, %v7297
      %v7362 = vsel %vm7234, %v7163, %v7298
      %v7363 = vsel %vm7235, %v7167, %v7299
      %v7364 = vsel %vm7236, %v7169, %v7300
      %v7365 = vsel %vm7237, %v7171, %v7301
      %v7366 = vsel %vm7238, %v7173, %v7302
      %v7367 = vld [vmem:[%s7] sm:$0x3]
      %v7369 = vlaneseq
      %v7370 = vshrl.u32 %v7369, 7
      %v7371 = vsub.s32 0, %v7370
      %v7372 = vrot.slane %v7367, %v7371
      %v7373 = vlaneseq
      %v7374 = vshrl.u32 %v7373, 7
      %v7375 = vsub.s32 1, %v7374
      %v7376 = vrot.slane %v7367, %v7375
      %v7379 = vmul.f32 %v7303, %v7372
      %v7380 = vmul.f32 %v7304, %v7376
      %v7381 = vmul.f32 %v7305, %v7372
      %v7382 = vmul.f32 %v7306, %v7376
      %v7383 = vmul.f32 %v7307, %v7372
      %v7384 = vmul.f32 %v7308, %v7376
      %v7385 = vmul.f32 %v7309, %v7372
      %v7386 = vmul.f32 %v7310, %v7376
      %v7387 = vmul.f32 %v7311, %v7372
      %v7388 = vmul.f32 %v7312, %v7376
      %v7389 = vmul.f32 %v7313, %v7372
      %v7390 = vmul.f32 %v7314, %v7376
      %v7391 = vmul.f32 %v7315, %v7372
      %v7392 = vmul.f32 %v7316, %v7376
      %v7393 = vmul.f32 %v7317, %v7372
      %v7394 = vmul.f32 %v7318, %v7376
      %v7395 = vmul.f32 %v7319, %v7372
      %v7396 = vmul.f32 %v7320, %v7376
      %v7397 = vmul.f32 %v7321, %v7372
      %v7398 = vmul.f32 %v7322, %v7376
      %v7399 = vmul.f32 %v7323, %v7372
      %v7400 = vmul.f32 %v7324, %v7376
      %v7401 = vmul.f32 %v7325, %v7372
      %v7402 = vmul.f32 %v7326, %v7376
      %v7403 = vmul.f32 %v7327, %v7372
      %v7404 = vmul.f32 %v7328, %v7376
      %v7405 = vmul.f32 %v7329, %v7372
      %v7406 = vmul.f32 %v7330, %v7376
      %v7407 = vmul.f32 %v7331, %v7372
      %v7408 = vmul.f32 %v7332, %v7376
      %v7409 = vmul.f32 %v7333, %v7372
      %v7410 = vmul.f32 %v7334, %v7376
      %v7411 = vmul.f32 %v7335, %v7372
      %v7412 = vmul.f32 %v7336, %v7376
      %v7413 = vmul.f32 %v7337, %v7372
      %v7414 = vmul.f32 %v7338, %v7376
      %v7415 = vmul.f32 %v7339, %v7372
      %v7416 = vmul.f32 %v7340, %v7376
      %v7417 = vmul.f32 %v7341, %v7372
      %v7418 = vmul.f32 %v7342, %v7376
      %v7419 = vmul.f32 %v7343, %v7372
      %v7420 = vmul.f32 %v7344, %v7376
      %v7421 = vmul.f32 %v7345, %v7372
      %v7422 = vmul.f32 %v7346, %v7376
      %v7423 = vmul.f32 %v7347, %v7372
      %v7424 = vmul.f32 %v7348, %v7376
      %v7425 = vmul.f32 %v7349, %v7372
      %v7426 = vmul.f32 %v7350, %v7376
      %v7427 = vmul.f32 %v7351, %v7372
      %v7428 = vmul.f32 %v7352, %v7376
      %v7429 = vmul.f32 %v7353, %v7372
      %v7430 = vmul.f32 %v7354, %v7376
      %v7431 = vmul.f32 %v7355, %v7372
      %v7432 = vmul.f32 %v7356, %v7376
      %v7433 = vmul.f32 %v7357, %v7372
      %v7434 = vmul.f32 %v7358, %v7376
      %v7435 = vmul.f32 %v7359, %v7372
      %v7436 = vmul.f32 %v7360, %v7376
      %v7437 = vmul.f32 %v7361, %v7372
      %v7438 = vmul.f32 %v7362, %v7376
      %v7439 = vmul.f32 %v7363, %v7372
      %v7440 = vmul.f32 %v7364, %v7376
      %v7441 = vmul.f32 %v7365, %v7372
      %v7442 = vmul.f32 %v7366, %v7376
      %v7443 = vld [vmem:[%s8] sm:$0x3]
      %v7445 = vlaneseq
      %v7446 = vshrl.u32 %v7445, 7
      %v7447 = vsub.s32 0, %v7446
      %v7448 = vrot.slane %v7443, %v7447
      %v7449 = vlaneseq
      %v7450 = vshrl.u32 %v7449, 7
      %v7451 = vsub.s32 1, %v7450
      %v7452 = vrot.slane %v7443, %v7451
      %v7455 = vadd.f32 %v7379, %v7448
      %v7456 = vadd.f32 %v7380, %v7452
      %v7457 = vadd.f32 %v7381, %v7448
      %v7458 = vadd.f32 %v7382, %v7452
      %v7459 = vadd.f32 %v7383, %v7448
      %v7460 = vadd.f32 %v7384, %v7452
      %v7461 = vadd.f32 %v7385, %v7448
      %v7462 = vadd.f32 %v7386, %v7452
      %v7463 = vadd.f32 %v7387, %v7448
      %v7464 = vadd.f32 %v7388, %v7452
      %v7465 = vadd.f32 %v7389, %v7448
      %v7466 = vadd.f32 %v7390, %v7452
      %v7467 = vadd.f32 %v7391, %v7448
      %v7468 = vadd.f32 %v7392, %v7452
      %v7469 = vadd.f32 %v7393, %v7448
      %v7470 = vadd.f32 %v7394, %v7452
      %v7471 = vadd.f32 %v7395, %v7448
      %v7472 = vadd.f32 %v7396, %v7452
      %v7473 = vadd.f32 %v7397, %v7448
      %v7474 = vadd.f32 %v7398, %v7452
      %v7475 = vadd.f32 %v7399, %v7448
      %v7476 = vadd.f32 %v7400, %v7452
      %v7477 = vadd.f32 %v7401, %v7448
      %v7478 = vadd.f32 %v7402, %v7452
      %v7479 = vadd.f32 %v7403, %v7448
      %v7480 = vadd.f32 %v7404, %v7452
      %v7481 = vadd.f32 %v7405, %v7448
      %v7482 = vadd.f32 %v7406, %v7452
      %v7483 = vadd.f32 %v7407, %v7448
      %v7484 = vadd.f32 %v7408, %v7452
      %v7485 = vadd.f32 %v7409, %v7448
      %v7486 = vadd.f32 %v7410, %v7452
      %v7487 = vadd.f32 %v7411, %v7448
      %v7488 = vadd.f32 %v7412, %v7452
      %v7489 = vadd.f32 %v7413, %v7448
      %v7490 = vadd.f32 %v7414, %v7452
      %v7491 = vadd.f32 %v7415, %v7448
      %v7492 = vadd.f32 %v7416, %v7452
      %v7493 = vadd.f32 %v7417, %v7448
      %v7494 = vadd.f32 %v7418, %v7452
      %v7495 = vadd.f32 %v7419, %v7448
      %v7496 = vadd.f32 %v7420, %v7452
      %v7497 = vadd.f32 %v7421, %v7448
      %v7498 = vadd.f32 %v7422, %v7452
      %v7499 = vadd.f32 %v7423, %v7448
      %v7500 = vadd.f32 %v7424, %v7452
      %v7501 = vadd.f32 %v7425, %v7448
      %v7502 = vadd.f32 %v7426, %v7452
      %v7503 = vadd.f32 %v7427, %v7448
      %v7504 = vadd.f32 %v7428, %v7452
      %v7505 = vadd.f32 %v7429, %v7448
      %v7506 = vadd.f32 %v7430, %v7452
      %v7507 = vadd.f32 %v7431, %v7448
      %v7508 = vadd.f32 %v7432, %v7452
      %v7509 = vadd.f32 %v7433, %v7448
      %v7510 = vadd.f32 %v7434, %v7452
      %v7511 = vadd.f32 %v7435, %v7448
      %v7512 = vadd.f32 %v7436, %v7452
      %v7513 = vadd.f32 %v7437, %v7448
      %v7514 = vadd.f32 %v7438, %v7452
      %v7515 = vadd.f32 %v7439, %v7448
      %v7516 = vadd.f32 %v7440, %v7452
      %v7517 = vadd.f32 %v7441, %v7448
      %v7518 = vadd.f32 %v7442, %v7452
      %v7519 = vpack.c.bf16 %v7457, %v7455
      %v7520 = vpack.c.bf16 %v7458, %v7456
      %v7521 = vpack.c.bf16 %v7461, %v7459
      %v7522 = vpack.c.bf16 %v7462, %v7460
      %v7523 = vpack.c.bf16 %v7465, %v7463
      %v7524 = vpack.c.bf16 %v7466, %v7464
      %v7525 = vpack.c.bf16 %v7469, %v7467
      %v7526 = vpack.c.bf16 %v7470, %v7468
      %v7527 = vpack.c.bf16 %v7473, %v7471
      %v7528 = vpack.c.bf16 %v7474, %v7472
      %v7529 = vpack.c.bf16 %v7477, %v7475
      %v7530 = vpack.c.bf16 %v7478, %v7476
      %v7531 = vpack.c.bf16 %v7481, %v7479
      %v7532 = vpack.c.bf16 %v7482, %v7480
      %v7533 = vpack.c.bf16 %v7485, %v7483
      %v7534 = vpack.c.bf16 %v7486, %v7484
      %v7535 = vpack.c.bf16 %v7489, %v7487
      %v7536 = vpack.c.bf16 %v7490, %v7488
      %v7537 = vpack.c.bf16 %v7493, %v7491
      %v7538 = vpack.c.bf16 %v7494, %v7492
      %v7539 = vpack.c.bf16 %v7497, %v7495
      %v7540 = vpack.c.bf16 %v7498, %v7496
      %v7541 = vpack.c.bf16 %v7501, %v7499
      %v7542 = vpack.c.bf16 %v7502, %v7500
      %v7543 = vpack.c.bf16 %v7505, %v7503
      %v7544 = vpack.c.bf16 %v7506, %v7504
      %v7545 = vpack.c.bf16 %v7509, %v7507
      %v7546 = vpack.c.bf16 %v7510, %v7508
      %v7547 = vpack.c.bf16 %v7513, %v7511
      %v7548 = vpack.c.bf16 %v7514, %v7512
      %v7549 = vpack.c.bf16 %v7517, %v7515
      %v7550 = vpack.c.bf16 %v7518, %v7516
      %7551 = vst [vmem:[#allocation5] sm:$0xff] %v7519
      %7552 = vst [vmem:[#allocation5 + $0x8] sm:$0xff] %v7520
      %7553 = vst [vmem:[#allocation5 + $0x10] sm:$0xff] %v7521
      %7554 = vst [vmem:[#allocation5 + $0x18] sm:$0xff] %v7522
      %7555 = vst [vmem:[#allocation5 + $0x20] sm:$0xff] %v7523
      %7556 = vst [vmem:[#allocation5 + $0x28] sm:$0xff] %v7524
      %7557 = vst [vmem:[#allocation5 + $0x30] sm:$0xff] %v7525
      %7558 = vst [vmem:[#allocation5 + $0x38] sm:$0xff] %v7526
      %7559 = vst [vmem:[#allocation5 + $0x40] sm:$0xff] %v7527
      %7560 = vst [vmem:[#allocation5 + $0x48] sm:$0xff] %v7528
      %7561 = vst [vmem:[#allocation5 + $0x50] sm:$0xff] %v7529
      %7562 = vst [vmem:[#allocation5 + $0x58] sm:$0xff] %v7530
      %7563 = vst [vmem:[#allocation5 + $0x60] sm:$0xff] %v7531
      %7564 = vst [vmem:[#allocation5 + $0x68] sm:$0xff] %v7532
      %7565 = vst [vmem:[#allocation5 + $0x70] sm:$0xff] %v7533
      %7566 = vst [vmem:[#allocation5 + $0x78] sm:$0xff] %v7534
      %7567 = vst [vmem:[#allocation5 + $0x80] sm:$0xff] %v7535
      %7568 = vst [vmem:[#allocation5 + $0x88] sm:$0xff] %v7536
      %7569 = vst [vmem:[#allocation5 + $0x90] sm:$0xff] %v7537
      %7570 = vst [vmem:[#allocation5 + $0x98] sm:$0xff] %v7538
      %7571 = vst [vmem:[#allocation5 + $0xa0] sm:$0xff] %v7539
      %7572 = vst [vmem:[#allocation5 + $0xa8] sm:$0xff] %v7540
      %7573 = vst [vmem:[#allocation5 + $0xb0] sm:$0xff] %v7541
      %7574 = vst [vmem:[#allocation5 + $0xb8] sm:$0xff] %v7542
      %7575 = vst [vmem:[#allocation5 + $0xc0] sm:$0xff] %v7543
      %7576 = vst [vmem:[#allocation5 + $0xc8] sm:$0xff] %v7544
      %7577 = vst [vmem:[#allocation5 + $0xd0] sm:$0xff] %v7545
      %7578 = vst [vmem:[#allocation5 + $0xd8] sm:$0xff] %v7546
      %7579 = vst [vmem:[#allocation5 + $0xe0] sm:$0xff] %v7547
      %7580 = vst [vmem:[#allocation5 + $0xe8] sm:$0xff] %v7548
      %7581 = vst [vmem:[#allocation5 + $0xf0] sm:$0xff] %v7549
      %7582 = vst [vmem:[#allocation5 + $0xf8] sm:$0xff] %v7550
      %v7583 = vld [vmem:[#allocation4] sm:$0xff]
      %v7584 = vld [vmem:[#allocation4 + $0x8] sm:$0xff]
      %v7585 = vld [vmem:[#allocation4 + $0x10] sm:$0xff]
      %v7586 = vld [vmem:[#allocation4 + $0x18] sm:$0xff]
      %v7587 = vld [vmem:[#allocation4 + $0x20] sm:$0xff]
      %v7588 = vld [vmem:[#allocation4 + $0x28] sm:$0xff]
      %v7589 = vld [vmem:[#allocation4 + $0x30] sm:$0xff]
      %v7590 = vld [vmem:[#allocation4 + $0x38] sm:$0xff]
      %v7591 = vld [vmem:[#allocation4 + $0x40] sm:$0xff]
      %v7592 = vld [vmem:[#allocation4 + $0x48] sm:$0xff]
      %v7593 = vld [vmem:[#allocation4 + $0x50] sm:$0xff]
      %v7594 = vld [vmem:[#allocation4 + $0x58] sm:$0xff]
      %v7595 = vld [vmem:[#allocation4 + $0x60] sm:$0xff]
      %v7596 = vld [vmem:[#allocation4 + $0x68] sm:$0xff]
      %v7597 = vld [vmem:[#allocation4 + $0x70] sm:$0xff]
      %v7598 = vld [vmem:[#allocation4 + $0x78] sm:$0xff]
      %v7599 = vld [vmem:[#allocation4 + $0x80] sm:$0xff]
      %v7600 = vld [vmem:[#allocation4 + $0x88] sm:$0xff]
      %v7601 = vld [vmem:[#allocation4 + $0x90] sm:$0xff]
      %v7602 = vld [vmem:[#allocation4 + $0x98] sm:$0xff]
      %v7603 = vld [vmem:[#allocation4 + $0xa0] sm:$0xff]
      %v7604 = vld [vmem:[#allocation4 + $0xa8] sm:$0xff]
      %v7605 = vld [vmem:[#allocation4 + $0xb0] sm:$0xff]
      %v7606 = vld [vmem:[#allocation4 + $0xb8] sm:$0xff]
      %v7607 = vld [vmem:[#allocation4 + $0xc0] sm:$0xff]
      %v7608 = vld [vmem:[#allocation4 + $0xc8] sm:$0xff]
      %v7609 = vld [vmem:[#allocation4 + $0xd0] sm:$0xff]
      %v7610 = vld [vmem:[#allocation4 + $0xd8] sm:$0xff]
      %v7611 = vld [vmem:[#allocation4 + $0xe0] sm:$0xff]
      %v7612 = vld [vmem:[#allocation4 + $0xe8] sm:$0xff]
      %v7613 = vld [vmem:[#allocation4 + $0xf0] sm:$0xff]
      %v7614 = vld [vmem:[#allocation4 + $0xf8] sm:$0xff]
      %v7615 = vld [vmem:[#allocation5] sm:$0xff]
      %v7616 = vld [vmem:[#allocation5 + $0x8] sm:$0xff]
      %v7617 = vld [vmem:[#allocation5 + $0x10] sm:$0xff]
      %v7618 = vld [vmem:[#allocation5 + $0x18] sm:$0xff]
      %v7619 = vld [vmem:[#allocation5 + $0x20] sm:$0xff]
      %v7620 = vld [vmem:[#allocation5 + $0x28] sm:$0xff]
      %v7621 = vld [vmem:[#allocation5 + $0x30] sm:$0xff]
      %v7622 = vld [vmem:[#allocation5 + $0x38] sm:$0xff]
      %v7623 = vld [vmem:[#allocation5 + $0x40] sm:$0xff]
      %v7624 = vld [vmem:[#allocation5 + $0x48] sm:$0xff]
      %v7625 = vld [vmem:[#allocation5 + $0x50] sm:$0xff]
      %v7626 = vld [vmem:[#allocation5 + $0x58] sm:$0xff]
      %v7627 = vld [vmem:[#allocation5 + $0x60] sm:$0xff]
      %v7628 = vld [vmem:[#allocation5 + $0x68] sm:$0xff]
      %v7629 = vld [vmem:[#allocation5 + $0x70] sm:$0xff]
      %v7630 = vld [vmem:[#allocation5 + $0x78] sm:$0xff]
      %v7631 = vld [vmem:[#allocation5 + $0x80] sm:$0xff]
      %v7632 = vld [vmem:[#allocation5 + $0x88] sm:$0xff]
      %v7633 = vld [vmem:[#allocation5 + $0x90] sm:$0xff]
      %v7634 = vld [vmem:[#allocation5 + $0x98] sm:$0xff]
      %v7635 = vld [vmem:[#allocation5 + $0xa0] sm:$0xff]
      %v7636 = vld [vmem:[#allocation5 + $0xa8] sm:$0xff]
      %v7637 = vld [vmem:[#allocation5 + $0xb0] sm:$0xff]
      %v7638 = vld [vmem:[#allocation5 + $0xb8] sm:$0xff]
      %v7639 = vld [vmem:[#allocation5 + $0xc0] sm:$0xff]
      %v7640 = vld [vmem:[#allocation5 + $0xc8] sm:$0xff]
      %v7641 = vld [vmem:[#allocation5 + $0xd0] sm:$0xff]
      %v7642 = vld [vmem:[#allocation5 + $0xd8] sm:$0xff]
      %v7643 = vld [vmem:[#allocation5 + $0xe0] sm:$0xff]
      %v7644 = vld [vmem:[#allocation5 + $0xe8] sm:$0xff]
      %v7645 = vld [vmem:[#allocation5 + $0xf0] sm:$0xff]
      %v7646 = vld [vmem:[#allocation5 + $0xf8] sm:$0xff]
      %7647 = vmatprep.subr.bf16.mxu0 %v7616
      %7648 = vmatpush1.bf16.msra.mxu0 %v7615
      %7649 = vmatprep.subr.bf16.mxu0 %v7618
      %7650 = vmatpush1.bf16.msra.mxu0 %v7617
      %7651 = vmatprep.subr.bf16.mxu0 %v7620
      %7652 = vmatpush1.bf16.msra.mxu0 %v7619
      %7653 = vmatprep.subr.bf16.mxu0 %v7622
      %7654 = vmatpush1.bf16.msra.mxu0 %v7621
      %7655 = vmatprep.subr.bf16.mxu0 %v7624
      %7656 = vmatpush1.bf16.msra.mxu0 %v7623
      %7657 = vmatprep.subr.bf16.mxu0 %v7626
      %7658 = vmatpush1.bf16.msra.mxu0 %v7625
      %7659 = vmatprep.subr.bf16.mxu0 %v7628
      %7660 = vmatpush1.bf16.msra.mxu0 %v7627
      %7661 = vmatprep.subr.bf16.mxu0 %v7630
      %7662 = vmatpush1.bf16.msra.mxu0 %v7629
      %7663 = vmatprep.subr.bf16.mxu0 %v7632
      %7664 = vmatpush1.bf16.msra.mxu0 %v7631
      %7665 = vmatprep.subr.bf16.mxu0 %v7634
      %7666 = vmatpush1.bf16.msra.mxu0 %v7633
      %7667 = vmatprep.subr.bf16.mxu0 %v7636
      %7668 = vmatpush1.bf16.msra.mxu0 %v7635
      %7669 = vmatprep.subr.bf16.mxu0 %v7638
      %7670 = vmatpush1.bf16.msra.mxu0 %v7637
      %7671 = vmatprep.subr.bf16.mxu0 %v7640
      %7672 = vmatpush1.bf16.msra.mxu0 %v7639
      %7673 = vmatprep.subr.bf16.mxu0 %v7642
      %7674 = vmatpush1.bf16.msra.mxu0 %v7641
      %7675 = vmatprep.subr.bf16.mxu0 %v7644
      %7676 = vmatpush1.bf16.msra.mxu0 %v7643
      %7677 = vmatprep.subr.bf16.mxu0 %v7646
      %7678 = vmatpush1.bf16.msra.mxu0 %v7645
      %7679 = vmatprep.mubr.bf16.mxu0 %v7584
      %7680 = vmatmul.mubr.bf16.gmra.mrb[0].mxu0 %v7583
      %v7681 = vpop.f32.mrb[0].mxu0
      %v7682 = vadd.f32 0.0, %v7681
      %v7683 = vpop.f32.mrb[0].mxu0
      %v7684 = vadd.f32 0.0, %v7683
      %v7685 = vpop.f32.mrb[0].mxu0
      %v7686 = vadd.f32 0.0, %v7685
      %v7687 = vpop.f32.mrb[0].mxu0
      %v7688 = vadd.f32 0.0, %v7687
      %7689 = vmatprep.mubr.bf16.mxu0 %v7586
      %7690 = vmatmul.mubr.bf16.gmra.mrb[0].mxu0 %v7585
      %v7691 = vpop.f32.mrb[0].mxu0
      %v7692 = vadd.f32 0.0, %v7691
      %v7693 = vpop.f32.mrb[0].mxu0
      %v7694 = vadd.f32 0.0, %v7693
      %v7695 = vpop.f32.mrb[0].mxu0
      %v7696 = vadd.f32 0.0, %v7695
      %v7697 = vpop.f32.mrb[0].mxu0
      %v7698 = vadd.f32 0.0, %v7697
      %7699 = vmatprep.mubr.bf16.mxu0 %v7588
      %7700 = vmatmul.mubr.bf16.gmra.mrb[0].mxu0 %v7587
      %v7701 = vpop.f32.mrb[0].mxu0
      %v7702 = vadd.f32 0.0, %v7701
      %v7703 = vpop.f32.mrb[0].mxu0
      %v7704 = vadd.f32 0.0, %v7703
      %v7705 = vpop.f32.mrb[0].mxu0
      %v7706 = vadd.f32 0.0, %v7705
      %v7707 = vpop.f32.mrb[0].mxu0
      %v7708 = vadd.f32 0.0, %v7707
      %7709 = vmatprep.mubr.bf16.mxu0 %v7590
      %7710 = vmatmul.mubr.bf16.gmra.mrb[0].mxu0 %v7589
      %v7711 = vpop.f32.mrb[0].mxu0
      %v7712 = vadd.f32 0.0, %v7711
      %v7713 = vpop.f32.mrb[0].mxu0
      %v7714 = vadd.f32 0.0, %v7713
      %v7715 = vpop.f32.mrb[0].mxu0
      %v7716 = vadd.f32 0.0, %v7715
      %v7717 = vpop.f32.mrb[0].mxu0
      %v7718 = vadd.f32 0.0, %v7717
      %7719 = vmatprep.mubr.bf16.mxu0 %v7592
      %7720 = vmatmul.mubr.bf16.gmra.mrb[0].mxu0 %v7591
      %v7721 = vpop.f32.mrb[0].mxu0
      %v7722 = vadd.f32 0.0, %v7721
      %v7723 = vpop.f32.mrb[0].mxu0
      %v7724 = vadd.f32 0.0, %v7723
      %v7725 = vpop.f32.mrb[0].mxu0
      %v7726 = vadd.f32 0.0, %v7725
      %v7727 = vpop.f32.mrb[0].mxu0
      %v7728 = vadd.f32 0.0, %v7727
      %7729 = vmatprep.mubr.bf16.mxu0 %v7594
      %7730 = vmatmul.mubr.bf16.gmra.mrb[0].mxu0 %v7593
      %v7731 = vpop.f32.mrb[0].mxu0
      %v7732 = vadd.f32 0.0, %v7731
      %v7733 = vpop.f32.mrb[0].mxu0
      %v7734 = vadd.f32 0.0, %v7733
      %v7735 = vpop.f32.mrb[0].mxu0
      %v7736 = vadd.f32 0.0, %v7735
      %v7737 = vpop.f32.mrb[0].mxu0
      %v7738 = vadd.f32 0.0, %v7737
      %7739 = vmatprep.mubr.bf16.mxu0 %v7596
      %7740 = vmatmul.mubr.bf16.gmra.mrb[0].mxu0 %v7595
      %v7741 = vpop.f32.mrb[0].mxu0
      %v7742 = vadd.f32 0.0, %v7741
      %v7743 = vpop.f32.mrb[0].mxu0
      %v7744 = vadd.f32 0.0, %v7743
      %v7745 = vpop.f32.mrb[0].mxu0
      %v7746 = vadd.f32 0.0, %v7745
      %v7747 = vpop.f32.mrb[0].mxu0
      %v7748 = vadd.f32 0.0, %v7747
      %7749 = vmatprep.mubr.bf16.mxu0 %v7598
      %7750 = vmatmul.mubr.bf16.gmra.mrb[0].mxu0 %v7597
      %v7751 = vpop.f32.mrb[0].mxu0
      %v7752 = vadd.f32 0.0, %v7751
      %v7753 = vpop.f32.mrb[0].mxu0
      %v7754 = vadd.f32 0.0, %v7753
      %v7755 = vpop.f32.mrb[0].mxu0
      %v7756 = vadd.f32 0.0, %v7755
      %v7757 = vpop.f32.mrb[0].mxu0
      %v7758 = vadd.f32 0.0, %v7757
      %7759 = vmatprep.mubr.bf16.mxu0 %v7600
      %7760 = vmatmul.mubr.bf16.gmra.mrb[0].mxu0 %v7599
      %v7761 = vpop.f32.mrb[0].mxu0
      %v7762 = vadd.f32 0.0, %v7761
      %v7763 = vpop.f32.mrb[0].mxu0
      %v7764 = vadd.f32 0.0, %v7763
      %v7765 = vpop.f32.mrb[0].mxu0
      %v7766 = vadd.f32 0.0, %v7765
      %v7767 = vpop.f32.mrb[0].mxu0
      %v7768 = vadd.f32 0.0, %v7767
      %7769 = vmatprep.mubr.bf16.mxu0 %v7602
      %7770 = vmatmul.mubr.bf16.gmra.mrb[0].mxu0 %v7601
      %v7771 = vpop.f32.mrb[0].mxu0
      %v7772 = vadd.f32 0.0, %v7771
      %v7773 = vpop.f32.mrb[0].mxu0
      %v7774 = vadd.f32 0.0, %v7773
      %v7775 = vpop.f32.mrb[0].mxu0
      %v7776 = vadd.f32 0.0, %v7775
      %v7777 = vpop.f32.mrb[0].mxu0
      %v7778 = vadd.f32 0.0, %v7777
      %7779 = vmatprep.mubr.bf16.mxu0 %v7604
      %7780 = vmatmul.mubr.bf16.gmra.mrb[0].mxu0 %v7603
      %v7781 = vpop.f32.mrb[0].mxu0
      %v7782 = vadd.f32 0.0, %v7781
      %v7783 = vpop.f32.mrb[0].mxu0
      %v7784 = vadd.f32 0.0, %v7783
      %v7785 = vpop.f32.mrb[0].mxu0
      %v7786 = vadd.f32 0.0, %v7785
      %v7787 = vpop.f32.mrb[0].mxu0
      %v7788 = vadd.f32 0.0, %v7787
      %7789 = vmatprep.mubr.bf16.mxu0 %v7606
      %7790 = vmatmul.mubr.bf16.gmra.mrb[0].mxu0 %v7605
      %v7791 = vpop.f32.mrb[0].mxu0
      %v7792 = vadd.f32 0.0, %v7791
      %v7793 = vpop.f32.mrb[0].mxu0
      %v7794 = vadd.f32 0.0, %v7793
      %v7795 = vpop.f32.mrb[0].mxu0
      %v7796 = vadd.f32 0.0, %v7795
      %v7797 = vpop.f32.mrb[0].mxu0
      %v7798 = vadd.f32 0.0, %v7797
      %7799 = vmatprep.mubr.bf16.mxu0 %v7608
      %7800 = vmatmul.mubr.bf16.gmra.mrb[0].mxu0 %v7607
      %v7801 = vpop.f32.mrb[0].mxu0
      %v7802 = vadd.f32 0.0, %v7801
      %v7803 = vpop.f32.mrb[0].mxu0
      %v7804 = vadd.f32 0.0, %v7803
      %v7805 = vpop.f32.mrb[0].mxu0
      %v7806 = vadd.f32 0.0, %v7805
      %v7807 = vpop.f32.mrb[0].mxu0
      %v7808 = vadd.f32 0.0, %v7807
      %7809 = vmatprep.mubr.bf16.mxu0 %v7610
      %7810 = vmatmul.mubr.bf16.gmra.mrb[0].mxu0 %v7609
      %v7811 = vpop.f32.mrb[0].mxu0
      %v7812 = vadd.f32 0.0, %v7811
      %v7813 = vpop.f32.mrb[0].mxu0
      %v7814 = vadd.f32 0.0, %v7813
      %v7815 = vpop.f32.mrb[0].mxu0
      %v7816 = vadd.f32 0.0, %v7815
      %v7817 = vpop.f32.mrb[0].mxu0
      %v7818 = vadd.f32 0.0, %v7817
      %7819 = vmatprep.mubr.bf16.mxu0 %v7612
      %7820 = vmatmul.mubr.bf16.gmra.mrb[0].mxu0 %v7611
      %v7821 = vpop.f32.mrb[0].mxu0
      %v7822 = vadd.f32 0.0, %v7821
      %v7823 = vpop.f32.mrb[0].mxu0
      %v7824 = vadd.f32 0.0, %v7823
      %v7825 = vpop.f32.mrb[0].mxu0
      %v7826 = vadd.f32 0.0, %v7825
      %v7827 = vpop.f32.mrb[0].mxu0
      %v7828 = vadd.f32 0.0, %v7827
      %7829 = vmatprep.mubr.bf16.mxu0 %v7614
      %7830 = vmatmul.mubr.bf16.gmra.mrb[0].mxu0 %v7613
      %v7831 = vpop.f32.mrb[0].mxu0
      %v7832 = vadd.f32 0.0, %v7831
      %v7833 = vpop.f32.mrb[0].mxu0
      %v7834 = vadd.f32 0.0, %v7833
      %v7835 = vpop.f32.mrb[0].mxu0
      %v7836 = vadd.f32 0.0, %v7835
      %v7837 = vpop.f32.mrb[0].mxu0
      %v7838 = vadd.f32 0.0, %v7837
      %7839 = vdwg.mxu0
      %v7840 = vmax.f32 %v7682, %v7684
      %7841 = vmax.xlane.f32.xlu0 %v7840
      %v7842 = vpop.xlane.xlu0 %7841
      %v7843 = vmax.f32 %v7686, %v7688
      %7844 = vmax.xlane.f32.xlu0 %v7843
      %v7845 = vpop.xlane.xlu0 %7844
      %v7846 = vmax.f32 %v7692, %v7694
      %7847 = vmax.xlane.f32.xlu0 %v7846
      %v7848 = vpop.xlane.xlu0 %7847
      %v7849 = vmax.f32 %v7696, %v7698
      %7850 = vmax.xlane.f32.xlu0 %v7849
      %v7851 = vpop.xlane.xlu0 %7850
      %v7852 = vmax.f32 %v7702, %v7704
      %7853 = vmax.xlane.f32.xlu0 %v7852
      %v7854 = vpop.xlane.xlu0 %7853
      %v7855 = vmax.f32 %v7706, %v7708
      %7856 = vmax.xlane.f32.xlu0 %v7855
      %v7857 = vpop.xlane.xlu0 %7856
      %v7858 = vmax.f32 %v7712, %v7714
      %7859 = vmax.xlane.f32.xlu0 %v7858
      %v7860 = vpop.xlane.xlu0 %7859
      %v7861 = vmax.f32 %v7716, %v7718
      %7862 = vmax.xlane.f32.xlu0 %v7861
      %v7863 = vpop.xlane.xlu0 %7862
      %v7864 = vmax.f32 %v7722, %v7724
      %7865 = vmax.xlane.f32.xlu0 %v7864
      %v7866 = vpop.xlane.xlu0 %7865
      %v7867 = vmax.f32 %v7726, %v7728
      %7868 = vmax.xlane.f32.xlu0 %v7867
      %v7869 = vpop.xlane.xlu0 %7868
      %v7870 = vmax.f32 %v7732, %v7734
      %7871 = vmax.xlane.f32.xlu0 %v7870
      %v7872 = vpop.xlane.xlu0 %7871
      %v7873 = vmax.f32 %v7736, %v7738
      %7874 = vmax.xlane.f32.xlu0 %v7873
      %v7875 = vpop.xlane.xlu0 %7874
      %v7876 = vmax.f32 %v7742, %v7744
      %7877 = vmax.xlane.f32.xlu0 %v7876
      %v7878 = vpop.xlane.xlu0 %7877
      %v7879 = vmax.f32 %v7746, %v7748
      %7880 = vmax.xlane.f32.xlu0 %v7879
      %v7881 = vpop.xlane.xlu0 %7880
      %v7882 = vmax.f32 %v7752, %v7754
      %7883 = vmax.xlane.f32.xlu0 %v7882
      %v7884 = vpop.xlane.xlu0 %7883
      %v7885 = vmax.f32 %v7756, %v7758
      %7886 = vmax.xlane.f32.xlu0 %v7885
      %v7887 = vpop.xlane.xlu0 %7886
      %v7888 = vmax.f32 %v7762, %v7764
      %7889 = vmax.xlane.f32.xlu0 %v7888
      %v7890 = vpop.xlane.xlu0 %7889
      %v7891 = vmax.f32 %v7766, %v7768
      %7892 = vmax.xlane.f32.xlu0 %v7891
      %v7893 = vpop.xlane.xlu0 %7892
      %v7894 = vmax.f32 %v7772, %v7774
      %7895 = vmax.xlane.f32.xlu0 %v7894
      %v7896 = vpop.xlane.xlu0 %7895
      %v7897 = vmax.f32 %v7776, %v7778
      %7898 = vmax.xlane.f32.xlu0 %v7897
      %v7899 = vpop.xlane.xlu0 %7898
      %v7900 = vmax.f32 %v7782, %v7784
      %7901 = vmax.xlane.f32.xlu0 %v7900
      %v7902 = vpop.xlane.xlu0 %7901
      %v7903 = vmax.f32 %v7786, %v7788
      %7904 = vmax.xlane.f32.xlu0 %v7903
      %v7905 = vpop.xlane.xlu0 %7904
      %v7906 = vmax.f32 %v7792, %v7794
      %7907 = vmax.xlane.f32.xlu0 %v7906
      %v7908 = vpop.xlane.xlu0 %7907
      %v7909 = vmax.f32 %v7796, %v7798
      %7910 = vmax.xlane.f32.xlu0 %v7909
      %v7911 = vpop.xlane.xlu0 %7910
      %v7912 = vmax.f32 %v7802, %v7804
      %7913 = vmax.xlane.f32.xlu0 %v7912
      %v7914 = vpop.xlane.xlu0 %7913
      %v7915 = vmax.f32 %v7806, %v7808
      %7916 = vmax.xlane.f32.xlu0 %v7915
      %v7917 = vpop.xlane.xlu0 %7916
      %v7918 = vmax.f32 %v7812, %v7814
      %7919 = vmax.xlane.f32.xlu0 %v7918
      %v7920 = vpop.xlane.xlu0 %7919
      %v7921 = vmax.f32 %v7816, %v7818
      %7922 = vmax.xlane.f32.xlu0 %v7921
      %v7923 = vpop.xlane.xlu0 %7922
      %v7924 = vmax.f32 %v7822, %v7824
      %7925 = vmax.xlane.f32.xlu0 %v7924
      %v7926 = vpop.xlane.xlu0 %7925
      %v7927 = vmax.f32 %v7826, %v7828
      %7928 = vmax.xlane.f32.xlu0 %v7927
      %v7929 = vpop.xlane.xlu0 %7928
      %v7930 = vmax.f32 %v7832, %v7834
      %7931 = vmax.xlane.f32.xlu0 %v7930
      %v7932 = vpop.xlane.xlu0 %7931
      %v7933 = vmax.f32 %v7836, %v7838
      %7934 = vmax.xlane.f32.xlu0 %v7933
      %v7935 = vpop.xlane.xlu0 %7934
      %v7936 = vsub.f32 %v7682, %v7842
      %v7937 = vsub.f32 %v7684, %v7842
      %v7938 = vsub.f32 %v7686, %v7845
      %v7939 = vsub.f32 %v7688, %v7845
      %v7940 = vsub.f32 %v7692, %v7848
      %v7941 = vsub.f32 %v7694, %v7848
      %v7942 = vsub.f32 %v7696, %v7851
      %v7943 = vsub.f32 %v7698, %v7851
      %v7944 = vsub.f32 %v7702, %v7854
      %v7945 = vsub.f32 %v7704, %v7854
      %v7946 = vsub.f32 %v7706, %v7857
      %v7947 = vsub.f32 %v7708, %v7857
      %v7948 = vsub.f32 %v7712, %v7860
      %v7949 = vsub.f32 %v7714, %v7860
      %v7950 = vsub.f32 %v7716, %v7863
      %v7951 = vsub.f32 %v7718, %v7863
      %v7952 = vsub.f32 %v7722, %v7866
      %v7953 = vsub.f32 %v7724, %v7866
      %v7954 = vsub.f32 %v7726, %v7869
      %v7955 = vsub.f32 %v7728, %v7869
      %v7956 = vsub.f32 %v7732, %v7872
      %v7957 = vsub.f32 %v7734, %v7872
      %v7958 = vsub.f32 %v7736, %v7875
      %v7959 = vsub.f32 %v7738, %v7875
      %v7960 = vsub.f32 %v7742, %v7878
      %v7961 = vsub.f32 %v7744, %v7878
      %v7962 = vsub.f32 %v7746, %v7881
      %v7963 = vsub.f32 %v7748, %v7881
      %v7964 = vsub.f32 %v7752, %v7884
      %v7965 = vsub.f32 %v7754, %v7884
      %v7966 = vsub.f32 %v7756, %v7887
      %v7967 = vsub.f32 %v7758, %v7887
      %v7968 = vsub.f32 %v7762, %v7890
      %v7969 = vsub.f32 %v7764, %v7890
      %v7970 = vsub.f32 %v7766, %v7893
      %v7971 = vsub.f32 %v7768, %v7893
      %v7972 = vsub.f32 %v7772, %v7896
      %v7973 = vsub.f32 %v7774, %v7896
      %v7974 = vsub.f32 %v7776, %v7899
      %v7975 = vsub.f32 %v7778, %v7899
      %v7976 = vsub.f32 %v7782, %v7902
      %v7977 = vsub.f32 %v7784, %v7902
      %v7978 = vsub.f32 %v7786, %v7905
      %v7979 = vsub.f32 %v7788, %v7905
      %v7980 = vsub.f32 %v7792, %v7908
      %v7981 = vsub.f32 %v7794, %v7908
      %v7982 = vsub.f32 %v7796, %v7911
      %v7983 = vsub.f32 %v7798, %v7911
      %v7984 = vsub.f32 %v7802, %v7914
      %v7985 = vsub.f32 %v7804, %v7914
      %v7986 = vsub.f32 %v7806, %v7917
      %v7987 = vsub.f32 %v7808, %v7917
      %v7988 = vsub.f32 %v7812, %v7920
      %v7989 = vsub.f32 %v7814, %v7920
      %v7990 = vsub.f32 %v7816, %v7923
      %v7991 = vsub.f32 %v7818, %v7923
      %v7992 = vsub.f32 %v7822, %v7926
      %v7993 = vsub.f32 %v7824, %v7926
      %v7994 = vsub.f32 %v7826, %v7929
      %v7995 = vsub.f32 %v7828, %v7929
      %v7996 = vsub.f32 %v7832, %v7932
      %v7997 = vsub.f32 %v7834, %v7932
      %v7998 = vsub.f32 %v7836, %v7935
      %v7999 = vsub.f32 %v7838, %v7935
      %v8000 = vmul.f32 %v7936, 1.442695
      %v8001 = vpow.pop %v8000
      %v8002 = vmul.f32 %v7937, 1.442695
      %v8003 = vpow.pop %v8002
      %v8004 = vmul.f32 %v7938, 1.442695
      %v8005 = vpow.pop %v8004
      %v8006 = vmul.f32 %v7939, 1.442695
      %v8007 = vpow.pop %v8006
      %v8008 = vmul.f32 %v7940, 1.442695
      %v8009 = vpow.pop %v8008
      %v8010 = vmul.f32 %v7941, 1.442695
      %v8011 = vpow.pop %v8010
      %v8012 = vmul.f32 %v7942, 1.442695
      %v8013 = vpow.pop %v8012
      %v8014 = vmul.f32 %v7943, 1.442695
      %v8015 = vpow.pop %v8014
      %v8016 = vmul.f32 %v7944, 1.442695
      %v8017 = vpow.pop %v8016
      %v8018 = vmul.f32 %v7945, 1.442695
      %v8019 = vpow.pop %v8018
      %v8020 = vmul.f32 %v7946, 1.442695
      %v8021 = vpow.pop %v8020
      %v8022 = vmul.f32 %v7947, 1.442695
      %v8023 = vpow.pop %v8022
      %v8024 = vmul.f32 %v7948, 1.442695
      %v8025 = vpow.pop %v8024
      %v8026 = vmul.f32 %v7949, 1.442695
      %v8027 = vpow.pop %v8026
      %v8028 = vmul.f32 %v7950, 1.442695
      %v8029 = vpow.pop %v8028
      %v8030 = vmul.f32 %v7951, 1.442695
      %v8031 = vpow.pop %v8030
      %v8032 = vmul.f32 %v7952, 1.442695
      %v8033 = vpow.pop %v8032
      %v8034 = vmul.f32 %v7953, 1.442695
      %v8035 = vpow.pop %v8034
      %v8036 = vmul.f32 %v7954, 1.442695
      %v8037 = vpow.pop %v8036
      %v8038 = vmul.f32 %v7955, 1.442695
      %v8039 = vpow.pop %v8038
      %v8040 = vmul.f32 %v7956, 1.442695
      %v8041 = vpow.pop %v8040
      %v8042 = vmul.f32 %v7957, 1.442695
      %v8043 = vpow.pop %v8042
      %v8044 = vmul.f32 %v7958, 1.442695
      %v8045 = vpow.pop %v8044
      %v8046 = vmul.f32 %v7959, 1.442695
      %v8047 = vpow.pop %v8046
      %v8048 = vmul.f32 %v7960, 1.442695
      %v8049 = vpow.pop %v8048
      %v8050 = vmul.f32 %v7961, 1.442695
      %v8051 = vpow.pop %v8050
      %v8052 = vmul.f32 %v7962, 1.442695
      %v8053 = vpow.pop %v8052
      %v8054 = vmul.f32 %v7963, 1.442695
      %v8055 = vpow.pop %v8054
      %v8056 = vmul.f32 %v7964, 1.442695
      %v8057 = vpow.pop %v8056
      %v8058 = vmul.f32 %v7965, 1.442695
      %v8059 = vpow.pop %v8058
      %v8060 = vmul.f32 %v7966, 1.442695
      %v8061 = vpow.pop %v8060
      %v8062 = vmul.f32 %v7967, 1.442695
      %v8063 = vpow.pop %v8062
      %v8064 = vmul.f32 %v7968, 1.442695
      %v8065 = vpow.pop %v8064
      %v8066 = vmul.f32 %v7969, 1.442695
      %v8067 = vpow.pop %v8066
      %v8068 = vmul.f32 %v7970, 1.442695
      %v8069 = vpow.pop %v8068
      %v8070 = vmul.f32 %v7971, 1.442695
      %v8071 = vpow.pop %v8070
      %v8072 = vmul.f32 %v7972, 1.442695
      %v8073 = vpow.pop %v8072
      %v8074 = vmul.f32 %v7973, 1.442695
      %v8075 = vpow.pop %v8074
      %v8076 = vmul.f32 %v7974, 1.442695
      %v8077 = vpow.pop %v8076
      %v8078 = vmul.f32 %v7975, 1.442695
      %v8079 = vpow.pop %v8078
      %v8080 = vmul.f32 %v7976, 1.442695
      %v8081 = vpow.pop %v8080
      %v8082 = vmul.f32 %v7977, 1.442695
      %v8083 = vpow.pop %v8082
      %v8084 = vmul.f32 %v7978, 1.442695
      %v8085 = vpow.pop %v8084
      %v8086 = vmul.f32 %v7979, 1.442695
      %v8087 = vpow.pop %v8086
      %v8088 = vmul.f32 %v7980, 1.442695
      %v8089 = vpow.pop %v8088
      %v8090 = vmul.f32 %v7981, 1.442695
      %v8091 = vpow.pop %v8090
      %v8092 = vmul.f32 %v7982, 1.442695
      %v8093 = vpow.pop %v8092
      %v8094 = vmul.f32 %v7983, 1.442695
      %v8095 = vpow.pop %v8094
      %v8096 = vmul.f32 %v7984, 1.442695
      %v8097 = vpow.pop %v8096
      %v8098 = vmul.f32 %v7985, 1.442695
      %v8099 = vpow.pop %v8098
      %v8100 = vmul.f32 %v7986, 1.442695
      %v8101 = vpow.pop %v8100
      %v8102 = vmul.f32 %v7987, 1.442695
      %v8103 = vpow.pop %v8102
      %v8104 = vmul.f32 %v7988, 1.442695
      %v8105 = vpow.pop %v8104
      %v8106 = vmul.f32 %v7989, 1.442695
      %v8107 = vpow.pop %v8106
      %v8108 = vmul.f32 %v7990, 1.442695
      %v8109 = vpow.pop %v8108
      %v8110 = vmul.f32 %v7991, 1.442695
      %v8111 = vpow.pop %v8110
      %v8112 = vmul.f32 %v7992, 1.442695
      %v8113 = vpow.pop %v8112
      %v8114 = vmul.f32 %v7993, 1.442695
      %v8115 = vpow.pop %v8114
      %v8116 = vmul.f32 %v7994, 1.442695
      %v8117 = vpow.pop %v8116
      %v8118 = vmul.f32 %v7995, 1.442695
      %v8119 = vpow.pop %v8118
      %v8120 = vmul.f32 %v7996, 1.442695
      %v8121 = vpow.pop %v8120
      %v8122 = vmul.f32 %v7997, 1.442695
      %v8123 = vpow.pop %v8122
      %v8124 = vmul.f32 %v7998, 1.442695
      %v8125 = vpow.pop %v8124
      %v8126 = vmul.f32 %v7999, 1.442695
      %v8127 = vpow.pop %v8126
      %v8128 = vadd.f32 %v8001, %v8003
      %8129 = vadd.xlane.f32.xlu0 %v8128
      %v8130 = vpop.xlane.xlu0 %8129
      %v8131 = vadd.f32 %v8005, %v8007
      %8132 = vadd.xlane.f32.xlu0 %v8131
      %v8133 = vpop.xlane.xlu0 %8132
      %v8134 = vadd.f32 %v8009, %v8011
      %8135 = vadd.xlane.f32.xlu0 %v8134
      %v8136 = vpop.xlane.xlu0 %8135
      %v8137 = vadd.f32 %v8013, %v8015
      %8138 = vadd.xlane.f32.xlu0 %v8137
      %v8139 = vpop.xlane.xlu0 %8138
      %v8140 = vadd.f32 %v8017, %v8019
      %8141 = vadd.xlane.f32.xlu0 %v8140
      %v8142 = vpop.xlane.xlu0 %8141
      %v8143 = vadd.f32 %v8021, %v8023
      %8144 = vadd.xlane.f32.xlu0 %v8143
      %v8145 = vpop.xlane.xlu0 %8144
      %v8146 = vadd.f32 %v8025, %v8027
      %8147 = vadd.xlane.f32.xlu0 %v8146
      %v8148 = vpop.xlane.xlu0 %8147
      %v8149 = vadd.f32 %v8029, %v8031
      %8150 = vadd.xlane.f32.xlu0 %v8149
      %v8151 = vpop.xlane.xlu0 %8150
      %v8152 = vadd.f32 %v8033, %v8035
      %8153 = vadd.xlane.f32.xlu0 %v8152
      %v8154 = vpop.xlane.xlu0 %8153
      %v8155 = vadd.f32 %v8037, %v8039
      %8156 = vadd.xlane.f32.xlu0 %v8155
      %v8157 = vpop.xlane.xlu0 %8156
      %v8158 = vadd.f32 %v8041, %v8043
      %8159 = vadd.xlane.f32.xlu0 %v8158
      %v8160 = vpop.xlane.xlu0 %8159
      %v8161 = vadd.f32 %v8045, %v8047
      %8162 = vadd.xlane.f32.xlu0 %v8161
      %v8163 = vpop.xlane.xlu0 %8162
      %v8164 = vadd.f32 %v8049, %v8051
      %8165 = vadd.xlane.f32.xlu0 %v8164
      %v8166 = vpop.xlane.xlu0 %8165
      %v8167 = vadd.f32 %v8053, %v8055
      %8168 = vadd.xlane.f32.xlu0 %v8167
      %v8169 = vpop.xlane.xlu0 %8168
      %v8170 = vadd.f32 %v8057, %v8059
      %8171 = vadd.xlane.f32.xlu0 %v8170
      %v8172 = vpop.xlane.xlu0 %8171
      %v8173 = vadd.f32 %v8061, %v8063
      %8174 = vadd.xlane.f32.xlu0 %v8173
      %v8175 = vpop.xlane.xlu0 %8174
      %v8176 = vadd.f32 %v8065, %v8067
      %8177 = vadd.xlane.f32.xlu0 %v8176
      %v8178 = vpop.xlane.xlu0 %8177
      %v8179 = vadd.f32 %v8069, %v8071
      %8180 = vadd.xlane.f32.xlu0 %v8179
      %v8181 = vpop.xlane.xlu0 %8180
      %v8182 = vadd.f32 %v8073, %v8075
      %8183 = vadd.xlane.f32.xlu0 %v8182
      %v8184 = vpop.xlane.xlu0 %8183
      %v8185 = vadd.f32 %v8077, %v8079
      %8186 = vadd.xlane.f32.xlu0 %v8185
      %v8187 = vpop.xlane.xlu0 %8186
      %v8188 = vadd.f32 %v8081, %v8083
      %8189 = vadd.xlane.f32.xlu0 %v8188
      %v8190 = vpop.xlane.xlu0 %8189
      %v8191 = vadd.f32 %v8085, %v8087
      %8192 = vadd.xlane.f32.xlu0 %v8191
      %v8193 = vpop.xlane.xlu0 %8192
      %v8194 = vadd.f32 %v8089, %v8091
      %8195 = vadd.xlane.f32.xlu0 %v8194
      %v8196 = vpop.xlane.xlu0 %8195
      %v8197 = vadd.f32 %v8093, %v8095
      %8198 = vadd.xlane.f32.xlu0 %v8197
      %v8199 = vpop.xlane.xlu0 %8198
      %v8200 = vadd.f32 %v8097, %v8099
      %8201 = vadd.xlane.f32.xlu0 %v8200
      %v8202 = vpop.xlane.xlu0 %8201
      %v8203 = vadd.f32 %v8101, %v8103
      %8204 = vadd.xlane.f32.xlu0 %v8203
      %v8205 = vpop.xlane.xlu0 %8204
      %v8206 = vadd.f32 %v8105, %v8107
      %8207 = vadd.xlane.f32.xlu0 %v8206
      %v8208 = vpop.xlane.xlu0 %8207
      %v8209 = vadd.f32 %v8109, %v8111
      %8210 = vadd.xlane.f32.xlu0 %v8209
      %v8211 = vpop.xlane.xlu0 %8210
      %v8212 = vadd.f32 %v8113, %v8115
      %8213 = vadd.xlane.f32.xlu0 %v8212
      %v8214 = vpop.xlane.xlu0 %8213
      %v8215 = vadd.f32 %v8117, %v8119
      %8216 = vadd.xlane.f32.xlu0 %v8215
      %v8217 = vpop.xlane.xlu0 %8216
      %v8218 = vadd.f32 %v8121, %v8123
      %8219 = vadd.xlane.f32.xlu0 %v8218
      %v8220 = vpop.xlane.xlu0 %8219
      %v8221 = vadd.f32 %v8125, %v8127
      %8222 = vadd.xlane.f32.xlu0 %v8221
      %v8223 = vpop.xlane.xlu0 %8222
      %v8224 = vrcp.pop %v8130
      %v8225 = vrcp.pop %v8133
      %v8226 = vrcp.pop %v8136
      %v8227 = vrcp.pop %v8139
      %v8228 = vrcp.pop %v8142
      %v8229 = vrcp.pop %v8145
      %v8230 = vrcp.pop %v8148
      %v8231 = vrcp.pop %v8151
      %v8232 = vrcp.pop %v8154
      %v8233 = vrcp.pop %v8157
      %v8234 = vrcp.pop %v8160
      %v8235 = vrcp.pop %v8163
      %v8236 = vrcp.pop %v8166
      %v8237 = vrcp.pop %v8169
      %v8238 = vrcp.pop %v8172
      %v8239 = vrcp.pop %v8175
      %v8240 = vrcp.pop %v8178
      %v8241 = vrcp.pop %v8181
      %v8242 = vrcp.pop %v8184
      %v8243 = vrcp.pop %v8187
      %v8244 = vrcp.pop %v8190
      %v8245 = vrcp.pop %v8193
      %v8246 = vrcp.pop %v8196
      %v8247 = vrcp.pop %v8199
      %v8248 = vrcp.pop %v8202
      %v8249 = vrcp.pop %v8205
      %v8250 = vrcp.pop %v8208
      %v8251 = vrcp.pop %v8211
      %v8252 = vrcp.pop %v8214
      %v8253 = vrcp.pop %v8217
      %v8254 = vrcp.pop %v8220
      %v8255 = vrcp.pop %v8223
      %v8256 = vmul.f32 %v8001, %v8224
      %v8257 = vmul.f32 %v8003, %v8224
      %v8258 = vmul.f32 %v8005, %v8225
      %v8259 = vmul.f32 %v8007, %v8225
      %v8260 = vmul.f32 %v8009, %v8226
      %v8261 = vmul.f32 %v8011, %v8226
      %v8262 = vmul.f32 %v8013, %v8227
      %v8263 = vmul.f32 %v8015, %v8227
      %v8264 = vmul.f32 %v8017, %v8228
      %v8265 = vmul.f32 %v8019, %v8228
      %v8266 = vmul.f32 %v8021, %v8229
      %v8267 = vmul.f32 %v8023, %v8229
      %v8268 = vmul.f32 %v8025, %v8230
      %v8269 = vmul.f32 %v8027, %v8230
      %v8270 = vmul.f32 %v8029, %v8231
      %v8271 = vmul.f32 %v8031, %v8231
      %v8272 = vmul.f32 %v8033, %v8232
      %v8273 = vmul.f32 %v8035, %v8232
      %v8274 = vmul.f32 %v8037, %v8233
      %v8275 = vmul.f32 %v8039, %v8233
      %v8276 = vmul.f32 %v8041, %v8234
      %v8277 = vmul.f32 %v8043, %v8234
      %v8278 = vmul.f32 %v8045, %v8235
      %v8279 = vmul.f32 %v8047, %v8235
      %v8280 = vmul.f32 %v8049, %v8236
      %v8281 = vmul.f32 %v8051, %v8236
      %v8282 = vmul.f32 %v8053, %v8237
      %v8283 = vmul.f32 %v8055, %v8237
      %v8284 = vmul.f32 %v8057, %v8238
      %v8285 = vmul.f32 %v8059, %v8238
      %v8286 = vmul.f32 %v8061, %v8239
      %v8287 = vmul.f32 %v8063, %v8239
      %v8288 = vmul.f32 %v8065, %v8240
      %v8289 = vmul.f32 %v8067, %v8240
      %v8290 = vmul.f32 %v8069, %v8241
      %v8291 = vmul.f32 %v8071, %v8241
      %v8292 = vmul.f32 %v8073, %v8242
      %v8293 = vmul.f32 %v8075, %v8242
      %v8294 = vmul.f32 %v8077, %v8243
      %v8295 = vmul.f32 %v8079, %v8243
      %v8296 = vmul.f32 %v8081, %v8244
      %v8297 = vmul.f32 %v8083, %v8244
      %v8298 = vmul.f32 %v8085, %v8245
      %v8299 = vmul.f32 %v8087, %v8245
      %v8300 = vmul.f32 %v8089, %v8246
      %v8301 = vmul.f32 %v8091, %v8246
      %v8302 = vmul.f32 %v8093, %v8247
      %v8303 = vmul.f32 %v8095, %v8247
      %v8304 = vmul.f32 %v8097, %v8248
      %v8305 = vmul.f32 %v8099, %v8248
      %v8306 = vmul.f32 %v8101, %v8249
      %v8307 = vmul.f32 %v8103, %v8249
      %v8308 = vmul.f32 %v8105, %v8250
      %v8309 = vmul.f32 %v8107, %v8250
      %v8310 = vmul.f32 %v8109, %v8251
      %v8311 = vmul.f32 %v8111, %v8251
      %v8312 = vmul.f32 %v8113, %v8252
      %v8313 = vmul.f32 %v8115, %v8252
      %v8314 = vmul.f32 %v8117, %v8253
      %v8315 = vmul.f32 %v8119, %v8253
      %v8316 = vmul.f32 %v8121, %v8254
      %v8317 = vmul.f32 %v8123, %v8254
      %v8318 = vmul.f32 %v8125, %v8255
      %v8319 = vmul.f32 %v8127, %v8255
      %v8320 = vpack.c.bf16 %v8258, %v8256
      %v8321 = vpack.c.bf16 %v8259, %v8257
      %v8322 = vpack.c.bf16 %v8262, %v8260
      %v8323 = vpack.c.bf16 %v8263, %v8261
      %v8324 = vpack.c.bf16 %v8266, %v8264
      %v8325 = vpack.c.bf16 %v8267, %v8265
      %v8326 = vpack.c.bf16 %v8270, %v8268
      %v8327 = vpack.c.bf16 %v8271, %v8269
      %v8328 = vpack.c.bf16 %v8274, %v8272
      %v8329 = vpack.c.bf16 %v8275, %v8273
      %v8330 = vpack.c.bf16 %v8278, %v8276
      %v8331 = vpack.c.bf16 %v8279, %v8277
      %v8332 = vpack.c.bf16 %v8282, %v8280
      %v8333 = vpack.c.bf16 %v8283, %v8281
      %v8334 = vpack.c.bf16 %v8286, %v8284
      %v8335 = vpack.c.bf16 %v8287, %v8285
      %v8336 = vpack.c.bf16 %v8290, %v8288
      %v8337 = vpack.c.bf16 %v8291, %v8289
      %v8338 = vpack.c.bf16 %v8294, %v8292
      %v8339 = vpack.c.bf16 %v8295, %v8293
      %v8340 = vpack.c.bf16 %v8298, %v8296
      %v8341 = vpack.c.bf16 %v8299, %v8297
      %v8342 = vpack.c.bf16 %v8302, %v8300
      %v8343 = vpack.c.bf16 %v8303, %v8301
      %v8344 = vpack.c.bf16 %v8306, %v8304
      %v8345 = vpack.c.bf16 %v8307, %v8305
      %v8346 = vpack.c.bf16 %v8310, %v8308
      %v8347 = vpack.c.bf16 %v8311, %v8309
      %v8348 = vpack.c.bf16 %v8314, %v8312
      %v8349 = vpack.c.bf16 %v8315, %v8313
      %v8350 = vpack.c.bf16 %v8318, %v8316
      %v8351 = vpack.c.bf16 %v8319, %v8317
      %v8352 = vld [vmem:[%s396] sm:$0xff]
      %v8353 = vld [vmem:[%s396 + $0x8] sm:$0xff]
      %v8354 = vld [vmem:[%s396 + $0x10] sm:$0xff]
      %v8355 = vld [vmem:[%s396 + $0x18] sm:$0xff]
      %v8356 = vld [vmem:[%s396 + $0x20] sm:$0xff]
      %v8357 = vld [vmem:[%s396 + $0x28] sm:$0xff]
      %v8358 = vld [vmem:[%s396 + $0x30] sm:$0xff]
      %v8359 = vld [vmem:[%s396 + $0x38] sm:$0xff]
      %v8360 = vld [vmem:[%s396 + $0x40] sm:$0xff]
      %v8361 = vld [vmem:[%s396 + $0x48] sm:$0xff]
      %v8362 = vld [vmem:[%s396 + $0x50] sm:$0xff]
      %v8363 = vld [vmem:[%s396 + $0x58] sm:$0xff]
      %v8364 = vld [vmem:[%s396 + $0x60] sm:$0xff]
      %v8365 = vld [vmem:[%s396 + $0x68] sm:$0xff]
      %v8366 = vld [vmem:[%s396 + $0x70] sm:$0xff]
      %v8367 = vld [vmem:[%s396 + $0x78] sm:$0xff]
      %v8368 = vld [vmem:[%s396 + $0x80] sm:$0xff]
      %v8369 = vld [vmem:[%s396 + $0x88] sm:$0xff]
      %v8370 = vld [vmem:[%s396 + $0x90] sm:$0xff]
      %v8371 = vld [vmem:[%s396 + $0x98] sm:$0xff]
      %v8372 = vld [vmem:[%s396 + $0xa0] sm:$0xff]
      %v8373 = vld [vmem:[%s396 + $0xa8] sm:$0xff]
      %v8374 = vld [vmem:[%s396 + $0xb0] sm:$0xff]
      %v8375 = vld [vmem:[%s396 + $0xb8] sm:$0xff]
      %v8376 = vld [vmem:[%s396 + $0xc0] sm:$0xff]
      %v8377 = vld [vmem:[%s396 + $0xc8] sm:$0xff]
      %v8378 = vld [vmem:[%s396 + $0xd0] sm:$0xff]
      %v8379 = vld [vmem:[%s396 + $0xd8] sm:$0xff]
      %v8380 = vld [vmem:[%s396 + $0xe0] sm:$0xff]
      %v8381 = vld [vmem:[%s396 + $0xe8] sm:$0xff]
      %v8382 = vld [vmem:[%s396 + $0xf0] sm:$0xff]
      %v8383 = vld [vmem:[%s396 + $0xf8] sm:$0xff]
      %v8416 = vunpack.c.l.b16 %v8352
      %v8417 = vunpack.c.h.b16 %v8352
      %v8418 = vunpack.c.l.b16 %v8353
      %v8419 = vunpack.c.h.b16 %v8353
      %v8420 = vunpack.c.l.b16 %v8354
      %v8421 = vunpack.c.h.b16 %v8354
      %v8422 = vunpack.c.l.b16 %v8355
      %v8423 = vunpack.c.h.b16 %v8355
      %v8424 = vunpack.c.l.b16 %v8356
      %v8425 = vunpack.c.h.b16 %v8356
      %v8426 = vunpack.c.l.b16 %v8357
      %v8427 = vunpack.c.h.b16 %v8357
      %v8428 = vunpack.c.l.b16 %v8358
      %v8429 = vunpack.c.h.b16 %v8358
      %v8430 = vunpack.c.l.b16 %v8359
      %v8431 = vunpack.c.h.b16 %v8359
      %v8432 = vunpack.c.l.b16 %v8360
      %v8433 = vunpack.c.h.b16 %v8360
      %v8434 = vunpack.c.l.b16 %v8361
      %v8435 = vunpack.c.h.b16 %v8361
      %v8436 = vunpack.c.l.b16 %v8362
      %v8437 = vunpack.c.h.b16 %v8362
      %v8438 = vunpack.c.l.b16 %v8363
      %v8439 = vunpack.c.h.b16 %v8363
      %v8440 = vunpack.c.l.b16 %v8364
      %v8441 = vunpack.c.h.b16 %v8364
      %v8442 = vunpack.c.l.b16 %v8365
      %v8443 = vunpack.c.h.b16 %v8365
      %v8444 = vunpack.c.l.b16 %v8366
      %v8445 = vunpack.c.h.b16 %v8366
      %v8446 = vunpack.c.l.b16 %v8367
      %v8447 = vunpack.c.h.b16 %v8367
      %v8448 = vunpack.c.l.b16 %v8368
      %v8449 = vunpack.c.h.b16 %v8368
      %v8450 = vunpack.c.l.b16 %v8369
      %v8451 = vunpack.c.h.b16 %v8369
      %v8452 = vunpack.c.l.b16 %v8370
      %v8453 = vunpack.c.h.b16 %v8370
      %v8454 = vunpack.c.l.b16 %v8371
      %v8455 = vunpack.c.h.b16 %v8371
      %v8456 = vunpack.c.l.b16 %v8372
      %v8457 = vunpack.c.h.b16 %v8372
      %v8458 = vunpack.c.l.b16 %v8373
      %v8459 = vunpack.c.h.b16 %v8373
      %v8460 = vunpack.c.l.b16 %v8374
      %v8461 = vunpack.c.h.b16 %v8374
      %v8462 = vunpack.c.l.b16 %v8375
      %v8463 = vunpack.c.h.b16 %v8375
      %v8464 = vunpack.c.l.b16 %v8376
      %v8465 = vunpack.c.h.b16 %v8376
      %v8466 = vunpack.c.l.b16 %v8377
      %v8467 = vunpack.c.h.b16 %v8377
      %v8468 = vunpack.c.l.b16 %v8378
      %v8469 = vunpack.c.h.b16 %v8378
      %v8470 = vunpack.c.l.b16 %v8379
      %v8471 = vunpack.c.h.b16 %v8379
      %v8472 = vunpack.c.l.b16 %v8380
      %v8473 = vunpack.c.h.b16 %v8380
      %v8474 = vunpack.c.l.b16 %v8381
      %v8475 = vunpack.c.h.b16 %v8381
      %v8476 = vunpack.c.l.b16 %v8382
      %v8477 = vunpack.c.h.b16 %v8382
      %v8478 = vunpack.c.l.b16 %v8383
      %v8479 = vunpack.c.h.b16 %v8383
      %v8480 = vpack.c.b16 %v8418, %v8416
      %v8481 = vpack.c.b16 %v8419, %v8417
      %v8482 = vpack.c.b16 %v8422, %v8420
      %v8483 = vpack.c.b16 %v8423, %v8421
      %v8484 = vpack.c.b16 %v8426, %v8424
      %v8485 = vpack.c.b16 %v8427, %v8425
      %v8486 = vpack.c.b16 %v8430, %v8428
      %v8487 = vpack.c.b16 %v8431, %v8429
      %v8488 = vpack.c.b16 %v8434, %v8432
      %v8489 = vpack.c.b16 %v8435, %v8433
      %v8490 = vpack.c.b16 %v8438, %v8436
      %v8491 = vpack.c.b16 %v8439, %v8437
      %v8492 = vpack.c.b16 %v8442, %v8440
      %v8493 = vpack.c.b16 %v8443, %v8441
      %v8494 = vpack.c.b16 %v8446, %v8444
      %v8495 = vpack.c.b16 %v8447, %v8445
      %v8496 = vpack.c.b16 %v8450, %v8448
      %v8497 = vpack.c.b16 %v8451, %v8449
      %v8498 = vpack.c.b16 %v8454, %v8452
      %v8499 = vpack.c.b16 %v8455, %v8453
      %v8500 = vpack.c.b16 %v8458, %v8456
      %v8501 = vpack.c.b16 %v8459, %v8457
      %v8502 = vpack.c.b16 %v8462, %v8460
      %v8503 = vpack.c.b16 %v8463, %v8461
      %v8504 = vpack.c.b16 %v8466, %v8464
      %v8505 = vpack.c.b16 %v8467, %v8465
      %v8506 = vpack.c.b16 %v8470, %v8468
      %v8507 = vpack.c.b16 %v8471, %v8469
      %v8508 = vpack.c.b16 %v8474, %v8472
      %v8509 = vpack.c.b16 %v8475, %v8473
      %v8510 = vpack.c.b16 %v8478, %v8476
      %v8511 = vpack.c.b16 %v8479, %v8477
      %8544 = vmatprep.subr.bf16.mxu0 %v8481
      %8545 = vmatpush1.bf16.msra.mxu0 %v8480
      %8546 = vmatprep.subr.bf16.mxu0 %v8483
      %8547 = vmatpush1.bf16.msra.mxu0 %v8482
      %8548 = vmatprep.subr.bf16.mxu0 %v8485
      %8549 = vmatpush1.bf16.msra.mxu0 %v8484
      %8550 = vmatprep.subr.bf16.mxu0 %v8487
      %8551 = vmatpush1.bf16.msra.mxu0 %v8486
      %8552 = vmatprep.subr.bf16.mxu0 %v8489
      %8553 = vmatpush1.bf16.msra.mxu0 %v8488
      %8554 = vmatprep.subr.bf16.mxu0 %v8491
      %8555 = vmatpush1.bf16.msra.mxu0 %v8490
      %8556 = vmatprep.subr.bf16.mxu0 %v8493
      %8557 = vmatpush1.bf16.msra.mxu0 %v8492
      %8558 = vmatprep.subr.bf16.mxu0 %v8495
      %8559 = vmatpush1.bf16.msra.mxu0 %v8494
      %8560 = vmatprep.subr.bf16.mxu0 %v8497
      %8561 = vmatpush1.bf16.msra.mxu0 %v8496
      %8562 = vmatprep.subr.bf16.mxu0 %v8499
      %8563 = vmatpush1.bf16.msra.mxu0 %v8498
      %8564 = vmatprep.subr.bf16.mxu0 %v8501
      %8565 = vmatpush1.bf16.msra.mxu0 %v8500
      %8566 = vmatprep.subr.bf16.mxu0 %v8503
      %8567 = vmatpush1.bf16.msra.mxu0 %v8502
      %8568 = vmatprep.subr.bf16.mxu0 %v8505
      %8569 = vmatpush1.bf16.msra.mxu0 %v8504
      %8570 = vmatprep.subr.bf16.mxu0 %v8507
      %8571 = vmatpush1.bf16.msra.mxu0 %v8506
      %8572 = vmatprep.subr.bf16.mxu0 %v8509
      %8573 = vmatpush1.bf16.msra.mxu0 %v8508
      %8574 = vmatprep.subr.bf16.mxu0 %v8511
      %8575 = vmatpush1.bf16.msra.mxu0 %v8510
      %8576 = vmatprep.mubr.bf16.mxu0 %v8321
      %8577 = vmatmul.mubr.bf16.gmra.mrb[0].mxu0 %v8320
      %v8578 = vpop.f32.mrb[0].mxu0
      %v8579 = vadd.f32 0.0, %v8578
      %v8580 = vpop.f32.mrb[0].mxu0
      %v8581 = vadd.f32 0.0, %v8580
      %v8582 = vpop.f32.mrb[0].mxu0
      %v8583 = vadd.f32 0.0, %v8582
      %v8584 = vpop.f32.mrb[0].mxu0
      %v8585 = vadd.f32 0.0, %v8584
      %8586 = vmatprep.mubr.bf16.mxu0 %v8323
      %8587 = vmatmul.mubr.bf16.gmra.mrb[0].mxu0 %v8322
      %v8588 = vpop.f32.mrb[0].mxu0
      %v8589 = vadd.f32 0.0, %v8588
      %v8590 = vpop.f32.mrb[0].mxu0
      %v8591 = vadd.f32 0.0, %v8590
      %v8592 = vpop.f32.mrb[0].mxu0
      %v8593 = vadd.f32 0.0, %v8592
      %v8594 = vpop.f32.mrb[0].mxu0
      %v8595 = vadd.f32 0.0, %v8594
      %8596 = vmatprep.mubr.bf16.mxu0 %v8325
      %8597 = vmatmul.mubr.bf16.gmra.mrb[0].mxu0 %v8324
      %v8598 = vpop.f32.mrb[0].mxu0
      %v8599 = vadd.f32 0.0, %v8598
      %v8600 = vpop.f32.mrb[0].mxu0
      %v8601 = vadd.f32 0.0, %v8600
      %v8602 = vpop.f32.mrb[0].mxu0
      %v8603 = vadd.f32 0.0, %v8602
      %v8604 = vpop.f32.mrb[0].mxu0
      %v8605 = vadd.f32 0.0, %v8604
      %8606 = vmatprep.mubr.bf16.mxu0 %v8327
      %8607 = vmatmul.mubr.bf16.gmra.mrb[0].mxu0 %v8326
      %v8608 = vpop.f32.mrb[0].mxu0
      %v8609 = vadd.f32 0.0, %v8608
      %v8610 = vpop.f32.mrb[0].mxu0
      %v8611 = vadd.f32 0.0, %v8610
      %v8612 = vpop.f32.mrb[0].mxu0
      %v8613 = vadd.f32 0.0, %v8612
      %v8614 = vpop.f32.mrb[0].mxu0
      %v8615 = vadd.f32 0.0, %v8614
      %8616 = vmatprep.mubr.bf16.mxu0 %v8329
      %8617 = vmatmul.mubr.bf16.gmra.mrb[0].mxu0 %v8328
      %v8618 = vpop.f32.mrb[0].mxu0
      %v8619 = vadd.f32 0.0, %v8618
      %v8620 = vpop.f32.mrb[0].mxu0
      %v8621 = vadd.f32 0.0, %v8620
      %v8622 = vpop.f32.mrb[0].mxu0
      %v8623 = vadd.f32 0.0, %v8622
      %v8624 = vpop.f32.mrb[0].mxu0
      %v8625 = vadd.f32 0.0, %v8624
      %8626 = vmatprep.mubr.bf16.mxu0 %v8331
      %8627 = vmatmul.mubr.bf16.gmra.mrb[0].mxu0 %v8330
      %v8628 = vpop.f32.mrb[0].mxu0
      %v8629 = vadd.f32 0.0, %v8628
      %v8630 = vpop.f32.mrb[0].mxu0
      %v8631 = vadd.f32 0.0, %v8630
      %v8632 = vpop.f32.mrb[0].mxu0
      %v8633 = vadd.f32 0.0, %v8632
      %v8634 = vpop.f32.mrb[0].mxu0
      %v8635 = vadd.f32 0.0, %v8634
      %8636 = vmatprep.mubr.bf16.mxu0 %v8333
      %8637 = vmatmul.mubr.bf16.gmra.mrb[0].mxu0 %v8332
      %v8638 = vpop.f32.mrb[0].mxu0
      %v8639 = vadd.f32 0.0, %v8638
      %v8640 = vpop.f32.mrb[0].mxu0
      %v8641 = vadd.f32 0.0, %v8640
      %v8642 = vpop.f32.mrb[0].mxu0
      %v8643 = vadd.f32 0.0, %v8642
      %v8644 = vpop.f32.mrb[0].mxu0
      %v8645 = vadd.f32 0.0, %v8644
      %8646 = vmatprep.mubr.bf16.mxu0 %v8335
      %8647 = vmatmul.mubr.bf16.gmra.mrb[0].mxu0 %v8334
      %v8648 = vpop.f32.mrb[0].mxu0
      %v8649 = vadd.f32 0.0, %v8648
      %v8650 = vpop.f32.mrb[0].mxu0
      %v8651 = vadd.f32 0.0, %v8650
      %v8652 = vpop.f32.mrb[0].mxu0
      %v8653 = vadd.f32 0.0, %v8652
      %v8654 = vpop.f32.mrb[0].mxu0
      %v8655 = vadd.f32 0.0, %v8654
      %8656 = vmatprep.mubr.bf16.mxu0 %v8337
      %8657 = vmatmul.mubr.bf16.gmra.mrb[0].mxu0 %v8336
      %v8658 = vpop.f32.mrb[0].mxu0
      %v8659 = vadd.f32 0.0, %v8658
      %v8660 = vpop.f32.mrb[0].mxu0
      %v8661 = vadd.f32 0.0, %v8660
      %v8662 = vpop.f32.mrb[0].mxu0
      %v8663 = vadd.f32 0.0, %v8662
      %v8664 = vpop.f32.mrb[0].mxu0
      %v8665 = vadd.f32 0.0, %v8664
      %8666 = vmatprep.mubr.bf16.mxu0 %v8339
      %8667 = vmatmul.mubr.bf16.gmra.mrb[0].mxu0 %v8338
      %v8668 = vpop.f32.mrb[0].mxu0
      %v8669 = vadd.f32 0.0, %v8668
      %v8670 = vpop.f32.mrb[0].mxu0
      %v8671 = vadd.f32 0.0, %v8670
      %v8672 = vpop.f32.mrb[0].mxu0
      %v8673 = vadd.f32 0.0, %v8672
      %v8674 = vpop.f32.mrb[0].mxu0
      %v8675 = vadd.f32 0.0, %v8674
      %8676 = vmatprep.mubr.bf16.mxu0 %v8341
      %8677 = vmatmul.mubr.bf16.gmra.mrb[0].mxu0 %v8340
      %v8678 = vpop.f32.mrb[0].mxu0
      %v8679 = vadd.f32 0.0, %v8678
      %v8680 = vpop.f32.mrb[0].mxu0
      %v8681 = vadd.f32 0.0, %v8680
      %v8682 = vpop.f32.mrb[0].mxu0
      %v8683 = vadd.f32 0.0, %v8682
      %v8684 = vpop.f32.mrb[0].mxu0
      %v8685 = vadd.f32 0.0, %v8684
      %8686 = vmatprep.mubr.bf16.mxu0 %v8343
      %8687 = vmatmul.mubr.bf16.gmra.mrb[0].mxu0 %v8342
      %v8688 = vpop.f32.mrb[0].mxu0
      %v8689 = vadd.f32 0.0, %v8688
      %v8690 = vpop.f32.mrb[0].mxu0
      %v8691 = vadd.f32 0.0, %v8690
      %v8692 = vpop.f32.mrb[0].mxu0
      %v8693 = vadd.f32 0.0, %v8692
      %v8694 = vpop.f32.mrb[0].mxu0
      %v8695 = vadd.f32 0.0, %v8694
      %8696 = vmatprep.mubr.bf16.mxu0 %v8345
      %8697 = vmatmul.mubr.bf16.gmra.mrb[0].mxu0 %v8344
      %v8698 = vpop.f32.mrb[0].mxu0
      %v8699 = vadd.f32 0.0, %v8698
      %v8700 = vpop.f32.mrb[0].mxu0
      %v8701 = vadd.f32 0.0, %v8700
      %v8702 = vpop.f32.mrb[0].mxu0
      %v8703 = vadd.f32 0.0, %v8702
      %v8704 = vpop.f32.mrb[0].mxu0
      %v8705 = vadd.f32 0.0, %v8704
      %8706 = vmatprep.mubr.bf16.mxu0 %v8347
      %8707 = vmatmul.mubr.bf16.gmra.mrb[0].mxu0 %v8346
      %v8708 = vpop.f32.mrb[0].mxu0
      %v8709 = vadd.f32 0.0, %v8708
      %v8710 = vpop.f32.mrb[0].mxu0
      %v8711 = vadd.f32 0.0, %v8710
      %v8712 = vpop.f32.mrb[0].mxu0
      %v8713 = vadd.f32 0.0, %v8712
      %v8714 = vpop.f32.mrb[0].mxu0
      %v8715 = vadd.f32 0.0, %v8714
      %8716 = vmatprep.mubr.bf16.mxu0 %v8349
      %8717 = vmatmul.mubr.bf16.gmra.mrb[0].mxu0 %v8348
      %v8718 = vpop.f32.mrb[0].mxu0
      %v8719 = vadd.f32 0.0, %v8718
      %v8720 = vpop.f32.mrb[0].mxu0
      %v8721 = vadd.f32 0.0, %v8720
      %v8722 = vpop.f32.mrb[0].mxu0
      %v8723 = vadd.f32 0.0, %v8722
      %v8724 = vpop.f32.mrb[0].mxu0
      %v8725 = vadd.f32 0.0, %v8724
      %8726 = vmatprep.mubr.bf16.mxu0 %v8351
      %8727 = vmatmul.mubr.bf16.gmra.mrb[0].mxu0 %v8350
      %v8728 = vpop.f32.mrb[0].mxu0
      %v8729 = vadd.f32 0.0, %v8728
      %v8730 = vpop.f32.mrb[0].mxu0
      %v8731 = vadd.f32 0.0, %v8730
      %v8732 = vpop.f32.mrb[0].mxu0
      %v8733 = vadd.f32 0.0, %v8732
      %v8734 = vpop.f32.mrb[0].mxu0
      %v8735 = vadd.f32 0.0, %v8734
      %8736 = vdwg.mxu0
      %v8737 = vld [vmem:[#allocation6] sm:$0x1]
      %v8739 = vlaneseq
      %v8740 = vshrl.u32 %v8739, 7
      %v8741 = vsub.s32 0, %v8740
      %v8742 = vrot.slane %v8737, %v8741
      %8743 = vset.pattern.permute.xlu0 0
      %8744 = vperm.xlu0 %8743, %v8742
      %v8745 = vpop.permute.xlu0 %8744
      %v8747 = vmul.f32 %v8579, %v8745
      %v8748 = vmul.f32 %v8581, %v8745
      %v8749 = vmul.f32 %v8583, %v8745
      %v8750 = vmul.f32 %v8585, %v8745
      %v8751 = vmul.f32 %v8589, %v8745
      %v8752 = vmul.f32 %v8591, %v8745
      %v8753 = vmul.f32 %v8593, %v8745
      %v8754 = vmul.f32 %v8595, %v8745
      %v8755 = vmul.f32 %v8599, %v8745
      %v8756 = vmul.f32 %v8601, %v8745
      %v8757 = vmul.f32 %v8603, %v8745
      %v8758 = vmul.f32 %v8605, %v8745
      %v8759 = vmul.f32 %v8609, %v8745
      %v8760 = vmul.f32 %v8611, %v8745
      %v8761 = vmul.f32 %v8613, %v8745
      %v8762 = vmul.f32 %v8615, %v8745
      %v8763 = vmul.f32 %v8619, %v8745
      %v8764 = vmul.f32 %v8621, %v8745
      %v8765 = vmul.f32 %v8623, %v8745
      %v8766 = vmul.f32 %v8625, %v8745
      %v8767 = vmul.f32 %v8629, %v8745
      %v8768 = vmul.f32 %v8631, %v8745
      %v8769 = vmul.f32 %v8633, %v8745
      %v8770 = vmul.f32 %v8635, %v8745
      %v8771 = vmul.f32 %v8639, %v8745
      %v8772 = vmul.f32 %v8641, %v8745
      %v8773 = vmul.f32 %v8643, %v8745
      %v8774 = vmul.f32 %v8645, %v8745
      %v8775 = vmul.f32 %v8649, %v8745
      %v8776 = vmul.f32 %v8651, %v8745
      %v8777 = vmul.f32 %v8653, %v8745
      %v8778 = vmul.f32 %v8655, %v8745
      %v8779 = vmul.f32 %v8659, %v8745
      %v8780 = vmul.f32 %v8661, %v8745
      %v8781 = vmul.f32 %v8663, %v8745
      %v8782 = vmul.f32 %v8665, %v8745
      %v8783 = vmul.f32 %v8669, %v8745
      %v8784 = vmul.f32 %v8671, %v8745
      %v8785 = vmul.f32 %v8673, %v8745
      %v8786 = vmul.f32 %v8675, %v8745
      %v8787 = vmul.f32 %v8679, %v8745
      %v8788 = vmul.f32 %v8681, %v8745
      %v8789 = vmul.f32 %v8683, %v8745
      %v8790 = vmul.f32 %v8685, %v8745
      %v8791 = vmul.f32 %v8689, %v8745
      %v8792 = vmul.f32 %v8691, %v8745
      %v8793 = vmul.f32 %v8693, %v8745
      %v8794 = vmul.f32 %v8695, %v8745
      %v8795 = vmul.f32 %v8699, %v8745
      %v8796 = vmul.f32 %v8701, %v8745
      %v8797 = vmul.f32 %v8703, %v8745
      %v8798 = vmul.f32 %v8705, %v8745
      %v8799 = vmul.f32 %v8709, %v8745
      %v8800 = vmul.f32 %v8711, %v8745
      %v8801 = vmul.f32 %v8713, %v8745
      %v8802 = vmul.f32 %v8715, %v8745
      %v8803 = vmul.f32 %v8719, %v8745
      %v8804 = vmul.f32 %v8721, %v8745
      %v8805 = vmul.f32 %v8723, %v8745
      %v8806 = vmul.f32 %v8725, %v8745
      %v8807 = vmul.f32 %v8729, %v8745
      %v8808 = vmul.f32 %v8731, %v8745
      %v8809 = vmul.f32 %v8733, %v8745
      %v8810 = vmul.f32 %v8735, %v8745
      %8811 = vst [vmem:[%s401] sm:$0xff] %v8747
      %8812 = vst [vmem:[%s401 + $0x8] sm:$0xff] %v8748
      %8813 = vst [vmem:[%s401 + $0x10] sm:$0xff] %v8749
      %8814 = vst [vmem:[%s401 + $0x18] sm:$0xff] %v8750
      %8815 = vst [vmem:[%s401 + $0x20] sm:$0xff] %v8751
      %8816 = vst [vmem:[%s401 + $0x28] sm:$0xff] %v8752
      %8817 = vst [vmem:[%s401 + $0x30] sm:$0xff] %v8753
      %8818 = vst [vmem:[%s401 + $0x38] sm:$0xff] %v8754
      %8819 = vst [vmem:[%s401 + $0x40] sm:$0xff] %v8755
      %8820 = vst [vmem:[%s401 + $0x48] sm:$0xff] %v8756
      %8821 = vst [vmem:[%s401 + $0x50] sm:$0xff] %v8757
      %8822 = vst [vmem:[%s401 + $0x58] sm:$0xff] %v8758
      %8823 = vst [vmem:[%s401 + $0x60] sm:$0xff] %v8759
      %8824 = vst [vmem:[%s401 + $0x68] sm:$0xff] %v8760
      %8825 = vst [vmem:[%s401 + $0x70] sm:$0xff] %v8761
      %8826 = vst [vmem:[%s401 + $0x78] sm:$0xff] %v8762
      %8827 = vst [vmem:[%s401 + $0x80] sm:$0xff] %v8763
      %8828 = vst [vmem:[%s401 + $0x88] sm:$0xff] %v8764
      %8829 = vst [vmem:[%s401 + $0x90] sm:$0xff] %v8765
      %8830 = vst [vmem:[%s401 + $0x98] sm:$0xff] %v8766
      %8831 = vst [vmem:[%s401 + $0xa0] sm:$0xff] %v8767
      %8832 = vst [vmem:[%s401 + $0xa8] sm:$0xff] %v8768
      %8833 = vst [vmem:[%s401 + $0xb0] sm:$0xff] %v8769
      %8834 = vst [vmem:[%s401 + $0xb8] sm:$0xff] %v8770
      %8835 = vst [vmem:[%s401 + $0xc0] sm:$0xff] %v8771
      %8836 = vst [vmem:[%s401 + $0xc8] sm:$0xff] %v8772
      %8837 = vst [vmem:[%s401 + $0xd0] sm:$0xff] %v8773
      %8838 = vst [vmem:[%s401 + $0xd8] sm:$0xff] %v8774
      %8839 = vst [vmem:[%s401 + $0xe0] sm:$0xff] %v8775
      %8840 = vst [vmem:[%s401 + $0xe8] sm:$0xff] %v8776
      %8841 = vst [vmem:[%s401 + $0xf0] sm:$0xff] %v8777
      %8842 = vst [vmem:[%s401 + $0xf8] sm:$0xff] %v8778
      %8843 = vst [vmem:[%s401 + $0x100] sm:$0xff] %v8779
      %8844 = vst [vmem:[%s401 + $0x108] sm:$0xff] %v8780
      %8845 = vst [vmem:[%s401 + $0x110] sm:$0xff] %v8781
      %8846 = vst [vmem:[%s401 + $0x118] sm:$0xff] %v8782
      %8847 = vst [vmem:[%s401 + $0x120] sm:$0xff] %v8783
      %8848 = vst [vmem:[%s401 + $0x128] sm:$0xff] %v8784
      %8849 = vst [vmem:[%s401 + $0x130] sm:$0xff] %v8785
      %8850 = vst [vmem:[%s401 + $0x138] sm:$0xff] %v8786
      %8851 = vst [vmem:[%s401 + $0x140] sm:$0xff] %v8787
      %8852 = vst [vmem:[%s401 + $0x148] sm:$0xff] %v8788
      %8853 = vst [vmem:[%s401 + $0x150] sm:$0xff] %v8789
      %8854 = vst [vmem:[%s401 + $0x158] sm:$0xff] %v8790
      %8855 = vst [vmem:[%s401 + $0x160] sm:$0xff] %v8791
      %8856 = vst [vmem:[%s401 + $0x168] sm:$0xff] %v8792
      %8857 = vst [vmem:[%s401 + $0x170] sm:$0xff] %v8793
      %8858 = vst [vmem:[%s401 + $0x178] sm:$0xff] %v8794
      %8859 = vst [vmem:[%s401 + $0x180] sm:$0xff] %v8795
      %8860 = vst [vmem:[%s401 + $0x188] sm:$0xff] %v8796
      %8861 = vst [vmem:[%s401 + $0x190] sm:$0xff] %v8797
      %8862 = vst [vmem:[%s401 + $0x198] sm:$0xff] %v8798
      %8863 = vst [vmem:[%s401 + $0x1a0] sm:$0xff] %v8799
      %8864 = vst [vmem:[%s401 + $0x1a8] sm:$0xff] %v8800
      %8865 = vst [vmem:[%s401 + $0x1b0] sm:$0xff] %v8801
      %8866 = vst [vmem:[%s401 + $0x1b8] sm:$0xff] %v8802
      %8867 = vst [vmem:[%s401 + $0x1c0] sm:$0xff] %v8803
      %8868 = vst [vmem:[%s401 + $0x1c8] sm:$0xff] %v8804
      %8869 = vst [vmem:[%s401 + $0x1d0] sm:$0xff] %v8805
      %8870 = vst [vmem:[%s401 + $0x1d8] sm:$0xff] %v8806
      %8871 = vst [vmem:[%s401 + $0x1e0] sm:$0xff] %v8807
      %8872 = vst [vmem:[%s401 + $0x1e8] sm:$0xff] %v8808
      %8873 = vst [vmem:[%s401 + $0x1f0] sm:$0xff] %v8809
      %8874 = vst [vmem:[%s401 + $0x1f8] sm:$0xff] %v8810
      %p8875 = scmp.lt.s32.totalorder %s23, 1
      %s8876 = scalar_select %p8875, %s23, 1
      %s8877 = smul.addr %s8876, 64
      %s8878 = smul.addr %s8877, 8
      %s8879 = scalar_lea.vmem %s10, %s8878
      // Predicated region
      $region61: #{disca_forward.1} parent=59 // pred_check
        %p8880 = pneg %p266
      $region62: #{disca_forward.1} parent=59 // pred_check_branch
        %8882 = sbr.rel (%p8880) target = $region64
      $region63: #{disca_forward.1} parent=59 // pred_region
        _
      $region64: #{disca_forward.1} parent=59 // pred_fallthru
        _
    $region60: #{disca_forward.1} parent=5 // pred_fallthru
      _
    %p8883 = scmp.le.s32.totalorder 2, %s18
    // Predicated region
    $region65: #{disca_forward.1} parent=5 // pred_check
      %p8884 = pneg %p8883
    $region66: #{disca_forward.1} parent=5 // pred_check_branch
      %8886 = sbr.rel (%p8884) target = $region68
    $region67: #{disca_forward.1} parent=5 // pred_region
      %s8887 = ssub.s32 %s18, 2
      // Predicated region
      $region69: #{disca_forward.1} parent=67 // pred_check
        %p8888 = pneg %p272
      $region70: #{disca_forward.1} parent=67 // pred_check_branch
        %8890 = sbr.rel (%p8888) target = $region72
      $region71: #{disca_forward.1} parent=67 // pred_region
        %p8891 = scmp.lt.s32.totalorder %s24, 1
        %s8892 = scalar_select %p8891, %s24, 1
        %s8893 = smul.addr %s8892, 64
        %s8894 = smul.addr %s8893, 8
        %s8895 = scalar_lea.vmem %s10, %s8894
      $region72: #{disca_forward.1} parent=67 // pred_fallthru
        _
    $region68: #{disca_forward.1} parent=5 // pred_fallthru
      _
  $region6: #{disca_forward.1} parent=0 // loop_footer
    %s22 = sadd.s32 1, %s18
  $region7: #{disca_forward.1} parent=0 // loop_footer_branch
    %17 = sbr.rel target = $region3
  $region8: #{disca_forward.1} parent=0 // loop_exit
    _

</llo_original>
